<compile_context>
chip_gen: v7x
topology: tpu7x:2x2x1
jax: 0.10.0
libtpu: 0.0.40
codegen_flags: <defaults>
</compile_context>

<pallas_src>
import numpy as np
import jax
import jax.numpy as jnp
from jax.experimental import pallas as pl
from jax.experimental.pallas import tpu as pltpu


# ----------------------------- helpers --------------------------------------

_INV_SQRT2 = float(1.0 / np.sqrt(2.0))


def _gelu_exact(v):
    # PyTorch nn.GELU() default: exact erf-based GELU (kept in f32).
    return 0.5 * v * (1.0 + jax.lax.erf(v * _INV_SQRT2))


def _layernorm(v, g, b, eps=1e-5):
    mu = jnp.mean(v, axis=-1, keepdims=True)
    var = jnp.mean((v - mu) ** 2, axis=-1, keepdims=True)
    return (v - mu) * jax.lax.rsqrt(var + eps) * g + b


def _bf16(v):
    return v.astype(jnp.bfloat16)


# ----------------------------- Pallas kernels -------------------------------

def patch_embed_kernel(x_ref, w_ref, b_ref, o_ref):
    # o = x @ w + b     x:(tm,K) w:(K,tn) b:(1,tn)  -- bf16 operands, f32 acc.
    o_ref[...] = (
        jnp.dot(_bf16(x_ref[...]), _bf16(w_ref[...]),
                preferred_element_type=jnp.float32)
        + b_ref[...]
    )


def mixer_blocks_kernel(x_ref,
                        ln1g_ref, ln1b_ref, w1_ref, b1_ref, w2_ref, b2_ref,
                        ln2g_ref, ln2b_ref, w3_ref, b3_ref, w4_ref, b4_ref,
                        o_ref):
    # Grid = (batch tiles [parallel], layers [arbitrary, innermost]).
    # The output block index is constant along the layer axis, so o_ref stays
    # VMEM-resident and carries the activation between layers of this tile.
    layer = pl.program_id(1)

    @pl.when(layer == 0)
    def _():
        o_ref[...] = x_ref[...]

    Bt, T, C = o_ref.shape
    Tm = w1_ref.shape[1]

    x = o_ref[...]                                             # (Bt, T, C) f32

    # ---- token mixer: LN -> Conv1d(T->Tm,1) -> GELU -> Conv1d(Tm->T,1) ----
    xn = _layernorm(x, ln1g_ref[0], ln1b_ref[0])               # (Bt, T, C)
    w1b = jnp.broadcast_to(_bf16(w1_ref[0]), (Bt, Tm, T))
    h = jnp.einsum("bot,btc->boc", w1b, _bf16(xn),
                   preferred_element_type=jnp.float32) + b1_ref[0]   # (Bt,Tm,C)
    h = _gelu_exact(h)
    w2b = jnp.broadcast_to(_bf16(w2_ref[0]), (Bt, T, Tm))
    tok = jnp.einsum("bto,boc->btc", w2b, _bf16(h),
                     preferred_element_type=jnp.float32) + b2_ref[0]  # (Bt,T,C)
    x = x + tok

    # ---- channel mixer: LN -> Linear(C->Cm) -> GELU -> Linear(Cm->C) ----
    xn2 = _layernorm(x, ln2g_ref[0], ln2b_ref[0]).reshape(Bt * T, C)
    h2 = jnp.dot(_bf16(xn2), _bf16(w3_ref[0]),
                 preferred_element_type=jnp.float32) + b3_ref[0]      # (Bt*T,Cm)
    h2 = _gelu_exact(h2)
    ch = jnp.dot(_bf16(h2), _bf16(w4_ref[0]),
                 preferred_element_type=jnp.float32) + b4_ref[0]      # (Bt*T,C)

    o_ref[...] = x + ch.reshape(Bt, T, C)


def head_kernel(x_ref, lng_ref, lnb_ref, wfc_ref, bfc_ref, o_ref):
    # x: (Bt, T, C) -> LN -> mean over tokens -> fc -> (Bt, num_classes)
    xn = _layernorm(x_ref[...], lng_ref[...], lnb_ref[...])
    pooled = jnp.mean(xn, axis=1)                              # (Bt, C)
    o_ref[...] = (
        jnp.dot(_bf16(pooled), _bf16(wfc_ref[...]),
                preferred_element_type=jnp.float32)
        + bfc_ref[...]
    )


# ------------------------------ wrappers -------------------------------------

def pallas_patch_embed(patches, w, b, *, tm=256, tn=128):
    M, K = patches.shape
    _, N = w.shape
    tm = tm if M % tm == 0 else M
    tn = tn if N % tn == 0 else N
    return pl.pallas_call(
        patch_embed_kernel,
        out_shape=jax.ShapeDtypeStruct((M, N), jnp.float32),
        grid=(M // tm, N // tn),
        in_specs=[
            pl.BlockSpec((tm, K), lambda i, j: (i, 0)),
            pl.BlockSpec((K, tn), lambda i, j: (0, j)),
            pl.BlockSpec((1, tn), lambda i, j: (0, j)),
        ],
        out_specs=pl.BlockSpec((tm, tn), lambda i, j: (i, j)),
        compiler_params=pltpu.CompilerParams(
            dimension_semantics=("parallel", "parallel")),
    )(patches, w, b)


def pallas_mixer_blocks(x, stacked, *, bt=8):
    B, T, C = x.shape
    L, Tm, _ = stacked["w1"].shape
    Cm = stacked["w3"].shape[2]
    bt = bt if B % bt == 0 else B

    def wspec(shape):
        nd = len(shape)
        return pl.BlockSpec((1,) + shape,
                            lambda b, l, _nd=nd: (l,) + (0,) * _nd)

    return pl.pallas_call(
        mixer_blocks_kernel,
        out_shape=jax.ShapeDtypeStruct((B, T, C), jnp.float32),
        grid=(B // bt, L),
        in_specs=[
            pl.BlockSpec((bt, T, C), lambda b, l: (b, 0, 0)),   # x (fetched 1x/b)
            wspec((1, C)), wspec((1, C)),                       # ln1 gamma, beta
            wspec((Tm, T)), wspec((Tm, 1)),                     # token-mix conv1
            wspec((T, Tm)), wspec((T, 1)),                      # token-mix conv2
            wspec((1, C)), wspec((1, C)),                       # ln2 gamma, beta
            wspec((C, Cm)), wspec((1, Cm)),                     # channel fc1
            wspec((Cm, C)), wspec((1, C)),                      # channel fc2
        ],
        out_specs=pl.BlockSpec((bt, T, C), lambda b, l: (b, 0, 0)),
        compiler_params=pltpu.CompilerParams(
            dimension_semantics=("parallel", "arbitrary")),
    )(x,
      stacked["ln1_g"], stacked["ln1_b"], stacked["w1"], stacked["b1"],
      stacked["w2"], stacked["b2"],
      stacked["ln2_g"], stacked["ln2_b"], stacked["w3"], stacked["b3"],
      stacked["w4"], stacked["b4"])


def pallas_head(x, lng, lnb, wfc, bfc, *, bt=8):
    B, T, C = x.shape
    N = wfc.shape[1]
    bt = bt if B % bt == 0 else B

    def full(shape):
        nd = len(shape)
        return pl.BlockSpec(shape, lambda b, _nd=nd: (0,) * _nd)

    return pl.pallas_call(
        head_kernel,
        out_shape=jax.ShapeDtypeStruct((B, N), jnp.float32),
        grid=(B // bt,),
        in_specs=[
            pl.BlockSpec((bt, T, C), lambda b: (b, 0, 0)),
            full((1, C)), full((1, C)), full((C, N)), full((1, N)),
        ],
        out_specs=pl.BlockSpec((bt, N), lambda b: (b, 0)),
        compiler_params=pltpu.CompilerParams(
            dimension_semantics=("parallel",)),
    )(x, lng, lnb, wfc, bfc)


# ------------------------------ full model -----------------------------------

def mlp_mixer_forward(x_nchw, params, patch_size, *, bt=8):
    B, Cin, H, W = x_nchw.shape
    p = patch_size
    Hp, Wp = H // p, W // p
    T = Hp * Wp

    # Patch extraction (layout glue): NCHW -> (B*T, Cin*p*p), row-major token
    # order, per-patch flattening (Cin, p, p) to match Conv2d weight layout.
    patches = x_nchw.reshape(B, Cin, Hp, p, Wp, p)
    patches = jnp.transpose(patches, (0, 2, 4, 1, 3, 5))
    patches = patches.reshape(B * T, Cin * p * p)

    tokens = pallas_patch_embed(patches, params["pe_w"], params["pe_b"])
    C = tokens.shape[-1]
    x = tokens.reshape(B, T, C)

    x = pallas_mixer_blocks(x, params["stacked_blocks"], bt=bt)

    return pallas_head(x, params["ln_g"], params["ln_b"],
                       params["fc_w"], params["fc_b"], bt=bt)


# ------------------------------ reference ------------------------------------

def mlp_mixer_reference(x_nchw, params, patch_size):
    # Pure-jnp f32 reference for correctness checking.
    B, Cin, H, W = x_nchw.shape
    p = patch_size
    Hp, Wp = H // p, W // p
    T = Hp * Wp
    patches = x_nchw.reshape(B, Cin, Hp, p, Wp, p)
    patches = jnp.transpose(patches, (0, 2, 4, 1, 3, 5)).reshape(B * T, Cin * p * p)
    x = (patches @ params["pe_w"] + params["pe_b"]).reshape(B, T, -1)

    def ln(v, g, b):
        mu = jnp.mean(v, -1, keepdims=True)
        var = jnp.mean((v - mu) ** 2, -1, keepdims=True)
        return (v - mu) / jnp.sqrt(var + 1e-5) * g + b

    def gelu(v):
        return 0.5 * v * (1.0 + jax.lax.erf(v * _INV_SQRT2))

    s = params["stacked_blocks"]
    L = s["w1"].shape[0]
    for l in range(L):
        xn = ln(x, s["ln1_g"][l], s["ln1_b"][l])
        h = gelu(jnp.einsum("ot,btc->boc", s["w1"][l], xn) + s["b1"][l][None])
        x = x + jnp.einsum("to,boc->btc", s["w2"][l], h) + s["b2"][l][None]
        xn2 = ln(x, s["ln2_g"][l], s["ln2_b"][l])
        h2 = gelu(xn2 @ s["w3"][l] + s["b3"][l])
        x = x + h2 @ s["w4"][l] + s["b4"][l]

    pooled = jnp.mean(ln(x, params["ln_g"], params["ln_b"]), axis=1)
    return pooled @ params["fc_w"] + params["fc_b"]


# ------------------------------ params ---------------------------------------

def init_params(key, *, num_classes, emb_dim, token_mlp_dim, channel_mlp_dim,
                patch_size, num_layers, in_channels, image_size):
    T = (image_size * image_size) // (patch_size * patch_size)
    C, Tm, Cm, L = emb_dim, token_mlp_dim, channel_mlp_dim, num_layers
    keys = iter(jax.random.split(key, 16))

    def rnd(shape, scale=0.05):
        return (scale * jax.random.normal(next(keys), shape)).astype(jnp.float32)

    params = {
        # Conv2d(Cin, C, p, p) weight flattened to (Cin*p*p, C) for matmul.
        "pe_w": rnd((in_channels * patch_size * patch_size, C)),
        "pe_b": rnd((1, C)),
        "ln_g": jnp.ones((1, C), jnp.float32),
        "ln_b": jnp.zeros((1, C), jnp.float32),
        # NOTE: PyTorch zero-inits fc.weight; a random fc.weight is used here
        # so the end-to-end check exercises the whole network (zero weight
        # would make the output == fc bias). Forward semantics are unchanged.
        "fc_w": rnd((C, num_classes)),
        "fc_b": rnd((1, num_classes)),
        # Per-layer weights stacked along a leading layer axis for the fused
        # mixer-block kernel (layer-indexed BlockSpecs).
        "stacked_blocks": {
            "ln1_g": jnp.ones((L, 1, C), jnp.float32),
            "ln1_b": jnp.zeros((L, 1, C), jnp.float32),
            "w1": rnd((L, Tm, T)), "b1": rnd((L, Tm, 1)),   # Conv1d(T->Tm, k=1)
            "w2": rnd((L, T, Tm)), "b2": rnd((L, T, 1)),    # Conv1d(Tm->T, k=1)
            "ln2_g": jnp.ones((L, 1, C), jnp.float32),
            "ln2_b": jnp.zeros((L, 1, C), jnp.float32),
            "w3": rnd((L, C, Cm)), "b3": rnd((L, 1, Cm)),   # Linear(C->Cm)
            "w4": rnd((L, Cm, C)), "b4": rnd((L, 1, C)),    # Linear(Cm->C)
        },
    }
    return params


# ------------------------------ main ------------------------------------------

if __name__ == "__main__":
    # Small but TPU-friendly config: lane-dense C, >=2 parallel grid steps.
    B = 16
    in_channels = 3
    image_size = 32
    patch_size = 4            # -> num_tokens T = 64
    emb_dim = 128             # lane-dense (multiple of 128)
    token_mlp_dim = 64
    channel_mlp_dim = 256
    num_layers = 4
    num_classes = 16
    bt = 8                    # batch elements per grid step

    key = jax.random.PRNGKey(0)
    kx, kp = jax.random.split(key)
    x = jax.random.normal(kx, (B, in_channels, image_size, image_size),
                          dtype=jnp.float32)
    params = init_params(kp,
                         num_classes=num_classes, emb_dim=emb_dim,
                         token_mlp_dim=token_mlp_dim,
                         channel_mlp_dim=channel_mlp_dim,
                         patch_size=patch_size, num_layers=num_layers,
                         in_channels=in_channels, image_size=image_size)

    fwd = jax.jit(lambda xx: mlp_mixer_forward(xx, params, patch_size, bt=bt))
    out = jax.block_until_ready(fwd(x))

    ref = jax.block_until_ready(mlp_mixer_reference(x, params, patch_size))
    assert out.shape == (B, num_classes)
    # Kernel uses bf16 matmul operands with f32 accumulation; reference is f32.
    np.testing.assert_allclose(np.asarray(out), np.asarray(ref),
                               rtol=2e-2, atol=2e-2)
    print("KERNEL_OK")
</pallas_src>

<mosaic_0001>
module attributes {stable_mosaic.version = 11 : i64} {
  func.func @patch_embed_kernel(%arg0: i32, %arg1: i32, %arg2: memref<256x48xf32, #tpu.memory_space<vmem>>, %arg3: memref<48x128xf32, #tpu.memory_space<vmem>>, %arg4: memref<1x128xf32, #tpu.memory_space<vmem>>, %arg5: memref<256x128xf32, #tpu.memory_space<vmem>>) attributes {dimension_semantics = [#tpu.dimension_semantics<parallel>, #tpu.dimension_semantics<parallel>], iteration_bounds = array<i64: 4, 1>, scalar_prefetch = 0 : i64, scratch_operands = 0 : i64, tpu.core_type = #tpu.core_type<tc>, window_params = [{transform_indices = @transform_0, window_bounds = array<i64: 256, 48>}, {transform_indices = @transform_1, window_bounds = array<i64: 48, 128>}, {transform_indices = @transform_2, window_bounds = array<i64: 1, 128>}, {transform_indices = @transform_3, window_bounds = array<i64: 256, 128>}]} {
    %c0 = arith.constant 0 : index
    %c0_0 = arith.constant 0 : index
    %0 = vector.load %arg2[%c0, %c0_0] : memref<256x48xf32, #tpu.memory_space<vmem>>, vector<256x48xf32>
    %1 = arith.truncf %0 : vector<256x48xf32> to vector<256x48xbf16>
    %c0_1 = arith.constant 0 : index
    %c0_2 = arith.constant 0 : index
    %2 = vector.load %arg3[%c0_1, %c0_2] : memref<48x128xf32, #tpu.memory_space<vmem>>, vector<48x128xf32>
    %3 = arith.truncf %2 : vector<48x128xf32> to vector<48x128xbf16>
    %cst = arith.constant dense<0.000000e+00> : vector<256x128xf32>
    %4 = tpu.matmul %1, %3, %cst {dimension_numbers = #tpu.dot_dimension_numbers<[1], [0], [0], [1], [0, 0, 1, 1], [], []>} : vector<256x48xbf16>, vector<48x128xbf16>, vector<256x128xf32> -> vector<256x128xf32>
    %c0_3 = arith.constant 0 : index
    %c0_4 = arith.constant 0 : index
    %5 = vector.load %arg4[%c0_3, %c0_4] : memref<1x128xf32, #tpu.memory_space<vmem>>, vector<1x128xf32>
    %6 = vector.broadcast %5 : vector<1x128xf32> to vector<256x128xf32>
    %7 = arith.addf %4, %6 : vector<256x128xf32>
    %c0_5 = arith.constant 0 : index
    %c0_6 = arith.constant 0 : index
    %8 = vector.load %arg5[%c0_5, %c0_6] : memref<256x128xf32, #tpu.memory_space<vmem>>, vector<256x128xf32>
    tpu.vector_store %arg5[%c0_5, %c0_6], %7 {strides = array<i32>} : memref<256x128xf32, #tpu.memory_space<vmem>>, vector<256x128xf32>,
    return
  }
  func.func @transform_0(%arg0: i32, %arg1: i32) -> (i32, i32) {
    %c0_i32 = arith.constant 0 : i32
    %c0_i32_0 = arith.constant 0 : i32
    return %arg0, %c0_i32 : i32, i32
  }
  func.func @transform_1(%arg0: i32, %arg1: i32) -> (i32, i32) {
    %c0_i32 = arith.constant 0 : i32
    %c0_i32_0 = arith.constant 0 : i32
    return %c0_i32, %arg1 : i32, i32
  }
  func.func @transform_2(%arg0: i32, %arg1: i32) -> (i32, i32) {
    %c0_i32 = arith.constant 0 : i32
    %c0_i32_0 = arith.constant 0 : i32
    return %c0_i32, %arg1 : i32, i32
  }
  func.func @transform_3(%arg0: i32, %arg1: i32) -> (i32, i32) {
    %c0_i32 = arith.constant 0 : i32
    return %arg0, %arg1 : i32, i32
  }
}

module attributes {stable_mosaic.version = 11 : i64} {
  func.func @mixer_blocks_kernel(%arg0: i32, %arg1: i32, %arg2: memref<8x64x128xf32, #tpu.memory_space<vmem>>, %arg3: memref<1x1x128xf32, #tpu.memory_space<vmem>>, %arg4: memref<1x1x128xf32, #tpu.memory_space<vmem>>, %arg5: memref<1x64x64xf32, #tpu.memory_space<vmem>>, %arg6: memref<1x64x1xf32, #tpu.memory_space<vmem>>, %arg7: memref<1x64x64xf32, #tpu.memory_space<vmem>>, %arg8: memref<1x64x1xf32, #tpu.memory_space<vmem>>, %arg9: memref<1x1x128xf32, #tpu.memory_space<vmem>>, %arg10: memref<1x1x128xf32, #tpu.memory_space<vmem>>, %arg11: memref<1x128x256xf32, #tpu.memory_space<vmem>>, %arg12: memref<1x1x256xf32, #tpu.memory_space<vmem>>, %arg13: memref<1x256x128xf32, #tpu.memory_space<vmem>>, %arg14: memref<1x1x128xf32, #tpu.memory_space<vmem>>, %arg15: memref<8x64x128xf32, #tpu.memory_space<vmem>>) attributes {dimension_semantics = [#tpu.dimension_semantics<parallel>, #tpu.dimension_semantics<arbitrary>], iteration_bounds = array<i64: 2, 4>, scalar_prefetch = 0 : i64, scratch_operands = 0 : i64, tpu.core_type = #tpu.core_type<tc>, window_params = [{transform_indices = @transform_0, window_bounds = array<i64: 8, 64, 128>}, {transform_indices = @transform_1, window_bounds = array<i64: 1, 1, 128>}, {transform_indices = @transform_2, window_bounds = array<i64: 1, 1, 128>}, {transform_indices = @transform_3, window_bounds = array<i64: 1, 64, 64>}, {transform_indices = @transform_4, window_bounds = array<i64: 1, 64, 1>}, {transform_indices = @transform_5, window_bounds = array<i64: 1, 64, 64>}, {transform_indices = @transform_6, window_bounds = array<i64: 1, 64, 1>}, {transform_indices = @transform_7, window_bounds = array<i64: 1, 1, 128>}, {transform_indices = @transform_8, window_bounds = array<i64: 1, 1, 128>}, {transform_indices = @transform_9, window_bounds = array<i64: 1, 128, 256>}, {transform_indices = @transform_10, window_bounds = array<i64: 1, 1, 256>}, {transform_indices = @transform_11, window_bounds = array<i64: 1, 256, 128>}, {transform_indices = @transform_12, window_bounds = array<i64: 1, 1, 128>}, {transform_indices = @transform_13, window_bounds = array<i64: 8, 64, 128>}]} {
    %c0_i32 = arith.constant 0 : i32
    %0 = arith.cmpi eq, %arg1, %c0_i32 : i32
    %1 = arith.extui %0 : i1 to i32
    %c0_i32_0 = arith.constant 0 : i32
    %2 = arith.cmpi ne, %1, %c0_i32_0 : i32
    scf.if %2 {
      %c0_61 = arith.constant 0 : index
      %c0_62 = arith.constant 0 : index
      %c0_63 = arith.constant 0 : index
      %123 = vector.load %arg2[%c0_61, %c0_62, %c0_63] : memref<8x64x128xf32, #tpu.memory_space<vmem>>, vector<8x64x128xf32>
      %c0_64 = arith.constant 0 : index
      %c0_65 = arith.constant 0 : index
      %c0_66 = arith.constant 0 : index
      %124 = vector.load %arg15[%c0_64, %c0_65, %c0_66] : memref<8x64x128xf32, #tpu.memory_space<vmem>>, vector<8x64x128xf32>
      tpu.vector_store %arg15[%c0_64, %c0_65, %c0_66], %123 {strides = array<i32>} : memref<8x64x128xf32, #tpu.memory_space<vmem>>, vector<8x64x128xf32>,
    } else {
    }
    %c0 = arith.constant 0 : index
    %c0_1 = arith.constant 0 : index
    %c0_2 = arith.constant 0 : index
    %3 = vector.load %arg15[%c0, %c0_1, %c0_2] : memref<8x64x128xf32, #tpu.memory_space<vmem>>, vector<8x64x128xf32>
    %c0_3 = arith.constant 0 : index
    %c0_4 = arith.constant 0 : index
    %c0_5 = arith.constant 0 : index
    %4 = vector.load %arg3[%c0_3, %c0_4, %c0_5] : memref<1x1x128xf32, #tpu.memory_space<vmem>>, vector<1x1x128xf32>
    %5 = vector.shape_cast %4 : vector<1x1x128xf32> to vector<1x128xf32>
    %c0_6 = arith.constant 0 : index
    %c0_7 = arith.constant 0 : index
    %c0_8 = arith.constant 0 : index
    %6 = vector.load %arg4[%c0_6, %c0_7, %c0_8] : memref<1x1x128xf32, #tpu.memory_space<vmem>>, vector<1x1x128xf32>
    %7 = vector.shape_cast %6 : vector<1x1x128xf32> to vector<1x128xf32>
    %cst = arith.constant dense<0.000000e+00> : vector<8x64xf32>
    %8 = vector.multi_reduction <add>, %3, %cst [2] : vector<8x64x128xf32> to vector<8x64xf32>
    %9 = vector.shape_cast %8 : vector<8x64xf32> to vector<8x64x1xf32>
    %cst_9 = arith.constant 1.280000e+02 : f32
    %10 = vector.broadcast %cst_9 : f32 to vector<8x64x1xf32>
    %11 = arith.divf %9, %10 : vector<8x64x1xf32>
    %12 = vector.broadcast %11 : vector<8x64x1xf32> to vector<8x64x128xf32>
    %13 = arith.subf %3, %12 : vector<8x64x128xf32>
    %14 = arith.mulf %13, %13 : vector<8x64x128xf32>
    %cst_10 = arith.constant dense<0.000000e+00> : vector<8x64xf32>
    %15 = vector.multi_reduction <add>, %14, %cst_10 [2] : vector<8x64x128xf32> to vector<8x64xf32>
    %16 = vector.shape_cast %15 : vector<8x64xf32> to vector<8x64x1xf32>
    %cst_11 = arith.constant 1.280000e+02 : f32
    %17 = vector.broadcast %cst_11 : f32 to vector<8x64x1xf32>
    %18 = arith.divf %16, %17 : vector<8x64x1xf32>
    %19 = vector.broadcast %11 : vector<8x64x1xf32> to vector<8x64x128xf32>
    %20 = arith.subf %3, %19 : vector<8x64x128xf32>
    %cst_12 = arith.constant 9.99999974E-6 : f32
    %21 = vector.broadcast %cst_12 : f32 to vector<8x64x1xf32>
    %22 = arith.addf %18, %21 : vector<8x64x1xf32>
    %23 = math.rsqrt %22 : vector<8x64x1xf32>
    %24 = vector.broadcast %23 : vector<8x64x1xf32> to vector<8x64x128xf32>
    %25 = arith.mulf %20, %24 : vector<8x64x128xf32>
    %26 = vector.shape_cast %5 : vector<1x128xf32> to vector<1x1x128xf32>
    %27 = vector.broadcast %26 : vector<1x1x128xf32> to vector<8x64x128xf32>
    %28 = arith.mulf %25, %27 : vector<8x64x128xf32>
    %29 = vector.shape_cast %7 : vector<1x128xf32> to vector<1x1x128xf32>
    %30 = vector.broadcast %29 : vector<1x1x128xf32> to vector<8x64x128xf32>
    %31 = arith.addf %28, %30 : vector<8x64x128xf32>
    %c0_13 = arith.constant 0 : index
    %c0_14 = arith.constant 0 : index
    %c0_15 = arith.constant 0 : index
    %32 = vector.load %arg5[%c0_13, %c0_14, %c0_15] : memref<1x64x64xf32, #tpu.memory_space<vmem>>, vector<1x64x64xf32>
    %33 = vector.shape_cast %32 : vector<1x64x64xf32> to vector<64x64xf32>
    %34 = arith.truncf %33 : vector<64x64xf32> to vector<64x64xbf16>
    %35 = vector.shape_cast %34 : vector<64x64xbf16> to vector<1x64x64xbf16>
    %36 = vector.broadcast %35 : vector<1x64x64xbf16> to vector<8x64x64xbf16>
    %37 = arith.truncf %31 : vector<8x64x128xf32> to vector<8x64x128xbf16>
    "tpu.trace_start"() <{level = 10 : i32, message = "bot,btc->boc"}> : () -> ()
    %cst_16 = arith.constant dense<0.000000e+00> : vector<8x64x128xf32>
    %38 = tpu.matmul %36, %37, %cst_16 {dimension_numbers = #tpu.dot_dimension_numbers<[2], [1], [1], [2], [0, 0, 0, 1, 1, 2], [0], [0]>} : vector<8x64x64xbf16>, vector<8x64x128xbf16>, vector<8x64x128xf32> -> vector<8x64x128xf32>
    "tpu.trace_stop"() : () -> ()
    %c0_17 = arith.constant 0 : index
    %c0_18 = arith.constant 0 : index
    %c0_19 = arith.constant 0 : index
    %39 = vector.load %arg6[%c0_17, %c0_18, %c0_19] : memref<1x64x1xf32, #tpu.memory_space<vmem>>, vector<1x64x1xf32>
    %40 = vector.shape_cast %39 : vector<1x64x1xf32> to vector<64x1xf32>
    %41 = vector.shape_cast %40 : vector<64x1xf32> to vector<1x64x1xf32>
    %42 = vector.broadcast %41 : vector<1x64x1xf32> to vector<8x64x128xf32>
    %43 = arith.addf %38, %42 : vector<8x64x128xf32>
    %cst_20 = arith.constant 5.000000e-01 : f32
    %44 = vector.broadcast %cst_20 : f32 to vector<8x64x128xf32>
    %45 = arith.mulf %44, %43 : vector<8x64x128xf32>
    %cst_21 = arith.constant 0.707106769 : f32
    %46 = vector.broadcast %cst_21 : f32 to vector<8x64x128xf32>
    %47 = arith.mulf %43, %46 : vector<8x64x128xf32>
    %48 = math.erf %47 : vector<8x64x128xf32>
    %cst_22 = arith.constant 1.000000e+00 : f32
    %49 = vector.broadcast %cst_22 : f32 to vector<8x64x128xf32>
    %50 = arith.addf %49, %48 : vector<8x64x128xf32>
    %51 = arith.mulf %45, %50 : vector<8x64x128xf32>
    %c0_23 = arith.constant 0 : index
    %c0_24 = arith.constant 0 : index
    %c0_25 = arith.constant 0 : index
    %52 = vector.load %arg7[%c0_23, %c0_24, %c0_25] : memref<1x64x64xf32, #tpu.memory_space<vmem>>, vector<1x64x64xf32>
    %53 = vector.shape_cast %52 : vector<1x64x64xf32> to vector<64x64xf32>
    %54 = arith.truncf %53 : vector<64x64xf32> to vector<64x64xbf16>
    %55 = vector.shape_cast %54 : vector<64x64xbf16> to vector<1x64x64xbf16>
    %56 = vector.broadcast %55 : vector<1x64x64xbf16> to vector<8x64x64xbf16>
    %57 = arith.truncf %51 : vector<8x64x128xf32> to vector<8x64x128xbf16>
    "tpu.trace_start"() <{level = 10 : i32, message = "bto,boc->btc"}> : () -> ()
    %cst_26 = arith.constant dense<0.000000e+00> : vector<8x64x128xf32>
    %58 = tpu.matmul %56, %57, %cst_26 {dimension_numbers = #tpu.dot_dimension_numbers<[2], [1], [1], [2], [0, 0, 0, 1, 1, 2], [0], [0]>} : vector<8x64x64xbf16>, vector<8x64x128xbf16>, vector<8x64x128xf32> -> vector<8x64x128xf32>
    "tpu.trace_stop"() : () -> ()
    %c0_27 = arith.constant 0 : index
    %c0_28 = arith.constant 0 : index
    %c0_29 = arith.constant 0 : index
    %59 = vector.load %arg8[%c0_27, %c0_28, %c0_29] : memref<1x64x1xf32, #tpu.memory_space<vmem>>, vector<1x64x1xf32>
    %60 = vector.shape_cast %59 : vector<1x64x1xf32> to vector<64x1xf32>
    %61 = vector.shape_cast %60 : vector<64x1xf32> to vector<1x64x1xf32>
    %62 = vector.broadcast %61 : vector<1x64x1xf32> to vector<8x64x128xf32>
    %63 = arith.addf %58, %62 : vector<8x64x128xf32>
    %64 = arith.addf %3, %63 : vector<8x64x128xf32>
    %c0_30 = arith.constant 0 : index
    %c0_31 = arith.constant 0 : index
    %c0_32 = arith.constant 0 : index
    %65 = vector.load %arg9[%c0_30, %c0_31, %c0_32] : memref<1x1x128xf32, #tpu.memory_space<vmem>>, vector<1x1x128xf32>
    %66 = vector.shape_cast %65 : vector<1x1x128xf32> to vector<1x128xf32>
    %c0_33 = arith.constant 0 : index
    %c0_34 = arith.constant 0 : index
    %c0_35 = arith.constant 0 : index
    %67 = vector.load %arg10[%c0_33, %c0_34, %c0_35] : memref<1x1x128xf32, #tpu.memory_space<vmem>>, vector<1x1x128xf32>
    %68 = vector.shape_cast %67 : vector<1x1x128xf32> to vector<1x128xf32>
    %cst_36 = arith.constant dense<0.000000e+00> : vector<8x64xf32>
    %69 = vector.multi_reduction <add>, %64, %cst_36 [2] : vector<8x64x128xf32> to vector<8x64xf32>
    %70 = vector.shape_cast %69 : vector<8x64xf32> to vector<8x64x1xf32>
    %cst_37 = arith.constant 1.280000e+02 : f32
    %71 = vector.broadcast %cst_37 : f32 to vector<8x64x1xf32>
    %72 = arith.divf %70, %71 : vector<8x64x1xf32>
    %73 = vector.broadcast %72 : vector<8x64x1xf32> to vector<8x64x128xf32>
    %74 = arith.subf %64, %73 : vector<8x64x128xf32>
    %75 = arith.mulf %74, %74 : vector<8x64x128xf32>
    %cst_38 = arith.constant dense<0.000000e+00> : vector<8x64xf32>
    %76 = vector.multi_reduction <add>, %75, %cst_38 [2] : vector<8x64x128xf32> to vector<8x64xf32>
    %77 = vector.shape_cast %76 : vector<8x64xf32> to vector<8x64x1xf32>
    %cst_39 = arith.constant 1.280000e+02 : f32
    %78 = vector.broadcast %cst_39 : f32 to vector<8x64x1xf32>
    %79 = arith.divf %77, %78 : vector<8x64x1xf32>
    %80 = vector.broadcast %72 : vector<8x64x1xf32> to vector<8x64x128xf32>
    %81 = arith.subf %64, %80 : vector<8x64x128xf32>
    %cst_40 = arith.constant 9.99999974E-6 : f32
    %82 = vector.broadcast %cst_40 : f32 to vector<8x64x1xf32>
    %83 = arith.addf %79, %82 : vector<8x64x1xf32>
    %84 = math.rsqrt %83 : vector<8x64x1xf32>
    %85 = vector.broadcast %84 : vector<8x64x1xf32> to vector<8x64x128xf32>
    %86 = arith.mulf %81, %85 : vector<8x64x128xf32>
    %87 = vector.shape_cast %66 : vector<1x128xf32> to vector<1x1x128xf32>
    %88 = vector.broadcast %87 : vector<1x1x128xf32> to vector<8x64x128xf32>
    %89 = arith.mulf %86, %88 : vector<8x64x128xf32>
    %90 = vector.shape_cast %68 : vector<1x128xf32> to vector<1x1x128xf32>
    %91 = vector.broadcast %90 : vector<1x1x128xf32> to vector<8x64x128xf32>
    %92 = arith.addf %89, %91 : vector<8x64x128xf32>
    %93 = vector.shape_cast %92 : vector<8x64x128xf32> to vector<512x128xf32>
    %94 = arith.truncf %93 : vector<512x128xf32> to vector<512x128xbf16>
    %c0_41 = arith.constant 0 : index
    %c0_42 = arith.constant 0 : index
    %c0_43 = arith.constant 0 : index
    %95 = vector.load %arg11[%c0_41, %c0_42, %c0_43] : memref<1x128x256xf32, #tpu.memory_space<vmem>>, vector<1x128x256xf32>
    %96 = vector.shape_cast %95 : vector<1x128x256xf32> to vector<128x256xf32>
    %97 = arith.truncf %96 : vector<128x256xf32> to vector<128x256xbf16>
    %cst_44 = arith.constant dense<0.000000e+00> : vector<512x256xf32>
    %98 = tpu.matmul %94, %97, %cst_44 {dimension_numbers = #tpu.dot_dimension_numbers<[1], [0], [0], [1], [0, 0, 1, 1], [], []>} : vector<512x128xbf16>, vector<128x256xbf16>, vector<512x256xf32> -> vector<512x256xf32>
    %c0_45 = arith.constant 0 : index
    %c0_46 = arith.constant 0 : index
    %c0_47 = arith.constant 0 : index
    %99 = vector.load %arg12[%c0_45, %c0_46, %c0_47] : memref<1x1x256xf32, #tpu.memory_space<vmem>>, vector<1x1x256xf32>
    %100 = vector.shape_cast %99 : vector<1x1x256xf32> to vector<1x256xf32>
    %101 = vector.broadcast %100 : vector<1x256xf32> to vector<512x256xf32>
    %102 = arith.addf %98, %101 : vector<512x256xf32>
    %cst_48 = arith.constant 5.000000e-01 : f32
    %103 = vector.broadcast %cst_48 : f32 to vector<512x256xf32>
    %104 = arith.mulf %103, %102 : vector<512x256xf32>
    %cst_49 = arith.constant 0.707106769 : f32
    %105 = vector.broadcast %cst_49 : f32 to vector<512x256xf32>
    %106 = arith.mulf %102, %105 : vector<512x256xf32>
    %107 = math.erf %106 : vector<512x256xf32>
    %cst_50 = arith.constant 1.000000e+00 : f32
    %108 = vector.broadcast %cst_50 : f32 to vector<512x256xf32>
    %109 = arith.addf %108, %107 : vector<512x256xf32>
    %110 = arith.mulf %104, %109 : vector<512x256xf32>
    %111 = arith.truncf %110 : vector<512x256xf32> to vector<512x256xbf16>
    %c0_51 = arith.constant 0 : index
    %c0_52 = arith.constant 0 : index
    %c0_53 = arith.constant 0 : index
    %112 = vector.load %arg13[%c0_51, %c0_52, %c0_53] : memref<1x256x128xf32, #tpu.memory_space<vmem>>, vector<1x256x128xf32>
    %113 = vector.shape_cast %112 : vector<1x256x128xf32> to vector<256x128xf32>
    %114 = arith.truncf %113 : vector<256x128xf32> to vector<256x128xbf16>
    %cst_54 = arith.constant dense<0.000000e+00> : vector<512x128xf32>
    %115 = tpu.matmul %111, %114, %cst_54 {dimension_numbers = #tpu.dot_dimension_numbers<[1], [0], [0], [1], [0, 0, 1, 1], [], []>} : vector<512x256xbf16>, vector<256x128xbf16>, vector<512x128xf32> -> vector<512x128xf32>
    %c0_55 = arith.constant 0 : index
    %c0_56 = arith.constant 0 : index
    %c0_57 = arith.constant 0 : index
    %116 = vector.load %arg14[%c0_55, %c0_56, %c0_57] : memref<1x1x128xf32, #tpu.memory_space<vmem>>, vector<1x1x128xf32>
    %117 = vector.shape_cast %116 : vector<1x1x128xf32> to vector<1x128xf32>
    %118 = vector.broadcast %117 : vector<1x128xf32> to vector<512x128xf32>
    %119 = arith.addf %115, %118 : vector<512x128xf32>
    %120 = vector.shape_cast %119 : vector<512x128xf32> to vector<8x64x128xf32>
    %121 = arith.addf %64, %120 : vector<8x64x128xf32>
    %c0_58 = arith.constant 0 : index
    %c0_59 = arith.constant 0 : index
    %c0_60 = arith.constant 0 : index
    %122 = vector.load %arg15[%c0_58, %c0_59, %c0_60] : memref<8x64x128xf32, #tpu.memory_space<vmem>>, vector<8x64x128xf32>
    tpu.vector_store %arg15[%c0_58, %c0_59, %c0_60], %121 {strides = array<i32>} : memref<8x64x128xf32, #tpu.memory_space<vmem>>, vector<8x64x128xf32>,
    return
  }
  func.func @transform_0(%arg0: i32, %arg1: i32) -> (i32, i32, i32) {
    %c0_i32 = arith.constant 0 : i32
    %c0_i32_0 = arith.constant 0 : i32
    %c0_i32_1 = arith.constant 0 : i32
    return %arg0, %c0_i32, %c0_i32_0 : i32, i32, i32
  }
  func.func @transform_1(%arg0: i32, %arg1: i32) -> (i32, i32, i32) {
    %c0_i32 = arith.constant 0 : i32
    %c0_i32_0 = arith.constant 0 : i32
    %c0_i32_1 = arith.constant 0 : i32
    return %arg1, %c0_i32, %c0_i32_0 : i32, i32, i32
  }
  func.func @transform_2(%arg0: i32, %arg1: i32) -> (i32, i32, i32) {
    %c0_i32 = arith.constant 0 : i32
    %c0_i32_0 = arith.constant 0 : i32
    %c0_i32_1 = arith.constant 0 : i32
    return %arg1, %c0_i32, %c0_i32_0 : i32, i32, i32
  }
  func.func @transform_3(%arg0: i32, %arg1: i32) -> (i32, i32, i32) {
    %c0_i32 = arith.constant 0 : i32
    %c0_i32_0 = arith.constant 0 : i32
    %c0_i32_1 = arith.constant 0 : i32
    return %arg1, %c0_i32, %c0_i32_0 : i32, i32, i32
  }
  func.func @transform_4(%arg0: i32, %arg1: i32) -> (i32, i32, i32) {
    %c0_i32 = arith.constant 0 : i32
    %c0_i32_0 = arith.constant 0 : i32
    %c0_i32_1 = arith.constant 0 : i32
    return %arg1, %c0_i32, %c0_i32_0 : i32, i32, i32
  }
  func.func @transform_5(%arg0: i32, %arg1: i32) -> (i32, i32, i32) {
    %c0_i32 = arith.constant 0 : i32
    %c0_i32_0 = arith.constant 0 : i32
    %c0_i32_1 = arith.constant 0 : i32
    return %arg1, %c0_i32, %c0_i32_0 : i32, i32, i32
  }
  func.func @transform_6(%arg0: i32, %arg1: i32) -> (i32, i32, i32) {
    %c0_i32 = arith.constant 0 : i32
    %c0_i32_0 = arith.constant 0 : i32
    %c0_i32_1 = arith.constant 0 : i32
    return %arg1, %c0_i32, %c0_i32_0 : i32, i32, i32
  }
  func.func @transform_7(%arg0: i32, %arg1: i32) -> (i32, i32, i32) {
    %c0_i32 = arith.constant 0 : i32
    %c0_i32_0 = arith.constant 0 : i32
    %c0_i32_1 = arith.constant 0 : i32
    return %arg1, %c0_i32, %c0_i32_0 : i32, i32, i32
  }
  func.func @transform_8(%arg0: i32, %arg1: i32) -> (i32, i32, i32) {
    %c0_i32 = arith.constant 0 : i32
    %c0_i32_0 = arith.constant 0 : i32
    %c0_i32_1 = arith.constant 0 : i32
    return %arg1, %c0_i32, %c0_i32_0 : i32, i32, i32
  }
  func.func @transform_9(%arg0: i32, %arg1: i32) -> (i32, i32, i32) {
    %c0_i32 = arith.constant 0 : i32
    %c0_i32_0 = arith.constant 0 : i32
    %c0_i32_1 = arith.constant 0 : i32
    return %arg1, %c0_i32, %c0_i32_0 : i32, i32, i32
  }
  func.func @transform_10(%arg0: i32, %arg1: i32) -> (i32, i32, i32) {
    %c0_i32 = arith.constant 0 : i32
    %c0_i32_0 = arith.constant 0 : i32
    %c0_i32_1 = arith.constant 0 : i32
    return %arg1, %c0_i32, %c0_i32_0 : i32, i32, i32
  }
  func.func @transform_11(%arg0: i32, %arg1: i32) -> (i32, i32, i32) {
    %c0_i32 = arith.constant 0 : i32
    %c0_i32_0 = arith.constant 0 : i32
    %c0_i32_1 = arith.constant 0 : i32
    return %arg1, %c0_i32, %c0_i32_0 : i32, i32, i32
  }
  func.func @transform_12(%arg0: i32, %arg1: i32) -> (i32, i32, i32) {
    %c0_i32 = arith.constant 0 : i32
    %c0_i32_0 = arith.constant 0 : i32
    %c0_i32_1 = arith.constant 0 : i32
    return %arg1, %c0_i32, %c0_i32_0 : i32, i32, i32
  }
  func.func @transform_13(%arg0: i32, %arg1: i32) -> (i32, i32, i32) {
    %c0_i32 = arith.constant 0 : i32
    %c0_i32_0 = arith.constant 0 : i32
    %c0_i32_1 = arith.constant 0 : i32
    return %arg0, %c0_i32, %c0_i32_0 : i32, i32, i32
  }
}

module attributes {stable_mosaic.version = 11 : i64} {
  func.func @head_kernel(%arg0: i32, %arg1: memref<8x64x128xf32, #tpu.memory_space<vmem>>, %arg2: memref<1x128xf32, #tpu.memory_space<vmem>>, %arg3: memref<1x128xf32, #tpu.memory_space<vmem>>, %arg4: memref<128x16xf32, #tpu.memory_space<vmem>>, %arg5: memref<1x16xf32, #tpu.memory_space<vmem>>, %arg6: memref<8x16xf32, #tpu.memory_space<vmem>>) attributes {dimension_semantics = [#tpu.dimension_semantics<parallel>], iteration_bounds = array<i64: 2>, scalar_prefetch = 0 : i64, scratch_operands = 0 : i64, tpu.core_type = #tpu.core_type<tc>, window_params = [{transform_indices = @transform_0, window_bounds = array<i64: 8, 64, 128>}, {pipeline_mode = #tpu.pipeline_mode<synchronous>, transform_indices = @transform_1, window_bounds = array<i64: 1, 128>}, {pipeline_mode = #tpu.pipeline_mode<synchronous>, transform_indices = @transform_2, window_bounds = array<i64: 1, 128>}, {pipeline_mode = #tpu.pipeline_mode<synchronous>, transform_indices = @transform_3, window_bounds = array<i64: 128, 16>}, {pipeline_mode = #tpu.pipeline_mode<synchronous>, transform_indices = @transform_4, window_bounds = array<i64: 1, 16>}, {transform_indices = @transform_5, window_bounds = array<i64: 8, 16>}]} {
    %c0 = arith.constant 0 : index
    %c0_0 = arith.constant 0 : index
    %c0_1 = arith.constant 0 : index
    %0 = vector.load %arg1[%c0, %c0_0, %c0_1] : memref<8x64x128xf32, #tpu.memory_space<vmem>>, vector<8x64x128xf32>
    %c0_2 = arith.constant 0 : index
    %c0_3 = arith.constant 0 : index
    %1 = vector.load %arg2[%c0_2, %c0_3] : memref<1x128xf32, #tpu.memory_space<vmem>>, vector<1x128xf32>
    %c0_4 = arith.constant 0 : index
    %c0_5 = arith.constant 0 : index
    %2 = vector.load %arg3[%c0_4, %c0_5] : memref<1x128xf32, #tpu.memory_space<vmem>>, vector<1x128xf32>
    %cst = arith.constant dense<0.000000e+00> : vector<8x64xf32>
    %3 = vector.multi_reduction <add>, %0, %cst [2] : vector<8x64x128xf32> to vector<8x64xf32>
    %4 = vector.shape_cast %3 : vector<8x64xf32> to vector<8x64x1xf32>
    %cst_6 = arith.constant 1.280000e+02 : f32
    %5 = vector.broadcast %cst_6 : f32 to vector<8x64x1xf32>
    %6 = arith.divf %4, %5 : vector<8x64x1xf32>
    %7 = vector.broadcast %6 : vector<8x64x1xf32> to vector<8x64x128xf32>
    %8 = arith.subf %0, %7 : vector<8x64x128xf32>
    %9 = arith.mulf %8, %8 : vector<8x64x128xf32>
    %cst_7 = arith.constant dense<0.000000e+00> : vector<8x64xf32>
    %10 = vector.multi_reduction <add>, %9, %cst_7 [2] : vector<8x64x128xf32> to vector<8x64xf32>
    %11 = vector.shape_cast %10 : vector<8x64xf32> to vector<8x64x1xf32>
    %cst_8 = arith.constant 1.280000e+02 : f32
    %12 = vector.broadcast %cst_8 : f32 to vector<8x64x1xf32>
    %13 = arith.divf %11, %12 : vector<8x64x1xf32>
    %14 = vector.broadcast %6 : vector<8x64x1xf32> to vector<8x64x128xf32>
    %15 = arith.subf %0, %14 : vector<8x64x128xf32>
    %cst_9 = arith.constant 9.99999974E-6 : f32
    %16 = vector.broadcast %cst_9 : f32 to vector<8x64x1xf32>
    %17 = arith.addf %13, %16 : vector<8x64x1xf32>
    %18 = math.rsqrt %17 : vector<8x64x1xf32>
    %19 = vector.broadcast %18 : vector<8x64x1xf32> to vector<8x64x128xf32>
    %20 = arith.mulf %15, %19 : vector<8x64x128xf32>
    %21 = vector.shape_cast %1 : vector<1x128xf32> to vector<1x1x128xf32>
    %22 = vector.broadcast %21 : vector<1x1x128xf32> to vector<8x64x128xf32>
    %23 = arith.mulf %20, %22 : vector<8x64x128xf32>
    %24 = vector.shape_cast %2 : vector<1x128xf32> to vector<1x1x128xf32>
    %25 = vector.broadcast %24 : vector<1x1x128xf32> to vector<8x64x128xf32>
    %26 = arith.addf %23, %25 : vector<8x64x128xf32>
    %cst_10 = arith.constant dense<0.000000e+00> : vector<8x128xf32>
    %27 = vector.multi_reduction <add>, %26, %cst_10 [1] : vector<8x64x128xf32> to vector<8x128xf32>
    %cst_11 = arith.constant 6.400000e+01 : f32
    %28 = vector.broadcast %cst_11 : f32 to vector<8x128xf32>
    %29 = arith.divf %27, %28 : vector<8x128xf32>
    %30 = arith.truncf %29 : vector<8x128xf32> to vector<8x128xbf16>
    %c0_12 = arith.constant 0 : index
    %c0_13 = arith.constant 0 : index
    %31 = vector.load %arg4[%c0_12, %c0_13] : memref<128x16xf32, #tpu.memory_space<vmem>>, vector<128x16xf32>
    %32 = arith.truncf %31 : vector<128x16xf32> to vector<128x16xbf16>
    %cst_14 = arith.constant dense<0.000000e+00> : vector<8x16xf32>
    %33 = tpu.matmul %30, %32, %cst_14 {dimension_numbers = #tpu.dot_dimension_numbers<[1], [0], [0], [1], [0, 0, 1, 1], [], []>} : vector<8x128xbf16>, vector<128x16xbf16>, vector<8x16xf32> -> vector<8x16xf32>
    %c0_15 = arith.constant 0 : index
    %c0_16 = arith.constant 0 : index
    %34 = vector.load %arg5[%c0_15, %c0_16] : memref<1x16xf32, #tpu.memory_space<vmem>>, vector<1x16xf32>
    %35 = vector.broadcast %34 : vector<1x16xf32> to vector<8x16xf32>
    %36 = arith.addf %33, %35 : vector<8x16xf32>
    %c0_17 = arith.constant 0 : index
    %c0_18 = arith.constant 0 : index
    %37 = vector.load %arg6[%c0_17, %c0_18] : memref<8x16xf32, #tpu.memory_space<vmem>>, vector<8x16xf32>
    tpu.vector_store %arg6[%c0_17, %c0_18], %36 {strides = array<i32>} : memref<8x16xf32, #tpu.memory_space<vmem>>, vector<8x16xf32>,
    return
  }
  func.func @transform_0(%arg0: i32) -> (i32, i32, i32) {
    %c0_i32 = arith.constant 0 : i32
    %c0_i32_0 = arith.constant 0 : i32
    %c0_i32_1 = arith.constant 0 : i32
    return %arg0, %c0_i32, %c0_i32_0 : i32, i32, i32
  }
  func.func @transform_1(%arg0: i32) -> (i32, i32) {
    %c0_i32 = arith.constant 0 : i32
    %c0_i32_0 = arith.constant 0 : i32
    %c0_i32_1 = arith.constant 0 : i32
    return %c0_i32, %c0_i32_0 : i32, i32
  }
  func.func @transform_2(%arg0: i32) -> (i32, i32) {
    %c0_i32 = arith.constant 0 : i32
    %c0_i32_0 = arith.constant 0 : i32
    %c0_i32_1 = arith.constant 0 : i32
    return %c0_i32, %c0_i32_0 : i32, i32
  }
  func.func @transform_3(%arg0: i32) -> (i32, i32) {
    %c0_i32 = arith.constant 0 : i32
    %c0_i32_0 = arith.constant 0 : i32
    %c0_i32_1 = arith.constant 0 : i32
    return %c0_i32, %c0_i32_0 : i32, i32
  }
  func.func @transform_4(%arg0: i32) -> (i32, i32) {
    %c0_i32 = arith.constant 0 : i32
    %c0_i32_0 = arith.constant 0 : i32
    %c0_i32_1 = arith.constant 0 : i32
    return %c0_i32, %c0_i32_0 : i32, i32
  }
  func.func @transform_5(%arg0: i32) -> (i32, i32) {
    %c0_i32 = arith.constant 0 : i32
    %c0_i32_0 = arith.constant 0 : i32
    return %arg0, %c0_i32 : i32, i32
  }
}

</mosaic_0001>

<llo_original>
// kernel: _lambda_.3
$region0: #{_lambda_.3}
  #allocation0 [shape = 'u32[]', space=smem, size = 0x4, offset = 0x4, fixed_abs, tag = 'smem constant byte address 0x4 - core index']
  #allocation1 [shape = 'u32[144,128]{1,0:T(1,128)}', space=vmem, size = 0x12000, scoped, tag = 'internal scratch']
  %s0 = inlined_call_operand.vmem [shape: f32[1024,48], index: 0, kind: input, shape index: {}]
  %s1 = inlined_call_operand.vmem [shape: f32[48,128], index: 1, kind: input, shape index: {}]
  %s2 = inlined_call_operand.vmem [shape: f32[1,128], index: 2, kind: input, shape index: {}]
  %s3 = inlined_call_operand.vmem [shape: f32[1024,128], index: 3, kind: output, shape index: {}]
  %s4 = sld [smem:[#allocation0]]
  $region45: #{_lambda_.3} parent=0
    _
  %s6 = ssub.s32 1, %s4
  %s7 = scalar_select 0, %s6, %s4
  loop: start=0, step=1, limit=6
  $region2: #{_lambda_.3} parent=0 // loop_pre_header
    _
  $region3: #{_lambda_.3} parent=0 // loop_header
    %s9 = sphi 0, %s13
    %p10 = scmp.ge.s32.totalorder %s9, 6
    %s16 = sphi 0, %s28
    %s17 = sphi 0, %s24
    %s18 = sphi 0, %s16
    %s19 = sphi 0, %s17
    %s20 = sphi 0, %s18
    %s21 = sphi 0, %s19
    %s31 = sphi 0, %s33
    %s34 = sphi 0, %s31
    %s35 = sphi 0, %s34
    %s51 = sphi 0, %s35
    %s57 = sphi 0, %s59
    %s60 = sphi 0, %s57
    %s61 = sphi 0, %s60
    %s77 = sphi 0, %s61
    %s83 = sphi 0, %s85
    %s86 = sphi 0, %s83
    %s87 = sphi 0, %s86
    %s103 = sphi 0, %s87
    %s111 = sphi 0, %s113
    %s114 = sphi 0, %s111
    %s115 = sphi 0, %s114
    %s131 = sphi 0, %s115
  $region4: #{_lambda_.3} parent=0 // loop_header_branch
    %12 = sbr.rel (%p10) target = $region8
  $region5: #{_lambda_.3} parent=0 // loop_body
    %s14 = ssub.s32 %s9, 1
    %s15 = ssub.s32 %s9, 2
    %s22 = sadd.s32 1, %s17
    %p23 = scmp.ge.s32.totalorder %s22, 1
    %s24 = scalar_select %p23, 0, %s22
    %s25 = sadd.s32 1, %s16
    %s26 = scalar_select %p23, %s25, %s16
    %p27 = scmp.ge.s32.totalorder %s26, 4
    %s28 = scalar_select %p27, 0, %s26
    %s29 = ssub.s32 %s16, %s28
    %p30 = scmp.eq.s32.totalorder %s29, 0
    %s32 = sadd.s32 %s31, 1
    %s33 = scalar_select %p30, %s31, %s32
    %p36 = pneg %p30
    %p37 = scmp.eq.s32.totalorder %s9, 3
    %p38 = por %p36, %p37
    %p39 = scmp.ne.s32.totalorder %s31, %s34
    %p40 = scmp.eq.s32.totalorder %s9, 0
    %p41 = por %p39, %p40
    %p42 = scmp.ne.s32.totalorder %s31, %s34
    %p43 = scmp.eq.s32.totalorder %s14, 3
    %p44 = por %p42, %p43
    %p45 = scmp.ne.s32.totalorder %s34, %s35
    %p46 = scmp.eq.s32.totalorder %s14, 0
    %p47 = por %p45, %p46
    %p48 = scmp.ne.s32.totalorder %s34, %s35
    %p49 = scmp.eq.s32.totalorder %s15, 3
    %p50 = por %p48, %p49
    %p52 = scmp.ne.s32.totalorder %s35, %s51
    %p53 = scmp.eq.s32.totalorder %s15, 0
    %p54 = por %p52, %p53
    %s55 = ssub.s32 %s17, %s24
    %p56 = scmp.eq.s32.totalorder %s55, 0
    %s58 = sadd.s32 %s57, 1
    %s59 = scalar_select %p56, %s57, %s58
    %p62 = pneg %p56
    %p63 = scmp.eq.s32.totalorder %s9, 3
    %p64 = por %p62, %p63
    %p65 = scmp.ne.s32.totalorder %s57, %s60
    %p66 = scmp.eq.s32.totalorder %s9, 0
    %p67 = por %p65, %p66
    %p68 = scmp.ne.s32.totalorder %s57, %s60
    %p69 = scmp.eq.s32.totalorder %s14, 3
    %p70 = por %p68, %p69
    %p71 = scmp.ne.s32.totalorder %s60, %s61
    %p72 = scmp.eq.s32.totalorder %s14, 0
    %p73 = por %p71, %p72
    %p74 = scmp.ne.s32.totalorder %s60, %s61
    %p75 = scmp.eq.s32.totalorder %s15, 3
    %p76 = por %p74, %p75
    %p78 = scmp.ne.s32.totalorder %s61, %s77
    %p79 = scmp.eq.s32.totalorder %s15, 0
    %p80 = por %p78, %p79
    %s81 = ssub.s32 %s17, %s24
    %p82 = scmp.eq.s32.totalorder %s81, 0
    %s84 = sadd.s32 %s83, 1
    %s85 = scalar_select %p82, %s83, %s84
    %p88 = pneg %p82
    %p89 = scmp.eq.s32.totalorder %s9, 3
    %p90 = por %p88, %p89
    %p91 = scmp.ne.s32.totalorder %s83, %s86
    %p92 = scmp.eq.s32.totalorder %s9, 0
    %p93 = por %p91, %p92
    %p94 = scmp.ne.s32.totalorder %s83, %s86
    %p95 = scmp.eq.s32.totalorder %s14, 3
    %p96 = por %p94, %p95
    %p97 = scmp.ne.s32.totalorder %s86, %s87
    %p98 = scmp.eq.s32.totalorder %s14, 0
    %p99 = por %p97, %p98
    %p100 = scmp.ne.s32.totalorder %s86, %s87
    %p101 = scmp.eq.s32.totalorder %s15, 3
    %p102 = por %p100, %p101
    %p104 = scmp.ne.s32.totalorder %s87, %s103
    %p105 = scmp.eq.s32.totalorder %s15, 0
    %p106 = por %p104, %p105
    %s107 = ssub.s32 %s16, %s28
    %s108 = ssub.s32 %s17, %s24
    %s109 = sor.u32 %s107, %s108
    %p110 = scmp.eq.s32.totalorder %s109, 0
    %s112 = sadd.s32 %s111, 1
    %s113 = scalar_select %p110, %s111, %s112
    %p116 = pneg %p110
    %p117 = scmp.eq.s32.totalorder %s9, 3
    %p118 = por %p116, %p117
    %p119 = scmp.ne.s32.totalorder %s111, %s114
    %p120 = scmp.eq.s32.totalorder %s9, 0
    %p121 = por %p119, %p120
    %p122 = scmp.ne.s32.totalorder %s111, %s114
    %p123 = scmp.eq.s32.totalorder %s14, 3
    %p124 = por %p122, %p123
    %p125 = scmp.ne.s32.totalorder %s114, %s115
    %p126 = scmp.eq.s32.totalorder %s14, 0
    %p127 = por %p125, %p126
    %p128 = scmp.ne.s32.totalorder %s114, %s115
    %p129 = scmp.eq.s32.totalorder %s15, 3
    %p130 = por %p128, %p129
    %p132 = scmp.ne.s32.totalorder %s115, %s131
    %p133 = scmp.eq.s32.totalorder %s15, 0
    %p134 = por %p132, %p133
    %p135 = scmp.le.s32.totalorder 1, %s9
    %p136 = scmp.lt.s32.totalorder %s9, 5
    %p137 = pnand %p135, %p136
    %p138 = pneg %p137
    // Predicated region
    $region9: #{_lambda_.3} parent=5 // pred_check
      _
    $region10: #{_lambda_.3} parent=5 // pred_check_branch
      %140 = sbr.rel (%p137) target = $region12
    $region11: #{_lambda_.3} parent=5 // pred_region
      %s141 = ssub.s32 %s9, 1
      // Predicated region
      $region13: #{_lambda_.3} parent=11 // pred_check
        %p142 = pneg %p73
      $region14: #{_lambda_.3} parent=11 // pred_check_branch
        %144 = sbr.rel (%p142) target = $region16
      $region15: #{_lambda_.3} parent=11 // pred_region
        %p145 = scmp.lt.s32.totalorder %s19, 0
        %s146 = scalar_select %p145, %s19, 0
        %s147 = smul.addr %s146, 8
        %s148 = scalar_lea.vmem %s1, %s147
      $region16: #{_lambda_.3} parent=11 // pred_fallthru
        _
      // Predicated region
      $region17: #{_lambda_.3} parent=11 // pred_check
        %p149 = pneg %p99
      $region18: #{_lambda_.3} parent=11 // pred_check_branch
        %151 = sbr.rel (%p149) target = $region20
      $region19: #{_lambda_.3} parent=11 // pred_region
        %p152 = scmp.lt.s32.totalorder %s19, 0
        %s153 = scalar_select %p152, %s19, 0
        %s154 = scalar_lea.vmem %s2, %s153
      $region20: #{_lambda_.3} parent=11 // pred_fallthru
        _
    $region12: #{_lambda_.3} parent=5 // pred_fallthru
      _
    %p155 = scmp.lt.s32.totalorder %s9, 4
    // Predicated region
    $region21: #{_lambda_.3} parent=5 // pred_check
      %p156 = pneg %p155
    $region22: #{_lambda_.3} parent=5 // pred_check_branch
      %158 = sbr.rel (%p156) target = $region24
    $region23: #{_lambda_.3} parent=5 // pred_region
      // Predicated region
      $region25: #{_lambda_.3} parent=23 // pred_check
        %p159 = pneg %p41
      $region26: #{_lambda_.3} parent=23 // pred_check_branch
        %161 = sbr.rel (%p159) target = $region28
      $region27: #{_lambda_.3} parent=23 // pred_region
        %s162 = smul.u32 32, %s16
        %p163 = scmp.lt.s32.totalorder %s162, 127
        %s164 = scalar_select %p163, %s162, 127
        %s165 = smul.addr %s164, 8
        %s166 = scalar_lea.vmem %s0, %s165
        %s167 = smul.u32 32, %s16
      $region28: #{_lambda_.3} parent=23 // pred_fallthru
        _
    $region24: #{_lambda_.3} parent=5 // pred_fallthru
      _
    %p168 = scmp.le.s32.totalorder 1, %s9
    %p169 = scmp.lt.s32.totalorder %s9, 5
    %p170 = pnand %p168, %p169
    %p171 = pneg %p170
    // Predicated region
    $region29: #{_lambda_.3} parent=5 // pred_check
      _
    $region30: #{_lambda_.3} parent=5 // pred_check_branch
      %173 = sbr.rel (%p170) target = $region32
    $region31: #{_lambda_.3} parent=5 // pred_region
      %s174 = ssub.s32 %s9, 1
      %s175 = smul.u32 32, %s18
      %p176 = scmp.lt.s32.totalorder %s175, 127
      %s177 = scalar_select %p176, %s175, 127
      %s178 = smul.addr %s177, 8
      %s179 = scalar_lea.vmem %s0, %s178
      %p180 = pneg %p47
      %p181 = pneg %p44
      %p182 = scmp.lt.s32.totalorder %s19, 0
      %s183 = scalar_select %p182, %s19, 0
      %s184 = smul.addr %s183, 8
      %s185 = scalar_lea.vmem %s1, %s184
      %p186 = pneg %p73
      %p187 = pneg %p70
      %p188 = scmp.lt.s32.totalorder %s19, 0
      %s189 = scalar_select %p188, %s19, 0
      %s190 = scalar_lea.vmem %s2, %s189
      %p191 = pneg %p99
      %p192 = pneg %p96
      %p193 = pneg %p127
      %p194 = pneg %p124
      %s195 = smul.u32 32, %s18
      %p196 = scmp.lt.s32.totalorder %s195, 127
      %s197 = scalar_select %p196, %s195, 127
      %p198 = scmp.lt.s32.totalorder %s19, 0
      %s199 = scalar_select %p198, %s19, 0
      %s200 = sadd.s32 %s199, %s197
      %s201 = smul.addr %s200, 8
      %s202 = scalar_lea.vmem %s3, %s201
      %s203 = smul.u32 32, %s18
      %p204 = scmp.lt.s32.totalorder %s203, 127
      %s205 = scalar_select %p204, %s203, 127
      %s206 = smul.addr %s205, 8
      %s207 = scalar_lea.vmem %s0, %s206
      %s208 = smul.u32 32, %s18
      %p209 = scmp.lt.s32.totalorder %s19, 0
      %s210 = scalar_select %p209, %s19, 0
      %s211 = smul.addr %s210, 8
      %s212 = scalar_lea.vmem %s1, %s211
      %p213 = scmp.lt.s32.totalorder %s19, 0
      %s214 = scalar_select %p213, %s19, 0
      %s215 = scalar_lea.vmem %s2, %s214
      %s216 = smul.u32 32, %s18
      %p217 = scmp.lt.s32.totalorder %s216, 127
      %s218 = scalar_select %p217, %s216, 127
      %p219 = scmp.lt.s32.totalorder %s19, 0
      %s220 = scalar_select %p219, %s19, 0
      %s221 = sadd.s32 %s220, %s218
      %s222 = smul.addr %s221, 8
      %s223 = scalar_lea.vmem %s3, %s222
      %s224 = smul.u32 32, %s18
      %v226 = vld [vmem:[%s207] sm:$0xff]
      %v227 = vld [vmem:[%s207 + $0x8] sm:$0xff]
      %v228 = vld [vmem:[%s207 + $0x10] sm:$0xff]
      %v229 = vld [vmem:[%s207 + $0x18] sm:$0xff]
      %v230 = vld [vmem:[%s207 + $0x20] sm:$0xff]
      %v231 = vld [vmem:[%s207 + $0x28] sm:$0xff]
      %v232 = vld [vmem:[%s207 + $0x30] sm:$0xff]
      %v233 = vld [vmem:[%s207 + $0x38] sm:$0xff]
      %v234 = vld [vmem:[%s207 + $0x40] sm:$0xff]
      %v235 = vld [vmem:[%s207 + $0x48] sm:$0xff]
      %v236 = vld [vmem:[%s207 + $0x50] sm:$0xff]
      %v237 = vld [vmem:[%s207 + $0x58] sm:$0xff]
      %v238 = vld [vmem:[%s207 + $0x60] sm:$0xff]
      %v239 = vld [vmem:[%s207 + $0x68] sm:$0xff]
      %v240 = vld [vmem:[%s207 + $0x70] sm:$0xff]
      %v241 = vld [vmem:[%s207 + $0x78] sm:$0xff]
      %v242 = vld [vmem:[%s207 + $0x80] sm:$0xff]
      %v243 = vld [vmem:[%s207 + $0x88] sm:$0xff]
      %v244 = vld [vmem:[%s207 + $0x90] sm:$0xff]
      %v245 = vld [vmem:[%s207 + $0x98] sm:$0xff]
      %v246 = vld [vmem:[%s207 + $0xa0] sm:$0xff]
      %v247 = vld [vmem:[%s207 + $0xa8] sm:$0xff]
      %v248 = vld [vmem:[%s207 + $0xb0] sm:$0xff]
      %v249 = vld [vmem:[%s207 + $0xb8] sm:$0xff]
      %v250 = vld [vmem:[%s207 + $0xc0] sm:$0xff]
      %v251 = vld [vmem:[%s207 + $0xc8] sm:$0xff]
      %v252 = vld [vmem:[%s207 + $0xd0] sm:$0xff]
      %v253 = vld [vmem:[%s207 + $0xd8] sm:$0xff]
      %v254 = vld [vmem:[%s207 + $0xe0] sm:$0xff]
      %v255 = vld [vmem:[%s207 + $0xe8] sm:$0xff]
      %v256 = vld [vmem:[%s207 + $0xf0] sm:$0xff]
      %v257 = vld [vmem:[%s207 + $0xf8] sm:$0xff]
      %v258 = vpack.c.bf16 %v227, %v226
      %v259 = vpack.c.bf16 %v229, %v228
      %v260 = vpack.c.bf16 %v231, %v230
      %v261 = vpack.c.bf16 %v233, %v232
      %v262 = vpack.c.bf16 %v235, %v234
      %v263 = vpack.c.bf16 %v237, %v236
      %v264 = vpack.c.bf16 %v239, %v238
      %v265 = vpack.c.bf16 %v241, %v240
      %v266 = vpack.c.bf16 %v243, %v242
      %v267 = vpack.c.bf16 %v245, %v244
      %v268 = vpack.c.bf16 %v247, %v246
      %v269 = vpack.c.bf16 %v249, %v248
      %v270 = vpack.c.bf16 %v251, %v250
      %v271 = vpack.c.bf16 %v253, %v252
      %v272 = vpack.c.bf16 %v255, %v254
      %v273 = vpack.c.bf16 %v257, %v256
      %v274 = vld [vmem:[%s212] sm:$0xff]
      %v275 = vld [vmem:[%s212 + $0x8] sm:$0xff]
      %v276 = vld [vmem:[%s212 + $0x10] sm:$0xff]
      %v277 = vld [vmem:[%s212 + $0x18] sm:$0xff]
      %v278 = vld [vmem:[%s212 + $0x20] sm:$0xff]
      %v279 = vld [vmem:[%s212 + $0x28] sm:$0xff]
      %v280 = vpack.c.bf16 %v275, %v274
      %v281 = vpack.c.bf16 %v277, %v276
      %v282 = vpack.c.bf16 %v279, %v278
      %v283 = vld [vmem:[%s215] sm:$0x1]
      %v285 = vlaneseq
      %v286 = vshrl.u32 %v285, 7
      %v287 = vsub.s32 0, %v286
      %v288 = vrot.slane %v283, %v287
      %vm290 = vcmask 392192
      %v292 = vsel %vm290, %v258, 0
      %v295 = vsel %vm290, %v259, 0
      %v298 = vsel %vm290, %v260, 0
      %v301 = vsel %vm290, %v261, 0
      %v304 = vsel %vm290, %v262, 0
      %v307 = vsel %vm290, %v263, 0
      %v310 = vsel %vm290, %v264, 0
      %v313 = vsel %vm290, %v265, 0
      %v316 = vsel %vm290, %v266, 0
      %v319 = vsel %vm290, %v267, 0
      %v322 = vsel %vm290, %v268, 0
      %v325 = vsel %vm290, %v269, 0
      %v328 = vsel %vm290, %v270, 0
      %v331 = vsel %vm290, %v271, 0
      %v334 = vsel %vm290, %v272, 0
      %v337 = vsel %vm290, %v273, 0
      %339 = vmatprep.subr.bf16.mxu0 0
      %340 = vmatpush1.bf16.msra.mxu0 %v280
      %341 = vmatprep.subr.bf16.mxu0 0
      %342 = vmatpush1.bf16.msra.mxu0 %v281
      %343 = vmatprep.subr.bf16.mxu0 0
      %344 = vmatpush1.bf16.msra.mxu0 %v282
      %345 = vmatprep.subr.bf16.mxu0 0
      %346 = vmatpush1.bf16.msra.mxu0 0
      %347 = vmatprep.subr.bf16.mxu0 0
      %348 = vmatpush1.bf16.msra.mxu0 0
      %349 = vmatprep.subr.bf16.mxu0 0
      %350 = vmatpush1.bf16.msra.mxu0 0
      %351 = vmatprep.subr.bf16.mxu0 0
      %352 = vmatpush1.bf16.msra.mxu0 0
      %353 = vmatprep.subr.bf16.mxu0 0
      %354 = vmatpush1.bf16.msra.mxu0 0
      %355 = vmatprep.subr.bf16.mxu0 0
      %356 = vmatpush1.bf16.msra.mxu0 0
      %357 = vmatprep.subr.bf16.mxu0 0
      %358 = vmatpush1.bf16.msra.mxu0 0
      %359 = vmatprep.subr.bf16.mxu0 0
      %360 = vmatpush1.bf16.msra.mxu0 0
      %361 = vmatprep.subr.bf16.mxu0 0
      %362 = vmatpush1.bf16.msra.mxu0 0
      %363 = vmatprep.subr.bf16.mxu0 0
      %364 = vmatpush1.bf16.msra.mxu0 0
      %365 = vmatprep.subr.bf16.mxu0 0
      %366 = vmatpush1.bf16.msra.mxu0 0
      %367 = vmatprep.subr.bf16.mxu0 0
      %368 = vmatpush1.bf16.msra.mxu0 0
      %369 = vmatprep.subr.bf16.mxu0 0
      %370 = vmatpush1.bf16.msra.mxu0 0
      %371 = vmatprep.mubr.bf16.mxu0 0
      %372 = vmatmul.mubr.bf16.gmra.mrb[0].mxu0 %v292
      %v373 = vpop.f32.mrb[0].mxu0
      %v374 = vadd.f32 %v288, %v373
      %v375 = vpop.f32.mrb[0].mxu0
      %v376 = vpop.f32.mrb[0].mxu0
      %v377 = vadd.f32 %v288, %v376
      %v378 = vpop.f32.mrb[0].mxu0
      %379 = vmatprep.mubr.bf16.mxu0 0
      %380 = vmatmul.mubr.bf16.gmra.mrb[0].mxu0 %v295
      %v381 = vpop.f32.mrb[0].mxu0
      %v382 = vadd.f32 %v288, %v381
      %v383 = vpop.f32.mrb[0].mxu0
      %v384 = vpop.f32.mrb[0].mxu0
      %v385 = vadd.f32 %v288, %v384
      %v386 = vpop.f32.mrb[0].mxu0
      %387 = vmatprep.mubr.bf16.mxu0 0
      %388 = vmatmul.mubr.bf16.gmra.mrb[0].mxu0 %v298
      %v389 = vpop.f32.mrb[0].mxu0
      %v390 = vadd.f32 %v288, %v389
      %v391 = vpop.f32.mrb[0].mxu0
      %v392 = vpop.f32.mrb[0].mxu0
      %v393 = vadd.f32 %v288, %v392
      %v394 = vpop.f32.mrb[0].mxu0
      %395 = vmatprep.mubr.bf16.mxu0 0
      %396 = vmatmul.mubr.bf16.gmra.mrb[0].mxu0 %v301
      %v397 = vpop.f32.mrb[0].mxu0
      %v398 = vadd.f32 %v288, %v397
      %v399 = vpop.f32.mrb[0].mxu0
      %v400 = vpop.f32.mrb[0].mxu0
      %v401 = vadd.f32 %v288, %v400
      %v402 = vpop.f32.mrb[0].mxu0
      %403 = vmatprep.mubr.bf16.mxu0 0
      %404 = vmatmul.mubr.bf16.gmra.mrb[0].mxu0 %v304
      %v405 = vpop.f32.mrb[0].mxu0
      %v406 = vadd.f32 %v288, %v405
      %v407 = vpop.f32.mrb[0].mxu0
      %v408 = vpop.f32.mrb[0].mxu0
      %v409 = vadd.f32 %v288, %v408
      %v410 = vpop.f32.mrb[0].mxu0
      %411 = vmatprep.mubr.bf16.mxu0 0
      %412 = vmatmul.mubr.bf16.gmra.mrb[0].mxu0 %v307
      %v413 = vpop.f32.mrb[0].mxu0
      %v414 = vadd.f32 %v288, %v413
      %v415 = vpop.f32.mrb[0].mxu0
      %v416 = vpop.f32.mrb[0].mxu0
      %v417 = vadd.f32 %v288, %v416
      %v418 = vpop.f32.mrb[0].mxu0
      %419 = vmatprep.mubr.bf16.mxu0 0
      %420 = vmatmul.mubr.bf16.gmra.mrb[0].mxu0 %v310
      %v421 = vpop.f32.mrb[0].mxu0
      %v422 = vadd.f32 %v288, %v421
      %v423 = vpop.f32.mrb[0].mxu0
      %v424 = vpop.f32.mrb[0].mxu0
      %v425 = vadd.f32 %v288, %v424
      %v426 = vpop.f32.mrb[0].mxu0
      %427 = vmatprep.mubr.bf16.mxu0 0
      %428 = vmatmul.mubr.bf16.gmra.mrb[0].mxu0 %v313
      %v429 = vpop.f32.mrb[0].mxu0
      %v430 = vadd.f32 %v288, %v429
      %v431 = vpop.f32.mrb[0].mxu0
      %v432 = vpop.f32.mrb[0].mxu0
      %v433 = vadd.f32 %v288, %v432
      %v434 = vpop.f32.mrb[0].mxu0
      %435 = vmatprep.mubr.bf16.mxu0 0
      %436 = vmatmul.mubr.bf16.gmra.mrb[0].mxu0 %v316
      %v437 = vpop.f32.mrb[0].mxu0
      %v438 = vadd.f32 %v288, %v437
      %v439 = vpop.f32.mrb[0].mxu0
      %v440 = vpop.f32.mrb[0].mxu0
      %v441 = vadd.f32 %v288, %v440
      %v442 = vpop.f32.mrb[0].mxu0
      %443 = vmatprep.mubr.bf16.mxu0 0
      %444 = vmatmul.mubr.bf16.gmra.mrb[0].mxu0 %v319
      %v445 = vpop.f32.mrb[0].mxu0
      %v446 = vadd.f32 %v288, %v445
      %v447 = vpop.f32.mrb[0].mxu0
      %v448 = vpop.f32.mrb[0].mxu0
      %v449 = vadd.f32 %v288, %v448
      %v450 = vpop.f32.mrb[0].mxu0
      %451 = vmatprep.mubr.bf16.mxu0 0
      %452 = vmatmul.mubr.bf16.gmra.mrb[0].mxu0 %v322
      %v453 = vpop.f32.mrb[0].mxu0
      %v454 = vadd.f32 %v288, %v453
      %v455 = vpop.f32.mrb[0].mxu0
      %v456 = vpop.f32.mrb[0].mxu0
      %v457 = vadd.f32 %v288, %v456
      %v458 = vpop.f32.mrb[0].mxu0
      %459 = vmatprep.mubr.bf16.mxu0 0
      %460 = vmatmul.mubr.bf16.gmra.mrb[0].mxu0 %v325
      %v461 = vpop.f32.mrb[0].mxu0
      %v462 = vadd.f32 %v288, %v461
      %v463 = vpop.f32.mrb[0].mxu0
      %v464 = vpop.f32.mrb[0].mxu0
      %v465 = vadd.f32 %v288, %v464
      %v466 = vpop.f32.mrb[0].mxu0
      %467 = vmatprep.mubr.bf16.mxu0 0
      %468 = vmatmul.mubr.bf16.gmra.mrb[0].mxu0 %v328
      %v469 = vpop.f32.mrb[0].mxu0
      %v470 = vadd.f32 %v288, %v469
      %v471 = vpop.f32.mrb[0].mxu0
      %v472 = vpop.f32.mrb[0].mxu0
      %v473 = vadd.f32 %v288, %v472
      %v474 = vpop.f32.mrb[0].mxu0
      %475 = vmatprep.mubr.bf16.mxu0 0
      %476 = vmatmul.mubr.bf16.gmra.mrb[0].mxu0 %v331
      %v477 = vpop.f32.mrb[0].mxu0
      %v478 = vadd.f32 %v288, %v477
      %v479 = vpop.f32.mrb[0].mxu0
      %v480 = vpop.f32.mrb[0].mxu0
      %v481 = vadd.f32 %v288, %v480
      %v482 = vpop.f32.mrb[0].mxu0
      %483 = vmatprep.mubr.bf16.mxu0 0
      %484 = vmatmul.mubr.bf16.gmra.mrb[0].mxu0 %v334
      %v485 = vpop.f32.mrb[0].mxu0
      %v486 = vadd.f32 %v288, %v485
      %v487 = vpop.f32.mrb[0].mxu0
      %v488 = vpop.f32.mrb[0].mxu0
      %v489 = vadd.f32 %v288, %v488
      %v490 = vpop.f32.mrb[0].mxu0
      %491 = vmatprep.mubr.bf16.mxu0 0
      %492 = vmatmul.mubr.bf16.gmra.mrb[0].mxu0 %v337
      %v493 = vpop.f32.mrb[0].mxu0
      %v494 = vadd.f32 %v288, %v493
      %v495 = vpop.f32.mrb[0].mxu0
      %v496 = vpop.f32.mrb[0].mxu0
      %v497 = vadd.f32 %v288, %v496
      %v498 = vpop.f32.mrb[0].mxu0
      %499 = vdwg.mxu0
      %500 = vst [vmem:[%s223] sm:$0xff] %v374
      %501 = vst [vmem:[%s223 + $0x8] sm:$0xff] %v377
      %502 = vst [vmem:[%s223 + $0x10] sm:$0xff] %v382
      %503 = vst [vmem:[%s223 + $0x18] sm:$0xff] %v385
      %504 = vst [vmem:[%s223 + $0x20] sm:$0xff] %v390
      %505 = vst [vmem:[%s223 + $0x28] sm:$0xff] %v393
      %506 = vst [vmem:[%s223 + $0x30] sm:$0xff] %v398
      %507 = vst [vmem:[%s223 + $0x38] sm:$0xff] %v401
      %508 = vst [vmem:[%s223 + $0x40] sm:$0xff] %v406
      %509 = vst [vmem:[%s223 + $0x48] sm:$0xff] %v409
      %510 = vst [vmem:[%s223 + $0x50] sm:$0xff] %v414
      %511 = vst [vmem:[%s223 + $0x58] sm:$0xff] %v417
      %512 = vst [vmem:[%s223 + $0x60] sm:$0xff] %v422
      %513 = vst [vmem:[%s223 + $0x68] sm:$0xff] %v425
      %514 = vst [vmem:[%s223 + $0x70] sm:$0xff] %v430
      %515 = vst [vmem:[%s223 + $0x78] sm:$0xff] %v433
      %516 = vst [vmem:[%s223 + $0x80] sm:$0xff] %v438
      %517 = vst [vmem:[%s223 + $0x88] sm:$0xff] %v441
      %518 = vst [vmem:[%s223 + $0x90] sm:$0xff] %v446
      %519 = vst [vmem:[%s223 + $0x98] sm:$0xff] %v449
      %520 = vst [vmem:[%s223 + $0xa0] sm:$0xff] %v454
      %521 = vst [vmem:[%s223 + $0xa8] sm:$0xff] %v457
      %522 = vst [vmem:[%s223 + $0xb0] sm:$0xff] %v462
      %523 = vst [vmem:[%s223 + $0xb8] sm:$0xff] %v465
      %524 = vst [vmem:[%s223 + $0xc0] sm:$0xff] %v470
      %525 = vst [vmem:[%s223 + $0xc8] sm:$0xff] %v473
      %526 = vst [vmem:[%s223 + $0xd0] sm:$0xff] %v478
      %527 = vst [vmem:[%s223 + $0xd8] sm:$0xff] %v481
      %528 = vst [vmem:[%s223 + $0xe0] sm:$0xff] %v486
      %529 = vst [vmem:[%s223 + $0xe8] sm:$0xff] %v489
      %530 = vst [vmem:[%s223 + $0xf0] sm:$0xff] %v494
      %531 = vst [vmem:[%s223 + $0xf8] sm:$0xff] %v497
      %s532 = smul.u32 32, %s18
      %p533 = scmp.lt.s32.totalorder %s532, 127
      %s534 = scalar_select %p533, %s532, 127
      %p535 = scmp.lt.s32.totalorder %s19, 0
      %s536 = scalar_select %p535, %s19, 0
      %s537 = sadd.s32 %s536, %s534
      %s538 = smul.addr %s537, 8
      %s539 = scalar_lea.vmem %s3, %s538
      // Predicated region
      $region33: #{_lambda_.3} parent=31 // pred_check
        %p540 = pneg %p124
      $region34: #{_lambda_.3} parent=31 // pred_check_branch
        %542 = sbr.rel (%p540) target = $region36
      $region35: #{_lambda_.3} parent=31 // pred_region
        %s543 = smul.u32 32, %s18
      $region36: #{_lambda_.3} parent=31 // pred_fallthru
        _
    $region32: #{_lambda_.3} parent=5 // pred_fallthru
      _
    %p544 = scmp.le.s32.totalorder 2, %s9
    // Predicated region
    $region37: #{_lambda_.3} parent=5 // pred_check
      %p545 = pneg %p544
    $region38: #{_lambda_.3} parent=5 // pred_check_branch
      %547 = sbr.rel (%p545) target = $region40
    $region39: #{_lambda_.3} parent=5 // pred_region
      %s548 = ssub.s32 %s9, 2
      // Predicated region
      $region41: #{_lambda_.3} parent=39 // pred_check
        %p549 = pneg %p130
      $region42: #{_lambda_.3} parent=39 // pred_check_branch
        %551 = sbr.rel (%p549) target = $region44
      $region43: #{_lambda_.3} parent=39 // pred_region
        %s552 = smul.u32 32, %s20
        %p553 = scmp.lt.s32.totalorder %s552, 127
        %s554 = scalar_select %p553, %s552, 127
        %p555 = scmp.lt.s32.totalorder %s21, 0
        %s556 = scalar_select %p555, %s21, 0
        %s557 = sadd.s32 %s556, %s554
        %s558 = smul.addr %s557, 8
        %s559 = scalar_lea.vmem %s3, %s558
      $region44: #{_lambda_.3} parent=39 // pred_fallthru
        _
    $region40: #{_lambda_.3} parent=5 // pred_fallthru
      _
  $region6: #{_lambda_.3} parent=0 // loop_footer
    %s13 = sadd.s32 1, %s9
  $region7: #{_lambda_.3} parent=0 // loop_footer_branch
    %8 = sbr.rel target = $region3
  $region8: #{_lambda_.3} parent=0 // loop_exit
    _

// kernel: _lambda_.5
$region0: #{_lambda_.5}
  #allocation0 [shape = 'u32[]', space=smem, size = 0x4, offset = 0x4, fixed_abs, tag = 'smem constant byte address 0x4 - core index']
  #allocation1 [shape = 'u32[144,128]{1,0:T(1,128)}', space=vmem, size = 0x12000, scoped, tag = 'internal scratch']
  %s0 = inlined_call_operand.vmem [shape: f32[16,64,128], index: 0, kind: input, shape index: {}]
  %s1 = inlined_call_operand.vmem [shape: f32[1,128], index: 1, kind: input, shape index: {}]
  %s2 = inlined_call_operand.vmem [shape: f32[1,128], index: 2, kind: input, shape index: {}]
  %s3 = inlined_call_operand.vmem [shape: f32[128,16], index: 3, kind: input, shape index: {}]
  %s4 = inlined_call_operand.vmem [shape: f32[1,16], index: 4, kind: input, shape index: {}]
  %s5 = inlined_call_operand.hbm [shape: f32[16,16], index: 5, kind: output, shape index: {}]
  %s6 = sld [smem:[#allocation0]]
  $region53: #{_lambda_.5} parent=0
    _
  %s8 = ssub.s32 1, %s6
  %s9 = scalar_select 0, %s8, %s6
  $region1: #{_lambda_.5} parent=0
    #allocation2 [shape = 'u8[8192]{0}', space=vmem, size = 0x2000, scoped, tag = 'output window, operand 0']
    #allocation3 [shape = 's32[2]{0}', space=sflag, size = 0x8, scoped, tag = 'scoped memory for _lambda_.5']
    %10 = vsyncpa [#allocation3], 0
    %s11 = scalar_lea.sflag [#allocation3], 1
    %12 = vsyncpa %s11, 0
    loop: start=0, step=1, limit=4
    $region2: #{_lambda_.5} parent=1 // loop_pre_header
      _
    $region3: #{_lambda_.5} parent=1 // loop_header
      %s14 = sphi 0, %s18
      %p15 = scmp.ge.s32.totalorder %s14, 4
      %s24 = sphi 0, %s26
      %s27 = sphi 0, %s24
      %s28 = sphi 0, %s27
      %s44 = sphi 0, %s28
      %s48 = sphi 0, %s48
      %s50 = sphi 0, %s48
      %s51 = sphi 0, %s50
      %s65 = sphi 0, %s51
      %s69 = sphi 0, %s69
      %s71 = sphi 0, %s69
      %s72 = sphi 0, %s71
      %s86 = sphi 0, %s72
      %s90 = sphi 0, %s90
      %s92 = sphi 0, %s90
      %s93 = sphi 0, %s92
      %s107 = sphi 0, %s93
      %s111 = sphi 0, %s111
      %s113 = sphi 0, %s111
      %s114 = sphi 0, %s113
      %s128 = sphi 0, %s114
      %s134 = sphi 0, %s136
      %s137 = sphi 0, %s134
      %s138 = sphi 0, %s137
      %s154 = sphi 0, %s138
    $region4: #{_lambda_.5} parent=1 // loop_header_branch
      %17 = sbr.rel (%p15) target = $region8
    $region5: #{_lambda_.5} parent=1 // loop_body
      %s19 = ssub.s32 %s14, 1
      %s20 = ssub.s32 %s14, 2
      %s21 = sadd.s32 %s14, 1
      %s22 = ssub.s32 %s14, %s21
      %p23 = scmp.eq.s32.totalorder %s22, 0
      %s25 = sadd.s32 %s24, 1
      %s26 = scalar_select %p23, %s24, %s25
      %p29 = pneg %p23
      %p30 = scmp.eq.s32.totalorder %s14, 1
      %p31 = por %p29, %p30
      %p32 = scmp.ne.s32.totalorder %s24, %s27
      %p33 = scmp.eq.s32.totalorder %s14, 0
      %p34 = por %p32, %p33
      %p35 = scmp.ne.s32.totalorder %s24, %s27
      %p36 = scmp.eq.s32.totalorder %s19, 1
      %p37 = por %p35, %p36
      %p38 = scmp.ne.s32.totalorder %s27, %s28
      %p39 = scmp.eq.s32.totalorder %s19, 0
      %p40 = por %p38, %p39
      %p41 = scmp.ne.s32.totalorder %s27, %s28
      %p42 = scmp.eq.s32.totalorder %s20, 1
      %p43 = por %p41, %p42
      %p45 = scmp.ne.s32.totalorder %s28, %s44
      %p46 = scmp.eq.s32.totalorder %s20, 0
      %p47 = por %p45, %p46
      %s49 = sadd.s32 %s48, 1
      %p52 = scmp.eq.s32.totalorder %s14, 1
      %p53 = scmp.ne.s32.totalorder %s48, %s50
      %p54 = scmp.eq.s32.totalorder %s14, 0
      %p55 = por %p53, %p54
      %p56 = scmp.ne.s32.totalorder %s48, %s50
      %p57 = scmp.eq.s32.totalorder %s19, 1
      %p58 = por %p56, %p57
      %p59 = scmp.ne.s32.totalorder %s50, %s51
      %p60 = scmp.eq.s32.totalorder %s19, 0
      %p61 = por %p59, %p60
      %p62 = scmp.ne.s32.totalorder %s50, %s51
      %p63 = scmp.eq.s32.totalorder %s20, 1
      %p64 = por %p62, %p63
      %p66 = scmp.ne.s32.totalorder %s51, %s65
      %p67 = scmp.eq.s32.totalorder %s20, 0
      %p68 = por %p66, %p67
      %s70 = sadd.s32 %s69, 1
      %p73 = scmp.eq.s32.totalorder %s14, 1
      %p74 = scmp.ne.s32.totalorder %s69, %s71
      %p75 = scmp.eq.s32.totalorder %s14, 0
      %p76 = por %p74, %p75
      %p77 = scmp.ne.s32.totalorder %s69, %s71
      %p78 = scmp.eq.s32.totalorder %s19, 1
      %p79 = por %p77, %p78
      %p80 = scmp.ne.s32.totalorder %s71, %s72
      %p81 = scmp.eq.s32.totalorder %s19, 0
      %p82 = por %p80, %p81
      %p83 = scmp.ne.s32.totalorder %s71, %s72
      %p84 = scmp.eq.s32.totalorder %s20, 1
      %p85 = por %p83, %p84
      %p87 = scmp.ne.s32.totalorder %s72, %s86
      %p88 = scmp.eq.s32.totalorder %s20, 0
      %p89 = por %p87, %p88
      %s91 = sadd.s32 %s90, 1
      %p94 = scmp.eq.s32.totalorder %s14, 1
      %p95 = scmp.ne.s32.totalorder %s90, %s92
      %p96 = scmp.eq.s32.totalorder %s14, 0
      %p97 = por %p95, %p96
      %p98 = scmp.ne.s32.totalorder %s90, %s92
      %p99 = scmp.eq.s32.totalorder %s19, 1
      %p100 = por %p98, %p99
      %p101 = scmp.ne.s32.totalorder %s92, %s93
      %p102 = scmp.eq.s32.totalorder %s19, 0
      %p103 = por %p101, %p102
      %p104 = scmp.ne.s32.totalorder %s92, %s93
      %p105 = scmp.eq.s32.totalorder %s20, 1
      %p106 = por %p104, %p105
      %p108 = scmp.ne.s32.totalorder %s93, %s107
      %p109 = scmp.eq.s32.totalorder %s20, 0
      %p110 = por %p108, %p109
      %s112 = sadd.s32 %s111, 1
      %p115 = scmp.eq.s32.totalorder %s14, 1
      %p116 = scmp.ne.s32.totalorder %s111, %s113
      %p117 = scmp.eq.s32.totalorder %s14, 0
      %p118 = por %p116, %p117
      %p119 = scmp.ne.s32.totalorder %s111, %s113
      %p120 = scmp.eq.s32.totalorder %s19, 1
      %p121 = por %p119, %p120
      %p122 = scmp.ne.s32.totalorder %s113, %s114
      %p123 = scmp.eq.s32.totalorder %s19, 0
      %p124 = por %p122, %p123
      %p125 = scmp.ne.s32.totalorder %s113, %s114
      %p126 = scmp.eq.s32.totalorder %s20, 1
      %p127 = por %p125, %p126
      %p129 = scmp.ne.s32.totalorder %s114, %s128
      %p130 = scmp.eq.s32.totalorder %s20, 0
      %p131 = por %p129, %p130
      %s132 = ssub.s32 %s14, %s21
      %p133 = scmp.eq.s32.totalorder %s132, 0
      %s135 = sadd.s32 %s134, 1
      %s136 = scalar_select %p133, %s134, %s135
      %p139 = pneg %p133
      %p140 = scmp.eq.s32.totalorder %s14, 1
      %p141 = por %p139, %p140
      %p142 = scmp.ne.s32.totalorder %s134, %s137
      %p143 = scmp.eq.s32.totalorder %s14, 0
      %p144 = por %p142, %p143
      %p145 = scmp.ne.s32.totalorder %s134, %s137
      %p146 = scmp.eq.s32.totalorder %s19, 1
      %p147 = por %p145, %p146
      %p148 = scmp.ne.s32.totalorder %s137, %s138
      %p149 = scmp.eq.s32.totalorder %s19, 0
      %p150 = por %p148, %p149
      %p151 = scmp.ne.s32.totalorder %s137, %s138
      %p152 = scmp.eq.s32.totalorder %s20, 1
      %p153 = por %p151, %p152
      %p155 = scmp.ne.s32.totalorder %s138, %s154
      %p156 = scmp.eq.s32.totalorder %s20, 0
      %p157 = por %p155, %p156
      %p158 = scmp.le.s32.totalorder 1, %s14
      %p159 = scmp.lt.s32.totalorder %s14, 3
      %p160 = pnand %p158, %p159
      %p161 = pneg %p160
      // Predicated region
      $region9: #{_lambda_.5} parent=5 // pred_check
        _
      $region10: #{_lambda_.5} parent=5 // pred_check_branch
        %163 = sbr.rel (%p160) target = $region12
      $region11: #{_lambda_.5} parent=5 // pred_region
        %s164 = ssub.s32 %s14, 1
        // Predicated region
        $region13: #{_lambda_.5} parent=11 // pred_check
          %p165 = pneg %p61
        $region14: #{_lambda_.5} parent=11 // pred_check_branch
          %167 = sbr.rel (%p165) target = $region16
        $region15: #{_lambda_.5} parent=11 // pred_region
          _
        $region16: #{_lambda_.5} parent=11 // pred_fallthru
          _
        // Predicated region
        $region17: #{_lambda_.5} parent=11 // pred_check
          %p168 = pneg %p82
        $region18: #{_lambda_.5} parent=11 // pred_check_branch
          %170 = sbr.rel (%p168) target = $region20
        $region19: #{_lambda_.5} parent=11 // pred_region
          _
        $region20: #{_lambda_.5} parent=11 // pred_fallthru
          _
        // Predicated region
        $region21: #{_lambda_.5} parent=11 // pred_check
          %p171 = pneg %p103
        $region22: #{_lambda_.5} parent=11 // pred_check_branch
          %173 = sbr.rel (%p171) target = $region24
        $region23: #{_lambda_.5} parent=11 // pred_region
          _
        $region24: #{_lambda_.5} parent=11 // pred_fallthru
          _
        // Predicated region
        $region25: #{_lambda_.5} parent=11 // pred_check
          %p174 = pneg %p124
        $region26: #{_lambda_.5} parent=11 // pred_check_branch
          %176 = sbr.rel (%p174) target = $region28
        $region27: #{_lambda_.5} parent=11 // pred_region
          _
        $region28: #{_lambda_.5} parent=11 // pred_fallthru
          _
      $region12: #{_lambda_.5} parent=5 // pred_fallthru
        _
      %p177 = scmp.lt.s32.totalorder %s14, 2
      // Predicated region
      $region29: #{_lambda_.5} parent=5 // pred_check
        %p178 = pneg %p177
      $region30: #{_lambda_.5} parent=5 // pred_check_branch
        %180 = sbr.rel (%p178) target = $region32
      $region31: #{_lambda_.5} parent=5 // pred_region
        // Predicated region
        $region33: #{_lambda_.5} parent=31 // pred_check
          %p181 = pneg %p34
        $region34: #{_lambda_.5} parent=31 // pred_check_branch
          %183 = sbr.rel (%p181) target = $region36
        $region35: #{_lambda_.5} parent=31 // pred_region
          %s184 = smul.u32 8, %s14
          %p185 = scmp.lt.s32.totalorder %s184, 15
          %s186 = scalar_select %p185, %s184, 15
          %s187 = smul.addr %s186, 8
          %s188 = smul.addr %s187, 8
          %s189 = scalar_lea.vmem %s0, %s188
          %s190 = smul.u32 8, %s14
        $region36: #{_lambda_.5} parent=31 // pred_fallthru
          _
      $region32: #{_lambda_.5} parent=5 // pred_fallthru
        _
      %p191 = scmp.le.s32.totalorder 1, %s14
      %p192 = scmp.lt.s32.totalorder %s14, 3
      %p193 = pnand %p191, %p192
      %p194 = pneg %p193
      // Predicated region
      $region37: #{_lambda_.5} parent=5 // pred_check
        _
      $region38: #{_lambda_.5} parent=5 // pred_check_branch
        %196 = sbr.rel (%p193) target = $region40
      $region39: #{_lambda_.5} parent=5 // pred_region
        %s197 = ssub.s32 %s14, 1
        %s198 = smul.u32 8, %s19
        %p199 = scmp.lt.s32.totalorder %s198, 15
        %s200 = scalar_select %p199, %s198, 15
        %s201 = smul.addr %s200, 8
        %s202 = smul.addr %s201, 8
        %s203 = scalar_lea.vmem %s0, %s202
        %p204 = pneg %p40
        %p205 = pneg %p37
        %p206 = pneg %p61
        %p207 = pneg %p58
        %p208 = pneg %p82
        %p209 = pneg %p79
        %p210 = pneg %p103
        %p211 = pneg %p100
        %p212 = pneg %p124
        %p213 = pneg %p121
        %p214 = pneg %p150
        %p215 = pneg %p147
        %s216 = sand.u32 %s137, 1
        %s217 = scalar_lea.sflag [#allocation3], %s216
        %s218 = sand.u32 %s137, 1
        %s219 = smul.addr %s218, 8
        %s220 = scalar_lea.vmem [#allocation2], %s219
        %s221 = smul.u32 8, %s19
        %p222 = scmp.lt.s32.totalorder %s221, 15
        %s223 = scalar_select %p222, %s221, 15
        %s224 = smul.addr %s223, 8
        %s225 = smul.addr %s224, 8
        %s226 = scalar_lea.vmem %s0, %s225
        %s227 = smul.u32 8, %s19
        %v229 = vld [vmem:[%s226] sm:$0xff]
        %v230 = vld [vmem:[%s226 + $0x8] sm:$0xff]
        %v231 = vld [vmem:[%s226 + $0x10] sm:$0xff]
        %v232 = vld [vmem:[%s226 + $0x18] sm:$0xff]
        %v233 = vld [vmem:[%s226 + $0x20] sm:$0xff]
        %v234 = vld [vmem:[%s226 + $0x28] sm:$0xff]
        %v235 = vld [vmem:[%s226 + $0x30] sm:$0xff]
        %v236 = vld [vmem:[%s226 + $0x38] sm:$0xff]
        %v237 = vld [vmem:[%s226 + $0x40] sm:$0xff]
        %v238 = vld [vmem:[%s226 + $0x48] sm:$0xff]
        %v239 = vld [vmem:[%s226 + $0x50] sm:$0xff]
        %v240 = vld [vmem:[%s226 + $0x58] sm:$0xff]
        %v241 = vld [vmem:[%s226 + $0x60] sm:$0xff]
        %v242 = vld [vmem:[%s226 + $0x68] sm:$0xff]
        %v243 = vld [vmem:[%s226 + $0x70] sm:$0xff]
        %v244 = vld [vmem:[%s226 + $0x78] sm:$0xff]
        %v245 = vld [vmem:[%s226 + $0x80] sm:$0xff]
        %v246 = vld [vmem:[%s226 + $0x88] sm:$0xff]
        %v247 = vld [vmem:[%s226 + $0x90] sm:$0xff]
        %v248 = vld [vmem:[%s226 + $0x98] sm:$0xff]
        %v249 = vld [vmem:[%s226 + $0xa0] sm:$0xff]
        %v250 = vld [vmem:[%s226 + $0xa8] sm:$0xff]
        %v251 = vld [vmem:[%s226 + $0xb0] sm:$0xff]
        %v252 = vld [vmem:[%s226 + $0xb8] sm:$0xff]
        %v253 = vld [vmem:[%s226 + $0xc0] sm:$0xff]
        %v254 = vld [vmem:[%s226 + $0xc8] sm:$0xff]
        %v255 = vld [vmem:[%s226 + $0xd0] sm:$0xff]
        %v256 = vld [vmem:[%s226 + $0xd8] sm:$0xff]
        %v257 = vld [vmem:[%s226 + $0xe0] sm:$0xff]
        %v258 = vld [vmem:[%s226 + $0xe8] sm:$0xff]
        %v259 = vld [vmem:[%s226 + $0xf0] sm:$0xff]
        %v260 = vld [vmem:[%s226 + $0xf8] sm:$0xff]
        %v261 = vld [vmem:[%s226 + $0x100] sm:$0xff]
        %v262 = vld [vmem:[%s226 + $0x108] sm:$0xff]
        %v263 = vld [vmem:[%s226 + $0x110] sm:$0xff]
        %v264 = vld [vmem:[%s226 + $0x118] sm:$0xff]
        %v265 = vld [vmem:[%s226 + $0x120] sm:$0xff]
        %v266 = vld [vmem:[%s226 + $0x128] sm:$0xff]
        %v267 = vld [vmem:[%s226 + $0x130] sm:$0xff]
        %v268 = vld [vmem:[%s226 + $0x138] sm:$0xff]
        %v269 = vld [vmem:[%s226 + $0x140] sm:$0xff]
        %v270 = vld [vmem:[%s226 + $0x148] sm:$0xff]
        %v271 = vld [vmem:[%s226 + $0x150] sm:$0xff]
        %v272 = vld [vmem:[%s226 + $0x158] sm:$0xff]
        %v273 = vld [vmem:[%s226 + $0x160] sm:$0xff]
        %v274 = vld [vmem:[%s226 + $0x168] sm:$0xff]
        %v275 = vld [vmem:[%s226 + $0x170] sm:$0xff]
        %v276 = vld [vmem:[%s226 + $0x178] sm:$0xff]
        %v277 = vld [vmem:[%s226 + $0x180] sm:$0xff]
        %v278 = vld [vmem:[%s226 + $0x188] sm:$0xff]
        %v279 = vld [vmem:[%s226 + $0x190] sm:$0xff]
        %v280 = vld [vmem:[%s226 + $0x198] sm:$0xff]
        %v281 = vld [vmem:[%s226 + $0x1a0] sm:$0xff]
        %v282 = vld [vmem:[%s226 + $0x1a8] sm:$0xff]
        %v283 = vld [vmem:[%s226 + $0x1b0] sm:$0xff]
        %v284 = vld [vmem:[%s226 + $0x1b8] sm:$0xff]
        %v285 = vld [vmem:[%s226 + $0x1c0] sm:$0xff]
        %v286 = vld [vmem:[%s226 + $0x1c8] sm:$0xff]
        %v287 = vld [vmem:[%s226 + $0x1d0] sm:$0xff]
        %v288 = vld [vmem:[%s226 + $0x1d8] sm:$0xff]
        %v289 = vld [vmem:[%s226 + $0x1e0] sm:$0xff]
        %v290 = vld [vmem:[%s226 + $0x1e8] sm:$0xff]
        %v291 = vld [vmem:[%s226 + $0x1f0] sm:$0xff]
        %v292 = vld [vmem:[%s226 + $0x1f8] sm:$0xff]
        %v293 = vld [vmem:[%s1] sm:$0x1]
        %v294 = vld [vmem:[%s2] sm:$0x1]
        %295 = vadd.xlane.f32.xlu0 %v229
        %v296 = vpop.xlane.xlu0 %295
        %297 = vadd.xlane.f32.xlu0 %v230
        %v298 = vpop.xlane.xlu0 %297
        %299 = vadd.xlane.f32.xlu0 %v231
        %v300 = vpop.xlane.xlu0 %299
        %301 = vadd.xlane.f32.xlu0 %v232
        %v302 = vpop.xlane.xlu0 %301
        %303 = vadd.xlane.f32.xlu0 %v233
        %v304 = vpop.xlane.xlu0 %303
        %305 = vadd.xlane.f32.xlu0 %v234
        %v306 = vpop.xlane.xlu0 %305
        %307 = vadd.xlane.f32.xlu0 %v235
        %v308 = vpop.xlane.xlu0 %307
        %309 = vadd.xlane.f32.xlu0 %v236
        %v310 = vpop.xlane.xlu0 %309
        %311 = vadd.xlane.f32.xlu0 %v237
        %v312 = vpop.xlane.xlu0 %311
        %313 = vadd.xlane.f32.xlu0 %v238
        %v314 = vpop.xlane.xlu0 %313
        %315 = vadd.xlane.f32.xlu0 %v239
        %v316 = vpop.xlane.xlu0 %315
        %317 = vadd.xlane.f32.xlu0 %v240
        %v318 = vpop.xlane.xlu0 %317
        %319 = vadd.xlane.f32.xlu0 %v241
        %v320 = vpop.xlane.xlu0 %319
        %321 = vadd.xlane.f32.xlu0 %v242
        %v322 = vpop.xlane.xlu0 %321
        %323 = vadd.xlane.f32.xlu0 %v243
        %v324 = vpop.xlane.xlu0 %323
        %325 = vadd.xlane.f32.xlu0 %v244
        %v326 = vpop.xlane.xlu0 %325
        %327 = vadd.xlane.f32.xlu0 %v245
        %v328 = vpop.xlane.xlu0 %327
        %329 = vadd.xlane.f32.xlu0 %v246
        %v330 = vpop.xlane.xlu0 %329
        %331 = vadd.xlane.f32.xlu0 %v247
        %v332 = vpop.xlane.xlu0 %331
        %333 = vadd.xlane.f32.xlu0 %v248
        %v334 = vpop.xlane.xlu0 %333
        %335 = vadd.xlane.f32.xlu0 %v249
        %v336 = vpop.xlane.xlu0 %335
        %337 = vadd.xlane.f32.xlu0 %v250
        %v338 = vpop.xlane.xlu0 %337
        %339 = vadd.xlane.f32.xlu0 %v251
        %v340 = vpop.xlane.xlu0 %339
        %341 = vadd.xlane.f32.xlu0 %v252
        %v342 = vpop.xlane.xlu0 %341
        %343 = vadd.xlane.f32.xlu0 %v253
        %v344 = vpop.xlane.xlu0 %343
        %345 = vadd.xlane.f32.xlu0 %v254
        %v346 = vpop.xlane.xlu0 %345
        %347 = vadd.xlane.f32.xlu0 %v255
        %v348 = vpop.xlane.xlu0 %347
        %349 = vadd.xlane.f32.xlu0 %v256
        %v350 = vpop.xlane.xlu0 %349
        %351 = vadd.xlane.f32.xlu0 %v257
        %v352 = vpop.xlane.xlu0 %351
        %353 = vadd.xlane.f32.xlu0 %v258
        %v354 = vpop.xlane.xlu0 %353
        %355 = vadd.xlane.f32.xlu0 %v259
        %v356 = vpop.xlane.xlu0 %355
        %357 = vadd.xlane.f32.xlu0 %v260
        %v358 = vpop.xlane.xlu0 %357
        %359 = vadd.xlane.f32.xlu0 %v261
        %v360 = vpop.xlane.xlu0 %359
        %361 = vadd.xlane.f32.xlu0 %v262
        %v362 = vpop.xlane.xlu0 %361
        %363 = vadd.xlane.f32.xlu0 %v263
        %v364 = vpop.xlane.xlu0 %363
        %365 = vadd.xlane.f32.xlu0 %v264
        %v366 = vpop.xlane.xlu0 %365
        %367 = vadd.xlane.f32.xlu0 %v265
        %v368 = vpop.xlane.xlu0 %367
        %369 = vadd.xlane.f32.xlu0 %v266
        %v370 = vpop.xlane.xlu0 %369
        %371 = vadd.xlane.f32.xlu0 %v267
        %v372 = vpop.xlane.xlu0 %371
        %373 = vadd.xlane.f32.xlu0 %v268
        %v374 = vpop.xlane.xlu0 %373
        %375 = vadd.xlane.f32.xlu0 %v269
        %v376 = vpop.xlane.xlu0 %375
        %377 = vadd.xlane.f32.xlu0 %v270
        %v378 = vpop.xlane.xlu0 %377
        %379 = vadd.xlane.f32.xlu0 %v271
        %v380 = vpop.xlane.xlu0 %379
        %381 = vadd.xlane.f32.xlu0 %v272
        %v382 = vpop.xlane.xlu0 %381
        %383 = vadd.xlane.f32.xlu0 %v273
        %v384 = vpop.xlane.xlu0 %383
        %385 = vadd.xlane.f32.xlu0 %v274
        %v386 = vpop.xlane.xlu0 %385
        %387 = vadd.xlane.f32.xlu0 %v275
        %v388 = vpop.xlane.xlu0 %387
        %389 = vadd.xlane.f32.xlu0 %v276
        %v390 = vpop.xlane.xlu0 %389
        %391 = vadd.xlane.f32.xlu0 %v277
        %v392 = vpop.xlane.xlu0 %391
        %393 = vadd.xlane.f32.xlu0 %v278
        %v394 = vpop.xlane.xlu0 %393
        %395 = vadd.xlane.f32.xlu0 %v279
        %v396 = vpop.xlane.xlu0 %395
        %397 = vadd.xlane.f32.xlu0 %v280
        %v398 = vpop.xlane.xlu0 %397
        %399 = vadd.xlane.f32.xlu0 %v281
        %v400 = vpop.xlane.xlu0 %399
        %401 = vadd.xlane.f32.xlu0 %v282
        %v402 = vpop.xlane.xlu0 %401
        %403 = vadd.xlane.f32.xlu0 %v283
        %v404 = vpop.xlane.xlu0 %403
        %405 = vadd.xlane.f32.xlu0 %v284
        %v406 = vpop.xlane.xlu0 %405
        %407 = vadd.xlane.f32.xlu0 %v285
        %v408 = vpop.xlane.xlu0 %407
        %409 = vadd.xlane.f32.xlu0 %v286
        %v410 = vpop.xlane.xlu0 %409
        %411 = vadd.xlane.f32.xlu0 %v287
        %v412 = vpop.xlane.xlu0 %411
        %413 = vadd.xlane.f32.xlu0 %v288
        %v414 = vpop.xlane.xlu0 %413
        %415 = vadd.xlane.f32.xlu0 %v289
        %v416 = vpop.xlane.xlu0 %415
        %417 = vadd.xlane.f32.xlu0 %v290
        %v418 = vpop.xlane.xlu0 %417
        %419 = vadd.xlane.f32.xlu0 %v291
        %v420 = vpop.xlane.xlu0 %419
        %421 = vadd.xlane.f32.xlu0 %v292
        %v422 = vpop.xlane.xlu0 %421
        %v423 = vrcp.pop 128.0
        %v424 = vmul.f32 %v296, %v423
        %v425 = vmul.f32 %v298, %v423
        %v426 = vmul.f32 %v300, %v423
        %v427 = vmul.f32 %v302, %v423
        %v428 = vmul.f32 %v304, %v423
        %v429 = vmul.f32 %v306, %v423
        %v430 = vmul.f32 %v308, %v423
        %v431 = vmul.f32 %v310, %v423
        %v432 = vmul.f32 %v312, %v423
        %v433 = vmul.f32 %v314, %v423
        %v434 = vmul.f32 %v316, %v423
        %v435 = vmul.f32 %v318, %v423
        %v436 = vmul.f32 %v320, %v423
        %v437 = vmul.f32 %v322, %v423
        %v438 = vmul.f32 %v324, %v423
        %v439 = vmul.f32 %v326, %v423
        %v440 = vmul.f32 %v328, %v423
        %v441 = vmul.f32 %v330, %v423
        %v442 = vmul.f32 %v332, %v423
        %v443 = vmul.f32 %v334, %v423
        %v444 = vmul.f32 %v336, %v423
        %v445 = vmul.f32 %v338, %v423
        %v446 = vmul.f32 %v340, %v423
        %v447 = vmul.f32 %v342, %v423
        %v448 = vmul.f32 %v344, %v423
        %v449 = vmul.f32 %v346, %v423
        %v450 = vmul.f32 %v348, %v423
        %v451 = vmul.f32 %v350, %v423
        %v452 = vmul.f32 %v352, %v423
        %v453 = vmul.f32 %v354, %v423
        %v454 = vmul.f32 %v356, %v423
        %v455 = vmul.f32 %v358, %v423
        %v456 = vmul.f32 %v360, %v423
        %v457 = vmul.f32 %v362, %v423
        %v458 = vmul.f32 %v364, %v423
        %v459 = vmul.f32 %v366, %v423
        %v460 = vmul.f32 %v368, %v423
        %v461 = vmul.f32 %v370, %v423
        %v462 = vmul.f32 %v372, %v423
        %v463 = vmul.f32 %v374, %v423
        %v464 = vmul.f32 %v376, %v423
        %v465 = vmul.f32 %v378, %v423
        %v466 = vmul.f32 %v380, %v423
        %v467 = vmul.f32 %v382, %v423
        %v468 = vmul.f32 %v384, %v423
        %v469 = vmul.f32 %v386, %v423
        %v470 = vmul.f32 %v388, %v423
        %v471 = vmul.f32 %v390, %v423
        %v472 = vmul.f32 %v392, %v423
        %v473 = vmul.f32 %v394, %v423
        %v474 = vmul.f32 %v396, %v423
        %v475 = vmul.f32 %v398, %v423
        %v476 = vmul.f32 %v400, %v423
        %v477 = vmul.f32 %v402, %v423
        %v478 = vmul.f32 %v404, %v423
        %v479 = vmul.f32 %v406, %v423
        %v480 = vmul.f32 %v408, %v423
        %v481 = vmul.f32 %v410, %v423
        %v482 = vmul.f32 %v412, %v423
        %v483 = vmul.f32 %v414, %v423
        %v484 = vmul.f32 %v416, %v423
        %v485 = vmul.f32 %v418, %v423
        %v486 = vmul.f32 %v420, %v423
        %v487 = vmul.f32 %v422, %v423
        %v488 = vsub.f32 %v229, %v424
        %v489 = vsub.f32 %v230, %v425
        %v490 = vsub.f32 %v231, %v426
        %v491 = vsub.f32 %v232, %v427
        %v492 = vsub.f32 %v233, %v428
        %v493 = vsub.f32 %v234, %v429
        %v494 = vsub.f32 %v235, %v430
        %v495 = vsub.f32 %v236, %v431
        %v496 = vsub.f32 %v237, %v432
        %v497 = vsub.f32 %v238, %v433
        %v498 = vsub.f32 %v239, %v434
        %v499 = vsub.f32 %v240, %v435
        %v500 = vsub.f32 %v241, %v436
        %v501 = vsub.f32 %v242, %v437
        %v502 = vsub.f32 %v243, %v438
        %v503 = vsub.f32 %v244, %v439
        %v504 = vsub.f32 %v245, %v440
        %v505 = vsub.f32 %v246, %v441
        %v506 = vsub.f32 %v247, %v442
        %v507 = vsub.f32 %v248, %v443
        %v508 = vsub.f32 %v249, %v444
        %v509 = vsub.f32 %v250, %v445
        %v510 = vsub.f32 %v251, %v446
        %v511 = vsub.f32 %v252, %v447
        %v512 = vsub.f32 %v253, %v448
        %v513 = vsub.f32 %v254, %v449
        %v514 = vsub.f32 %v255, %v450
        %v515 = vsub.f32 %v256, %v451
        %v516 = vsub.f32 %v257, %v452
        %v517 = vsub.f32 %v258, %v453
        %v518 = vsub.f32 %v259, %v454
        %v519 = vsub.f32 %v260, %v455
        %v520 = vsub.f32 %v261, %v456
        %v521 = vsub.f32 %v262, %v457
        %v522 = vsub.f32 %v263, %v458
        %v523 = vsub.f32 %v264, %v459
        %v524 = vsub.f32 %v265, %v460
        %v525 = vsub.f32 %v266, %v461
        %v526 = vsub.f32 %v267, %v462
        %v527 = vsub.f32 %v268, %v463
        %v528 = vsub.f32 %v269, %v464
        %v529 = vsub.f32 %v270, %v465
        %v530 = vsub.f32 %v271, %v466
        %v531 = vsub.f32 %v272, %v467
        %v532 = vsub.f32 %v273, %v468
        %v533 = vsub.f32 %v274, %v469
        %v534 = vsub.f32 %v275, %v470
        %v535 = vsub.f32 %v276, %v471
        %v536 = vsub.f32 %v277, %v472
        %v537 = vsub.f32 %v278, %v473
        %v538 = vsub.f32 %v279, %v474
        %v539 = vsub.f32 %v280, %v475
        %v540 = vsub.f32 %v281, %v476
        %v541 = vsub.f32 %v282, %v477
        %v542 = vsub.f32 %v283, %v478
        %v543 = vsub.f32 %v284, %v479
        %v544 = vsub.f32 %v285, %v480
        %v545 = vsub.f32 %v286, %v481
        %v546 = vsub.f32 %v287, %v482
        %v547 = vsub.f32 %v288, %v483
        %v548 = vsub.f32 %v289, %v484
        %v549 = vsub.f32 %v290, %v485
        %v550 = vsub.f32 %v291, %v486
        %v551 = vsub.f32 %v292, %v487
        %v552 = vmul.f32 %v488, %v488
        %v553 = vmul.f32 %v489, %v489
        %v554 = vmul.f32 %v490, %v490
        %v555 = vmul.f32 %v491, %v491
        %v556 = vmul.f32 %v492, %v492
        %v557 = vmul.f32 %v493, %v493
        %v558 = vmul.f32 %v494, %v494
        %v559 = vmul.f32 %v495, %v495
        %v560 = vmul.f32 %v496, %v496
        %v561 = vmul.f32 %v497, %v497
        %v562 = vmul.f32 %v498, %v498
        %v563 = vmul.f32 %v499, %v499
        %v564 = vmul.f32 %v500, %v500
        %v565 = vmul.f32 %v501, %v501
        %v566 = vmul.f32 %v502, %v502
        %v567 = vmul.f32 %v503, %v503
        %v568 = vmul.f32 %v504, %v504
        %v569 = vmul.f32 %v505, %v505
        %v570 = vmul.f32 %v506, %v506
        %v571 = vmul.f32 %v507, %v507
        %v572 = vmul.f32 %v508, %v508
        %v573 = vmul.f32 %v509, %v509
        %v574 = vmul.f32 %v510, %v510
        %v575 = vmul.f32 %v511, %v511
        %v576 = vmul.f32 %v512, %v512
        %v577 = vmul.f32 %v513, %v513
        %v578 = vmul.f32 %v514, %v514
        %v579 = vmul.f32 %v515, %v515
        %v580 = vmul.f32 %v516, %v516
        %v581 = vmul.f32 %v517, %v517
        %v582 = vmul.f32 %v518, %v518
        %v583 = vmul.f32 %v519, %v519
        %v584 = vmul.f32 %v520, %v520
        %v585 = vmul.f32 %v521, %v521
        %v586 = vmul.f32 %v522, %v522
        %v587 = vmul.f32 %v523, %v523
        %v588 = vmul.f32 %v524, %v524
        %v589 = vmul.f32 %v525, %v525
        %v590 = vmul.f32 %v526, %v526
        %v591 = vmul.f32 %v527, %v527
        %v592 = vmul.f32 %v528, %v528
        %v593 = vmul.f32 %v529, %v529
        %v594 = vmul.f32 %v530, %v530
        %v595 = vmul.f32 %v531, %v531
        %v596 = vmul.f32 %v532, %v532
        %v597 = vmul.f32 %v533, %v533
        %v598 = vmul.f32 %v534, %v534
        %v599 = vmul.f32 %v535, %v535
        %v600 = vmul.f32 %v536, %v536
        %v601 = vmul.f32 %v537, %v537
        %v602 = vmul.f32 %v538, %v538
        %v603 = vmul.f32 %v539, %v539
        %v604 = vmul.f32 %v540, %v540
        %v605 = vmul.f32 %v541, %v541
        %v606 = vmul.f32 %v542, %v542
        %v607 = vmul.f32 %v543, %v543
        %v608 = vmul.f32 %v544, %v544
        %v609 = vmul.f32 %v545, %v545
        %v610 = vmul.f32 %v546, %v546
        %v611 = vmul.f32 %v547, %v547
        %v612 = vmul.f32 %v548, %v548
        %v613 = vmul.f32 %v549, %v549
        %v614 = vmul.f32 %v550, %v550
        %v615 = vmul.f32 %v551, %v551
        %616 = vadd.xlane.f32.xlu0 %v552
        %v617 = vpop.xlane.xlu0 %616
        %618 = vadd.xlane.f32.xlu0 %v553
        %v619 = vpop.xlane.xlu0 %618
        %620 = vadd.xlane.f32.xlu0 %v554
        %v621 = vpop.xlane.xlu0 %620
        %622 = vadd.xlane.f32.xlu0 %v555
        %v623 = vpop.xlane.xlu0 %622
        %624 = vadd.xlane.f32.xlu0 %v556
        %v625 = vpop.xlane.xlu0 %624
        %626 = vadd.xlane.f32.xlu0 %v557
        %v627 = vpop.xlane.xlu0 %626
        %628 = vadd.xlane.f32.xlu0 %v558
        %v629 = vpop.xlane.xlu0 %628
        %630 = vadd.xlane.f32.xlu0 %v559
        %v631 = vpop.xlane.xlu0 %630
        %632 = vadd.xlane.f32.xlu0 %v560
        %v633 = vpop.xlane.xlu0 %632
        %634 = vadd.xlane.f32.xlu0 %v561
        %v635 = vpop.xlane.xlu0 %634
        %636 = vadd.xlane.f32.xlu0 %v562
        %v637 = vpop.xlane.xlu0 %636
        %638 = vadd.xlane.f32.xlu0 %v563
        %v639 = vpop.xlane.xlu0 %638
        %640 = vadd.xlane.f32.xlu0 %v564
        %v641 = vpop.xlane.xlu0 %640
        %642 = vadd.xlane.f32.xlu0 %v565
        %v643 = vpop.xlane.xlu0 %642
        %644 = vadd.xlane.f32.xlu0 %v566
        %v645 = vpop.xlane.xlu0 %644
        %646 = vadd.xlane.f32.xlu0 %v567
        %v647 = vpop.xlane.xlu0 %646
        %648 = vadd.xlane.f32.xlu0 %v568
        %v649 = vpop.xlane.xlu0 %648
        %650 = vadd.xlane.f32.xlu0 %v569
        %v651 = vpop.xlane.xlu0 %650
        %652 = vadd.xlane.f32.xlu0 %v570
        %v653 = vpop.xlane.xlu0 %652
        %654 = vadd.xlane.f32.xlu0 %v571
        %v655 = vpop.xlane.xlu0 %654
        %656 = vadd.xlane.f32.xlu0 %v572
        %v657 = vpop.xlane.xlu0 %656
        %658 = vadd.xlane.f32.xlu0 %v573
        %v659 = vpop.xlane.xlu0 %658
        %660 = vadd.xlane.f32.xlu0 %v574
        %v661 = vpop.xlane.xlu0 %660
        %662 = vadd.xlane.f32.xlu0 %v575
        %v663 = vpop.xlane.xlu0 %662
        %664 = vadd.xlane.f32.xlu0 %v576
        %v665 = vpop.xlane.xlu0 %664
        %666 = vadd.xlane.f32.xlu0 %v577
        %v667 = vpop.xlane.xlu0 %666
        %668 = vadd.xlane.f32.xlu0 %v578
        %v669 = vpop.xlane.xlu0 %668
        %670 = vadd.xlane.f32.xlu0 %v579
        %v671 = vpop.xlane.xlu0 %670
        %672 = vadd.xlane.f32.xlu0 %v580
        %v673 = vpop.xlane.xlu0 %672
        %674 = vadd.xlane.f32.xlu0 %v581
        %v675 = vpop.xlane.xlu0 %674
        %676 = vadd.xlane.f32.xlu0 %v582
        %v677 = vpop.xlane.xlu0 %676
        %678 = vadd.xlane.f32.xlu0 %v583
        %v679 = vpop.xlane.xlu0 %678
        %680 = vadd.xlane.f32.xlu0 %v584
        %v681 = vpop.xlane.xlu0 %680
        %682 = vadd.xlane.f32.xlu0 %v585
        %v683 = vpop.xlane.xlu0 %682
        %684 = vadd.xlane.f32.xlu0 %v586
        %v685 = vpop.xlane.xlu0 %684
        %686 = vadd.xlane.f32.xlu0 %v587
        %v687 = vpop.xlane.xlu0 %686
        %688 = vadd.xlane.f32.xlu0 %v588
        %v689 = vpop.xlane.xlu0 %688
        %690 = vadd.xlane.f32.xlu0 %v589
        %v691 = vpop.xlane.xlu0 %690
        %692 = vadd.xlane.f32.xlu0 %v590
        %v693 = vpop.xlane.xlu0 %692
        %694 = vadd.xlane.f32.xlu0 %v591
        %v695 = vpop.xlane.xlu0 %694
        %696 = vadd.xlane.f32.xlu0 %v592
        %v697 = vpop.xlane.xlu0 %696
        %698 = vadd.xlane.f32.xlu0 %v593
        %v699 = vpop.xlane.xlu0 %698
        %700 = vadd.xlane.f32.xlu0 %v594
        %v701 = vpop.xlane.xlu0 %700
        %702 = vadd.xlane.f32.xlu0 %v595
        %v703 = vpop.xlane.xlu0 %702
        %704 = vadd.xlane.f32.xlu0 %v596
        %v705 = vpop.xlane.xlu0 %704
        %706 = vadd.xlane.f32.xlu0 %v597
        %v707 = vpop.xlane.xlu0 %706
        %708 = vadd.xlane.f32.xlu0 %v598
        %v709 = vpop.xlane.xlu0 %708
        %710 = vadd.xlane.f32.xlu0 %v599
        %v711 = vpop.xlane.xlu0 %710
        %712 = vadd.xlane.f32.xlu0 %v600
        %v713 = vpop.xlane.xlu0 %712
        %714 = vadd.xlane.f32.xlu0 %v601
        %v715 = vpop.xlane.xlu0 %714
        %716 = vadd.xlane.f32.xlu0 %v602
        %v717 = vpop.xlane.xlu0 %716
        %718 = vadd.xlane.f32.xlu0 %v603
        %v719 = vpop.xlane.xlu0 %718
        %720 = vadd.xlane.f32.xlu0 %v604
        %v721 = vpop.xlane.xlu0 %720
        %722 = vadd.xlane.f32.xlu0 %v605
        %v723 = vpop.xlane.xlu0 %722
        %724 = vadd.xlane.f32.xlu0 %v606
        %v725 = vpop.xlane.xlu0 %724
        %726 = vadd.xlane.f32.xlu0 %v607
        %v727 = vpop.xlane.xlu0 %726
        %728 = vadd.xlane.f32.xlu0 %v608
        %v729 = vpop.xlane.xlu0 %728
        %730 = vadd.xlane.f32.xlu0 %v609
        %v731 = vpop.xlane.xlu0 %730
        %732 = vadd.xlane.f32.xlu0 %v610
        %v733 = vpop.xlane.xlu0 %732
        %734 = vadd.xlane.f32.xlu0 %v611
        %v735 = vpop.xlane.xlu0 %734
        %736 = vadd.xlane.f32.xlu0 %v612
        %v737 = vpop.xlane.xlu0 %736
        %738 = vadd.xlane.f32.xlu0 %v613
        %v739 = vpop.xlane.xlu0 %738
        %740 = vadd.xlane.f32.xlu0 %v614
        %v741 = vpop.xlane.xlu0 %740
        %742 = vadd.xlane.f32.xlu0 %v615
        %v743 = vpop.xlane.xlu0 %742
        %v744 = vmul.f32 %v617, %v423
        %v745 = vmul.f32 %v619, %v423
        %v746 = vmul.f32 %v621, %v423
        %v747 = vmul.f32 %v623, %v423
        %v748 = vmul.f32 %v625, %v423
        %v749 = vmul.f32 %v627, %v423
        %v750 = vmul.f32 %v629, %v423
        %v751 = vmul.f32 %v631, %v423
        %v752 = vmul.f32 %v633, %v423
        %v753 = vmul.f32 %v635, %v423
        %v754 = vmul.f32 %v637, %v423
        %v755 = vmul.f32 %v639, %v423
        %v756 = vmul.f32 %v641, %v423
        %v757 = vmul.f32 %v643, %v423
        %v758 = vmul.f32 %v645, %v423
        %v759 = vmul.f32 %v647, %v423
        %v760 = vmul.f32 %v649, %v423
        %v761 = vmul.f32 %v651, %v423
        %v762 = vmul.f32 %v653, %v423
        %v763 = vmul.f32 %v655, %v423
        %v764 = vmul.f32 %v657, %v423
        %v765 = vmul.f32 %v659, %v423
        %v766 = vmul.f32 %v661, %v423
        %v767 = vmul.f32 %v663, %v423
        %v768 = vmul.f32 %v665, %v423
        %v769 = vmul.f32 %v667, %v423
        %v770 = vmul.f32 %v669, %v423
        %v771 = vmul.f32 %v671, %v423
        %v772 = vmul.f32 %v673, %v423
        %v773 = vmul.f32 %v675, %v423
        %v774 = vmul.f32 %v677, %v423
        %v775 = vmul.f32 %v679, %v423
        %v776 = vmul.f32 %v681, %v423
        %v777 = vmul.f32 %v683, %v423
        %v778 = vmul.f32 %v685, %v423
        %v779 = vmul.f32 %v687, %v423
        %v780 = vmul.f32 %v689, %v423
        %v781 = vmul.f32 %v691, %v423
        %v782 = vmul.f32 %v693, %v423
        %v783 = vmul.f32 %v695, %v423
        %v784 = vmul.f32 %v697, %v423
        %v785 = vmul.f32 %v699, %v423
        %v786 = vmul.f32 %v701, %v423
        %v787 = vmul.f32 %v703, %v423
        %v788 = vmul.f32 %v705, %v423
        %v789 = vmul.f32 %v707, %v423
        %v790 = vmul.f32 %v709, %v423
        %v791 = vmul.f32 %v711, %v423
        %v792 = vmul.f32 %v713, %v423
        %v793 = vmul.f32 %v715, %v423
        %v794 = vmul.f32 %v717, %v423
        %v795 = vmul.f32 %v719, %v423
        %v796 = vmul.f32 %v721, %v423
        %v797 = vmul.f32 %v723, %v423
        %v798 = vmul.f32 %v725, %v423
        %v799 = vmul.f32 %v727, %v423
        %v800 = vmul.f32 %v729, %v423
        %v801 = vmul.f32 %v731, %v423
        %v802 = vmul.f32 %v733, %v423
        %v803 = vmul.f32 %v735, %v423
        %v804 = vmul.f32 %v737, %v423
        %v805 = vmul.f32 %v739, %v423
        %v806 = vmul.f32 %v741, %v423
        %v807 = vmul.f32 %v743, %v423
        %v808 = vadd.f32 %v744, 1e-05
        %v809 = vadd.f32 %v745, 1e-05
        %v810 = vadd.f32 %v746, 1e-05
        %v811 = vadd.f32 %v747, 1e-05
        %v812 = vadd.f32 %v748, 1e-05
        %v813 = vadd.f32 %v749, 1e-05
        %v814 = vadd.f32 %v750, 1e-05
        %v815 = vadd.f32 %v751, 1e-05
        %v816 = vadd.f32 %v752, 1e-05
        %v817 = vadd.f32 %v753, 1e-05
        %v818 = vadd.f32 %v754, 1e-05
        %v819 = vadd.f32 %v755, 1e-05
        %v820 = vadd.f32 %v756, 1e-05
        %v821 = vadd.f32 %v757, 1e-05
        %v822 = vadd.f32 %v758, 1e-05
        %v823 = vadd.f32 %v759, 1e-05
        %v824 = vadd.f32 %v760, 1e-05
        %v825 = vadd.f32 %v761, 1e-05
        %v826 = vadd.f32 %v762, 1e-05
        %v827 = vadd.f32 %v763, 1e-05
        %v828 = vadd.f32 %v764, 1e-05
        %v829 = vadd.f32 %v765, 1e-05
        %v830 = vadd.f32 %v766, 1e-05
        %v831 = vadd.f32 %v767, 1e-05
        %v832 = vadd.f32 %v768, 1e-05
        %v833 = vadd.f32 %v769, 1e-05
        %v834 = vadd.f32 %v770, 1e-05
        %v835 = vadd.f32 %v771, 1e-05
        %v836 = vadd.f32 %v772, 1e-05
        %v837 = vadd.f32 %v773, 1e-05
        %v838 = vadd.f32 %v774, 1e-05
        %v839 = vadd.f32 %v775, 1e-05
        %v840 = vadd.f32 %v776, 1e-05
        %v841 = vadd.f32 %v777, 1e-05
        %v842 = vadd.f32 %v778, 1e-05
        %v843 = vadd.f32 %v779, 1e-05
        %v844 = vadd.f32 %v780, 1e-05
        %v845 = vadd.f32 %v781, 1e-05
        %v846 = vadd.f32 %v782, 1e-05
        %v847 = vadd.f32 %v783, 1e-05
        %v848 = vadd.f32 %v784, 1e-05
        %v849 = vadd.f32 %v785, 1e-05
        %v850 = vadd.f32 %v786, 1e-05
        %v851 = vadd.f32 %v787, 1e-05
        %v852 = vadd.f32 %v788, 1e-05
        %v853 = vadd.f32 %v789, 1e-05
        %v854 = vadd.f32 %v790, 1e-05
        %v855 = vadd.f32 %v791, 1e-05
        %v856 = vadd.f32 %v792, 1e-05
        %v857 = vadd.f32 %v793, 1e-05
        %v858 = vadd.f32 %v794, 1e-05
        %v859 = vadd.f32 %v795, 1e-05
        %v860 = vadd.f32 %v796, 1e-05
        %v861 = vadd.f32 %v797, 1e-05
        %v862 = vadd.f32 %v798, 1e-05
        %v863 = vadd.f32 %v799, 1e-05
        %v864 = vadd.f32 %v800, 1e-05
        %v865 = vadd.f32 %v801, 1e-05
        %v866 = vadd.f32 %v802, 1e-05
        %v867 = vadd.f32 %v803, 1e-05
        %v868 = vadd.f32 %v804, 1e-05
        %v869 = vadd.f32 %v805, 1e-05
        %v870 = vadd.f32 %v806, 1e-05
        %v871 = vadd.f32 %v807, 1e-05
        %v872 = vrsqrt.pop %v808
        %v873 = vrsqrt.pop %v809
        %v874 = vrsqrt.pop %v810
        %v875 = vrsqrt.pop %v811
        %v876 = vrsqrt.pop %v812
        %v877 = vrsqrt.pop %v813
        %v878 = vrsqrt.pop %v814
        %v879 = vrsqrt.pop %v815
        %v880 = vrsqrt.pop %v816
        %v881 = vrsqrt.pop %v817
        %v882 = vrsqrt.pop %v818
        %v883 = vrsqrt.pop %v819
        %v884 = vrsqrt.pop %v820
        %v885 = vrsqrt.pop %v821
        %v886 = vrsqrt.pop %v822
        %v887 = vrsqrt.pop %v823
        %v888 = vrsqrt.pop %v824
        %v889 = vrsqrt.pop %v825
        %v890 = vrsqrt.pop %v826
        %v891 = vrsqrt.pop %v827
        %v892 = vrsqrt.pop %v828
        %v893 = vrsqrt.pop %v829
        %v894 = vrsqrt.pop %v830
        %v895 = vrsqrt.pop %v831
        %v896 = vrsqrt.pop %v832
        %v897 = vrsqrt.pop %v833
        %v898 = vrsqrt.pop %v834
        %v899 = vrsqrt.pop %v835
        %v900 = vrsqrt.pop %v836
        %v901 = vrsqrt.pop %v837
        %v902 = vrsqrt.pop %v838
        %v903 = vrsqrt.pop %v839
        %v904 = vrsqrt.pop %v840
        %v905 = vrsqrt.pop %v841
        %v906 = vrsqrt.pop %v842
        %v907 = vrsqrt.pop %v843
        %v908 = vrsqrt.pop %v844
        %v909 = vrsqrt.pop %v845
        %v910 = vrsqrt.pop %v846
        %v911 = vrsqrt.pop %v847
        %v912 = vrsqrt.pop %v848
        %v913 = vrsqrt.pop %v849
        %v914 = vrsqrt.pop %v850
        %v915 = vrsqrt.pop %v851
        %v916 = vrsqrt.pop %v852
        %v917 = vrsqrt.pop %v853
        %v918 = vrsqrt.pop %v854
        %v919 = vrsqrt.pop %v855
        %v920 = vrsqrt.pop %v856
        %v921 = vrsqrt.pop %v857
        %v922 = vrsqrt.pop %v858
        %v923 = vrsqrt.pop %v859
        %v924 = vrsqrt.pop %v860
        %v925 = vrsqrt.pop %v861
        %v926 = vrsqrt.pop %v862
        %v927 = vrsqrt.pop %v863
        %v928 = vrsqrt.pop %v864
        %v929 = vrsqrt.pop %v865
        %v930 = vrsqrt.pop %v866
        %v931 = vrsqrt.pop %v867
        %v932 = vrsqrt.pop %v868
        %v933 = vrsqrt.pop %v869
        %v934 = vrsqrt.pop %v870
        %v935 = vrsqrt.pop %v871
        %v936 = vmul.f32 %v488, %v872
        %v937 = vmul.f32 %v489, %v873
        %v938 = vmul.f32 %v490, %v874
        %v939 = vmul.f32 %v491, %v875
        %v940 = vmul.f32 %v492, %v876
        %v941 = vmul.f32 %v493, %v877
        %v942 = vmul.f32 %v494, %v878
        %v943 = vmul.f32 %v495, %v879
        %v944 = vmul.f32 %v496, %v880
        %v945 = vmul.f32 %v497, %v881
        %v946 = vmul.f32 %v498, %v882
        %v947 = vmul.f32 %v499, %v883
        %v948 = vmul.f32 %v500, %v884
        %v949 = vmul.f32 %v501, %v885
        %v950 = vmul.f32 %v502, %v886
        %v951 = vmul.f32 %v503, %v887
        %v952 = vmul.f32 %v504, %v888
        %v953 = vmul.f32 %v505, %v889
        %v954 = vmul.f32 %v506, %v890
        %v955 = vmul.f32 %v507, %v891
        %v956 = vmul.f32 %v508, %v892
        %v957 = vmul.f32 %v509, %v893
        %v958 = vmul.f32 %v510, %v894
        %v959 = vmul.f32 %v511, %v895
        %v960 = vmul.f32 %v512, %v896
        %v961 = vmul.f32 %v513, %v897
        %v962 = vmul.f32 %v514, %v898
        %v963 = vmul.f32 %v515, %v899
        %v964 = vmul.f32 %v516, %v900
        %v965 = vmul.f32 %v517, %v901
        %v966 = vmul.f32 %v518, %v902
        %v967 = vmul.f32 %v519, %v903
        %v968 = vmul.f32 %v520, %v904
        %v969 = vmul.f32 %v521, %v905
        %v970 = vmul.f32 %v522, %v906
        %v971 = vmul.f32 %v523, %v907
        %v972 = vmul.f32 %v524, %v908
        %v973 = vmul.f32 %v525, %v909
        %v974 = vmul.f32 %v526, %v910
        %v975 = vmul.f32 %v527, %v911
        %v976 = vmul.f32 %v528, %v912
        %v977 = vmul.f32 %v529, %v913
        %v978 = vmul.f32 %v530, %v914
        %v979 = vmul.f32 %v531, %v915
        %v980 = vmul.f32 %v532, %v916
        %v981 = vmul.f32 %v533, %v917
        %v982 = vmul.f32 %v534, %v918
        %v983 = vmul.f32 %v535, %v919
        %v984 = vmul.f32 %v536, %v920
        %v985 = vmul.f32 %v537, %v921
        %v986 = vmul.f32 %v538, %v922
        %v987 = vmul.f32 %v539, %v923
        %v988 = vmul.f32 %v540, %v924
        %v989 = vmul.f32 %v541, %v925
        %v990 = vmul.f32 %v542, %v926
        %v991 = vmul.f32 %v543, %v927
        %v992 = vmul.f32 %v544, %v928
        %v993 = vmul.f32 %v545, %v929
        %v994 = vmul.f32 %v546, %v930
        %v995 = vmul.f32 %v547, %v931
        %v996 = vmul.f32 %v548, %v932
        %v997 = vmul.f32 %v549, %v933
        %v998 = vmul.f32 %v550, %v934
        %v999 = vmul.f32 %v551, %v935
        %v1001 = vlaneseq
        %v1002 = vshrl.u32 %v1001, 7
        %v1003 = vsub.s32 0, %v1002
        %v1004 = vrot.slane %v293, %v1003
        %v1006 = vmul.f32 %v936, %v1004
        %v1007 = vmul.f32 %v937, %v1004
        %v1008 = vmul.f32 %v938, %v1004
        %v1009 = vmul.f32 %v939, %v1004
        %v1010 = vmul.f32 %v940, %v1004
        %v1011 = vmul.f32 %v941, %v1004
        %v1012 = vmul.f32 %v942, %v1004
        %v1013 = vmul.f32 %v943, %v1004
        %v1014 = vmul.f32 %v944, %v1004
        %v1015 = vmul.f32 %v945, %v1004
        %v1016 = vmul.f32 %v946, %v1004
        %v1017 = vmul.f32 %v947, %v1004
        %v1018 = vmul.f32 %v948, %v1004
        %v1019 = vmul.f32 %v949, %v1004
        %v1020 = vmul.f32 %v950, %v1004
        %v1021 = vmul.f32 %v951, %v1004
        %v1022 = vmul.f32 %v952, %v1004
        %v1023 = vmul.f32 %v953, %v1004
        %v1024 = vmul.f32 %v954, %v1004
        %v1025 = vmul.f32 %v955, %v1004
        %v1026 = vmul.f32 %v956, %v1004
        %v1027 = vmul.f32 %v957, %v1004
        %v1028 = vmul.f32 %v958, %v1004
        %v1029 = vmul.f32 %v959, %v1004
        %v1030 = vmul.f32 %v960, %v1004
        %v1031 = vmul.f32 %v961, %v1004
        %v1032 = vmul.f32 %v962, %v1004
        %v1033 = vmul.f32 %v963, %v1004
        %v1034 = vmul.f32 %v964, %v1004
        %v1035 = vmul.f32 %v965, %v1004
        %v1036 = vmul.f32 %v966, %v1004
        %v1037 = vmul.f32 %v967, %v1004
        %v1038 = vmul.f32 %v968, %v1004
        %v1039 = vmul.f32 %v969, %v1004
        %v1040 = vmul.f32 %v970, %v1004
        %v1041 = vmul.f32 %v971, %v1004
        %v1042 = vmul.f32 %v972, %v1004
        %v1043 = vmul.f32 %v973, %v1004
        %v1044 = vmul.f32 %v974, %v1004
        %v1045 = vmul.f32 %v975, %v1004
        %v1046 = vmul.f32 %v976, %v1004
        %v1047 = vmul.f32 %v977, %v1004
        %v1048 = vmul.f32 %v978, %v1004
        %v1049 = vmul.f32 %v979, %v1004
        %v1050 = vmul.f32 %v980, %v1004
        %v1051 = vmul.f32 %v981, %v1004
        %v1052 = vmul.f32 %v982, %v1004
        %v1053 = vmul.f32 %v983, %v1004
        %v1054 = vmul.f32 %v984, %v1004
        %v1055 = vmul.f32 %v985, %v1004
        %v1056 = vmul.f32 %v986, %v1004
        %v1057 = vmul.f32 %v987, %v1004
        %v1058 = vmul.f32 %v988, %v1004
        %v1059 = vmul.f32 %v989, %v1004
        %v1060 = vmul.f32 %v990, %v1004
        %v1061 = vmul.f32 %v991, %v1004
        %v1062 = vmul.f32 %v992, %v1004
        %v1063 = vmul.f32 %v993, %v1004
        %v1064 = vmul.f32 %v994, %v1004
        %v1065 = vmul.f32 %v995, %v1004
        %v1066 = vmul.f32 %v996, %v1004
        %v1067 = vmul.f32 %v997, %v1004
        %v1068 = vmul.f32 %v998, %v1004
        %v1069 = vmul.f32 %v999, %v1004
        %v1071 = vlaneseq
        %v1072 = vshrl.u32 %v1071, 7
        %v1073 = vsub.s32 0, %v1072
        %v1074 = vrot.slane %v294, %v1073
        %v1076 = vadd.f32 %v1006, %v1074
        %v1077 = vadd.f32 %v1007, %v1074
        %v1078 = vadd.f32 %v1008, %v1074
        %v1079 = vadd.f32 %v1009, %v1074
        %v1080 = vadd.f32 %v1010, %v1074
        %v1081 = vadd.f32 %v1011, %v1074
        %v1082 = vadd.f32 %v1012, %v1074
        %v1083 = vadd.f32 %v1013, %v1074
        %v1084 = vadd.f32 %v1014, %v1074
        %v1085 = vadd.f32 %v1015, %v1074
        %v1086 = vadd.f32 %v1016, %v1074
        %v1087 = vadd.f32 %v1017, %v1074
        %v1088 = vadd.f32 %v1018, %v1074
        %v1089 = vadd.f32 %v1019, %v1074
        %v1090 = vadd.f32 %v1020, %v1074
        %v1091 = vadd.f32 %v1021, %v1074
        %v1092 = vadd.f32 %v1022, %v1074
        %v1093 = vadd.f32 %v1023, %v1074
        %v1094 = vadd.f32 %v1024, %v1074
        %v1095 = vadd.f32 %v1025, %v1074
        %v1096 = vadd.f32 %v1026, %v1074
        %v1097 = vadd.f32 %v1027, %v1074
        %v1098 = vadd.f32 %v1028, %v1074
        %v1099 = vadd.f32 %v1029, %v1074
        %v1100 = vadd.f32 %v1030, %v1074
        %v1101 = vadd.f32 %v1031, %v1074
        %v1102 = vadd.f32 %v1032, %v1074
        %v1103 = vadd.f32 %v1033, %v1074
        %v1104 = vadd.f32 %v1034, %v1074
        %v1105 = vadd.f32 %v1035, %v1074
        %v1106 = vadd.f32 %v1036, %v1074
        %v1107 = vadd.f32 %v1037, %v1074
        %v1108 = vadd.f32 %v1038, %v1074
        %v1109 = vadd.f32 %v1039, %v1074
        %v1110 = vadd.f32 %v1040, %v1074
        %v1111 = vadd.f32 %v1041, %v1074
        %v1112 = vadd.f32 %v1042, %v1074
        %v1113 = vadd.f32 %v1043, %v1074
        %v1114 = vadd.f32 %v1044, %v1074
        %v1115 = vadd.f32 %v1045, %v1074
        %v1116 = vadd.f32 %v1046, %v1074
        %v1117 = vadd.f32 %v1047, %v1074
        %v1118 = vadd.f32 %v1048, %v1074
        %v1119 = vadd.f32 %v1049, %v1074
        %v1120 = vadd.f32 %v1050, %v1074
        %v1121 = vadd.f32 %v1051, %v1074
        %v1122 = vadd.f32 %v1052, %v1074
        %v1123 = vadd.f32 %v1053, %v1074
        %v1124 = vadd.f32 %v1054, %v1074
        %v1125 = vadd.f32 %v1055, %v1074
        %v1126 = vadd.f32 %v1056, %v1074
        %v1127 = vadd.f32 %v1057, %v1074
        %v1128 = vadd.f32 %v1058, %v1074
        %v1129 = vadd.f32 %v1059, %v1074
        %v1130 = vadd.f32 %v1060, %v1074
        %v1131 = vadd.f32 %v1061, %v1074
        %v1132 = vadd.f32 %v1062, %v1074
        %v1133 = vadd.f32 %v1063, %v1074
        %v1134 = vadd.f32 %v1064, %v1074
        %v1135 = vadd.f32 %v1065, %v1074
        %v1136 = vadd.f32 %v1066, %v1074
        %v1137 = vadd.f32 %v1067, %v1074
        %v1138 = vadd.f32 %v1068, %v1074
        %v1139 = vadd.f32 %v1069, %v1074
        %v1140 = vadd.f32 %v1076, %v1077
        %v1141 = vadd.f32 %v1140, %v1078
        %v1142 = vadd.f32 %v1141, %v1079
        %v1143 = vadd.f32 %v1142, %v1080
        %v1144 = vadd.f32 %v1143, %v1081
        %v1145 = vadd.f32 %v1144, %v1082
        %v1146 = vadd.f32 %v1145, %v1083
        %v1147 = vrot.slane %v1146, 4
        %v1148 = vadd.f32 %v1146, %v1147
        %v1149 = vrot.slane %v1148, 2
        %v1150 = vadd.f32 %v1148, %v1149
        %v1151 = vrot.slane %v1150, 1
        %v1152 = vadd.f32 %v1150, %v1151
        %v1153 = vadd.f32 %v1084, %v1085
        %v1154 = vadd.f32 %v1153, %v1086
        %v1155 = vadd.f32 %v1154, %v1087
        %v1156 = vadd.f32 %v1155, %v1088
        %v1157 = vadd.f32 %v1156, %v1089
        %v1158 = vadd.f32 %v1157, %v1090
        %v1159 = vadd.f32 %v1158, %v1091
        %v1160 = vrot.slane %v1159, 4
        %v1161 = vadd.f32 %v1159, %v1160
        %v1162 = vrot.slane %v1161, 2
        %v1163 = vadd.f32 %v1161, %v1162
        %v1164 = vrot.slane %v1163, 1
        %v1165 = vadd.f32 %v1163, %v1164
        %v1166 = vadd.f32 %v1092, %v1093
        %v1167 = vadd.f32 %v1166, %v1094
        %v1168 = vadd.f32 %v1167, %v1095
        %v1169 = vadd.f32 %v1168, %v1096
        %v1170 = vadd.f32 %v1169, %v1097
        %v1171 = vadd.f32 %v1170, %v1098
        %v1172 = vadd.f32 %v1171, %v1099
        %v1173 = vrot.slane %v1172, 4
        %v1174 = vadd.f32 %v1172, %v1173
        %v1175 = vrot.slane %v1174, 2
        %v1176 = vadd.f32 %v1174, %v1175
        %v1177 = vrot.slane %v1176, 1
        %v1178 = vadd.f32 %v1176, %v1177
        %v1179 = vadd.f32 %v1100, %v1101
        %v1180 = vadd.f32 %v1179, %v1102
        %v1181 = vadd.f32 %v1180, %v1103
        %v1182 = vadd.f32 %v1181, %v1104
        %v1183 = vadd.f32 %v1182, %v1105
        %v1184 = vadd.f32 %v1183, %v1106
        %v1185 = vadd.f32 %v1184, %v1107
        %v1186 = vrot.slane %v1185, 4
        %v1187 = vadd.f32 %v1185, %v1186
        %v1188 = vrot.slane %v1187, 2
        %v1189 = vadd.f32 %v1187, %v1188
        %v1190 = vrot.slane %v1189, 1
        %v1191 = vadd.f32 %v1189, %v1190
        %v1192 = vadd.f32 %v1108, %v1109
        %v1193 = vadd.f32 %v1192, %v1110
        %v1194 = vadd.f32 %v1193, %v1111
        %v1195 = vadd.f32 %v1194, %v1112
        %v1196 = vadd.f32 %v1195, %v1113
        %v1197 = vadd.f32 %v1196, %v1114
        %v1198 = vadd.f32 %v1197, %v1115
        %v1199 = vrot.slane %v1198, 4
        %v1200 = vadd.f32 %v1198, %v1199
        %v1201 = vrot.slane %v1200, 2
        %v1202 = vadd.f32 %v1200, %v1201
        %v1203 = vrot.slane %v1202, 1
        %v1204 = vadd.f32 %v1202, %v1203
        %v1205 = vadd.f32 %v1116, %v1117
        %v1206 = vadd.f32 %v1205, %v1118
        %v1207 = vadd.f32 %v1206, %v1119
        %v1208 = vadd.f32 %v1207, %v1120
        %v1209 = vadd.f32 %v1208, %v1121
        %v1210 = vadd.f32 %v1209, %v1122
        %v1211 = vadd.f32 %v1210, %v1123
        %v1212 = vrot.slane %v1211, 4
        %v1213 = vadd.f32 %v1211, %v1212
        %v1214 = vrot.slane %v1213, 2
        %v1215 = vadd.f32 %v1213, %v1214
        %v1216 = vrot.slane %v1215, 1
        %v1217 = vadd.f32 %v1215, %v1216
        %v1218 = vadd.f32 %v1124, %v1125
        %v1219 = vadd.f32 %v1218, %v1126
        %v1220 = vadd.f32 %v1219, %v1127
        %v1221 = vadd.f32 %v1220, %v1128
        %v1222 = vadd.f32 %v1221, %v1129
        %v1223 = vadd.f32 %v1222, %v1130
        %v1224 = vadd.f32 %v1223, %v1131
        %v1225 = vrot.slane %v1224, 4
        %v1226 = vadd.f32 %v1224, %v1225
        %v1227 = vrot.slane %v1226, 2
        %v1228 = vadd.f32 %v1226, %v1227
        %v1229 = vrot.slane %v1228, 1
        %v1230 = vadd.f32 %v1228, %v1229
        %v1231 = vadd.f32 %v1132, %v1133
        %v1232 = vadd.f32 %v1231, %v1134
        %v1233 = vadd.f32 %v1232, %v1135
        %v1234 = vadd.f32 %v1233, %v1136
        %v1235 = vadd.f32 %v1234, %v1137
        %v1236 = vadd.f32 %v1235, %v1138
        %v1237 = vadd.f32 %v1236, %v1139
        %v1238 = vrot.slane %v1237, 4
        %v1239 = vadd.f32 %v1237, %v1238
        %v1240 = vrot.slane %v1239, 2
        %v1241 = vadd.f32 %v1239, %v1240
        %v1242 = vrot.slane %v1241, 1
        %v1243 = vadd.f32 %v1241, %v1242
        %v1244 = vrcp.pop 64.0
        %v1245 = vmul.f32 %v1152, %v1244
        %v1246 = vmul.f32 %v1165, %v1244
        %v1247 = vmul.f32 %v1178, %v1244
        %v1248 = vmul.f32 %v1191, %v1244
        %v1249 = vmul.f32 %v1204, %v1244
        %v1250 = vmul.f32 %v1217, %v1244
        %v1251 = vmul.f32 %v1230, %v1244
        %v1252 = vmul.f32 %v1243, %v1244
        %v1253 = vpack.c.bf16 %v1245, %v1245
        %v1254 = vpack.c.bf16 %v1246, %v1246
        %v1255 = vpack.c.bf16 %v1247, %v1247
        %v1256 = vpack.c.bf16 %v1248, %v1248
        %v1257 = vpack.c.bf16 %v1249, %v1249
        %v1258 = vpack.c.bf16 %v1250, %v1250
        %v1259 = vpack.c.bf16 %v1251, %v1251
        %v1260 = vpack.c.bf16 %v1252, %v1252
        %v1261 = vld [vmem:[%s3] sm:$0xff]
        %v1262 = vld [vmem:[%s3 + $0x8] sm:$0xff]
        %v1263 = vld [vmem:[%s3 + $0x10] sm:$0xff]
        %v1264 = vld [vmem:[%s3 + $0x18] sm:$0xff]
        %v1265 = vld [vmem:[%s3 + $0x20] sm:$0xff]
        %v1266 = vld [vmem:[%s3 + $0x28] sm:$0xff]
        %v1267 = vld [vmem:[%s3 + $0x30] sm:$0xff]
        %v1268 = vld [vmem:[%s3 + $0x38] sm:$0xff]
        %v1269 = vld [vmem:[%s3 + $0x40] sm:$0xff]
        %v1270 = vld [vmem:[%s3 + $0x48] sm:$0xff]
        %v1271 = vld [vmem:[%s3 + $0x50] sm:$0xff]
        %v1272 = vld [vmem:[%s3 + $0x58] sm:$0xff]
        %v1273 = vld [vmem:[%s3 + $0x60] sm:$0xff]
        %v1274 = vld [vmem:[%s3 + $0x68] sm:$0xff]
        %v1275 = vld [vmem:[%s3 + $0x70] sm:$0xff]
        %v1276 = vld [vmem:[%s3 + $0x78] sm:$0xff]
        %v1277 = vpack.c.bf16 %v1262, %v1261
        %v1278 = vpack.c.bf16 %v1264, %v1263
        %v1279 = vpack.c.bf16 %v1266, %v1265
        %v1280 = vpack.c.bf16 %v1268, %v1267
        %v1281 = vpack.c.bf16 %v1270, %v1269
        %v1282 = vpack.c.bf16 %v1272, %v1271
        %v1283 = vpack.c.bf16 %v1274, %v1273
        %v1284 = vpack.c.bf16 %v1276, %v1275
        %v1285 = vld [vmem:[%s4] sm:$0x1]
        %v1287 = vlaneseq
        %v1288 = vshrl.u32 %v1287, 7
        %v1289 = vsub.s32 0, %v1288
        %v1290 = vrot.slane %v1285, %v1289
        %v1300 = vunpack.c.l.b16 %v1253
        %v1301 = vunpack.c.l.b16 %v1254
        %v1302 = vunpack.c.l.b16 %v1255
        %v1303 = vunpack.c.l.b16 %v1256
        %v1304 = vunpack.c.l.b16 %v1257
        %v1305 = vunpack.c.l.b16 %v1258
        %v1306 = vunpack.c.l.b16 %v1259
        %v1307 = vunpack.c.l.b16 %v1260
        %vm1308 = vcmask 1041409
        %v1309 = vsel %vm1308, %v1301, %v1300
        %vm1310 = vcmask 1042434
        %v1311 = vsel %vm1310, %v1302, %v1309
        %vm1312 = vcmask 1043459
        %v1313 = vsel %vm1312, %v1303, %v1311
        %vm1314 = vcmask 1044484
        %v1315 = vsel %vm1314, %v1304, %v1313
        %vm1316 = vcmask 1045509
        %v1317 = vsel %vm1316, %v1305, %v1315
        %vm1318 = vcmask 1046534
        %v1319 = vsel %vm1318, %v1306, %v1317
        %vm1320 = vcmask 1047559
        %v1321 = vsel %vm1320, %v1307, %v1319
        %v1322 = vpack.c.b16 %v1321, %v1321
        %1324 = vmatprep.subr.bf16.mxu0 0
        %1325 = vmatpush1.bf16.msra.mxu0 %v1277
        %1326 = vmatprep.subr.bf16.mxu0 0
        %1327 = vmatpush1.bf16.msra.mxu0 %v1278
        %1328 = vmatprep.subr.bf16.mxu0 0
        %1329 = vmatpush1.bf16.msra.mxu0 %v1279
        %1330 = vmatprep.subr.bf16.mxu0 0
        %1331 = vmatpush1.bf16.msra.mxu0 %v1280
        %1332 = vmatprep.subr.bf16.mxu0 0
        %1333 = vmatpush1.bf16.msra.mxu0 %v1281
        %1334 = vmatprep.subr.bf16.mxu0 0
        %1335 = vmatpush1.bf16.msra.mxu0 %v1282
        %1336 = vmatprep.subr.bf16.mxu0 0
        %1337 = vmatpush1.bf16.msra.mxu0 %v1283
        %1338 = vmatprep.subr.bf16.mxu0 0
        %1339 = vmatpush1.bf16.msra.mxu0 %v1284
        %1340 = vmatprep.subr.bf16.mxu0 0
        %1341 = vmatpush1.bf16.msra.mxu0 0
        %1342 = vmatprep.subr.bf16.mxu0 0
        %1343 = vmatpush1.bf16.msra.mxu0 0
        %1344 = vmatprep.subr.bf16.mxu0 0
        %1345 = vmatpush1.bf16.msra.mxu0 0
        %1346 = vmatprep.subr.bf16.mxu0 0
        %1347 = vmatpush1.bf16.msra.mxu0 0
        %1348 = vmatprep.subr.bf16.mxu0 0
        %1349 = vmatpush1.bf16.msra.mxu0 0
        %1350 = vmatprep.subr.bf16.mxu0 0
        %1351 = vmatpush1.bf16.msra.mxu0 0
        %1352 = vmatprep.subr.bf16.mxu0 0
        %1353 = vmatpush1.bf16.msra.mxu0 0
        %1354 = vmatprep.subr.bf16.mxu0 0
        %1355 = vmatpush1.bf16.msra.mxu0 0
        %1356 = vmatprep.mubr.bf16.mxu0 0
        %1357 = vmatmul.mubr.bf16.gmra.mrb[0].mxu0 %v1322
        %v1358 = vpop.f32.mrb[0].mxu0
        %v1359 = vadd.f32 %v1290, %v1358
        %v1360 = vpop.f32.mrb[0].mxu0
        %v1361 = vpop.f32.mrb[0].mxu0
        %v1362 = vpop.f32.mrb[0].mxu0
        %1363 = vdwg.mxu0
        %vm1364 = vcmask 130048
        %1365 = vst.msk [vmem:[%s220] sm:$0xff] %vm1364, %v1359
        %s1366 = sand.u32 %s137, 1
        %s1367 = scalar_lea.sflag [#allocation3], %s1366
        %s1368 = sand.u32 %s137, 1
        %s1369 = smul.addr %s1368, 8
        %s1370 = scalar_lea.vmem [#allocation2], %s1369
        // Predicated region
        $region41: #{_lambda_.5} parent=39 // pred_check
          %p1371 = pneg %p147
        $region42: #{_lambda_.5} parent=39 // pred_check_branch
          %1373 = sbr.rel (%p1371) target = $region44
        $region43: #{_lambda_.5} parent=39 // pred_region
          %s1375 = ssub.s32 128, 128
          %1376 = vsyncadd %s1367, %s1375
          %s1377 = smul.addr %s19, 128
          %s1378 = scalar_lea.hbm %s5, %s1377
          %s1380 = sshll.u32 %s1370, 4
          %s1381 = int_to_ptr.vmem [resolvable:$true] %s1380
          %1383 = dma.vmem_to_hbm [thread:$0]  %s1381, 128, %s1378, %s1367
        $region44: #{_lambda_.5} parent=39 // pred_fallthru
          _
      $region40: #{_lambda_.5} parent=5 // pred_fallthru
        _
      %p1384 = scmp.le.s32.totalorder 2, %s14
      // Predicated region
      $region45: #{_lambda_.5} parent=5 // pred_check
        %p1385 = pneg %p1384
      $region46: #{_lambda_.5} parent=5 // pred_check_branch
        %1387 = sbr.rel (%p1385) target = $region48
      $region47: #{_lambda_.5} parent=5 // pred_region
        %s1388 = ssub.s32 %s14, 2
        // Predicated region
        $region49: #{_lambda_.5} parent=47 // pred_check
          %p1389 = pneg %p153
        $region50: #{_lambda_.5} parent=47 // pred_check_branch
          %1391 = sbr.rel (%p1389) target = $region52
        $region51: #{_lambda_.5} parent=47 // pred_region
          %s1392 = sand.u32 %s138, 1
          %s1393 = scalar_lea.sflag [#allocation3], %s1392
          %s1394 = sand.u32 %s138, 1
          %s1395 = smul.addr %s1394, 8
          %s1396 = scalar_lea.vmem [#allocation2], %s1395
          %1397 = dma.done %s1393, 128
        $region52: #{_lambda_.5} parent=47 // pred_fallthru
          _
      $region48: #{_lambda_.5} parent=5 // pred_fallthru
        _
    $region6: #{_lambda_.5} parent=1 // loop_footer
      %s18 = sadd.s32 1, %s14
    $region7: #{_lambda_.5} parent=1 // loop_footer_branch
      %13 = sbr.rel target = $region3
    $region8: #{_lambda_.5} parent=1 // loop_exit
      _
    %1398 = vsyncpa [#allocation3], 1
    %s1399 = scalar_lea.sflag [#allocation3], 1
    %1400 = vsyncpa %s1399, 1

// kernel: _lambda_.4
$region0: #{_lambda_.4}
  #allocation0 [shape = 'u32[]', space=smem, size = 0x4, offset = 0x4, fixed_abs, tag = 'smem constant byte address 0x4 - core index']
  #allocation1 [shape = 'u32[144,128]{1,0:T(1,128)}', space=vmem, size = 0x12000, scoped, tag = 'internal scratch']
  %s0 = inlined_call_operand.vmem [shape: f32[16,64,128], index: 0, kind: input, shape index: {}]
  %s1 = inlined_call_operand.vmem [shape: f32[4,1,128], index: 1, kind: input, shape index: {}, may-alias: {1,7}]
  %s2 = inlined_call_operand.vmem [shape: f32[4,1,128], index: 2, kind: input, shape index: {}, may-alias: {2,8}]
  %s3 = inlined_call_operand.vmem [shape: f32[4,64,64], index: 3, kind: input, shape index: {}]
  %s4 = inlined_call_operand.vmem [shape: f32[4,64,1], index: 4, kind: input, shape index: {}]
  %s5 = inlined_call_operand.vmem [shape: f32[4,64,64], index: 5, kind: input, shape index: {}]
  %s6 = inlined_call_operand.vmem [shape: f32[4,64,1], index: 6, kind: input, shape index: {}]
  %s7 = inlined_call_operand.vmem [shape: f32[4,1,128], index: 7, kind: input, shape index: {}, may-alias: {1,7}]
  %s8 = inlined_call_operand.vmem [shape: f32[4,1,128], index: 8, kind: input, shape index: {}, may-alias: {2,8}]
  %s9 = inlined_call_operand.vmem [shape: f32[4,128,256], index: 9, kind: input, shape index: {}]
  %s10 = inlined_call_operand.vmem [shape: f32[4,1,256], index: 10, kind: input, shape index: {}]
  %s11 = inlined_call_operand.vmem [shape: f32[4,256,128], index: 11, kind: input, shape index: {}]
  %s12 = inlined_call_operand.vmem [shape: f32[4,1,128], index: 12, kind: input, shape index: {}]
  %s13 = inlined_call_operand.vmem [shape: f32[16,64,128], index: 13, kind: output, shape index: {}]
  %s14 = sld [smem:[#allocation0]]
  $region89: #{_lambda_.4} parent=0
    _
  %s16 = ssub.s32 1, %s14
  %s17 = scalar_select 0, %s16, %s14
  loop: start=0, step=1, limit=10
  $region2: #{_lambda_.4} parent=0 // loop_pre_header
    _
  $region3: #{_lambda_.4} parent=0 // loop_header
    %s19 = sphi 0, %s23
    %p20 = scmp.ge.s32.totalorder %s19, 10
    %s26 = sphi 0, %s38
    %s27 = sphi 0, %s34
    %s28 = sphi 0, %s26
    %s29 = sphi 0, %s27
    %s30 = sphi 0, %s28
    %s31 = sphi 0, %s29
    %s41 = sphi 0, %s43
    %s44 = sphi 0, %s41
    %s45 = sphi 0, %s44
    %s61 = sphi 0, %s45
    %s67 = sphi 0, %s69
    %s70 = sphi 0, %s67
    %s71 = sphi 0, %s70
    %s87 = sphi 0, %s71
    %s93 = sphi 0, %s95
    %s96 = sphi 0, %s93
    %s97 = sphi 0, %s96
    %s113 = sphi 0, %s97
    %s119 = sphi 0, %s121
    %s122 = sphi 0, %s119
    %s123 = sphi 0, %s122
    %s139 = sphi 0, %s123
    %s145 = sphi 0, %s147
    %s148 = sphi 0, %s145
    %s149 = sphi 0, %s148
    %s165 = sphi 0, %s149
    %s171 = sphi 0, %s173
    %s174 = sphi 0, %s171
    %s175 = sphi 0, %s174
    %s191 = sphi 0, %s175
    %s197 = sphi 0, %s199
    %s200 = sphi 0, %s197
    %s201 = sphi 0, %s200
    %s217 = sphi 0, %s201
    %s223 = sphi 0, %s225
    %s226 = sphi 0, %s223
    %s227 = sphi 0, %s226
    %s243 = sphi 0, %s227
    %s249 = sphi 0, %s251
    %s252 = sphi 0, %s249
    %s253 = sphi 0, %s252
    %s269 = sphi 0, %s253
    %s275 = sphi 0, %s277
    %s278 = sphi 0, %s275
    %s279 = sphi 0, %s278
    %s295 = sphi 0, %s279
    %s301 = sphi 0, %s303
    %s304 = sphi 0, %s301
    %s305 = sphi 0, %s304
    %s321 = sphi 0, %s305
    %s327 = sphi 0, %s329
    %s330 = sphi 0, %s327
    %s331 = sphi 0, %s330
    %s347 = sphi 0, %s331
    %s353 = sphi 0, %s355
    %s356 = sphi 0, %s353
    %s357 = sphi 0, %s356
    %s373 = sphi 0, %s357
    %s379 = sphi 0, %s381
    %s382 = sphi 0, %s379
    %s383 = sphi 0, %s382
    %s399 = sphi 0, %s383
  $region4: #{_lambda_.4} parent=0 // loop_header_branch
    %22 = sbr.rel (%p20) target = $region8
  $region5: #{_lambda_.4} parent=0 // loop_body
    %s24 = ssub.s32 %s19, 1
    %s25 = ssub.s32 %s19, 2
    %s32 = sadd.s32 1, %s27
    %p33 = scmp.ge.s32.totalorder %s32, 4
    %s34 = scalar_select %p33, 0, %s32
    %s35 = sadd.s32 1, %s26
    %s36 = scalar_select %p33, %s35, %s26
    %p37 = scmp.ge.s32.totalorder %s36, 2
    %s38 = scalar_select %p37, 0, %s36
    %s39 = ssub.s32 %s26, %s38
    %p40 = scmp.eq.s32.totalorder %s39, 0
    %s42 = sadd.s32 %s41, 1
    %s43 = scalar_select %p40, %s41, %s42
    %p46 = pneg %p40
    %p47 = scmp.eq.s32.totalorder %s19, 7
    %p48 = por %p46, %p47
    %p49 = scmp.ne.s32.totalorder %s41, %s44
    %p50 = scmp.eq.s32.totalorder %s19, 0
    %p51 = por %p49, %p50
    %p52 = scmp.ne.s32.totalorder %s41, %s44
    %p53 = scmp.eq.s32.totalorder %s24, 7
    %p54 = por %p52, %p53
    %p55 = scmp.ne.s32.totalorder %s44, %s45
    %p56 = scmp.eq.s32.totalorder %s24, 0
    %p57 = por %p55, %p56
    %p58 = scmp.ne.s32.totalorder %s44, %s45
    %p59 = scmp.eq.s32.totalorder %s25, 7
    %p60 = por %p58, %p59
    %p62 = scmp.ne.s32.totalorder %s45, %s61
    %p63 = scmp.eq.s32.totalorder %s25, 0
    %p64 = por %p62, %p63
    %s65 = ssub.s32 %s27, %s34
    %p66 = scmp.eq.s32.totalorder %s65, 0
    %s68 = sadd.s32 %s67, 1
    %s69 = scalar_select %p66, %s67, %s68
    %p72 = pneg %p66
    %p73 = scmp.eq.s32.totalorder %s19, 7
    %p74 = por %p72, %p73
    %p75 = scmp.ne.s32.totalorder %s67, %s70
    %p76 = scmp.eq.s32.totalorder %s19, 0
    %p77 = por %p75, %p76
    %p78 = scmp.ne.s32.totalorder %s67, %s70
    %p79 = scmp.eq.s32.totalorder %s24, 7
    %p80 = por %p78, %p79
    %p81 = scmp.ne.s32.totalorder %s70, %s71
    %p82 = scmp.eq.s32.totalorder %s24, 0
    %p83 = por %p81, %p82
    %p84 = scmp.ne.s32.totalorder %s70, %s71
    %p85 = scmp.eq.s32.totalorder %s25, 7
    %p86 = por %p84, %p85
    %p88 = scmp.ne.s32.totalorder %s71, %s87
    %p89 = scmp.eq.s32.totalorder %s25, 0
    %p90 = por %p88, %p89
    %s91 = ssub.s32 %s27, %s34
    %p92 = scmp.eq.s32.totalorder %s91, 0
    %s94 = sadd.s32 %s93, 1
    %s95 = scalar_select %p92, %s93, %s94
    %p98 = pneg %p92
    %p99 = scmp.eq.s32.totalorder %s19, 7
    %p100 = por %p98, %p99
    %p101 = scmp.ne.s32.totalorder %s93, %s96
    %p102 = scmp.eq.s32.totalorder %s19, 0
    %p103 = por %p101, %p102
    %p104 = scmp.ne.s32.totalorder %s93, %s96
    %p105 = scmp.eq.s32.totalorder %s24, 7
    %p106 = por %p104, %p105
    %p107 = scmp.ne.s32.totalorder %s96, %s97
    %p108 = scmp.eq.s32.totalorder %s24, 0
    %p109 = por %p107, %p108
    %p110 = scmp.ne.s32.totalorder %s96, %s97
    %p111 = scmp.eq.s32.totalorder %s25, 7
    %p112 = por %p110, %p111
    %p114 = scmp.ne.s32.totalorder %s97, %s113
    %p115 = scmp.eq.s32.totalorder %s25, 0
    %p116 = por %p114, %p115
    %s117 = ssub.s32 %s27, %s34
    %p118 = scmp.eq.s32.totalorder %s117, 0
    %s120 = sadd.s32 %s119, 1
    %s121 = scalar_select %p118, %s119, %s120
    %p124 = pneg %p118
    %p125 = scmp.eq.s32.totalorder %s19, 7
    %p126 = por %p124, %p125
    %p127 = scmp.ne.s32.totalorder %s119, %s122
    %p128 = scmp.eq.s32.totalorder %s19, 0
    %p129 = por %p127, %p128
    %p130 = scmp.ne.s32.totalorder %s119, %s122
    %p131 = scmp.eq.s32.totalorder %s24, 7
    %p132 = por %p130, %p131
    %p133 = scmp.ne.s32.totalorder %s122, %s123
    %p134 = scmp.eq.s32.totalorder %s24, 0
    %p135 = por %p133, %p134
    %p136 = scmp.ne.s32.totalorder %s122, %s123
    %p137 = scmp.eq.s32.totalorder %s25, 7
    %p138 = por %p136, %p137
    %p140 = scmp.ne.s32.totalorder %s123, %s139
    %p141 = scmp.eq.s32.totalorder %s25, 0
    %p142 = por %p140, %p141
    %s143 = ssub.s32 %s27, %s34
    %p144 = scmp.eq.s32.totalorder %s143, 0
    %s146 = sadd.s32 %s145, 1
    %s147 = scalar_select %p144, %s145, %s146
    %p150 = pneg %p144
    %p151 = scmp.eq.s32.totalorder %s19, 7
    %p152 = por %p150, %p151
    %p153 = scmp.ne.s32.totalorder %s145, %s148
    %p154 = scmp.eq.s32.totalorder %s19, 0
    %p155 = por %p153, %p154
    %p156 = scmp.ne.s32.totalorder %s145, %s148
    %p157 = scmp.eq.s32.totalorder %s24, 7
    %p158 = por %p156, %p157
    %p159 = scmp.ne.s32.totalorder %s148, %s149
    %p160 = scmp.eq.s32.totalorder %s24, 0
    %p161 = por %p159, %p160
    %p162 = scmp.ne.s32.totalorder %s148, %s149
    %p163 = scmp.eq.s32.totalorder %s25, 7
    %p164 = por %p162, %p163
    %p166 = scmp.ne.s32.totalorder %s149, %s165
    %p167 = scmp.eq.s32.totalorder %s25, 0
    %p168 = por %p166, %p167
    %s169 = ssub.s32 %s27, %s34
    %p170 = scmp.eq.s32.totalorder %s169, 0
    %s172 = sadd.s32 %s171, 1
    %s173 = scalar_select %p170, %s171, %s172
    %p176 = pneg %p170
    %p177 = scmp.eq.s32.totalorder %s19, 7
    %p178 = por %p176, %p177
    %p179 = scmp.ne.s32.totalorder %s171, %s174
    %p180 = scmp.eq.s32.totalorder %s19, 0
    %p181 = por %p179, %p180
    %p182 = scmp.ne.s32.totalorder %s171, %s174
    %p183 = scmp.eq.s32.totalorder %s24, 7
    %p184 = por %p182, %p183
    %p185 = scmp.ne.s32.totalorder %s174, %s175
    %p186 = scmp.eq.s32.totalorder %s24, 0
    %p187 = por %p185, %p186
    %p188 = scmp.ne.s32.totalorder %s174, %s175
    %p189 = scmp.eq.s32.totalorder %s25, 7
    %p190 = por %p188, %p189
    %p192 = scmp.ne.s32.totalorder %s175, %s191
    %p193 = scmp.eq.s32.totalorder %s25, 0
    %p194 = por %p192, %p193
    %s195 = ssub.s32 %s27, %s34
    %p196 = scmp.eq.s32.totalorder %s195, 0
    %s198 = sadd.s32 %s197, 1
    %s199 = scalar_select %p196, %s197, %s198
    %p202 = pneg %p196
    %p203 = scmp.eq.s32.totalorder %s19, 7
    %p204 = por %p202, %p203
    %p205 = scmp.ne.s32.totalorder %s197, %s200
    %p206 = scmp.eq.s32.totalorder %s19, 0
    %p207 = por %p205, %p206
    %p208 = scmp.ne.s32.totalorder %s197, %s200
    %p209 = scmp.eq.s32.totalorder %s24, 7
    %p210 = por %p208, %p209
    %p211 = scmp.ne.s32.totalorder %s200, %s201
    %p212 = scmp.eq.s32.totalorder %s24, 0
    %p213 = por %p211, %p212
    %p214 = scmp.ne.s32.totalorder %s200, %s201
    %p215 = scmp.eq.s32.totalorder %s25, 7
    %p216 = por %p214, %p215
    %p218 = scmp.ne.s32.totalorder %s201, %s217
    %p219 = scmp.eq.s32.totalorder %s25, 0
    %p220 = por %p218, %p219
    %s221 = ssub.s32 %s27, %s34
    %p222 = scmp.eq.s32.totalorder %s221, 0
    %s224 = sadd.s32 %s223, 1
    %s225 = scalar_select %p222, %s223, %s224
    %p228 = pneg %p222
    %p229 = scmp.eq.s32.totalorder %s19, 7
    %p230 = por %p228, %p229
    %p231 = scmp.ne.s32.totalorder %s223, %s226
    %p232 = scmp.eq.s32.totalorder %s19, 0
    %p233 = por %p231, %p232
    %p234 = scmp.ne.s32.totalorder %s223, %s226
    %p235 = scmp.eq.s32.totalorder %s24, 7
    %p236 = por %p234, %p235
    %p237 = scmp.ne.s32.totalorder %s226, %s227
    %p238 = scmp.eq.s32.totalorder %s24, 0
    %p239 = por %p237, %p238
    %p240 = scmp.ne.s32.totalorder %s226, %s227
    %p241 = scmp.eq.s32.totalorder %s25, 7
    %p242 = por %p240, %p241
    %p244 = scmp.ne.s32.totalorder %s227, %s243
    %p245 = scmp.eq.s32.totalorder %s25, 0
    %p246 = por %p244, %p245
    %s247 = ssub.s32 %s27, %s34
    %p248 = scmp.eq.s32.totalorder %s247, 0
    %s250 = sadd.s32 %s249, 1
    %s251 = scalar_select %p248, %s249, %s250
    %p254 = pneg %p248
    %p255 = scmp.eq.s32.totalorder %s19, 7
    %p256 = por %p254, %p255
    %p257 = scmp.ne.s32.totalorder %s249, %s252
    %p258 = scmp.eq.s32.totalorder %s19, 0
    %p259 = por %p257, %p258
    %p260 = scmp.ne.s32.totalorder %s249, %s252
    %p261 = scmp.eq.s32.totalorder %s24, 7
    %p262 = por %p260, %p261
    %p263 = scmp.ne.s32.totalorder %s252, %s253
    %p264 = scmp.eq.s32.totalorder %s24, 0
    %p265 = por %p263, %p264
    %p266 = scmp.ne.s32.totalorder %s252, %s253
    %p267 = scmp.eq.s32.totalorder %s25, 7
    %p268 = por %p266, %p267
    %p270 = scmp.ne.s32.totalorder %s253, %s269
    %p271 = scmp.eq.s32.totalorder %s25, 0
    %p272 = por %p270, %p271
    %s273 = ssub.s32 %s27, %s34
    %p274 = scmp.eq.s32.totalorder %s273, 0
    %s276 = sadd.s32 %s275, 1
    %s277 = scalar_select %p274, %s275, %s276
    %p280 = pneg %p274
    %p281 = scmp.eq.s32.totalorder %s19, 7
    %p282 = por %p280, %p281
    %p283 = scmp.ne.s32.totalorder %s275, %s278
    %p284 = scmp.eq.s32.totalorder %s19, 0
    %p285 = por %p283, %p284
    %p286 = scmp.ne.s32.totalorder %s275, %s278
    %p287 = scmp.eq.s32.totalorder %s24, 7
    %p288 = por %p286, %p287
    %p289 = scmp.ne.s32.totalorder %s278, %s279
    %p290 = scmp.eq.s32.totalorder %s24, 0
    %p291 = por %p289, %p290
    %p292 = scmp.ne.s32.totalorder %s278, %s279
    %p293 = scmp.eq.s32.totalorder %s25, 7
    %p294 = por %p292, %p293
    %p296 = scmp.ne.s32.totalorder %s279, %s295
    %p297 = scmp.eq.s32.totalorder %s25, 0
    %p298 = por %p296, %p297
    %s299 = ssub.s32 %s27, %s34
    %p300 = scmp.eq.s32.totalorder %s299, 0
    %s302 = sadd.s32 %s301, 1
    %s303 = scalar_select %p300, %s301, %s302
    %p306 = pneg %p300
    %p307 = scmp.eq.s32.totalorder %s19, 7
    %p308 = por %p306, %p307
    %p309 = scmp.ne.s32.totalorder %s301, %s304
    %p310 = scmp.eq.s32.totalorder %s19, 0
    %p311 = por %p309, %p310
    %p312 = scmp.ne.s32.totalorder %s301, %s304
    %p313 = scmp.eq.s32.totalorder %s24, 7
    %p314 = por %p312, %p313
    %p315 = scmp.ne.s32.totalorder %s304, %s305
    %p316 = scmp.eq.s32.totalorder %s24, 0
    %p317 = por %p315, %p316
    %p318 = scmp.ne.s32.totalorder %s304, %s305
    %p319 = scmp.eq.s32.totalorder %s25, 7
    %p320 = por %p318, %p319
    %p322 = scmp.ne.s32.totalorder %s305, %s321
    %p323 = scmp.eq.s32.totalorder %s25, 0
    %p324 = por %p322, %p323
    %s325 = ssub.s32 %s27, %s34
    %p326 = scmp.eq.s32.totalorder %s325, 0
    %s328 = sadd.s32 %s327, 1
    %s329 = scalar_select %p326, %s327, %s328
    %p332 = pneg %p326
    %p333 = scmp.eq.s32.totalorder %s19, 7
    %p334 = por %p332, %p333
    %p335 = scmp.ne.s32.totalorder %s327, %s330
    %p336 = scmp.eq.s32.totalorder %s19, 0
    %p337 = por %p335, %p336
    %p338 = scmp.ne.s32.totalorder %s327, %s330
    %p339 = scmp.eq.s32.totalorder %s24, 7
    %p340 = por %p338, %p339
    %p341 = scmp.ne.s32.totalorder %s330, %s331
    %p342 = scmp.eq.s32.totalorder %s24, 0
    %p343 = por %p341, %p342
    %p344 = scmp.ne.s32.totalorder %s330, %s331
    %p345 = scmp.eq.s32.totalorder %s25, 7
    %p346 = por %p344, %p345
    %p348 = scmp.ne.s32.totalorder %s331, %s347
    %p349 = scmp.eq.s32.totalorder %s25, 0
    %p350 = por %p348, %p349
    %s351 = ssub.s32 %s27, %s34
    %p352 = scmp.eq.s32.totalorder %s351, 0
    %s354 = sadd.s32 %s353, 1
    %s355 = scalar_select %p352, %s353, %s354
    %p358 = pneg %p352
    %p359 = scmp.eq.s32.totalorder %s19, 7
    %p360 = por %p358, %p359
    %p361 = scmp.ne.s32.totalorder %s353, %s356
    %p362 = scmp.eq.s32.totalorder %s19, 0
    %p363 = por %p361, %p362
    %p364 = scmp.ne.s32.totalorder %s353, %s356
    %p365 = scmp.eq.s32.totalorder %s24, 7
    %p366 = por %p364, %p365
    %p367 = scmp.ne.s32.totalorder %s356, %s357
    %p368 = scmp.eq.s32.totalorder %s24, 0
    %p369 = por %p367, %p368
    %p370 = scmp.ne.s32.totalorder %s356, %s357
    %p371 = scmp.eq.s32.totalorder %s25, 7
    %p372 = por %p370, %p371
    %p374 = scmp.ne.s32.totalorder %s357, %s373
    %p375 = scmp.eq.s32.totalorder %s25, 0
    %p376 = por %p374, %p375
    %s377 = ssub.s32 %s26, %s38
    %p378 = scmp.eq.s32.totalorder %s377, 0
    %s380 = sadd.s32 %s379, 1
    %s381 = scalar_select %p378, %s379, %s380
    %p384 = pneg %p378
    %p385 = scmp.eq.s32.totalorder %s19, 7
    %p386 = por %p384, %p385
    %p387 = scmp.ne.s32.totalorder %s379, %s382
    %p388 = scmp.eq.s32.totalorder %s19, 0
    %p389 = por %p387, %p388
    %p390 = scmp.ne.s32.totalorder %s379, %s382
    %p391 = scmp.eq.s32.totalorder %s24, 7
    %p392 = por %p390, %p391
    %p393 = scmp.ne.s32.totalorder %s382, %s383
    %p394 = scmp.eq.s32.totalorder %s24, 0
    %p395 = por %p393, %p394
    %p396 = scmp.ne.s32.totalorder %s382, %s383
    %p397 = scmp.eq.s32.totalorder %s25, 7
    %p398 = por %p396, %p397
    %p400 = scmp.ne.s32.totalorder %s383, %s399
    %p401 = scmp.eq.s32.totalorder %s25, 0
    %p402 = por %p400, %p401
    %p403 = scmp.le.s32.totalorder 1, %s19
    %p404 = scmp.lt.s32.totalorder %s19, 9
    %p405 = pnand %p403, %p404
    %p406 = pneg %p405
    // Predicated region
    $region9: #{_lambda_.4} parent=5 // pred_check
      _
    $region10: #{_lambda_.4} parent=5 // pred_check_branch
      %408 = sbr.rel (%p405) target = $region12
    $region11: #{_lambda_.4} parent=5 // pred_region
      %s409 = ssub.s32 %s19, 1
    $region12: #{_lambda_.4} parent=5 // pred_fallthru
      _
    %p410 = scmp.lt.s32.totalorder %s19, 8
    // Predicated region
    $region13: #{_lambda_.4} parent=5 // pred_check
      %p411 = pneg %p410
    $region14: #{_lambda_.4} parent=5 // pred_check_branch
      %413 = sbr.rel (%p411) target = $region16
    $region15: #{_lambda_.4} parent=5 // pred_region
      // Predicated region
      $region17: #{_lambda_.4} parent=15 // pred_check
        %p414 = pneg %p51
      $region18: #{_lambda_.4} parent=15 // pred_check_branch
        %416 = sbr.rel (%p414) target = $region20
      $region19: #{_lambda_.4} parent=15 // pred_region
        %s417 = smul.u32 8, %s26
        %p418 = scmp.lt.s32.totalorder %s417, 15
        %s419 = scalar_select %p418, %s417, 15
        %s420 = smul.addr %s419, 8
        %s421 = smul.addr %s420, 8
        %s422 = scalar_lea.vmem %s0, %s421
        %s423 = smul.u32 8, %s26
      $region20: #{_lambda_.4} parent=15 // pred_fallthru
        _
      // Predicated region
      $region21: #{_lambda_.4} parent=15 // pred_check
        %p424 = pneg %p77
      $region22: #{_lambda_.4} parent=15 // pred_check_branch
        %426 = sbr.rel (%p424) target = $region24
      $region23: #{_lambda_.4} parent=15 // pred_region
        %p427 = scmp.lt.s32.totalorder %s27, 3
        %s428 = scalar_select %p427, %s27, 3
        %s429 = scalar_lea.vmem %s1, %s428
      $region24: #{_lambda_.4} parent=15 // pred_fallthru
        _
      // Predicated region
      $region25: #{_lambda_.4} parent=15 // pred_check
        %p430 = pneg %p103
      $region26: #{_lambda_.4} parent=15 // pred_check_branch
        %432 = sbr.rel (%p430) target = $region28
      $region27: #{_lambda_.4} parent=15 // pred_region
        %p433 = scmp.lt.s32.totalorder %s27, 3
        %s434 = scalar_select %p433, %s27, 3
        %s435 = scalar_lea.vmem %s2, %s434
      $region28: #{_lambda_.4} parent=15 // pred_fallthru
        _
      // Predicated region
      $region29: #{_lambda_.4} parent=15 // pred_check
        %p436 = pneg %p129
      $region30: #{_lambda_.4} parent=15 // pred_check_branch
        %438 = sbr.rel (%p436) target = $region32
      $region31: #{_lambda_.4} parent=15 // pred_region
        %p439 = scmp.lt.s32.totalorder %s27, 3
        %s440 = scalar_select %p439, %s27, 3
        %s441 = smul.addr %s440, 8
        %s442 = smul.addr %s441, 8
        %s443 = scalar_lea.vmem %s3, %s442
      $region32: #{_lambda_.4} parent=15 // pred_fallthru
        _
      // Predicated region
      $region33: #{_lambda_.4} parent=15 // pred_check
        %p444 = pneg %p155
      $region34: #{_lambda_.4} parent=15 // pred_check_branch
        %446 = sbr.rel (%p444) target = $region36
      $region35: #{_lambda_.4} parent=15 // pred_region
        %p447 = scmp.lt.s32.totalorder %s27, 3
        %s448 = scalar_select %p447, %s27, 3
        %s449 = smul.addr %s448, 8
        %s450 = smul.addr %s449, 8
        %s451 = scalar_lea.vmem %s4, %s450
      $region36: #{_lambda_.4} parent=15 // pred_fallthru
        _
      // Predicated region
      $region37: #{_lambda_.4} parent=15 // pred_check
        %p452 = pneg %p181
      $region38: #{_lambda_.4} parent=15 // pred_check_branch
        %454 = sbr.rel (%p452) target = $region40
      $region39: #{_lambda_.4} parent=15 // pred_region
        %p455 = scmp.lt.s32.totalorder %s27, 3
        %s456 = scalar_select %p455, %s27, 3
        %s457 = smul.addr %s456, 8
        %s458 = smul.addr %s457, 8
        %s459 = scalar_lea.vmem %s5, %s458
      $region40: #{_lambda_.4} parent=15 // pred_fallthru
        _
      // Predicated region
      $region41: #{_lambda_.4} parent=15 // pred_check
        %p460 = pneg %p207
      $region42: #{_lambda_.4} parent=15 // pred_check_branch
        %462 = sbr.rel (%p460) target = $region44
      $region43: #{_lambda_.4} parent=15 // pred_region
        %p463 = scmp.lt.s32.totalorder %s27, 3
        %s464 = scalar_select %p463, %s27, 3
        %s465 = smul.addr %s464, 8
        %s466 = smul.addr %s465, 8
        %s467 = scalar_lea.vmem %s6, %s466
      $region44: #{_lambda_.4} parent=15 // pred_fallthru
        _
      // Predicated region
      $region45: #{_lambda_.4} parent=15 // pred_check
        %p468 = pneg %p233
      $region46: #{_lambda_.4} parent=15 // pred_check_branch
        %470 = sbr.rel (%p468) target = $region48
      $region47: #{_lambda_.4} parent=15 // pred_region
        %p471 = scmp.lt.s32.totalorder %s27, 3
        %s472 = scalar_select %p471, %s27, 3
        %s473 = scalar_lea.vmem %s7, %s472
      $region48: #{_lambda_.4} parent=15 // pred_fallthru
        _
      // Predicated region
      $region49: #{_lambda_.4} parent=15 // pred_check
        %p474 = pneg %p259
      $region50: #{_lambda_.4} parent=15 // pred_check_branch
        %476 = sbr.rel (%p474) target = $region52
      $region51: #{_lambda_.4} parent=15 // pred_region
        %p477 = scmp.lt.s32.totalorder %s27, 3
        %s478 = scalar_select %p477, %s27, 3
        %s479 = scalar_lea.vmem %s8, %s478
      $region52: #{_lambda_.4} parent=15 // pred_fallthru
        _
      // Predicated region
      $region53: #{_lambda_.4} parent=15 // pred_check
        %p480 = pneg %p285
      $region54: #{_lambda_.4} parent=15 // pred_check_branch
        %482 = sbr.rel (%p480) target = $region56
      $region55: #{_lambda_.4} parent=15 // pred_region
        %p483 = scmp.lt.s32.totalorder %s27, 3
        %s484 = scalar_select %p483, %s27, 3
        %s485 = smul.addr %s484, 32
        %s486 = smul.addr %s485, 8
        %s487 = scalar_lea.vmem %s9, %s486
      $region56: #{_lambda_.4} parent=15 // pred_fallthru
        _
      // Predicated region
      $region57: #{_lambda_.4} parent=15 // pred_check
        %p488 = pneg %p311
      $region58: #{_lambda_.4} parent=15 // pred_check_branch
        %490 = sbr.rel (%p488) target = $region60
      $region59: #{_lambda_.4} parent=15 // pred_region
        %p491 = scmp.lt.s32.totalorder %s27, 3
        %s492 = scalar_select %p491, %s27, 3
        %s493 = smul.addr %s492, 2
        %s494 = scalar_lea.vmem %s10, %s493
      $region60: #{_lambda_.4} parent=15 // pred_fallthru
        _
      // Predicated region
      $region61: #{_lambda_.4} parent=15 // pred_check
        %p495 = pneg %p337
      $region62: #{_lambda_.4} parent=15 // pred_check_branch
        %497 = sbr.rel (%p495) target = $region64
      $region63: #{_lambda_.4} parent=15 // pred_region
        %p498 = scmp.lt.s32.totalorder %s27, 3
        %s499 = scalar_select %p498, %s27, 3
        %s500 = smul.addr %s499, 32
        %s501 = smul.addr %s500, 8
        %s502 = scalar_lea.vmem %s11, %s501
      $region64: #{_lambda_.4} parent=15 // pred_fallthru
        _
      // Predicated region
      $region65: #{_lambda_.4} parent=15 // pred_check
        %p503 = pneg %p363
      $region66: #{_lambda_.4} parent=15 // pred_check_branch
        %505 = sbr.rel (%p503) target = $region68
      $region67: #{_lambda_.4} parent=15 // pred_region
        %p506 = scmp.lt.s32.totalorder %s27, 3
        %s507 = scalar_select %p506, %s27, 3
        %s508 = scalar_lea.vmem %s12, %s507
      $region68: #{_lambda_.4} parent=15 // pred_fallthru
        _
    $region16: #{_lambda_.4} parent=5 // pred_fallthru
      _
    %p509 = scmp.le.s32.totalorder 1, %s19
    %p510 = scmp.lt.s32.totalorder %s19, 9
    %p511 = pnand %p509, %p510
    %p512 = pneg %p511
    // Predicated region
    $region69: #{_lambda_.4} parent=5 // pred_check
      _
    $region70: #{_lambda_.4} parent=5 // pred_check_branch
      %514 = sbr.rel (%p511) target = $region72
    $region71: #{_lambda_.4} parent=5 // pred_region
      %s515 = ssub.s32 %s19, 1
      %s516 = smul.u32 8, %s28
      %p517 = scmp.lt.s32.totalorder %s516, 15
      %s518 = scalar_select %p517, %s516, 15
      %s519 = smul.addr %s518, 8
      %s520 = smul.addr %s519, 8
      %s521 = scalar_lea.vmem %s0, %s520
      %p522 = pneg %p57
      %p523 = pneg %p54
      %p524 = scmp.lt.s32.totalorder %s29, 3
      %s525 = scalar_select %p524, %s29, 3
      %s526 = scalar_lea.vmem %s1, %s525
      %p527 = pneg %p83
      %p528 = pneg %p80
      %p529 = scmp.lt.s32.totalorder %s29, 3
      %s530 = scalar_select %p529, %s29, 3
      %s531 = scalar_lea.vmem %s2, %s530
      %p532 = pneg %p109
      %p533 = pneg %p106
      %p534 = scmp.lt.s32.totalorder %s29, 3
      %s535 = scalar_select %p534, %s29, 3
      %s536 = smul.addr %s535, 8
      %s537 = smul.addr %s536, 8
      %s538 = scalar_lea.vmem %s3, %s537
      %p539 = pneg %p135
      %p540 = pneg %p132
      %p541 = scmp.lt.s32.totalorder %s29, 3
      %s542 = scalar_select %p541, %s29, 3
      %s543 = smul.addr %s542, 8
      %s544 = smul.addr %s543, 8
      %s545 = scalar_lea.vmem %s4, %s544
      %p546 = pneg %p161
      %p547 = pneg %p158
      %p548 = scmp.lt.s32.totalorder %s29, 3
      %s549 = scalar_select %p548, %s29, 3
      %s550 = smul.addr %s549, 8
      %s551 = smul.addr %s550, 8
      %s552 = scalar_lea.vmem %s5, %s551
      %p553 = pneg %p187
      %p554 = pneg %p184
      %p555 = scmp.lt.s32.totalorder %s29, 3
      %s556 = scalar_select %p555, %s29, 3
      %s557 = smul.addr %s556, 8
      %s558 = smul.addr %s557, 8
      %s559 = scalar_lea.vmem %s6, %s558
      %p560 = pneg %p213
      %p561 = pneg %p210
      %p562 = scmp.lt.s32.totalorder %s29, 3
      %s563 = scalar_select %p562, %s29, 3
      %s564 = scalar_lea.vmem %s7, %s563
      %p565 = pneg %p239
      %p566 = pneg %p236
      %p567 = scmp.lt.s32.totalorder %s29, 3
      %s568 = scalar_select %p567, %s29, 3
      %s569 = scalar_lea.vmem %s8, %s568
      %p570 = pneg %p265
      %p571 = pneg %p262
      %p572 = scmp.lt.s32.totalorder %s29, 3
      %s573 = scalar_select %p572, %s29, 3
      %s574 = smul.addr %s573, 32
      %s575 = smul.addr %s574, 8
      %s576 = scalar_lea.vmem %s9, %s575
      %p577 = pneg %p291
      %p578 = pneg %p288
      %p579 = scmp.lt.s32.totalorder %s29, 3
      %s580 = scalar_select %p579, %s29, 3
      %s581 = smul.addr %s580, 2
      %s582 = scalar_lea.vmem %s10, %s581
      %p583 = pneg %p317
      %p584 = pneg %p314
      %p585 = scmp.lt.s32.totalorder %s29, 3
      %s586 = scalar_select %p585, %s29, 3
      %s587 = smul.addr %s586, 32
      %s588 = smul.addr %s587, 8
      %s589 = scalar_lea.vmem %s11, %s588
      %p590 = pneg %p343
      %p591 = pneg %p340
      %p592 = scmp.lt.s32.totalorder %s29, 3
      %s593 = scalar_select %p592, %s29, 3
      %s594 = scalar_lea.vmem %s12, %s593
      %p595 = pneg %p369
      %p596 = pneg %p366
      %p597 = pneg %p395
      %p598 = pneg %p392
      %s599 = smul.u32 8, %s28
      %p600 = scmp.lt.s32.totalorder %s599, 15
      %s601 = scalar_select %p600, %s599, 15
      %s602 = smul.addr %s601, 8
      %s603 = smul.addr %s602, 8
      %s604 = scalar_lea.vmem %s13, %s603
      %s605 = smul.u32 8, %s28
      %p606 = scmp.lt.s32.totalorder %s605, 15
      %s607 = scalar_select %p606, %s605, 15
      %s608 = smul.addr %s607, 8
      %s609 = smul.addr %s608, 8
      %s610 = scalar_lea.vmem %s0, %s609
      %s611 = smul.u32 8, %s28
      %p612 = scmp.lt.s32.totalorder %s29, 3
      %s613 = scalar_select %p612, %s29, 3
      %s614 = scalar_lea.vmem %s1, %s613
      %p615 = scmp.lt.s32.totalorder %s29, 3
      %s616 = scalar_select %p615, %s29, 3
      %s617 = scalar_lea.vmem %s2, %s616
      %p618 = scmp.lt.s32.totalorder %s29, 3
      %s619 = scalar_select %p618, %s29, 3
      %s620 = smul.addr %s619, 8
      %s621 = smul.addr %s620, 8
      %s622 = scalar_lea.vmem %s3, %s621
      %p623 = scmp.lt.s32.totalorder %s29, 3
      %s624 = scalar_select %p623, %s29, 3
      %s625 = smul.addr %s624, 8
      %s626 = smul.addr %s625, 8
      %s627 = scalar_lea.vmem %s4, %s626
      %p628 = scmp.lt.s32.totalorder %s29, 3
      %s629 = scalar_select %p628, %s29, 3
      %s630 = smul.addr %s629, 8
      %s631 = smul.addr %s630, 8
      %s632 = scalar_lea.vmem %s5, %s631
      %p633 = scmp.lt.s32.totalorder %s29, 3
      %s634 = scalar_select %p633, %s29, 3
      %s635 = smul.addr %s634, 8
      %s636 = smul.addr %s635, 8
      %s637 = scalar_lea.vmem %s6, %s636
      %p638 = scmp.lt.s32.totalorder %s29, 3
      %s639 = scalar_select %p638, %s29, 3
      %s640 = scalar_lea.vmem %s7, %s639
      %p641 = scmp.lt.s32.totalorder %s29, 3
      %s642 = scalar_select %p641, %s29, 3
      %s643 = scalar_lea.vmem %s8, %s642
      %p644 = scmp.lt.s32.totalorder %s29, 3
      %s645 = scalar_select %p644, %s29, 3
      %s646 = smul.addr %s645, 32
      %s647 = smul.addr %s646, 8
      %s648 = scalar_lea.vmem %s9, %s647
      %p649 = scmp.lt.s32.totalorder %s29, 3
      %s650 = scalar_select %p649, %s29, 3
      %s651 = smul.addr %s650, 2
      %s652 = scalar_lea.vmem %s10, %s651
      %p653 = scmp.lt.s32.totalorder %s29, 3
      %s654 = scalar_select %p653, %s29, 3
      %s655 = smul.addr %s654, 32
      %s656 = smul.addr %s655, 8
      %s657 = scalar_lea.vmem %s11, %s656
      %p658 = scmp.lt.s32.totalorder %s29, 3
      %s659 = scalar_select %p658, %s29, 3
      %s660 = scalar_lea.vmem %s12, %s659
      %s661 = smul.u32 8, %s28
      %p662 = scmp.lt.s32.totalorder %s661, 15
      %s663 = scalar_select %p662, %s661, 15
      %s664 = smul.addr %s663, 8
      %s665 = smul.addr %s664, 8
      %s666 = scalar_lea.vmem %s13, %s665
      %s667 = smul.u32 8, %s28
      %p669 = scmp.eq.s32.totalorder %s29, 0
      // Predicated region
      $region73: #{_lambda_.4} parent=71 // pred_check
        %p670 = pneg %p669
      $region74: #{_lambda_.4} parent=71 // pred_check_branch
        %672 = sbr.rel (%p670) target = $region76
      $region75: #{_lambda_.4} parent=71 // pred_region
        %v673 = vld [vmem:[%s610] sm:$0xff]
        %v674 = vld [vmem:[%s610 + $0x8] sm:$0xff]
        %v675 = vld [vmem:[%s610 + $0x10] sm:$0xff]
        %v676 = vld [vmem:[%s610 + $0x18] sm:$0xff]
        %v677 = vld [vmem:[%s610 + $0x20] sm:$0xff]
        %v678 = vld [vmem:[%s610 + $0x28] sm:$0xff]
        %v679 = vld [vmem:[%s610 + $0x30] sm:$0xff]
        %v680 = vld [vmem:[%s610 + $0x38] sm:$0xff]
        %v681 = vld [vmem:[%s610 + $0x40] sm:$0xff]
        %v682 = vld [vmem:[%s610 + $0x48] sm:$0xff]
        %v683 = vld [vmem:[%s610 + $0x50] sm:$0xff]
        %v684 = vld [vmem:[%s610 + $0x58] sm:$0xff]
        %v685 = vld [vmem:[%s610 + $0x60] sm:$0xff]
        %v686 = vld [vmem:[%s610 + $0x68] sm:$0xff]
        %v687 = vld [vmem:[%s610 + $0x70] sm:$0xff]
        %v688 = vld [vmem:[%s610 + $0x78] sm:$0xff]
        %v689 = vld [vmem:[%s610 + $0x80] sm:$0xff]
        %v690 = vld [vmem:[%s610 + $0x88] sm:$0xff]
        %v691 = vld [vmem:[%s610 + $0x90] sm:$0xff]
        %v692 = vld [vmem:[%s610 + $0x98] sm:$0xff]
        %v693 = vld [vmem:[%s610 + $0xa0] sm:$0xff]
        %v694 = vld [vmem:[%s610 + $0xa8] sm:$0xff]
        %v695 = vld [vmem:[%s610 + $0xb0] sm:$0xff]
        %v696 = vld [vmem:[%s610 + $0xb8] sm:$0xff]
        %v697 = vld [vmem:[%s610 + $0xc0] sm:$0xff]
        %v698 = vld [vmem:[%s610 + $0xc8] sm:$0xff]
        %v699 = vld [vmem:[%s610 + $0xd0] sm:$0xff]
        %v700 = vld [vmem:[%s610 + $0xd8] sm:$0xff]
        %v701 = vld [vmem:[%s610 + $0xe0] sm:$0xff]
        %v702 = vld [vmem:[%s610 + $0xe8] sm:$0xff]
        %v703 = vld [vmem:[%s610 + $0xf0] sm:$0xff]
        %v704 = vld [vmem:[%s610 + $0xf8] sm:$0xff]
        %v705 = vld [vmem:[%s610 + $0x100] sm:$0xff]
        %v706 = vld [vmem:[%s610 + $0x108] sm:$0xff]
        %v707 = vld [vmem:[%s610 + $0x110] sm:$0xff]
        %v708 = vld [vmem:[%s610 + $0x118] sm:$0xff]
        %v709 = vld [vmem:[%s610 + $0x120] sm:$0xff]
        %v710 = vld [vmem:[%s610 + $0x128] sm:$0xff]
        %v711 = vld [vmem:[%s610 + $0x130] sm:$0xff]
        %v712 = vld [vmem:[%s610 + $0x138] sm:$0xff]
        %v713 = vld [vmem:[%s610 + $0x140] sm:$0xff]
        %v714 = vld [vmem:[%s610 + $0x148] sm:$0xff]
        %v715 = vld [vmem:[%s610 + $0x150] sm:$0xff]
        %v716 = vld [vmem:[%s610 + $0x158] sm:$0xff]
        %v717 = vld [vmem:[%s610 + $0x160] sm:$0xff]
        %v718 = vld [vmem:[%s610 + $0x168] sm:$0xff]
        %v719 = vld [vmem:[%s610 + $0x170] sm:$0xff]
        %v720 = vld [vmem:[%s610 + $0x178] sm:$0xff]
        %v721 = vld [vmem:[%s610 + $0x180] sm:$0xff]
        %v722 = vld [vmem:[%s610 + $0x188] sm:$0xff]
        %v723 = vld [vmem:[%s610 + $0x190] sm:$0xff]
        %v724 = vld [vmem:[%s610 + $0x198] sm:$0xff]
        %v725 = vld [vmem:[%s610 + $0x1a0] sm:$0xff]
        %v726 = vld [vmem:[%s610 + $0x1a8] sm:$0xff]
        %v727 = vld [vmem:[%s610 + $0x1b0] sm:$0xff]
        %v728 = vld [vmem:[%s610 + $0x1b8] sm:$0xff]
        %v729 = vld [vmem:[%s610 + $0x1c0] sm:$0xff]
        %v730 = vld [vmem:[%s610 + $0x1c8] sm:$0xff]
        %v731 = vld [vmem:[%s610 + $0x1d0] sm:$0xff]
        %v732 = vld [vmem:[%s610 + $0x1d8] sm:$0xff]
        %v733 = vld [vmem:[%s610 + $0x1e0] sm:$0xff]
        %v734 = vld [vmem:[%s610 + $0x1e8] sm:$0xff]
        %v735 = vld [vmem:[%s610 + $0x1f0] sm:$0xff]
        %v736 = vld [vmem:[%s610 + $0x1f8] sm:$0xff]
        %737 = vst [vmem:[%s666] sm:$0xff] %v673
        %738 = vst [vmem:[%s666 + $0x8] sm:$0xff] %v674
        %739 = vst [vmem:[%s666 + $0x10] sm:$0xff] %v675
        %740 = vst [vmem:[%s666 + $0x18] sm:$0xff] %v676
        %741 = vst [vmem:[%s666 + $0x20] sm:$0xff] %v677
        %742 = vst [vmem:[%s666 + $0x28] sm:$0xff] %v678
        %743 = vst [vmem:[%s666 + $0x30] sm:$0xff] %v679
        %744 = vst [vmem:[%s666 + $0x38] sm:$0xff] %v680
        %745 = vst [vmem:[%s666 + $0x40] sm:$0xff] %v681
        %746 = vst [vmem:[%s666 + $0x48] sm:$0xff] %v682
        %747 = vst [vmem:[%s666 + $0x50] sm:$0xff] %v683
        %748 = vst [vmem:[%s666 + $0x58] sm:$0xff] %v684
        %749 = vst [vmem:[%s666 + $0x60] sm:$0xff] %v685
        %750 = vst [vmem:[%s666 + $0x68] sm:$0xff] %v686
        %751 = vst [vmem:[%s666 + $0x70] sm:$0xff] %v687
        %752 = vst [vmem:[%s666 + $0x78] sm:$0xff] %v688
        %753 = vst [vmem:[%s666 + $0x80] sm:$0xff] %v689
        %754 = vst [vmem:[%s666 + $0x88] sm:$0xff] %v690
        %755 = vst [vmem:[%s666 + $0x90] sm:$0xff] %v691
        %756 = vst [vmem:[%s666 + $0x98] sm:$0xff] %v692
        %757 = vst [vmem:[%s666 + $0xa0] sm:$0xff] %v693
        %758 = vst [vmem:[%s666 + $0xa8] sm:$0xff] %v694
        %759 = vst [vmem:[%s666 + $0xb0] sm:$0xff] %v695
        %760 = vst [vmem:[%s666 + $0xb8] sm:$0xff] %v696
        %761 = vst [vmem:[%s666 + $0xc0] sm:$0xff] %v697
        %762 = vst [vmem:[%s666 + $0xc8] sm:$0xff] %v698
        %763 = vst [vmem:[%s666 + $0xd0] sm:$0xff] %v699
        %764 = vst [vmem:[%s666 + $0xd8] sm:$0xff] %v700
        %765 = vst [vmem:[%s666 + $0xe0] sm:$0xff] %v701
        %766 = vst [vmem:[%s666 + $0xe8] sm:$0xff] %v702
        %767 = vst [vmem:[%s666 + $0xf0] sm:$0xff] %v703
        %768 = vst [vmem:[%s666 + $0xf8] sm:$0xff] %v704
        %769 = vst [vmem:[%s666 + $0x100] sm:$0xff] %v705
        %770 = vst [vmem:[%s666 + $0x108] sm:$0xff] %v706
        %771 = vst [vmem:[%s666 + $0x110] sm:$0xff] %v707
        %772 = vst [vmem:[%s666 + $0x118] sm:$0xff] %v708
        %773 = vst [vmem:[%s666 + $0x120] sm:$0xff] %v709
        %774 = vst [vmem:[%s666 + $0x128] sm:$0xff] %v710
        %775 = vst [vmem:[%s666 + $0x130] sm:$0xff] %v711
        %776 = vst [vmem:[%s666 + $0x138] sm:$0xff] %v712
        %777 = vst [vmem:[%s666 + $0x140] sm:$0xff] %v713
        %778 = vst [vmem:[%s666 + $0x148] sm:$0xff] %v714
        %779 = vst [vmem:[%s666 + $0x150] sm:$0xff] %v715
        %780 = vst [vmem:[%s666 + $0x158] sm:$0xff] %v716
        %781 = vst [vmem:[%s666 + $0x160] sm:$0xff] %v717
        %782 = vst [vmem:[%s666 + $0x168] sm:$0xff] %v718
        %783 = vst [vmem:[%s666 + $0x170] sm:$0xff] %v719
        %784 = vst [vmem:[%s666 + $0x178] sm:$0xff] %v720
        %785 = vst [vmem:[%s666 + $0x180] sm:$0xff] %v721
        %786 = vst [vmem:[%s666 + $0x188] sm:$0xff] %v722
        %787 = vst [vmem:[%s666 + $0x190] sm:$0xff] %v723
        %788 = vst [vmem:[%s666 + $0x198] sm:$0xff] %v724
        %789 = vst [vmem:[%s666 + $0x1a0] sm:$0xff] %v725
        %790 = vst [vmem:[%s666 + $0x1a8] sm:$0xff] %v726
        %791 = vst [vmem:[%s666 + $0x1b0] sm:$0xff] %v727
        %792 = vst [vmem:[%s666 + $0x1b8] sm:$0xff] %v728
        %793 = vst [vmem:[%s666 + $0x1c0] sm:$0xff] %v729
        %794 = vst [vmem:[%s666 + $0x1c8] sm:$0xff] %v730
        %795 = vst [vmem:[%s666 + $0x1d0] sm:$0xff] %v731
        %796 = vst [vmem:[%s666 + $0x1d8] sm:$0xff] %v732
        %797 = vst [vmem:[%s666 + $0x1e0] sm:$0xff] %v733
        %798 = vst [vmem:[%s666 + $0x1e8] sm:$0xff] %v734
        %799 = vst [vmem:[%s666 + $0x1f0] sm:$0xff] %v735
        %800 = vst [vmem:[%s666 + $0x1f8] sm:$0xff] %v736
      $region76: #{_lambda_.4} parent=71 // pred_fallthru
        _
      %v801 = vld [vmem:[%s666] sm:$0xff]
      %v802 = vld [vmem:[%s666 + $0x8] sm:$0xff]
      %v803 = vld [vmem:[%s666 + $0x10] sm:$0xff]
      %v804 = vld [vmem:[%s666 + $0x18] sm:$0xff]
      %v805 = vld [vmem:[%s666 + $0x20] sm:$0xff]
      %v806 = vld [vmem:[%s666 + $0x28] sm:$0xff]
      %v807 = vld [vmem:[%s666 + $0x30] sm:$0xff]
      %v808 = vld [vmem:[%s666 + $0x38] sm:$0xff]
      %v809 = vld [vmem:[%s666 + $0x40] sm:$0xff]
      %v810 = vld [vmem:[%s666 + $0x48] sm:$0xff]
      %v811 = vld [vmem:[%s666 + $0x50] sm:$0xff]
      %v812 = vld [vmem:[%s666 + $0x58] sm:$0xff]
      %v813 = vld [vmem:[%s666 + $0x60] sm:$0xff]
      %v814 = vld [vmem:[%s666 + $0x68] sm:$0xff]
      %v815 = vld [vmem:[%s666 + $0x70] sm:$0xff]
      %v816 = vld [vmem:[%s666 + $0x78] sm:$0xff]
      %v817 = vld [vmem:[%s666 + $0x80] sm:$0xff]
      %v818 = vld [vmem:[%s666 + $0x88] sm:$0xff]
      %v819 = vld [vmem:[%s666 + $0x90] sm:$0xff]
      %v820 = vld [vmem:[%s666 + $0x98] sm:$0xff]
      %v821 = vld [vmem:[%s666 + $0xa0] sm:$0xff]
      %v822 = vld [vmem:[%s666 + $0xa8] sm:$0xff]
      %v823 = vld [vmem:[%s666 + $0xb0] sm:$0xff]
      %v824 = vld [vmem:[%s666 + $0xb8] sm:$0xff]
      %v825 = vld [vmem:[%s666 + $0xc0] sm:$0xff]
      %v826 = vld [vmem:[%s666 + $0xc8] sm:$0xff]
      %v827 = vld [vmem:[%s666 + $0xd0] sm:$0xff]
      %v828 = vld [vmem:[%s666 + $0xd8] sm:$0xff]
      %v829 = vld [vmem:[%s666 + $0xe0] sm:$0xff]
      %v830 = vld [vmem:[%s666 + $0xe8] sm:$0xff]
      %v831 = vld [vmem:[%s666 + $0xf0] sm:$0xff]
      %v832 = vld [vmem:[%s666 + $0xf8] sm:$0xff]
      %v833 = vld [vmem:[%s666 + $0x100] sm:$0xff]
      %v834 = vld [vmem:[%s666 + $0x108] sm:$0xff]
      %v835 = vld [vmem:[%s666 + $0x110] sm:$0xff]
      %v836 = vld [vmem:[%s666 + $0x118] sm:$0xff]
      %v837 = vld [vmem:[%s666 + $0x120] sm:$0xff]
      %v838 = vld [vmem:[%s666 + $0x128] sm:$0xff]
      %v839 = vld [vmem:[%s666 + $0x130] sm:$0xff]
      %v840 = vld [vmem:[%s666 + $0x138] sm:$0xff]
      %v841 = vld [vmem:[%s666 + $0x140] sm:$0xff]
      %v842 = vld [vmem:[%s666 + $0x148] sm:$0xff]
      %v843 = vld [vmem:[%s666 + $0x150] sm:$0xff]
      %v844 = vld [vmem:[%s666 + $0x158] sm:$0xff]
      %v845 = vld [vmem:[%s666 + $0x160] sm:$0xff]
      %v846 = vld [vmem:[%s666 + $0x168] sm:$0xff]
      %v847 = vld [vmem:[%s666 + $0x170] sm:$0xff]
      %v848 = vld [vmem:[%s666 + $0x178] sm:$0xff]
      %v849 = vld [vmem:[%s666 + $0x180] sm:$0xff]
      %v850 = vld [vmem:[%s666 + $0x188] sm:$0xff]
      %v851 = vld [vmem:[%s666 + $0x190] sm:$0xff]
      %v852 = vld [vmem:[%s666 + $0x198] sm:$0xff]
      %v853 = vld [vmem:[%s666 + $0x1a0] sm:$0xff]
      %v854 = vld [vmem:[%s666 + $0x1a8] sm:$0xff]
      %v855 = vld [vmem:[%s666 + $0x1b0] sm:$0xff]
      %v856 = vld [vmem:[%s666 + $0x1b8] sm:$0xff]
      %v857 = vld [vmem:[%s666 + $0x1c0] sm:$0xff]
      %v858 = vld [vmem:[%s666 + $0x1c8] sm:$0xff]
      %v859 = vld [vmem:[%s666 + $0x1d0] sm:$0xff]
      %v860 = vld [vmem:[%s666 + $0x1d8] sm:$0xff]
      %v861 = vld [vmem:[%s666 + $0x1e0] sm:$0xff]
      %v862 = vld [vmem:[%s666 + $0x1e8] sm:$0xff]
      %v863 = vld [vmem:[%s666 + $0x1f0] sm:$0xff]
      %v864 = vld [vmem:[%s666 + $0x1f8] sm:$0xff]
      %v865 = vld [vmem:[%s614] sm:$0x1]
      %v866 = vld [vmem:[%s617] sm:$0x1]
      %867 = vadd.xlane.f32.xlu0 %v801
      %v868 = vpop.xlane.xlu0 %867
      %869 = vadd.xlane.f32.xlu0 %v802
      %v870 = vpop.xlane.xlu0 %869
      %871 = vadd.xlane.f32.xlu0 %v803
      %v872 = vpop.xlane.xlu0 %871
      %873 = vadd.xlane.f32.xlu0 %v804
      %v874 = vpop.xlane.xlu0 %873
      %875 = vadd.xlane.f32.xlu0 %v805
      %v876 = vpop.xlane.xlu0 %875
      %877 = vadd.xlane.f32.xlu0 %v806
      %v878 = vpop.xlane.xlu0 %877
      %879 = vadd.xlane.f32.xlu0 %v807
      %v880 = vpop.xlane.xlu0 %879
      %881 = vadd.xlane.f32.xlu0 %v808
      %v882 = vpop.xlane.xlu0 %881
      %883 = vadd.xlane.f32.xlu0 %v809
      %v884 = vpop.xlane.xlu0 %883
      %885 = vadd.xlane.f32.xlu0 %v810
      %v886 = vpop.xlane.xlu0 %885
      %887 = vadd.xlane.f32.xlu0 %v811
      %v888 = vpop.xlane.xlu0 %887
      %889 = vadd.xlane.f32.xlu0 %v812
      %v890 = vpop.xlane.xlu0 %889
      %891 = vadd.xlane.f32.xlu0 %v813
      %v892 = vpop.xlane.xlu0 %891
      %893 = vadd.xlane.f32.xlu0 %v814
      %v894 = vpop.xlane.xlu0 %893
      %895 = vadd.xlane.f32.xlu0 %v815
      %v896 = vpop.xlane.xlu0 %895
      %897 = vadd.xlane.f32.xlu0 %v816
      %v898 = vpop.xlane.xlu0 %897
      %899 = vadd.xlane.f32.xlu0 %v817
      %v900 = vpop.xlane.xlu0 %899
      %901 = vadd.xlane.f32.xlu0 %v818
      %v902 = vpop.xlane.xlu0 %901
      %903 = vadd.xlane.f32.xlu0 %v819
      %v904 = vpop.xlane.xlu0 %903
      %905 = vadd.xlane.f32.xlu0 %v820
      %v906 = vpop.xlane.xlu0 %905
      %907 = vadd.xlane.f32.xlu0 %v821
      %v908 = vpop.xlane.xlu0 %907
      %909 = vadd.xlane.f32.xlu0 %v822
      %v910 = vpop.xlane.xlu0 %909
      %911 = vadd.xlane.f32.xlu0 %v823
      %v912 = vpop.xlane.xlu0 %911
      %913 = vadd.xlane.f32.xlu0 %v824
      %v914 = vpop.xlane.xlu0 %913
      %915 = vadd.xlane.f32.xlu0 %v825
      %v916 = vpop.xlane.xlu0 %915
      %917 = vadd.xlane.f32.xlu0 %v826
      %v918 = vpop.xlane.xlu0 %917
      %919 = vadd.xlane.f32.xlu0 %v827
      %v920 = vpop.xlane.xlu0 %919
      %921 = vadd.xlane.f32.xlu0 %v828
      %v922 = vpop.xlane.xlu0 %921
      %923 = vadd.xlane.f32.xlu0 %v829
      %v924 = vpop.xlane.xlu0 %923
      %925 = vadd.xlane.f32.xlu0 %v830
      %v926 = vpop.xlane.xlu0 %925
      %927 = vadd.xlane.f32.xlu0 %v831
      %v928 = vpop.xlane.xlu0 %927
      %929 = vadd.xlane.f32.xlu0 %v832
      %v930 = vpop.xlane.xlu0 %929
      %931 = vadd.xlane.f32.xlu0 %v833
      %v932 = vpop.xlane.xlu0 %931
      %933 = vadd.xlane.f32.xlu0 %v834
      %v934 = vpop.xlane.xlu0 %933
      %935 = vadd.xlane.f32.xlu0 %v835
      %v936 = vpop.xlane.xlu0 %935
      %937 = vadd.xlane.f32.xlu0 %v836
      %v938 = vpop.xlane.xlu0 %937
      %939 = vadd.xlane.f32.xlu0 %v837
      %v940 = vpop.xlane.xlu0 %939
      %941 = vadd.xlane.f32.xlu0 %v838
      %v942 = vpop.xlane.xlu0 %941
      %943 = vadd.xlane.f32.xlu0 %v839
      %v944 = vpop.xlane.xlu0 %943
      %945 = vadd.xlane.f32.xlu0 %v840
      %v946 = vpop.xlane.xlu0 %945
      %947 = vadd.xlane.f32.xlu0 %v841
      %v948 = vpop.xlane.xlu0 %947
      %949 = vadd.xlane.f32.xlu0 %v842
      %v950 = vpop.xlane.xlu0 %949
      %951 = vadd.xlane.f32.xlu0 %v843
      %v952 = vpop.xlane.xlu0 %951
      %953 = vadd.xlane.f32.xlu0 %v844
      %v954 = vpop.xlane.xlu0 %953
      %955 = vadd.xlane.f32.xlu0 %v845
      %v956 = vpop.xlane.xlu0 %955
      %957 = vadd.xlane.f32.xlu0 %v846
      %v958 = vpop.xlane.xlu0 %957
      %959 = vadd.xlane.f32.xlu0 %v847
      %v960 = vpop.xlane.xlu0 %959
      %961 = vadd.xlane.f32.xlu0 %v848
      %v962 = vpop.xlane.xlu0 %961
      %963 = vadd.xlane.f32.xlu0 %v849
      %v964 = vpop.xlane.xlu0 %963
      %965 = vadd.xlane.f32.xlu0 %v850
      %v966 = vpop.xlane.xlu0 %965
      %967 = vadd.xlane.f32.xlu0 %v851
      %v968 = vpop.xlane.xlu0 %967
      %969 = vadd.xlane.f32.xlu0 %v852
      %v970 = vpop.xlane.xlu0 %969
      %971 = vadd.xlane.f32.xlu0 %v853
      %v972 = vpop.xlane.xlu0 %971
      %973 = vadd.xlane.f32.xlu0 %v854
      %v974 = vpop.xlane.xlu0 %973
      %975 = vadd.xlane.f32.xlu0 %v855
      %v976 = vpop.xlane.xlu0 %975
      %977 = vadd.xlane.f32.xlu0 %v856
      %v978 = vpop.xlane.xlu0 %977
      %979 = vadd.xlane.f32.xlu0 %v857
      %v980 = vpop.xlane.xlu0 %979
      %981 = vadd.xlane.f32.xlu0 %v858
      %v982 = vpop.xlane.xlu0 %981
      %983 = vadd.xlane.f32.xlu0 %v859
      %v984 = vpop.xlane.xlu0 %983
      %985 = vadd.xlane.f32.xlu0 %v860
      %v986 = vpop.xlane.xlu0 %985
      %987 = vadd.xlane.f32.xlu0 %v861
      %v988 = vpop.xlane.xlu0 %987
      %989 = vadd.xlane.f32.xlu0 %v862
      %v990 = vpop.xlane.xlu0 %989
      %991 = vadd.xlane.f32.xlu0 %v863
      %v992 = vpop.xlane.xlu0 %991
      %993 = vadd.xlane.f32.xlu0 %v864
      %v994 = vpop.xlane.xlu0 %993
      %v995 = vrcp.pop 128.0
      %v996 = vmul.f32 %v868, %v995
      %v997 = vmul.f32 %v870, %v995
      %v998 = vmul.f32 %v872, %v995
      %v999 = vmul.f32 %v874, %v995
      %v1000 = vmul.f32 %v876, %v995
      %v1001 = vmul.f32 %v878, %v995
      %v1002 = vmul.f32 %v880, %v995
      %v1003 = vmul.f32 %v882, %v995
      %v1004 = vmul.f32 %v884, %v995
      %v1005 = vmul.f32 %v886, %v995
      %v1006 = vmul.f32 %v888, %v995
      %v1007 = vmul.f32 %v890, %v995
      %v1008 = vmul.f32 %v892, %v995
      %v1009 = vmul.f32 %v894, %v995
      %v1010 = vmul.f32 %v896, %v995
      %v1011 = vmul.f32 %v898, %v995
      %v1012 = vmul.f32 %v900, %v995
      %v1013 = vmul.f32 %v902, %v995
      %v1014 = vmul.f32 %v904, %v995
      %v1015 = vmul.f32 %v906, %v995
      %v1016 = vmul.f32 %v908, %v995
      %v1017 = vmul.f32 %v910, %v995
      %v1018 = vmul.f32 %v912, %v995
      %v1019 = vmul.f32 %v914, %v995
      %v1020 = vmul.f32 %v916, %v995
      %v1021 = vmul.f32 %v918, %v995
      %v1022 = vmul.f32 %v920, %v995
      %v1023 = vmul.f32 %v922, %v995
      %v1024 = vmul.f32 %v924, %v995
      %v1025 = vmul.f32 %v926, %v995
      %v1026 = vmul.f32 %v928, %v995
      %v1027 = vmul.f32 %v930, %v995
      %v1028 = vmul.f32 %v932, %v995
      %v1029 = vmul.f32 %v934, %v995
      %v1030 = vmul.f32 %v936, %v995
      %v1031 = vmul.f32 %v938, %v995
      %v1032 = vmul.f32 %v940, %v995
      %v1033 = vmul.f32 %v942, %v995
      %v1034 = vmul.f32 %v944, %v995
      %v1035 = vmul.f32 %v946, %v995
      %v1036 = vmul.f32 %v948, %v995
      %v1037 = vmul.f32 %v950, %v995
      %v1038 = vmul.f32 %v952, %v995
      %v1039 = vmul.f32 %v954, %v995
      %v1040 = vmul.f32 %v956, %v995
      %v1041 = vmul.f32 %v958, %v995
      %v1042 = vmul.f32 %v960, %v995
      %v1043 = vmul.f32 %v962, %v995
      %v1044 = vmul.f32 %v964, %v995
      %v1045 = vmul.f32 %v966, %v995
      %v1046 = vmul.f32 %v968, %v995
      %v1047 = vmul.f32 %v970, %v995
      %v1048 = vmul.f32 %v972, %v995
      %v1049 = vmul.f32 %v974, %v995
      %v1050 = vmul.f32 %v976, %v995
      %v1051 = vmul.f32 %v978, %v995
      %v1052 = vmul.f32 %v980, %v995
      %v1053 = vmul.f32 %v982, %v995
      %v1054 = vmul.f32 %v984, %v995
      %v1055 = vmul.f32 %v986, %v995
      %v1056 = vmul.f32 %v988, %v995
      %v1057 = vmul.f32 %v990, %v995
      %v1058 = vmul.f32 %v992, %v995
      %v1059 = vmul.f32 %v994, %v995
      %v1060 = vsub.f32 %v801, %v996
      %v1061 = vsub.f32 %v802, %v997
      %v1062 = vsub.f32 %v803, %v998
      %v1063 = vsub.f32 %v804, %v999
      %v1064 = vsub.f32 %v805, %v1000
      %v1065 = vsub.f32 %v806, %v1001
      %v1066 = vsub.f32 %v807, %v1002
      %v1067 = vsub.f32 %v808, %v1003
      %v1068 = vsub.f32 %v809, %v1004
      %v1069 = vsub.f32 %v810, %v1005
      %v1070 = vsub.f32 %v811, %v1006
      %v1071 = vsub.f32 %v812, %v1007
      %v1072 = vsub.f32 %v813, %v1008
      %v1073 = vsub.f32 %v814, %v1009
      %v1074 = vsub.f32 %v815, %v1010
      %v1075 = vsub.f32 %v816, %v1011
      %v1076 = vsub.f32 %v817, %v1012
      %v1077 = vsub.f32 %v818, %v1013
      %v1078 = vsub.f32 %v819, %v1014
      %v1079 = vsub.f32 %v820, %v1015
      %v1080 = vsub.f32 %v821, %v1016
      %v1081 = vsub.f32 %v822, %v1017
      %v1082 = vsub.f32 %v823, %v1018
      %v1083 = vsub.f32 %v824, %v1019
      %v1084 = vsub.f32 %v825, %v1020
      %v1085 = vsub.f32 %v826, %v1021
      %v1086 = vsub.f32 %v827, %v1022
      %v1087 = vsub.f32 %v828, %v1023
      %v1088 = vsub.f32 %v829, %v1024
      %v1089 = vsub.f32 %v830, %v1025
      %v1090 = vsub.f32 %v831, %v1026
      %v1091 = vsub.f32 %v832, %v1027
      %v1092 = vsub.f32 %v833, %v1028
      %v1093 = vsub.f32 %v834, %v1029
      %v1094 = vsub.f32 %v835, %v1030
      %v1095 = vsub.f32 %v836, %v1031
      %v1096 = vsub.f32 %v837, %v1032
      %v1097 = vsub.f32 %v838, %v1033
      %v1098 = vsub.f32 %v839, %v1034
      %v1099 = vsub.f32 %v840, %v1035
      %v1100 = vsub.f32 %v841, %v1036
      %v1101 = vsub.f32 %v842, %v1037
      %v1102 = vsub.f32 %v843, %v1038
      %v1103 = vsub.f32 %v844, %v1039
      %v1104 = vsub.f32 %v845, %v1040
      %v1105 = vsub.f32 %v846, %v1041
      %v1106 = vsub.f32 %v847, %v1042
      %v1107 = vsub.f32 %v848, %v1043
      %v1108 = vsub.f32 %v849, %v1044
      %v1109 = vsub.f32 %v850, %v1045
      %v1110 = vsub.f32 %v851, %v1046
      %v1111 = vsub.f32 %v852, %v1047
      %v1112 = vsub.f32 %v853, %v1048
      %v1113 = vsub.f32 %v854, %v1049
      %v1114 = vsub.f32 %v855, %v1050
      %v1115 = vsub.f32 %v856, %v1051
      %v1116 = vsub.f32 %v857, %v1052
      %v1117 = vsub.f32 %v858, %v1053
      %v1118 = vsub.f32 %v859, %v1054
      %v1119 = vsub.f32 %v860, %v1055
      %v1120 = vsub.f32 %v861, %v1056
      %v1121 = vsub.f32 %v862, %v1057
      %v1122 = vsub.f32 %v863, %v1058
      %v1123 = vsub.f32 %v864, %v1059
      %v1124 = vmul.f32 %v1060, %v1060
      %v1125 = vmul.f32 %v1061, %v1061
      %v1126 = vmul.f32 %v1062, %v1062
      %v1127 = vmul.f32 %v1063, %v1063
      %v1128 = vmul.f32 %v1064, %v1064
      %v1129 = vmul.f32 %v1065, %v1065
      %v1130 = vmul.f32 %v1066, %v1066
      %v1131 = vmul.f32 %v1067, %v1067
      %v1132 = vmul.f32 %v1068, %v1068
      %v1133 = vmul.f32 %v1069, %v1069
      %v1134 = vmul.f32 %v1070, %v1070
      %v1135 = vmul.f32 %v1071, %v1071
      %v1136 = vmul.f32 %v1072, %v1072
      %v1137 = vmul.f32 %v1073, %v1073
      %v1138 = vmul.f32 %v1074, %v1074
      %v1139 = vmul.f32 %v1075, %v1075
      %v1140 = vmul.f32 %v1076, %v1076
      %v1141 = vmul.f32 %v1077, %v1077
      %v1142 = vmul.f32 %v1078, %v1078
      %v1143 = vmul.f32 %v1079, %v1079
      %v1144 = vmul.f32 %v1080, %v1080
      %v1145 = vmul.f32 %v1081, %v1081
      %v1146 = vmul.f32 %v1082, %v1082
      %v1147 = vmul.f32 %v1083, %v1083
      %v1148 = vmul.f32 %v1084, %v1084
      %v1149 = vmul.f32 %v1085, %v1085
      %v1150 = vmul.f32 %v1086, %v1086
      %v1151 = vmul.f32 %v1087, %v1087
      %v1152 = vmul.f32 %v1088, %v1088
      %v1153 = vmul.f32 %v1089, %v1089
      %v1154 = vmul.f32 %v1090, %v1090
      %v1155 = vmul.f32 %v1091, %v1091
      %v1156 = vmul.f32 %v1092, %v1092
      %v1157 = vmul.f32 %v1093, %v1093
      %v1158 = vmul.f32 %v1094, %v1094
      %v1159 = vmul.f32 %v1095, %v1095
      %v1160 = vmul.f32 %v1096, %v1096
      %v1161 = vmul.f32 %v1097, %v1097
      %v1162 = vmul.f32 %v1098, %v1098
      %v1163 = vmul.f32 %v1099, %v1099
      %v1164 = vmul.f32 %v1100, %v1100
      %v1165 = vmul.f32 %v1101, %v1101
      %v1166 = vmul.f32 %v1102, %v1102
      %v1167 = vmul.f32 %v1103, %v1103
      %v1168 = vmul.f32 %v1104, %v1104
      %v1169 = vmul.f32 %v1105, %v1105
      %v1170 = vmul.f32 %v1106, %v1106
      %v1171 = vmul.f32 %v1107, %v1107
      %v1172 = vmul.f32 %v1108, %v1108
      %v1173 = vmul.f32 %v1109, %v1109
      %v1174 = vmul.f32 %v1110, %v1110
      %v1175 = vmul.f32 %v1111, %v1111
      %v1176 = vmul.f32 %v1112, %v1112
      %v1177 = vmul.f32 %v1113, %v1113
      %v1178 = vmul.f32 %v1114, %v1114
      %v1179 = vmul.f32 %v1115, %v1115
      %v1180 = vmul.f32 %v1116, %v1116
      %v1181 = vmul.f32 %v1117, %v1117
      %v1182 = vmul.f32 %v1118, %v1118
      %v1183 = vmul.f32 %v1119, %v1119
      %v1184 = vmul.f32 %v1120, %v1120
      %v1185 = vmul.f32 %v1121, %v1121
      %v1186 = vmul.f32 %v1122, %v1122
      %v1187 = vmul.f32 %v1123, %v1123
      %1188 = vadd.xlane.f32.xlu0 %v1124
      %v1189 = vpop.xlane.xlu0 %1188
      %1190 = vadd.xlane.f32.xlu0 %v1125
      %v1191 = vpop.xlane.xlu0 %1190
      %1192 = vadd.xlane.f32.xlu0 %v1126
      %v1193 = vpop.xlane.xlu0 %1192
      %1194 = vadd.xlane.f32.xlu0 %v1127
      %v1195 = vpop.xlane.xlu0 %1194
      %1196 = vadd.xlane.f32.xlu0 %v1128
      %v1197 = vpop.xlane.xlu0 %1196
      %1198 = vadd.xlane.f32.xlu0 %v1129
      %v1199 = vpop.xlane.xlu0 %1198
      %1200 = vadd.xlane.f32.xlu0 %v1130
      %v1201 = vpop.xlane.xlu0 %1200
      %1202 = vadd.xlane.f32.xlu0 %v1131
      %v1203 = vpop.xlane.xlu0 %1202
      %1204 = vadd.xlane.f32.xlu0 %v1132
      %v1205 = vpop.xlane.xlu0 %1204
      %1206 = vadd.xlane.f32.xlu0 %v1133
      %v1207 = vpop.xlane.xlu0 %1206
      %1208 = vadd.xlane.f32.xlu0 %v1134
      %v1209 = vpop.xlane.xlu0 %1208
      %1210 = vadd.xlane.f32.xlu0 %v1135
      %v1211 = vpop.xlane.xlu0 %1210
      %1212 = vadd.xlane.f32.xlu0 %v1136
      %v1213 = vpop.xlane.xlu0 %1212
      %1214 = vadd.xlane.f32.xlu0 %v1137
      %v1215 = vpop.xlane.xlu0 %1214
      %1216 = vadd.xlane.f32.xlu0 %v1138
      %v1217 = vpop.xlane.xlu0 %1216
      %1218 = vadd.xlane.f32.xlu0 %v1139
      %v1219 = vpop.xlane.xlu0 %1218
      %1220 = vadd.xlane.f32.xlu0 %v1140
      %v1221 = vpop.xlane.xlu0 %1220
      %1222 = vadd.xlane.f32.xlu0 %v1141
      %v1223 = vpop.xlane.xlu0 %1222
      %1224 = vadd.xlane.f32.xlu0 %v1142
      %v1225 = vpop.xlane.xlu0 %1224
      %1226 = vadd.xlane.f32.xlu0 %v1143
      %v1227 = vpop.xlane.xlu0 %1226
      %1228 = vadd.xlane.f32.xlu0 %v1144
      %v1229 = vpop.xlane.xlu0 %1228
      %1230 = vadd.xlane.f32.xlu0 %v1145
      %v1231 = vpop.xlane.xlu0 %1230
      %1232 = vadd.xlane.f32.xlu0 %v1146
      %v1233 = vpop.xlane.xlu0 %1232
      %1234 = vadd.xlane.f32.xlu0 %v1147
      %v1235 = vpop.xlane.xlu0 %1234
      %1236 = vadd.xlane.f32.xlu0 %v1148
      %v1237 = vpop.xlane.xlu0 %1236
      %1238 = vadd.xlane.f32.xlu0 %v1149
      %v1239 = vpop.xlane.xlu0 %1238
      %1240 = vadd.xlane.f32.xlu0 %v1150
      %v1241 = vpop.xlane.xlu0 %1240
      %1242 = vadd.xlane.f32.xlu0 %v1151
      %v1243 = vpop.xlane.xlu0 %1242
      %1244 = vadd.xlane.f32.xlu0 %v1152
      %v1245 = vpop.xlane.xlu0 %1244
      %1246 = vadd.xlane.f32.xlu0 %v1153
      %v1247 = vpop.xlane.xlu0 %1246
      %1248 = vadd.xlane.f32.xlu0 %v1154
      %v1249 = vpop.xlane.xlu0 %1248
      %1250 = vadd.xlane.f32.xlu0 %v1155
      %v1251 = vpop.xlane.xlu0 %1250
      %1252 = vadd.xlane.f32.xlu0 %v1156
      %v1253 = vpop.xlane.xlu0 %1252
      %1254 = vadd.xlane.f32.xlu0 %v1157
      %v1255 = vpop.xlane.xlu0 %1254
      %1256 = vadd.xlane.f32.xlu0 %v1158
      %v1257 = vpop.xlane.xlu0 %1256
      %1258 = vadd.xlane.f32.xlu0 %v1159
      %v1259 = vpop.xlane.xlu0 %1258
      %1260 = vadd.xlane.f32.xlu0 %v1160
      %v1261 = vpop.xlane.xlu0 %1260
      %1262 = vadd.xlane.f32.xlu0 %v1161
      %v1263 = vpop.xlane.xlu0 %1262
      %1264 = vadd.xlane.f32.xlu0 %v1162
      %v1265 = vpop.xlane.xlu0 %1264
      %1266 = vadd.xlane.f32.xlu0 %v1163
      %v1267 = vpop.xlane.xlu0 %1266
      %1268 = vadd.xlane.f32.xlu0 %v1164
      %v1269 = vpop.xlane.xlu0 %1268
      %1270 = vadd.xlane.f32.xlu0 %v1165
      %v1271 = vpop.xlane.xlu0 %1270
      %1272 = vadd.xlane.f32.xlu0 %v1166
      %v1273 = vpop.xlane.xlu0 %1272
      %1274 = vadd.xlane.f32.xlu0 %v1167
      %v1275 = vpop.xlane.xlu0 %1274
      %1276 = vadd.xlane.f32.xlu0 %v1168
      %v1277 = vpop.xlane.xlu0 %1276
      %1278 = vadd.xlane.f32.xlu0 %v1169
      %v1279 = vpop.xlane.xlu0 %1278
      %1280 = vadd.xlane.f32.xlu0 %v1170
      %v1281 = vpop.xlane.xlu0 %1280
      %1282 = vadd.xlane.f32.xlu0 %v1171
      %v1283 = vpop.xlane.xlu0 %1282
      %1284 = vadd.xlane.f32.xlu0 %v1172
      %v1285 = vpop.xlane.xlu0 %1284
      %1286 = vadd.xlane.f32.xlu0 %v1173
      %v1287 = vpop.xlane.xlu0 %1286
      %1288 = vadd.xlane.f32.xlu0 %v1174
      %v1289 = vpop.xlane.xlu0 %1288
      %1290 = vadd.xlane.f32.xlu0 %v1175
      %v1291 = vpop.xlane.xlu0 %1290
      %1292 = vadd.xlane.f32.xlu0 %v1176
      %v1293 = vpop.xlane.xlu0 %1292
      %1294 = vadd.xlane.f32.xlu0 %v1177
      %v1295 = vpop.xlane.xlu0 %1294
      %1296 = vadd.xlane.f32.xlu0 %v1178
      %v1297 = vpop.xlane.xlu0 %1296
      %1298 = vadd.xlane.f32.xlu0 %v1179
      %v1299 = vpop.xlane.xlu0 %1298
      %1300 = vadd.xlane.f32.xlu0 %v1180
      %v1301 = vpop.xlane.xlu0 %1300
      %1302 = vadd.xlane.f32.xlu0 %v1181
      %v1303 = vpop.xlane.xlu0 %1302
      %1304 = vadd.xlane.f32.xlu0 %v1182
      %v1305 = vpop.xlane.xlu0 %1304
      %1306 = vadd.xlane.f32.xlu0 %v1183
      %v1307 = vpop.xlane.xlu0 %1306
      %1308 = vadd.xlane.f32.xlu0 %v1184
      %v1309 = vpop.xlane.xlu0 %1308
      %1310 = vadd.xlane.f32.xlu0 %v1185
      %v1311 = vpop.xlane.xlu0 %1310
      %1312 = vadd.xlane.f32.xlu0 %v1186
      %v1313 = vpop.xlane.xlu0 %1312
      %1314 = vadd.xlane.f32.xlu0 %v1187
      %v1315 = vpop.xlane.xlu0 %1314
      %v1316 = vmul.f32 %v1189, %v995
      %v1317 = vmul.f32 %v1191, %v995
      %v1318 = vmul.f32 %v1193, %v995
      %v1319 = vmul.f32 %v1195, %v995
      %v1320 = vmul.f32 %v1197, %v995
      %v1321 = vmul.f32 %v1199, %v995
      %v1322 = vmul.f32 %v1201, %v995
      %v1323 = vmul.f32 %v1203, %v995
      %v1324 = vmul.f32 %v1205, %v995
      %v1325 = vmul.f32 %v1207, %v995
      %v1326 = vmul.f32 %v1209, %v995
      %v1327 = vmul.f32 %v1211, %v995
      %v1328 = vmul.f32 %v1213, %v995
      %v1329 = vmul.f32 %v1215, %v995
      %v1330 = vmul.f32 %v1217, %v995
      %v1331 = vmul.f32 %v1219, %v995
      %v1332 = vmul.f32 %v1221, %v995
      %v1333 = vmul.f32 %v1223, %v995
      %v1334 = vmul.f32 %v1225, %v995
      %v1335 = vmul.f32 %v1227, %v995
      %v1336 = vmul.f32 %v1229, %v995
      %v1337 = vmul.f32 %v1231, %v995
      %v1338 = vmul.f32 %v1233, %v995
      %v1339 = vmul.f32 %v1235, %v995
      %v1340 = vmul.f32 %v1237, %v995
      %v1341 = vmul.f32 %v1239, %v995
      %v1342 = vmul.f32 %v1241, %v995
      %v1343 = vmul.f32 %v1243, %v995
      %v1344 = vmul.f32 %v1245, %v995
      %v1345 = vmul.f32 %v1247, %v995
      %v1346 = vmul.f32 %v1249, %v995
      %v1347 = vmul.f32 %v1251, %v995
      %v1348 = vmul.f32 %v1253, %v995
      %v1349 = vmul.f32 %v1255, %v995
      %v1350 = vmul.f32 %v1257, %v995
      %v1351 = vmul.f32 %v1259, %v995
      %v1352 = vmul.f32 %v1261, %v995
      %v1353 = vmul.f32 %v1263, %v995
      %v1354 = vmul.f32 %v1265, %v995
      %v1355 = vmul.f32 %v1267, %v995
      %v1356 = vmul.f32 %v1269, %v995
      %v1357 = vmul.f32 %v1271, %v995
      %v1358 = vmul.f32 %v1273, %v995
      %v1359 = vmul.f32 %v1275, %v995
      %v1360 = vmul.f32 %v1277, %v995
      %v1361 = vmul.f32 %v1279, %v995
      %v1362 = vmul.f32 %v1281, %v995
      %v1363 = vmul.f32 %v1283, %v995
      %v1364 = vmul.f32 %v1285, %v995
      %v1365 = vmul.f32 %v1287, %v995
      %v1366 = vmul.f32 %v1289, %v995
      %v1367 = vmul.f32 %v1291, %v995
      %v1368 = vmul.f32 %v1293, %v995
      %v1369 = vmul.f32 %v1295, %v995
      %v1370 = vmul.f32 %v1297, %v995
      %v1371 = vmul.f32 %v1299, %v995
      %v1372 = vmul.f32 %v1301, %v995
      %v1373 = vmul.f32 %v1303, %v995
      %v1374 = vmul.f32 %v1305, %v995
      %v1375 = vmul.f32 %v1307, %v995
      %v1376 = vmul.f32 %v1309, %v995
      %v1377 = vmul.f32 %v1311, %v995
      %v1378 = vmul.f32 %v1313, %v995
      %v1379 = vmul.f32 %v1315, %v995
      %v1380 = vadd.f32 %v1316, 1e-05
      %v1381 = vadd.f32 %v1317, 1e-05
      %v1382 = vadd.f32 %v1318, 1e-05
      %v1383 = vadd.f32 %v1319, 1e-05
      %v1384 = vadd.f32 %v1320, 1e-05
      %v1385 = vadd.f32 %v1321, 1e-05
      %v1386 = vadd.f32 %v1322, 1e-05
      %v1387 = vadd.f32 %v1323, 1e-05
      %v1388 = vadd.f32 %v1324, 1e-05
      %v1389 = vadd.f32 %v1325, 1e-05
      %v1390 = vadd.f32 %v1326, 1e-05
      %v1391 = vadd.f32 %v1327, 1e-05
      %v1392 = vadd.f32 %v1328, 1e-05
      %v1393 = vadd.f32 %v1329, 1e-05
      %v1394 = vadd.f32 %v1330, 1e-05
      %v1395 = vadd.f32 %v1331, 1e-05
      %v1396 = vadd.f32 %v1332, 1e-05
      %v1397 = vadd.f32 %v1333, 1e-05
      %v1398 = vadd.f32 %v1334, 1e-05
      %v1399 = vadd.f32 %v1335, 1e-05
      %v1400 = vadd.f32 %v1336, 1e-05
      %v1401 = vadd.f32 %v1337, 1e-05
      %v1402 = vadd.f32 %v1338, 1e-05
      %v1403 = vadd.f32 %v1339, 1e-05
      %v1404 = vadd.f32 %v1340, 1e-05
      %v1405 = vadd.f32 %v1341, 1e-05
      %v1406 = vadd.f32 %v1342, 1e-05
      %v1407 = vadd.f32 %v1343, 1e-05
      %v1408 = vadd.f32 %v1344, 1e-05
      %v1409 = vadd.f32 %v1345, 1e-05
      %v1410 = vadd.f32 %v1346, 1e-05
      %v1411 = vadd.f32 %v1347, 1e-05
      %v1412 = vadd.f32 %v1348, 1e-05
      %v1413 = vadd.f32 %v1349, 1e-05
      %v1414 = vadd.f32 %v1350, 1e-05
      %v1415 = vadd.f32 %v1351, 1e-05
      %v1416 = vadd.f32 %v1352, 1e-05
      %v1417 = vadd.f32 %v1353, 1e-05
      %v1418 = vadd.f32 %v1354, 1e-05
      %v1419 = vadd.f32 %v1355, 1e-05
      %v1420 = vadd.f32 %v1356, 1e-05
      %v1421 = vadd.f32 %v1357, 1e-05
      %v1422 = vadd.f32 %v1358, 1e-05
      %v1423 = vadd.f32 %v1359, 1e-05
      %v1424 = vadd.f32 %v1360, 1e-05
      %v1425 = vadd.f32 %v1361, 1e-05
      %v1426 = vadd.f32 %v1362, 1e-05
      %v1427 = vadd.f32 %v1363, 1e-05
      %v1428 = vadd.f32 %v1364, 1e-05
      %v1429 = vadd.f32 %v1365, 1e-05
      %v1430 = vadd.f32 %v1366, 1e-05
      %v1431 = vadd.f32 %v1367, 1e-05
      %v1432 = vadd.f32 %v1368, 1e-05
      %v1433 = vadd.f32 %v1369, 1e-05
      %v1434 = vadd.f32 %v1370, 1e-05
      %v1435 = vadd.f32 %v1371, 1e-05
      %v1436 = vadd.f32 %v1372, 1e-05
      %v1437 = vadd.f32 %v1373, 1e-05
      %v1438 = vadd.f32 %v1374, 1e-05
      %v1439 = vadd.f32 %v1375, 1e-05
      %v1440 = vadd.f32 %v1376, 1e-05
      %v1441 = vadd.f32 %v1377, 1e-05
      %v1442 = vadd.f32 %v1378, 1e-05
      %v1443 = vadd.f32 %v1379, 1e-05
      %v1444 = vrsqrt.pop %v1380
      %v1445 = vrsqrt.pop %v1381
      %v1446 = vrsqrt.pop %v1382
      %v1447 = vrsqrt.pop %v1383
      %v1448 = vrsqrt.pop %v1384
      %v1449 = vrsqrt.pop %v1385
      %v1450 = vrsqrt.pop %v1386
      %v1451 = vrsqrt.pop %v1387
      %v1452 = vrsqrt.pop %v1388
      %v1453 = vrsqrt.pop %v1389
      %v1454 = vrsqrt.pop %v1390
      %v1455 = vrsqrt.pop %v1391
      %v1456 = vrsqrt.pop %v1392
      %v1457 = vrsqrt.pop %v1393
      %v1458 = vrsqrt.pop %v1394
      %v1459 = vrsqrt.pop %v1395
      %v1460 = vrsqrt.pop %v1396
      %v1461 = vrsqrt.pop %v1397
      %v1462 = vrsqrt.pop %v1398
      %v1463 = vrsqrt.pop %v1399
      %v1464 = vrsqrt.pop %v1400
      %v1465 = vrsqrt.pop %v1401
      %v1466 = vrsqrt.pop %v1402
      %v1467 = vrsqrt.pop %v1403
      %v1468 = vrsqrt.pop %v1404
      %v1469 = vrsqrt.pop %v1405
      %v1470 = vrsqrt.pop %v1406
      %v1471 = vrsqrt.pop %v1407
      %v1472 = vrsqrt.pop %v1408
      %v1473 = vrsqrt.pop %v1409
      %v1474 = vrsqrt.pop %v1410
      %v1475 = vrsqrt.pop %v1411
      %v1476 = vrsqrt.pop %v1412
      %v1477 = vrsqrt.pop %v1413
      %v1478 = vrsqrt.pop %v1414
      %v1479 = vrsqrt.pop %v1415
      %v1480 = vrsqrt.pop %v1416
      %v1481 = vrsqrt.pop %v1417
      %v1482 = vrsqrt.pop %v1418
      %v1483 = vrsqrt.pop %v1419
      %v1484 = vrsqrt.pop %v1420
      %v1485 = vrsqrt.pop %v1421
      %v1486 = vrsqrt.pop %v1422
      %v1487 = vrsqrt.pop %v1423
      %v1488 = vrsqrt.pop %v1424
      %v1489 = vrsqrt.pop %v1425
      %v1490 = vrsqrt.pop %v1426
      %v1491 = vrsqrt.pop %v1427
      %v1492 = vrsqrt.pop %v1428
      %v1493 = vrsqrt.pop %v1429
      %v1494 = vrsqrt.pop %v1430
      %v1495 = vrsqrt.pop %v1431
      %v1496 = vrsqrt.pop %v1432
      %v1497 = vrsqrt.pop %v1433
      %v1498 = vrsqrt.pop %v1434
      %v1499 = vrsqrt.pop %v1435
      %v1500 = vrsqrt.pop %v1436
      %v1501 = vrsqrt.pop %v1437
      %v1502 = vrsqrt.pop %v1438
      %v1503 = vrsqrt.pop %v1439
      %v1504 = vrsqrt.pop %v1440
      %v1505 = vrsqrt.pop %v1441
      %v1506 = vrsqrt.pop %v1442
      %v1507 = vrsqrt.pop %v1443
      %v1508 = vmul.f32 %v1060, %v1444
      %v1509 = vmul.f32 %v1061, %v1445
      %v1510 = vmul.f32 %v1062, %v1446
      %v1511 = vmul.f32 %v1063, %v1447
      %v1512 = vmul.f32 %v1064, %v1448
      %v1513 = vmul.f32 %v1065, %v1449
      %v1514 = vmul.f32 %v1066, %v1450
      %v1515 = vmul.f32 %v1067, %v1451
      %v1516 = vmul.f32 %v1068, %v1452
      %v1517 = vmul.f32 %v1069, %v1453
      %v1518 = vmul.f32 %v1070, %v1454
      %v1519 = vmul.f32 %v1071, %v1455
      %v1520 = vmul.f32 %v1072, %v1456
      %v1521 = vmul.f32 %v1073, %v1457
      %v1522 = vmul.f32 %v1074, %v1458
      %v1523 = vmul.f32 %v1075, %v1459
      %v1524 = vmul.f32 %v1076, %v1460
      %v1525 = vmul.f32 %v1077, %v1461
      %v1526 = vmul.f32 %v1078, %v1462
      %v1527 = vmul.f32 %v1079, %v1463
      %v1528 = vmul.f32 %v1080, %v1464
      %v1529 = vmul.f32 %v1081, %v1465
      %v1530 = vmul.f32 %v1082, %v1466
      %v1531 = vmul.f32 %v1083, %v1467
      %v1532 = vmul.f32 %v1084, %v1468
      %v1533 = vmul.f32 %v1085, %v1469
      %v1534 = vmul.f32 %v1086, %v1470
      %v1535 = vmul.f32 %v1087, %v1471
      %v1536 = vmul.f32 %v1088, %v1472
      %v1537 = vmul.f32 %v1089, %v1473
      %v1538 = vmul.f32 %v1090, %v1474
      %v1539 = vmul.f32 %v1091, %v1475
      %v1540 = vmul.f32 %v1092, %v1476
      %v1541 = vmul.f32 %v1093, %v1477
      %v1542 = vmul.f32 %v1094, %v1478
      %v1543 = vmul.f32 %v1095, %v1479
      %v1544 = vmul.f32 %v1096, %v1480
      %v1545 = vmul.f32 %v1097, %v1481
      %v1546 = vmul.f32 %v1098, %v1482
      %v1547 = vmul.f32 %v1099, %v1483
      %v1548 = vmul.f32 %v1100, %v1484
      %v1549 = vmul.f32 %v1101, %v1485
      %v1550 = vmul.f32 %v1102, %v1486
      %v1551 = vmul.f32 %v1103, %v1487
      %v1552 = vmul.f32 %v1104, %v1488
      %v1553 = vmul.f32 %v1105, %v1489
      %v1554 = vmul.f32 %v1106, %v1490
      %v1555 = vmul.f32 %v1107, %v1491
      %v1556 = vmul.f32 %v1108, %v1492
      %v1557 = vmul.f32 %v1109, %v1493
      %v1558 = vmul.f32 %v1110, %v1494
      %v1559 = vmul.f32 %v1111, %v1495
      %v1560 = vmul.f32 %v1112, %v1496
      %v1561 = vmul.f32 %v1113, %v1497
      %v1562 = vmul.f32 %v1114, %v1498
      %v1563 = vmul.f32 %v1115, %v1499
      %v1564 = vmul.f32 %v1116, %v1500
      %v1565 = vmul.f32 %v1117, %v1501
      %v1566 = vmul.f32 %v1118, %v1502
      %v1567 = vmul.f32 %v1119, %v1503
      %v1568 = vmul.f32 %v1120, %v1504
      %v1569 = vmul.f32 %v1121, %v1505
      %v1570 = vmul.f32 %v1122, %v1506
      %v1571 = vmul.f32 %v1123, %v1507
      %v1573 = vlaneseq
      %v1574 = vshrl.u32 %v1573, 7
      %v1575 = vsub.s32 0, %v1574
      %v1576 = vrot.slane %v865, %v1575
      %v1578 = vmul.f32 %v1508, %v1576
      %v1579 = vmul.f32 %v1509, %v1576
      %v1580 = vmul.f32 %v1510, %v1576
      %v1581 = vmul.f32 %v1511, %v1576
      %v1582 = vmul.f32 %v1512, %v1576
      %v1583 = vmul.f32 %v1513, %v1576
      %v1584 = vmul.f32 %v1514, %v1576
      %v1585 = vmul.f32 %v1515, %v1576
      %v1586 = vmul.f32 %v1516, %v1576
      %v1587 = vmul.f32 %v1517, %v1576
      %v1588 = vmul.f32 %v1518, %v1576
      %v1589 = vmul.f32 %v1519, %v1576
      %v1590 = vmul.f32 %v1520, %v1576
      %v1591 = vmul.f32 %v1521, %v1576
      %v1592 = vmul.f32 %v1522, %v1576
      %v1593 = vmul.f32 %v1523, %v1576
      %v1594 = vmul.f32 %v1524, %v1576
      %v1595 = vmul.f32 %v1525, %v1576
      %v1596 = vmul.f32 %v1526, %v1576
      %v1597 = vmul.f32 %v1527, %v1576
      %v1598 = vmul.f32 %v1528, %v1576
      %v1599 = vmul.f32 %v1529, %v1576
      %v1600 = vmul.f32 %v1530, %v1576
      %v1601 = vmul.f32 %v1531, %v1576
      %v1602 = vmul.f32 %v1532, %v1576
      %v1603 = vmul.f32 %v1533, %v1576
      %v1604 = vmul.f32 %v1534, %v1576
      %v1605 = vmul.f32 %v1535, %v1576
      %v1606 = vmul.f32 %v1536, %v1576
      %v1607 = vmul.f32 %v1537, %v1576
      %v1608 = vmul.f32 %v1538, %v1576
      %v1609 = vmul.f32 %v1539, %v1576
      %v1610 = vmul.f32 %v1540, %v1576
      %v1611 = vmul.f32 %v1541, %v1576
      %v1612 = vmul.f32 %v1542, %v1576
      %v1613 = vmul.f32 %v1543, %v1576
      %v1614 = vmul.f32 %v1544, %v1576
      %v1615 = vmul.f32 %v1545, %v1576
      %v1616 = vmul.f32 %v1546, %v1576
      %v1617 = vmul.f32 %v1547, %v1576
      %v1618 = vmul.f32 %v1548, %v1576
      %v1619 = vmul.f32 %v1549, %v1576
      %v1620 = vmul.f32 %v1550, %v1576
      %v1621 = vmul.f32 %v1551, %v1576
      %v1622 = vmul.f32 %v1552, %v1576
      %v1623 = vmul.f32 %v1553, %v1576
      %v1624 = vmul.f32 %v1554, %v1576
      %v1625 = vmul.f32 %v1555, %v1576
      %v1626 = vmul.f32 %v1556, %v1576
      %v1627 = vmul.f32 %v1557, %v1576
      %v1628 = vmul.f32 %v1558, %v1576
      %v1629 = vmul.f32 %v1559, %v1576
      %v1630 = vmul.f32 %v1560, %v1576
      %v1631 = vmul.f32 %v1561, %v1576
      %v1632 = vmul.f32 %v1562, %v1576
      %v1633 = vmul.f32 %v1563, %v1576
      %v1634 = vmul.f32 %v1564, %v1576
      %v1635 = vmul.f32 %v1565, %v1576
      %v1636 = vmul.f32 %v1566, %v1576
      %v1637 = vmul.f32 %v1567, %v1576
      %v1638 = vmul.f32 %v1568, %v1576
      %v1639 = vmul.f32 %v1569, %v1576
      %v1640 = vmul.f32 %v1570, %v1576
      %v1641 = vmul.f32 %v1571, %v1576
      %v1643 = vlaneseq
      %v1644 = vshrl.u32 %v1643, 7
      %v1645 = vsub.s32 0, %v1644
      %v1646 = vrot.slane %v866, %v1645
      %v1648 = vadd.f32 %v1578, %v1646
      %v1649 = vadd.f32 %v1579, %v1646
      %v1650 = vadd.f32 %v1580, %v1646
      %v1651 = vadd.f32 %v1581, %v1646
      %v1652 = vadd.f32 %v1582, %v1646
      %v1653 = vadd.f32 %v1583, %v1646
      %v1654 = vadd.f32 %v1584, %v1646
      %v1655 = vadd.f32 %v1585, %v1646
      %v1656 = vadd.f32 %v1586, %v1646
      %v1657 = vadd.f32 %v1587, %v1646
      %v1658 = vadd.f32 %v1588, %v1646
      %v1659 = vadd.f32 %v1589, %v1646
      %v1660 = vadd.f32 %v1590, %v1646
      %v1661 = vadd.f32 %v1591, %v1646
      %v1662 = vadd.f32 %v1592, %v1646
      %v1663 = vadd.f32 %v1593, %v1646
      %v1664 = vadd.f32 %v1594, %v1646
      %v1665 = vadd.f32 %v1595, %v1646
      %v1666 = vadd.f32 %v1596, %v1646
      %v1667 = vadd.f32 %v1597, %v1646
      %v1668 = vadd.f32 %v1598, %v1646
      %v1669 = vadd.f32 %v1599, %v1646
      %v1670 = vadd.f32 %v1600, %v1646
      %v1671 = vadd.f32 %v1601, %v1646
      %v1672 = vadd.f32 %v1602, %v1646
      %v1673 = vadd.f32 %v1603, %v1646
      %v1674 = vadd.f32 %v1604, %v1646
      %v1675 = vadd.f32 %v1605, %v1646
      %v1676 = vadd.f32 %v1606, %v1646
      %v1677 = vadd.f32 %v1607, %v1646
      %v1678 = vadd.f32 %v1608, %v1646
      %v1679 = vadd.f32 %v1609, %v1646
      %v1680 = vadd.f32 %v1610, %v1646
      %v1681 = vadd.f32 %v1611, %v1646
      %v1682 = vadd.f32 %v1612, %v1646
      %v1683 = vadd.f32 %v1613, %v1646
      %v1684 = vadd.f32 %v1614, %v1646
      %v1685 = vadd.f32 %v1615, %v1646
      %v1686 = vadd.f32 %v1616, %v1646
      %v1687 = vadd.f32 %v1617, %v1646
      %v1688 = vadd.f32 %v1618, %v1646
      %v1689 = vadd.f32 %v1619, %v1646
      %v1690 = vadd.f32 %v1620, %v1646
      %v1691 = vadd.f32 %v1621, %v1646
      %v1692 = vadd.f32 %v1622, %v1646
      %v1693 = vadd.f32 %v1623, %v1646
      %v1694 = vadd.f32 %v1624, %v1646
      %v1695 = vadd.f32 %v1625, %v1646
      %v1696 = vadd.f32 %v1626, %v1646
      %v1697 = vadd.f32 %v1627, %v1646
      %v1698 = vadd.f32 %v1628, %v1646
      %v1699 = vadd.f32 %v1629, %v1646
      %v1700 = vadd.f32 %v1630, %v1646
      %v1701 = vadd.f32 %v1631, %v1646
      %v1702 = vadd.f32 %v1632, %v1646
      %v1703 = vadd.f32 %v1633, %v1646
      %v1704 = vadd.f32 %v1634, %v1646
      %v1705 = vadd.f32 %v1635, %v1646
      %v1706 = vadd.f32 %v1636, %v1646
      %v1707 = vadd.f32 %v1637, %v1646
      %v1708 = vadd.f32 %v1638, %v1646
      %v1709 = vadd.f32 %v1639, %v1646
      %v1710 = vadd.f32 %v1640, %v1646
      %v1711 = vadd.f32 %v1641, %v1646
      %v1712 = vld [vmem:[%s622] sm:$0xff]
      %v1713 = vld [vmem:[%s622 + $0x8] sm:$0xff]
      %v1714 = vld [vmem:[%s622 + $0x10] sm:$0xff]
      %v1715 = vld [vmem:[%s622 + $0x18] sm:$0xff]
      %v1716 = vld [vmem:[%s622 + $0x20] sm:$0xff]
      %v1717 = vld [vmem:[%s622 + $0x28] sm:$0xff]
      %v1718 = vld [vmem:[%s622 + $0x30] sm:$0xff]
      %v1719 = vld [vmem:[%s622 + $0x38] sm:$0xff]
      %v1720 = vpack.c.bf16 %v1713, %v1712
      %v1721 = vpack.c.bf16 %v1715, %v1714
      %v1722 = vpack.c.bf16 %v1717, %v1716
      %v1723 = vpack.c.bf16 %v1719, %v1718
      %v1724 = vpack.c.bf16 %v1649, %v1648
      %v1725 = vpack.c.bf16 %v1651, %v1650
      %v1726 = vpack.c.bf16 %v1653, %v1652
      %v1727 = vpack.c.bf16 %v1655, %v1654
      %v1728 = vpack.c.bf16 %v1657, %v1656
      %v1729 = vpack.c.bf16 %v1659, %v1658
      %v1730 = vpack.c.bf16 %v1661, %v1660
      %v1731 = vpack.c.bf16 %v1663, %v1662
      %v1732 = vpack.c.bf16 %v1665, %v1664
      %v1733 = vpack.c.bf16 %v1667, %v1666
      %v1734 = vpack.c.bf16 %v1669, %v1668
      %v1735 = vpack.c.bf16 %v1671, %v1670
      %v1736 = vpack.c.bf16 %v1673, %v1672
      %v1737 = vpack.c.bf16 %v1675, %v1674
      %v1738 = vpack.c.bf16 %v1677, %v1676
      %v1739 = vpack.c.bf16 %v1679, %v1678
      %v1740 = vpack.c.bf16 %v1681, %v1680
      %v1741 = vpack.c.bf16 %v1683, %v1682
      %v1742 = vpack.c.bf16 %v1685, %v1684
      %v1743 = vpack.c.bf16 %v1687, %v1686
      %v1744 = vpack.c.bf16 %v1689, %v1688
      %v1745 = vpack.c.bf16 %v1691, %v1690
      %v1746 = vpack.c.bf16 %v1693, %v1692
      %v1747 = vpack.c.bf16 %v1695, %v1694
      %v1748 = vpack.c.bf16 %v1697, %v1696
      %v1749 = vpack.c.bf16 %v1699, %v1698
      %v1750 = vpack.c.bf16 %v1701, %v1700
      %v1751 = vpack.c.bf16 %v1703, %v1702
      %v1752 = vpack.c.bf16 %v1705, %v1704
      %v1753 = vpack.c.bf16 %v1707, %v1706
      %v1754 = vpack.c.bf16 %v1709, %v1708
      %v1755 = vpack.c.bf16 %v1711, %v1710
      %v1756 = vld [vmem:[%s627] sm:$0xff]
      %v1757 = vld [vmem:[%s627 + $0x8] sm:$0xff]
      %v1758 = vld [vmem:[%s627 + $0x10] sm:$0xff]
      %v1759 = vld [vmem:[%s627 + $0x18] sm:$0xff]
      %v1760 = vld [vmem:[%s627 + $0x20] sm:$0xff]
      %v1761 = vld [vmem:[%s627 + $0x28] sm:$0xff]
      %v1762 = vld [vmem:[%s627 + $0x30] sm:$0xff]
      %v1763 = vld [vmem:[%s627 + $0x38] sm:$0xff]
      %1765 = vset.pattern.permute.xlu0 0
      %1766 = vperm.xlu0 %1765, %v1756
      %v1767 = vpop.permute.xlu0 %1766
      %1770 = vset.pattern.permute.xlu0 0
      %1771 = vperm.xlu0 %1770, %v1757
      %v1772 = vpop.permute.xlu0 %1771
      %1775 = vset.pattern.permute.xlu0 0
      %1776 = vperm.xlu0 %1775, %v1758
      %v1777 = vpop.permute.xlu0 %1776
      %1780 = vset.pattern.permute.xlu0 0
      %1781 = vperm.xlu0 %1780, %v1759
      %v1782 = vpop.permute.xlu0 %1781
      %1785 = vset.pattern.permute.xlu0 0
      %1786 = vperm.xlu0 %1785, %v1760
      %v1787 = vpop.permute.xlu0 %1786
      %1790 = vset.pattern.permute.xlu0 0
      %1791 = vperm.xlu0 %1790, %v1761
      %v1792 = vpop.permute.xlu0 %1791
      %1795 = vset.pattern.permute.xlu0 0
      %1796 = vperm.xlu0 %1795, %v1762
      %v1797 = vpop.permute.xlu0 %1796
      %1800 = vset.pattern.permute.xlu0 0
      %1801 = vperm.xlu0 %1800, %v1763
      %v1802 = vpop.permute.xlu0 %1801
      %vm1804 = vcmask 523264
      %v1806 = vsel %vm1804, %v1720, 0
      %v1809 = vsel %vm1804, %v1721, 0
      %v1812 = vsel %vm1804, %v1722, 0
      %v1815 = vsel %vm1804, %v1723, 0
      %1817 = vmatprep.subr.bf16.mxu0 0
      %1818 = vmatpush1.bf16.msra.mxu0 %v1724
      %1819 = vmatprep.subr.bf16.mxu0 0
      %1820 = vmatpush1.bf16.msra.mxu0 %v1725
      %1821 = vmatprep.subr.bf16.mxu0 0
      %1822 = vmatpush1.bf16.msra.mxu0 %v1726
      %1823 = vmatprep.subr.bf16.mxu0 0
      %1824 = vmatpush1.bf16.msra.mxu0 %v1727
      %1825 = vmatprep.subr.bf16.mxu0 0
      %1826 = vmatpush1.bf16.msra.mxu0 0
      %1827 = vmatprep.subr.bf16.mxu0 0
      %1828 = vmatpush1.bf16.msra.mxu0 0
      %1829 = vmatprep.subr.bf16.mxu0 0
      %1830 = vmatpush1.bf16.msra.mxu0 0
      %1831 = vmatprep.subr.bf16.mxu0 0
      %1832 = vmatpush1.bf16.msra.mxu0 0
      %1833 = vmatprep.subr.bf16.mxu0 0
      %1834 = vmatpush1.bf16.msra.mxu0 0
      %1835 = vmatprep.subr.bf16.mxu0 0
      %1836 = vmatpush1.bf16.msra.mxu0 0
      %1837 = vmatprep.subr.bf16.mxu0 0
      %1838 = vmatpush1.bf16.msra.mxu0 0
      %1839 = vmatprep.subr.bf16.mxu0 0
      %1840 = vmatpush1.bf16.msra.mxu0 0
      %1841 = vmatprep.subr.bf16.mxu0 0
      %1842 = vmatpush1.bf16.msra.mxu0 0
      %1843 = vmatprep.subr.bf16.mxu0 0
      %1844 = vmatpush1.bf16.msra.mxu0 0
      %1845 = vmatprep.subr.bf16.mxu0 0
      %1846 = vmatpush1.bf16.msra.mxu0 0
      %1847 = vmatprep.subr.bf16.mxu0 0
      %1848 = vmatpush1.bf16.msra.mxu0 0
      %1849 = vmatprep.mubr.bf16.mxu0 0
      %1850 = vmatmul.mubr.bf16.gmra.mrb[0].mxu0 %v1806
      %v1851 = vpop.f32.mrb[0].mxu0
      %v1852 = vadd.f32 %v1767, %v1851
      %v1853 = vpop.f32.mrb[0].mxu0
      %v1854 = vpop.f32.mrb[0].mxu0
      %v1855 = vadd.f32 %v1772, %v1854
      %v1856 = vpop.f32.mrb[0].mxu0
      %1857 = vmatprep.mubr.bf16.mxu0 0
      %1858 = vmatmul.mubr.bf16.gmra.mrb[0].mxu0 %v1809
      %v1859 = vpop.f32.mrb[0].mxu0
      %v1860 = vadd.f32 %v1777, %v1859
      %v1861 = vpop.f32.mrb[0].mxu0
      %v1862 = vpop.f32.mrb[0].mxu0
      %v1863 = vadd.f32 %v1782, %v1862
      %v1864 = vpop.f32.mrb[0].mxu0
      %1865 = vmatprep.mubr.bf16.mxu0 0
      %1866 = vmatmul.mubr.bf16.gmra.mrb[0].mxu0 %v1812
      %v1867 = vpop.f32.mrb[0].mxu0
      %v1868 = vadd.f32 %v1787, %v1867
      %v1869 = vpop.f32.mrb[0].mxu0
      %v1870 = vpop.f32.mrb[0].mxu0
      %v1871 = vadd.f32 %v1792, %v1870
      %v1872 = vpop.f32.mrb[0].mxu0
      %1873 = vmatprep.mubr.bf16.mxu0 0
      %1874 = vmatmul.mubr.bf16.gmra.mrb[0].mxu0 %v1815
      %v1875 = vpop.f32.mrb[0].mxu0
      %v1876 = vadd.f32 %v1797, %v1875
      %v1877 = vpop.f32.mrb[0].mxu0
      %v1878 = vpop.f32.mrb[0].mxu0
      %v1879 = vadd.f32 %v1802, %v1878
      %v1880 = vpop.f32.mrb[0].mxu0
      %1881 = vdwg.mxu0
      %1882 = vmatprep.subr.bf16.mxu0 0
      %1883 = vmatpush1.bf16.msra.mxu0 %v1728
      %1884 = vmatprep.subr.bf16.mxu0 0
      %1885 = vmatpush1.bf16.msra.mxu0 %v1729
      %1886 = vmatprep.subr.bf16.mxu0 0
      %1887 = vmatpush1.bf16.msra.mxu0 %v1730
      %1888 = vmatprep.subr.bf16.mxu0 0
      %1889 = vmatpush1.bf16.msra.mxu0 %v1731
      %1890 = vmatprep.subr.bf16.mxu0 0
      %1891 = vmatpush1.bf16.msra.mxu0 0
      %1892 = vmatprep.subr.bf16.mxu0 0
      %1893 = vmatpush1.bf16.msra.mxu0 0
      %1894 = vmatprep.subr.bf16.mxu0 0
      %1895 = vmatpush1.bf16.msra.mxu0 0
      %1896 = vmatprep.subr.bf16.mxu0 0
      %1897 = vmatpush1.bf16.msra.mxu0 0
      %1898 = vmatprep.subr.bf16.mxu0 0
      %1899 = vmatpush1.bf16.msra.mxu0 0
      %1900 = vmatprep.subr.bf16.mxu0 0
      %1901 = vmatpush1.bf16.msra.mxu0 0
      %1902 = vmatprep.subr.bf16.mxu0 0
      %1903 = vmatpush1.bf16.msra.mxu0 0
      %1904 = vmatprep.subr.bf16.mxu0 0
      %1905 = vmatpush1.bf16.msra.mxu0 0
      %1906 = vmatprep.subr.bf16.mxu0 0
      %1907 = vmatpush1.bf16.msra.mxu0 0
      %1908 = vmatprep.subr.bf16.mxu0 0
      %1909 = vmatpush1.bf16.msra.mxu0 0
      %1910 = vmatprep.subr.bf16.mxu0 0
      %1911 = vmatpush1.bf16.msra.mxu0 0
      %1912 = vmatprep.subr.bf16.mxu0 0
      %1913 = vmatpush1.bf16.msra.mxu0 0
      %1914 = vmatprep.mubr.bf16.mxu0 0
      %1915 = vmatmul.mubr.bf16.gmra.mrb[0].mxu0 %v1806
      %v1916 = vpop.f32.mrb[0].mxu0
      %v1917 = vadd.f32 %v1767, %v1916
      %v1918 = vpop.f32.mrb[0].mxu0
      %v1919 = vpop.f32.mrb[0].mxu0
      %v1920 = vadd.f32 %v1772, %v1919
      %v1921 = vpop.f32.mrb[0].mxu0
      %1922 = vmatprep.mubr.bf16.mxu0 0
      %1923 = vmatmul.mubr.bf16.gmra.mrb[0].mxu0 %v1809
      %v1924 = vpop.f32.mrb[0].mxu0
      %v1925 = vadd.f32 %v1777, %v1924
      %v1926 = vpop.f32.mrb[0].mxu0
      %v1927 = vpop.f32.mrb[0].mxu0
      %v1928 = vadd.f32 %v1782, %v1927
      %v1929 = vpop.f32.mrb[0].mxu0
      %1930 = vmatprep.mubr.bf16.mxu0 0
      %1931 = vmatmul.mubr.bf16.gmra.mrb[0].mxu0 %v1812
      %v1932 = vpop.f32.mrb[0].mxu0
      %v1933 = vadd.f32 %v1787, %v1932
      %v1934 = vpop.f32.mrb[0].mxu0
      %v1935 = vpop.f32.mrb[0].mxu0
      %v1936 = vadd.f32 %v1792, %v1935
      %v1937 = vpop.f32.mrb[0].mxu0
      %1938 = vmatprep.mubr.bf16.mxu0 0
      %1939 = vmatmul.mubr.bf16.gmra.mrb[0].mxu0 %v1815
      %v1940 = vpop.f32.mrb[0].mxu0
      %v1941 = vadd.f32 %v1797, %v1940
      %v1942 = vpop.f32.mrb[0].mxu0
      %v1943 = vpop.f32.mrb[0].mxu0
      %v1944 = vadd.f32 %v1802, %v1943
      %v1945 = vpop.f32.mrb[0].mxu0
      %1946 = vdwg.mxu0
      %1947 = vmatprep.subr.bf16.mxu0 0
      %1948 = vmatpush1.bf16.msra.mxu0 %v1732
      %1949 = vmatprep.subr.bf16.mxu0 0
      %1950 = vmatpush1.bf16.msra.mxu0 %v1733
      %1951 = vmatprep.subr.bf16.mxu0 0
      %1952 = vmatpush1.bf16.msra.mxu0 %v1734
      %1953 = vmatprep.subr.bf16.mxu0 0
      %1954 = vmatpush1.bf16.msra.mxu0 %v1735
      %1955 = vmatprep.subr.bf16.mxu0 0
      %1956 = vmatpush1.bf16.msra.mxu0 0
      %1957 = vmatprep.subr.bf16.mxu0 0
      %1958 = vmatpush1.bf16.msra.mxu0 0
      %1959 = vmatprep.subr.bf16.mxu0 0
      %1960 = vmatpush1.bf16.msra.mxu0 0
      %1961 = vmatprep.subr.bf16.mxu0 0
      %1962 = vmatpush1.bf16.msra.mxu0 0
      %1963 = vmatprep.subr.bf16.mxu0 0
      %1964 = vmatpush1.bf16.msra.mxu0 0
      %1965 = vmatprep.subr.bf16.mxu0 0
      %1966 = vmatpush1.bf16.msra.mxu0 0
      %1967 = vmatprep.subr.bf16.mxu0 0
      %1968 = vmatpush1.bf16.msra.mxu0 0
      %1969 = vmatprep.subr.bf16.mxu0 0
      %1970 = vmatpush1.bf16.msra.mxu0 0
      %1971 = vmatprep.subr.bf16.mxu0 0
      %1972 = vmatpush1.bf16.msra.mxu0 0
      %1973 = vmatprep.subr.bf16.mxu0 0
      %1974 = vmatpush1.bf16.msra.mxu0 0
      %1975 = vmatprep.subr.bf16.mxu0 0
      %1976 = vmatpush1.bf16.msra.mxu0 0
      %1977 = vmatprep.subr.bf16.mxu0 0
      %1978 = vmatpush1.bf16.msra.mxu0 0
      %1979 = vmatprep.mubr.bf16.mxu0 0
      %1980 = vmatmul.mubr.bf16.gmra.mrb[0].mxu0 %v1806
      %v1981 = vpop.f32.mrb[0].mxu0
      %v1982 = vadd.f32 %v1767, %v1981
      %v1983 = vpop.f32.mrb[0].mxu0
      %v1984 = vpop.f32.mrb[0].mxu0
      %v1985 = vadd.f32 %v1772, %v1984
      %v1986 = vpop.f32.mrb[0].mxu0
      %1987 = vmatprep.mubr.bf16.mxu0 0
      %1988 = vmatmul.mubr.bf16.gmra.mrb[0].mxu0 %v1809
      %v1989 = vpop.f32.mrb[0].mxu0
      %v1990 = vadd.f32 %v1777, %v1989
      %v1991 = vpop.f32.mrb[0].mxu0
      %v1992 = vpop.f32.mrb[0].mxu0
      %v1993 = vadd.f32 %v1782, %v1992
      %v1994 = vpop.f32.mrb[0].mxu0
      %1995 = vmatprep.mubr.bf16.mxu0 0
      %1996 = vmatmul.mubr.bf16.gmra.mrb[0].mxu0 %v1812
      %v1997 = vpop.f32.mrb[0].mxu0
      %v1998 = vadd.f32 %v1787, %v1997
      %v1999 = vpop.f32.mrb[0].mxu0
      %v2000 = vpop.f32.mrb[0].mxu0
      %v2001 = vadd.f32 %v1792, %v2000
      %v2002 = vpop.f32.mrb[0].mxu0
      %2003 = vmatprep.mubr.bf16.mxu0 0
      %2004 = vmatmul.mubr.bf16.gmra.mrb[0].mxu0 %v1815
      %v2005 = vpop.f32.mrb[0].mxu0
      %v2006 = vadd.f32 %v1797, %v2005
      %v2007 = vpop.f32.mrb[0].mxu0
      %v2008 = vpop.f32.mrb[0].mxu0
      %v2009 = vadd.f32 %v1802, %v2008
      %v2010 = vpop.f32.mrb[0].mxu0
      %2011 = vdwg.mxu0
      %2012 = vmatprep.subr.bf16.mxu0 0
      %2013 = vmatpush1.bf16.msra.mxu0 %v1736
      %2014 = vmatprep.subr.bf16.mxu0 0
      %2015 = vmatpush1.bf16.msra.mxu0 %v1737
      %2016 = vmatprep.subr.bf16.mxu0 0
      %2017 = vmatpush1.bf16.msra.mxu0 %v1738
      %2018 = vmatprep.subr.bf16.mxu0 0
      %2019 = vmatpush1.bf16.msra.mxu0 %v1739
      %2020 = vmatprep.subr.bf16.mxu0 0
      %2021 = vmatpush1.bf16.msra.mxu0 0
      %2022 = vmatprep.subr.bf16.mxu0 0
      %2023 = vmatpush1.bf16.msra.mxu0 0
      %2024 = vmatprep.subr.bf16.mxu0 0
      %2025 = vmatpush1.bf16.msra.mxu0 0
      %2026 = vmatprep.subr.bf16.mxu0 0
      %2027 = vmatpush1.bf16.msra.mxu0 0
      %2028 = vmatprep.subr.bf16.mxu0 0
      %2029 = vmatpush1.bf16.msra.mxu0 0
      %2030 = vmatprep.subr.bf16.mxu0 0
      %2031 = vmatpush1.bf16.msra.mxu0 0
      %2032 = vmatprep.subr.bf16.mxu0 0
      %2033 = vmatpush1.bf16.msra.mxu0 0
      %2034 = vmatprep.subr.bf16.mxu0 0
      %2035 = vmatpush1.bf16.msra.mxu0 0
      %2036 = vmatprep.subr.bf16.mxu0 0
      %2037 = vmatpush1.bf16.msra.mxu0 0
      %2038 = vmatprep.subr.bf16.mxu0 0
      %2039 = vmatpush1.bf16.msra.mxu0 0
      %2040 = vmatprep.subr.bf16.mxu0 0
      %2041 = vmatpush1.bf16.msra.mxu0 0
      %2042 = vmatprep.subr.bf16.mxu0 0
      %2043 = vmatpush1.bf16.msra.mxu0 0
      %2044 = vmatprep.mubr.bf16.mxu0 0
      %2045 = vmatmul.mubr.bf16.gmra.mrb[0].mxu0 %v1806
      %v2046 = vpop.f32.mrb[0].mxu0
      %v2047 = vadd.f32 %v1767, %v2046
      %v2048 = vpop.f32.mrb[0].mxu0
      %v2049 = vpop.f32.mrb[0].mxu0
      %v2050 = vadd.f32 %v1772, %v2049
      %v2051 = vpop.f32.mrb[0].mxu0
      %2052 = vmatprep.mubr.bf16.mxu0 0
      %2053 = vmatmul.mubr.bf16.gmra.mrb[0].mxu0 %v1809
      %v2054 = vpop.f32.mrb[0].mxu0
      %v2055 = vadd.f32 %v1777, %v2054
      %v2056 = vpop.f32.mrb[0].mxu0
      %v2057 = vpop.f32.mrb[0].mxu0
      %v2058 = vadd.f32 %v1782, %v2057
      %v2059 = vpop.f32.mrb[0].mxu0
      %2060 = vmatprep.mubr.bf16.mxu0 0
      %2061 = vmatmul.mubr.bf16.gmra.mrb[0].mxu0 %v1812
      %v2062 = vpop.f32.mrb[0].mxu0
      %v2063 = vadd.f32 %v1787, %v2062
      %v2064 = vpop.f32.mrb[0].mxu0
      %v2065 = vpop.f32.mrb[0].mxu0
      %v2066 = vadd.f32 %v1792, %v2065
      %v2067 = vpop.f32.mrb[0].mxu0
      %2068 = vmatprep.mubr.bf16.mxu0 0
      %2069 = vmatmul.mubr.bf16.gmra.mrb[0].mxu0 %v1815
      %v2070 = vpop.f32.mrb[0].mxu0
      %v2071 = vadd.f32 %v1797, %v2070
      %v2072 = vpop.f32.mrb[0].mxu0
      %v2073 = vpop.f32.mrb[0].mxu0
      %v2074 = vadd.f32 %v1802, %v2073
      %v2075 = vpop.f32.mrb[0].mxu0
      %2076 = vdwg.mxu0
      %2077 = vmatprep.subr.bf16.mxu0 0
      %2078 = vmatpush1.bf16.msra.mxu0 %v1740
      %2079 = vmatprep.subr.bf16.mxu0 0
      %2080 = vmatpush1.bf16.msra.mxu0 %v1741
      %2081 = vmatprep.subr.bf16.mxu0 0
      %2082 = vmatpush1.bf16.msra.mxu0 %v1742
      %2083 = vmatprep.subr.bf16.mxu0 0
      %2084 = vmatpush1.bf16.msra.mxu0 %v1743
      %2085 = vmatprep.subr.bf16.mxu0 0
      %2086 = vmatpush1.bf16.msra.mxu0 0
      %2087 = vmatprep.subr.bf16.mxu0 0
      %2088 = vmatpush1.bf16.msra.mxu0 0
      %2089 = vmatprep.subr.bf16.mxu0 0
      %2090 = vmatpush1.bf16.msra.mxu0 0
      %2091 = vmatprep.subr.bf16.mxu0 0
      %2092 = vmatpush1.bf16.msra.mxu0 0
      %2093 = vmatprep.subr.bf16.mxu0 0
      %2094 = vmatpush1.bf16.msra.mxu0 0
      %2095 = vmatprep.subr.bf16.mxu0 0
      %2096 = vmatpush1.bf16.msra.mxu0 0
      %2097 = vmatprep.subr.bf16.mxu0 0
      %2098 = vmatpush1.bf16.msra.mxu0 0
      %2099 = vmatprep.subr.bf16.mxu0 0
      %2100 = vmatpush1.bf16.msra.mxu0 0
      %2101 = vmatprep.subr.bf16.mxu0 0
      %2102 = vmatpush1.bf16.msra.mxu0 0
      %2103 = vmatprep.subr.bf16.mxu0 0
      %2104 = vmatpush1.bf16.msra.mxu0 0
      %2105 = vmatprep.subr.bf16.mxu0 0
      %2106 = vmatpush1.bf16.msra.mxu0 0
      %2107 = vmatprep.subr.bf16.mxu0 0
      %2108 = vmatpush1.bf16.msra.mxu0 0
      %2109 = vmatprep.mubr.bf16.mxu0 0
      %2110 = vmatmul.mubr.bf16.gmra.mrb[0].mxu0 %v1806
      %v2111 = vpop.f32.mrb[0].mxu0
      %v2112 = vadd.f32 %v1767, %v2111
      %v2113 = vpop.f32.mrb[0].mxu0
      %v2114 = vpop.f32.mrb[0].mxu0
      %v2115 = vadd.f32 %v1772, %v2114
      %v2116 = vpop.f32.mrb[0].mxu0
      %2117 = vmatprep.mubr.bf16.mxu0 0
      %2118 = vmatmul.mubr.bf16.gmra.mrb[0].mxu0 %v1809
      %v2119 = vpop.f32.mrb[0].mxu0
      %v2120 = vadd.f32 %v1777, %v2119
      %v2121 = vpop.f32.mrb[0].mxu0
      %v2122 = vpop.f32.mrb[0].mxu0
      %v2123 = vadd.f32 %v1782, %v2122
      %v2124 = vpop.f32.mrb[0].mxu0
      %2125 = vmatprep.mubr.bf16.mxu0 0
      %2126 = vmatmul.mubr.bf16.gmra.mrb[0].mxu0 %v1812
      %v2127 = vpop.f32.mrb[0].mxu0
      %v2128 = vadd.f32 %v1787, %v2127
      %v2129 = vpop.f32.mrb[0].mxu0
      %v2130 = vpop.f32.mrb[0].mxu0
      %v2131 = vadd.f32 %v1792, %v2130
      %v2132 = vpop.f32.mrb[0].mxu0
      %2133 = vmatprep.mubr.bf16.mxu0 0
      %2134 = vmatmul.mubr.bf16.gmra.mrb[0].mxu0 %v1815
      %v2135 = vpop.f32.mrb[0].mxu0
      %v2136 = vadd.f32 %v1797, %v2135
      %v2137 = vpop.f32.mrb[0].mxu0
      %v2138 = vpop.f32.mrb[0].mxu0
      %v2139 = vadd.f32 %v1802, %v2138
      %v2140 = vpop.f32.mrb[0].mxu0
      %2141 = vdwg.mxu0
      %2142 = vmatprep.subr.bf16.mxu0 0
      %2143 = vmatpush1.bf16.msra.mxu0 %v1744
      %2144 = vmatprep.subr.bf16.mxu0 0
      %2145 = vmatpush1.bf16.msra.mxu0 %v1745
      %2146 = vmatprep.subr.bf16.mxu0 0
      %2147 = vmatpush1.bf16.msra.mxu0 %v1746
      %2148 = vmatprep.subr.bf16.mxu0 0
      %2149 = vmatpush1.bf16.msra.mxu0 %v1747
      %2150 = vmatprep.subr.bf16.mxu0 0
      %2151 = vmatpush1.bf16.msra.mxu0 0
      %2152 = vmatprep.subr.bf16.mxu0 0
      %2153 = vmatpush1.bf16.msra.mxu0 0
      %2154 = vmatprep.subr.bf16.mxu0 0
      %2155 = vmatpush1.bf16.msra.mxu0 0
      %2156 = vmatprep.subr.bf16.mxu0 0
      %2157 = vmatpush1.bf16.msra.mxu0 0
      %2158 = vmatprep.subr.bf16.mxu0 0
      %2159 = vmatpush1.bf16.msra.mxu0 0
      %2160 = vmatprep.subr.bf16.mxu0 0
      %2161 = vmatpush1.bf16.msra.mxu0 0
      %2162 = vmatprep.subr.bf16.mxu0 0
      %2163 = vmatpush1.bf16.msra.mxu0 0
      %2164 = vmatprep.subr.bf16.mxu0 0
      %2165 = vmatpush1.bf16.msra.mxu0 0
      %2166 = vmatprep.subr.bf16.mxu0 0
      %2167 = vmatpush1.bf16.msra.mxu0 0
      %2168 = vmatprep.subr.bf16.mxu0 0
      %2169 = vmatpush1.bf16.msra.mxu0 0
      %2170 = vmatprep.subr.bf16.mxu0 0
      %2171 = vmatpush1.bf16.msra.mxu0 0
      %2172 = vmatprep.subr.bf16.mxu0 0
      %2173 = vmatpush1.bf16.msra.mxu0 0
      %2174 = vmatprep.mubr.bf16.mxu0 0
      %2175 = vmatmul.mubr.bf16.gmra.mrb[0].mxu0 %v1806
      %v2176 = vpop.f32.mrb[0].mxu0
      %v2177 = vadd.f32 %v1767, %v2176
      %v2178 = vpop.f32.mrb[0].mxu0
      %v2179 = vpop.f32.mrb[0].mxu0
      %v2180 = vadd.f32 %v1772, %v2179
      %v2181 = vpop.f32.mrb[0].mxu0
      %2182 = vmatprep.mubr.bf16.mxu0 0
      %2183 = vmatmul.mubr.bf16.gmra.mrb[0].mxu0 %v1809
      %v2184 = vpop.f32.mrb[0].mxu0
      %v2185 = vadd.f32 %v1777, %v2184
      %v2186 = vpop.f32.mrb[0].mxu0
      %v2187 = vpop.f32.mrb[0].mxu0
      %v2188 = vadd.f32 %v1782, %v2187
      %v2189 = vpop.f32.mrb[0].mxu0
      %2190 = vmatprep.mubr.bf16.mxu0 0
      %2191 = vmatmul.mubr.bf16.gmra.mrb[0].mxu0 %v1812
      %v2192 = vpop.f32.mrb[0].mxu0
      %v2193 = vadd.f32 %v1787, %v2192
      %v2194 = vpop.f32.mrb[0].mxu0
      %v2195 = vpop.f32.mrb[0].mxu0
      %v2196 = vadd.f32 %v1792, %v2195
      %v2197 = vpop.f32.mrb[0].mxu0
      %2198 = vmatprep.mubr.bf16.mxu0 0
      %2199 = vmatmul.mubr.bf16.gmra.mrb[0].mxu0 %v1815
      %v2200 = vpop.f32.mrb[0].mxu0
      %v2201 = vadd.f32 %v1797, %v2200
      %v2202 = vpop.f32.mrb[0].mxu0
      %v2203 = vpop.f32.mrb[0].mxu0
      %v2204 = vadd.f32 %v1802, %v2203
      %v2205 = vpop.f32.mrb[0].mxu0
      %2206 = vdwg.mxu0
      %2207 = vmatprep.subr.bf16.mxu0 0
      %2208 = vmatpush1.bf16.msra.mxu0 %v1748
      %2209 = vmatprep.subr.bf16.mxu0 0
      %2210 = vmatpush1.bf16.msra.mxu0 %v1749
      %2211 = vmatprep.subr.bf16.mxu0 0
      %2212 = vmatpush1.bf16.msra.mxu0 %v1750
      %2213 = vmatprep.subr.bf16.mxu0 0
      %2214 = vmatpush1.bf16.msra.mxu0 %v1751
      %2215 = vmatprep.subr.bf16.mxu0 0
      %2216 = vmatpush1.bf16.msra.mxu0 0
      %2217 = vmatprep.subr.bf16.mxu0 0
      %2218 = vmatpush1.bf16.msra.mxu0 0
      %2219 = vmatprep.subr.bf16.mxu0 0
      %2220 = vmatpush1.bf16.msra.mxu0 0
      %2221 = vmatprep.subr.bf16.mxu0 0
      %2222 = vmatpush1.bf16.msra.mxu0 0
      %2223 = vmatprep.subr.bf16.mxu0 0
      %2224 = vmatpush1.bf16.msra.mxu0 0
      %2225 = vmatprep.subr.bf16.mxu0 0
      %2226 = vmatpush1.bf16.msra.mxu0 0
      %2227 = vmatprep.subr.bf16.mxu0 0
      %2228 = vmatpush1.bf16.msra.mxu0 0
      %2229 = vmatprep.subr.bf16.mxu0 0
      %2230 = vmatpush1.bf16.msra.mxu0 0
      %2231 = vmatprep.subr.bf16.mxu0 0
      %2232 = vmatpush1.bf16.msra.mxu0 0
      %2233 = vmatprep.subr.bf16.mxu0 0
      %2234 = vmatpush1.bf16.msra.mxu0 0
      %2235 = vmatprep.subr.bf16.mxu0 0
      %2236 = vmatpush1.bf16.msra.mxu0 0
      %2237 = vmatprep.subr.bf16.mxu0 0
      %2238 = vmatpush1.bf16.msra.mxu0 0
      %2239 = vmatprep.mubr.bf16.mxu0 0
      %2240 = vmatmul.mubr.bf16.gmra.mrb[0].mxu0 %v1806
      %v2241 = vpop.f32.mrb[0].mxu0
      %v2242 = vadd.f32 %v1767, %v2241
      %v2243 = vpop.f32.mrb[0].mxu0
      %v2244 = vpop.f32.mrb[0].mxu0
      %v2245 = vadd.f32 %v1772, %v2244
      %v2246 = vpop.f32.mrb[0].mxu0
      %2247 = vmatprep.mubr.bf16.mxu0 0
      %2248 = vmatmul.mubr.bf16.gmra.mrb[0].mxu0 %v1809
      %v2249 = vpop.f32.mrb[0].mxu0
      %v2250 = vadd.f32 %v1777, %v2249
      %v2251 = vpop.f32.mrb[0].mxu0
      %v2252 = vpop.f32.mrb[0].mxu0
      %v2253 = vadd.f32 %v1782, %v2252
      %v2254 = vpop.f32.mrb[0].mxu0
      %2255 = vmatprep.mubr.bf16.mxu0 0
      %2256 = vmatmul.mubr.bf16.gmra.mrb[0].mxu0 %v1812
      %v2257 = vpop.f32.mrb[0].mxu0
      %v2258 = vadd.f32 %v1787, %v2257
      %v2259 = vpop.f32.mrb[0].mxu0
      %v2260 = vpop.f32.mrb[0].mxu0
      %v2261 = vadd.f32 %v1792, %v2260
      %v2262 = vpop.f32.mrb[0].mxu0
      %2263 = vmatprep.mubr.bf16.mxu0 0
      %2264 = vmatmul.mubr.bf16.gmra.mrb[0].mxu0 %v1815
      %v2265 = vpop.f32.mrb[0].mxu0
      %v2266 = vadd.f32 %v1797, %v2265
      %v2267 = vpop.f32.mrb[0].mxu0
      %v2268 = vpop.f32.mrb[0].mxu0
      %v2269 = vadd.f32 %v1802, %v2268
      %v2270 = vpop.f32.mrb[0].mxu0
      %2271 = vdwg.mxu0
      %2272 = vmatprep.subr.bf16.mxu0 0
      %2273 = vmatpush1.bf16.msra.mxu0 %v1752
      %2274 = vmatprep.subr.bf16.mxu0 0
      %2275 = vmatpush1.bf16.msra.mxu0 %v1753
      %2276 = vmatprep.subr.bf16.mxu0 0
      %2277 = vmatpush1.bf16.msra.mxu0 %v1754
      %2278 = vmatprep.subr.bf16.mxu0 0
      %2279 = vmatpush1.bf16.msra.mxu0 %v1755
      %2280 = vmatprep.subr.bf16.mxu0 0
      %2281 = vmatpush1.bf16.msra.mxu0 0
      %2282 = vmatprep.subr.bf16.mxu0 0
      %2283 = vmatpush1.bf16.msra.mxu0 0
      %2284 = vmatprep.subr.bf16.mxu0 0
      %2285 = vmatpush1.bf16.msra.mxu0 0
      %2286 = vmatprep.subr.bf16.mxu0 0
      %2287 = vmatpush1.bf16.msra.mxu0 0
      %2288 = vmatprep.subr.bf16.mxu0 0
      %2289 = vmatpush1.bf16.msra.mxu0 0
      %2290 = vmatprep.subr.bf16.mxu0 0
      %2291 = vmatpush1.bf16.msra.mxu0 0
      %2292 = vmatprep.subr.bf16.mxu0 0
      %2293 = vmatpush1.bf16.msra.mxu0 0
      %2294 = vmatprep.subr.bf16.mxu0 0
      %2295 = vmatpush1.bf16.msra.mxu0 0
      %2296 = vmatprep.subr.bf16.mxu0 0
      %2297 = vmatpush1.bf16.msra.mxu0 0
      %2298 = vmatprep.subr.bf16.mxu0 0
      %2299 = vmatpush1.bf16.msra.mxu0 0
      %2300 = vmatprep.subr.bf16.mxu0 0
      %2301 = vmatpush1.bf16.msra.mxu0 0
      %2302 = vmatprep.subr.bf16.mxu0 0
      %2303 = vmatpush1.bf16.msra.mxu0 0
      %2304 = vmatprep.mubr.bf16.mxu0 0
      %2305 = vmatmul.mubr.bf16.gmra.mrb[0].mxu0 %v1806
      %v2306 = vpop.f32.mrb[0].mxu0
      %v2307 = vadd.f32 %v1767, %v2306
      %v2308 = vpop.f32.mrb[0].mxu0
      %v2309 = vpop.f32.mrb[0].mxu0
      %v2310 = vadd.f32 %v1772, %v2309
      %v2311 = vpop.f32.mrb[0].mxu0
      %2312 = vmatprep.mubr.bf16.mxu0 0
      %2313 = vmatmul.mubr.bf16.gmra.mrb[0].mxu0 %v1809
      %v2314 = vpop.f32.mrb[0].mxu0
      %v2315 = vadd.f32 %v1777, %v2314
      %v2316 = vpop.f32.mrb[0].mxu0
      %v2317 = vpop.f32.mrb[0].mxu0
      %v2318 = vadd.f32 %v1782, %v2317
      %v2319 = vpop.f32.mrb[0].mxu0
      %2320 = vmatprep.mubr.bf16.mxu0 0
      %2321 = vmatmul.mubr.bf16.gmra.mrb[0].mxu0 %v1812
      %v2322 = vpop.f32.mrb[0].mxu0
      %v2323 = vadd.f32 %v1787, %v2322
      %v2324 = vpop.f32.mrb[0].mxu0
      %v2325 = vpop.f32.mrb[0].mxu0
      %v2326 = vadd.f32 %v1792, %v2325
      %v2327 = vpop.f32.mrb[0].mxu0
      %2328 = vmatprep.mubr.bf16.mxu0 0
      %2329 = vmatmul.mubr.bf16.gmra.mrb[0].mxu0 %v1815
      %v2330 = vpop.f32.mrb[0].mxu0
      %v2331 = vadd.f32 %v1797, %v2330
      %v2332 = vpop.f32.mrb[0].mxu0
      %v2333 = vpop.f32.mrb[0].mxu0
      %v2334 = vadd.f32 %v1802, %v2333
      %v2335 = vpop.f32.mrb[0].mxu0
      %2336 = vdwg.mxu0
      %v2337 = vmul.f32 %v1852, 0.5
      %v2338 = vmul.f32 %v1855, 0.5
      %v2339 = vmul.f32 %v1860, 0.5
      %v2340 = vmul.f32 %v1863, 0.5
      %v2341 = vmul.f32 %v1868, 0.5
      %v2342 = vmul.f32 %v1871, 0.5
      %v2343 = vmul.f32 %v1876, 0.5
      %v2344 = vmul.f32 %v1879, 0.5
      %v2345 = vmul.f32 %v1917, 0.5
      %v2346 = vmul.f32 %v1920, 0.5
      %v2347 = vmul.f32 %v1925, 0.5
      %v2348 = vmul.f32 %v1928, 0.5
      %v2349 = vmul.f32 %v1933, 0.5
      %v2350 = vmul.f32 %v1936, 0.5
      %v2351 = vmul.f32 %v1941, 0.5
      %v2352 = vmul.f32 %v1944, 0.5
      %v2353 = vmul.f32 %v1982, 0.5
      %v2354 = vmul.f32 %v1985, 0.5
      %v2355 = vmul.f32 %v1990, 0.5
      %v2356 = vmul.f32 %v1993, 0.5
      %v2357 = vmul.f32 %v1998, 0.5
      %v2358 = vmul.f32 %v2001, 0.5
      %v2359 = vmul.f32 %v2006, 0.5
      %v2360 = vmul.f32 %v2009, 0.5
      %v2361 = vmul.f32 %v2047, 0.5
      %v2362 = vmul.f32 %v2050, 0.5
      %v2363 = vmul.f32 %v2055, 0.5
      %v2364 = vmul.f32 %v2058, 0.5
      %v2365 = vmul.f32 %v2063, 0.5
      %v2366 = vmul.f32 %v2066, 0.5
      %v2367 = vmul.f32 %v2071, 0.5
      %v2368 = vmul.f32 %v2074, 0.5
      %v2369 = vmul.f32 %v2112, 0.5
      %v2370 = vmul.f32 %v2115, 0.5
      %v2371 = vmul.f32 %v2120, 0.5
      %v2372 = vmul.f32 %v2123, 0.5
      %v2373 = vmul.f32 %v2128, 0.5
      %v2374 = vmul.f32 %v2131, 0.5
      %v2375 = vmul.f32 %v2136, 0.5
      %v2376 = vmul.f32 %v2139, 0.5
      %v2377 = vmul.f32 %v2177, 0.5
      %v2378 = vmul.f32 %v2180, 0.5
      %v2379 = vmul.f32 %v2185, 0.5
      %v2380 = vmul.f32 %v2188, 0.5
      %v2381 = vmul.f32 %v2193, 0.5
      %v2382 = vmul.f32 %v2196, 0.5
      %v2383 = vmul.f32 %v2201, 0.5
      %v2384 = vmul.f32 %v2204, 0.5
      %v2385 = vmul.f32 %v2242, 0.5
      %v2386 = vmul.f32 %v2245, 0.5
      %v2387 = vmul.f32 %v2250, 0.5
      %v2388 = vmul.f32 %v2253, 0.5
      %v2389 = vmul.f32 %v2258, 0.5
      %v2390 = vmul.f32 %v2261, 0.5
      %v2391 = vmul.f32 %v2266, 0.5
      %v2392 = vmul.f32 %v2269, 0.5
      %v2393 = vmul.f32 %v2307, 0.5
      %v2394 = vmul.f32 %v2310, 0.5
      %v2395 = vmul.f32 %v2315, 0.5
      %v2396 = vmul.f32 %v2318, 0.5
      %v2397 = vmul.f32 %v2323, 0.5
      %v2398 = vmul.f32 %v2326, 0.5
      %v2399 = vmul.f32 %v2331, 0.5
      %v2400 = vmul.f32 %v2334, 0.5
      %v2401 = vmul.f32 %v1852, 0.70710677
      %v2402 = vmul.f32 %v1855, 0.70710677
      %v2403 = vmul.f32 %v1860, 0.70710677
      %v2404 = vmul.f32 %v1863, 0.70710677
      %v2405 = vmul.f32 %v1868, 0.70710677
      %v2406 = vmul.f32 %v1871, 0.70710677
      %v2407 = vmul.f32 %v1876, 0.70710677
      %v2408 = vmul.f32 %v1879, 0.70710677
      %v2409 = vmul.f32 %v1917, 0.70710677
      %v2410 = vmul.f32 %v1920, 0.70710677
      %v2411 = vmul.f32 %v1925, 0.70710677
      %v2412 = vmul.f32 %v1928, 0.70710677
      %v2413 = vmul.f32 %v1933, 0.70710677
      %v2414 = vmul.f32 %v1936, 0.70710677
      %v2415 = vmul.f32 %v1941, 0.70710677
      %v2416 = vmul.f32 %v1944, 0.70710677
      %v2417 = vmul.f32 %v1982, 0.70710677
      %v2418 = vmul.f32 %v1985, 0.70710677
      %v2419 = vmul.f32 %v1990, 0.70710677
      %v2420 = vmul.f32 %v1993, 0.70710677
      %v2421 = vmul.f32 %v1998, 0.70710677
      %v2422 = vmul.f32 %v2001, 0.70710677
      %v2423 = vmul.f32 %v2006, 0.70710677
      %v2424 = vmul.f32 %v2009, 0.70710677
      %v2425 = vmul.f32 %v2047, 0.70710677
      %v2426 = vmul.f32 %v2050, 0.70710677
      %v2427 = vmul.f32 %v2055, 0.70710677
      %v2428 = vmul.f32 %v2058, 0.70710677
      %v2429 = vmul.f32 %v2063, 0.70710677
      %v2430 = vmul.f32 %v2066, 0.70710677
      %v2431 = vmul.f32 %v2071, 0.70710677
      %v2432 = vmul.f32 %v2074, 0.70710677
      %v2433 = vmul.f32 %v2112, 0.70710677
      %v2434 = vmul.f32 %v2115, 0.70710677
      %v2435 = vmul.f32 %v2120, 0.70710677
      %v2436 = vmul.f32 %v2123, 0.70710677
      %v2437 = vmul.f32 %v2128, 0.70710677
      %v2438 = vmul.f32 %v2131, 0.70710677
      %v2439 = vmul.f32 %v2136, 0.70710677
      %v2440 = vmul.f32 %v2139, 0.70710677
      %v2441 = vmul.f32 %v2177, 0.70710677
      %v2442 = vmul.f32 %v2180, 0.70710677
      %v2443 = vmul.f32 %v2185, 0.70710677
      %v2444 = vmul.f32 %v2188, 0.70710677
      %v2445 = vmul.f32 %v2193, 0.70710677
      %v2446 = vmul.f32 %v2196, 0.70710677
      %v2447 = vmul.f32 %v2201, 0.70710677
      %v2448 = vmul.f32 %v2204, 0.70710677
      %v2449 = vmul.f32 %v2242, 0.70710677
      %v2450 = vmul.f32 %v2245, 0.70710677
      %v2451 = vmul.f32 %v2250, 0.70710677
      %v2452 = vmul.f32 %v2253, 0.70710677
      %v2453 = vmul.f32 %v2258, 0.70710677
      %v2454 = vmul.f32 %v2261, 0.70710677
      %v2455 = vmul.f32 %v2266, 0.70710677
      %v2456 = vmul.f32 %v2269, 0.70710677
      %v2457 = vmul.f32 %v2307, 0.70710677
      %v2458 = vmul.f32 %v2310, 0.70710677
      %v2459 = vmul.f32 %v2315, 0.70710677
      %v2460 = vmul.f32 %v2318, 0.70710677
      %v2461 = vmul.f32 %v2323, 0.70710677
      %v2462 = vmul.f32 %v2326, 0.70710677
      %v2463 = vmul.f32 %v2331, 0.70710677
      %v2464 = vmul.f32 %v2334, 0.70710677
      %v2465 = verf.f32.pop %v2401
      %v2466 = verf.f32.pop %v2402
      %v2467 = verf.f32.pop %v2403
      %v2468 = verf.f32.pop %v2404
      %v2469 = verf.f32.pop %v2405
      %v2470 = verf.f32.pop %v2406
      %v2471 = verf.f32.pop %v2407
      %v2472 = verf.f32.pop %v2408
      %v2473 = verf.f32.pop %v2409
      %v2474 = verf.f32.pop %v2410
      %v2475 = verf.f32.pop %v2411
      %v2476 = verf.f32.pop %v2412
      %v2477 = verf.f32.pop %v2413
      %v2478 = verf.f32.pop %v2414
      %v2479 = verf.f32.pop %v2415
      %v2480 = verf.f32.pop %v2416
      %v2481 = verf.f32.pop %v2417
      %v2482 = verf.f32.pop %v2418
      %v2483 = verf.f32.pop %v2419
      %v2484 = verf.f32.pop %v2420
      %v2485 = verf.f32.pop %v2421
      %v2486 = verf.f32.pop %v2422
      %v2487 = verf.f32.pop %v2423
      %v2488 = verf.f32.pop %v2424
      %v2489 = verf.f32.pop %v2425
      %v2490 = verf.f32.pop %v2426
      %v2491 = verf.f32.pop %v2427
      %v2492 = verf.f32.pop %v2428
      %v2493 = verf.f32.pop %v2429
      %v2494 = verf.f32.pop %v2430
      %v2495 = verf.f32.pop %v2431
      %v2496 = verf.f32.pop %v2432
      %v2497 = verf.f32.pop %v2433
      %v2498 = verf.f32.pop %v2434
      %v2499 = verf.f32.pop %v2435
      %v2500 = verf.f32.pop %v2436
      %v2501 = verf.f32.pop %v2437
      %v2502 = verf.f32.pop %v2438
      %v2503 = verf.f32.pop %v2439
      %v2504 = verf.f32.pop %v2440
      %v2505 = verf.f32.pop %v2441
      %v2506 = verf.f32.pop %v2442
      %v2507 = verf.f32.pop %v2443
      %v2508 = verf.f32.pop %v2444
      %v2509 = verf.f32.pop %v2445
      %v2510 = verf.f32.pop %v2446
      %v2511 = verf.f32.pop %v2447
      %v2512 = verf.f32.pop %v2448
      %v2513 = verf.f32.pop %v2449
      %v2514 = verf.f32.pop %v2450
      %v2515 = verf.f32.pop %v2451
      %v2516 = verf.f32.pop %v2452
      %v2517 = verf.f32.pop %v2453
      %v2518 = verf.f32.pop %v2454
      %v2519 = verf.f32.pop %v2455
      %v2520 = verf.f32.pop %v2456
      %v2521 = verf.f32.pop %v2457
      %v2522 = verf.f32.pop %v2458
      %v2523 = verf.f32.pop %v2459
      %v2524 = verf.f32.pop %v2460
      %v2525 = verf.f32.pop %v2461
      %v2526 = verf.f32.pop %v2462
      %v2527 = verf.f32.pop %v2463
      %v2528 = verf.f32.pop %v2464
      %v2529 = vadd.f32 %v2465, 1.0
      %v2530 = vadd.f32 %v2466, 1.0
      %v2531 = vadd.f32 %v2467, 1.0
      %v2532 = vadd.f32 %v2468, 1.0
      %v2533 = vadd.f32 %v2469, 1.0
      %v2534 = vadd.f32 %v2470, 1.0
      %v2535 = vadd.f32 %v2471, 1.0
      %v2536 = vadd.f32 %v2472, 1.0
      %v2537 = vadd.f32 %v2473, 1.0
      %v2538 = vadd.f32 %v2474, 1.0
      %v2539 = vadd.f32 %v2475, 1.0
      %v2540 = vadd.f32 %v2476, 1.0
      %v2541 = vadd.f32 %v2477, 1.0
      %v2542 = vadd.f32 %v2478, 1.0
      %v2543 = vadd.f32 %v2479, 1.0
      %v2544 = vadd.f32 %v2480, 1.0
      %v2545 = vadd.f32 %v2481, 1.0
      %v2546 = vadd.f32 %v2482, 1.0
      %v2547 = vadd.f32 %v2483, 1.0
      %v2548 = vadd.f32 %v2484, 1.0
      %v2549 = vadd.f32 %v2485, 1.0
      %v2550 = vadd.f32 %v2486, 1.0
      %v2551 = vadd.f32 %v2487, 1.0
      %v2552 = vadd.f32 %v2488, 1.0
      %v2553 = vadd.f32 %v2489, 1.0
      %v2554 = vadd.f32 %v2490, 1.0
      %v2555 = vadd.f32 %v2491, 1.0
      %v2556 = vadd.f32 %v2492, 1.0
      %v2557 = vadd.f32 %v2493, 1.0
      %v2558 = vadd.f32 %v2494, 1.0
      %v2559 = vadd.f32 %v2495, 1.0
      %v2560 = vadd.f32 %v2496, 1.0
      %v2561 = vadd.f32 %v2497, 1.0
      %v2562 = vadd.f32 %v2498, 1.0
      %v2563 = vadd.f32 %v2499, 1.0
      %v2564 = vadd.f32 %v2500, 1.0
      %v2565 = vadd.f32 %v2501, 1.0
      %v2566 = vadd.f32 %v2502, 1.0
      %v2567 = vadd.f32 %v2503, 1.0
      %v2568 = vadd.f32 %v2504, 1.0
      %v2569 = vadd.f32 %v2505, 1.0
      %v2570 = vadd.f32 %v2506, 1.0
      %v2571 = vadd.f32 %v2507, 1.0
      %v2572 = vadd.f32 %v2508, 1.0
      %v2573 = vadd.f32 %v2509, 1.0
      %v2574 = vadd.f32 %v2510, 1.0
      %v2575 = vadd.f32 %v2511, 1.0
      %v2576 = vadd.f32 %v2512, 1.0
      %v2577 = vadd.f32 %v2513, 1.0
      %v2578 = vadd.f32 %v2514, 1.0
      %v2579 = vadd.f32 %v2515, 1.0
      %v2580 = vadd.f32 %v2516, 1.0
      %v2581 = vadd.f32 %v2517, 1.0
      %v2582 = vadd.f32 %v2518, 1.0
      %v2583 = vadd.f32 %v2519, 1.0
      %v2584 = vadd.f32 %v2520, 1.0
      %v2585 = vadd.f32 %v2521, 1.0
      %v2586 = vadd.f32 %v2522, 1.0
      %v2587 = vadd.f32 %v2523, 1.0
      %v2588 = vadd.f32 %v2524, 1.0
      %v2589 = vadd.f32 %v2525, 1.0
      %v2590 = vadd.f32 %v2526, 1.0
      %v2591 = vadd.f32 %v2527, 1.0
      %v2592 = vadd.f32 %v2528, 1.0
      %v2593 = vmul.f32 %v2337, %v2529
      %v2594 = vmul.f32 %v2338, %v2530
      %v2595 = vmul.f32 %v2339, %v2531
      %v2596 = vmul.f32 %v2340, %v2532
      %v2597 = vmul.f32 %v2341, %v2533
      %v2598 = vmul.f32 %v2342, %v2534
      %v2599 = vmul.f32 %v2343, %v2535
      %v2600 = vmul.f32 %v2344, %v2536
      %v2601 = vmul.f32 %v2345, %v2537
      %v2602 = vmul.f32 %v2346, %v2538
      %v2603 = vmul.f32 %v2347, %v2539
      %v2604 = vmul.f32 %v2348, %v2540
      %v2605 = vmul.f32 %v2349, %v2541
      %v2606 = vmul.f32 %v2350, %v2542
      %v2607 = vmul.f32 %v2351, %v2543
      %v2608 = vmul.f32 %v2352, %v2544
      %v2609 = vmul.f32 %v2353, %v2545
      %v2610 = vmul.f32 %v2354, %v2546
      %v2611 = vmul.f32 %v2355, %v2547
      %v2612 = vmul.f32 %v2356, %v2548
      %v2613 = vmul.f32 %v2357, %v2549
      %v2614 = vmul.f32 %v2358, %v2550
      %v2615 = vmul.f32 %v2359, %v2551
      %v2616 = vmul.f32 %v2360, %v2552
      %v2617 = vmul.f32 %v2361, %v2553
      %v2618 = vmul.f32 %v2362, %v2554
      %v2619 = vmul.f32 %v2363, %v2555
      %v2620 = vmul.f32 %v2364, %v2556
      %v2621 = vmul.f32 %v2365, %v2557
      %v2622 = vmul.f32 %v2366, %v2558
      %v2623 = vmul.f32 %v2367, %v2559
      %v2624 = vmul.f32 %v2368, %v2560
      %v2625 = vmul.f32 %v2369, %v2561
      %v2626 = vmul.f32 %v2370, %v2562
      %v2627 = vmul.f32 %v2371, %v2563
      %v2628 = vmul.f32 %v2372, %v2564
      %v2629 = vmul.f32 %v2373, %v2565
      %v2630 = vmul.f32 %v2374, %v2566
      %v2631 = vmul.f32 %v2375, %v2567
      %v2632 = vmul.f32 %v2376, %v2568
      %v2633 = vmul.f32 %v2377, %v2569
      %v2634 = vmul.f32 %v2378, %v2570
      %v2635 = vmul.f32 %v2379, %v2571
      %v2636 = vmul.f32 %v2380, %v2572
      %v2637 = vmul.f32 %v2381, %v2573
      %v2638 = vmul.f32 %v2382, %v2574
      %v2639 = vmul.f32 %v2383, %v2575
      %v2640 = vmul.f32 %v2384, %v2576
      %v2641 = vmul.f32 %v2385, %v2577
      %v2642 = vmul.f32 %v2386, %v2578
      %v2643 = vmul.f32 %v2387, %v2579
      %v2644 = vmul.f32 %v2388, %v2580
      %v2645 = vmul.f32 %v2389, %v2581
      %v2646 = vmul.f32 %v2390, %v2582
      %v2647 = vmul.f32 %v2391, %v2583
      %v2648 = vmul.f32 %v2392, %v2584
      %v2649 = vmul.f32 %v2393, %v2585
      %v2650 = vmul.f32 %v2394, %v2586
      %v2651 = vmul.f32 %v2395, %v2587
      %v2652 = vmul.f32 %v2396, %v2588
      %v2653 = vmul.f32 %v2397, %v2589
      %v2654 = vmul.f32 %v2398, %v2590
      %v2655 = vmul.f32 %v2399, %v2591
      %v2656 = vmul.f32 %v2400, %v2592
      %v2657 = vld [vmem:[%s632] sm:$0xff]
      %v2658 = vld [vmem:[%s632 + $0x8] sm:$0xff]
      %v2659 = vld [vmem:[%s632 + $0x10] sm:$0xff]
      %v2660 = vld [vmem:[%s632 + $0x18] sm:$0xff]
      %v2661 = vld [vmem:[%s632 + $0x20] sm:$0xff]
      %v2662 = vld [vmem:[%s632 + $0x28] sm:$0xff]
      %v2663 = vld [vmem:[%s632 + $0x30] sm:$0xff]
      %v2664 = vld [vmem:[%s632 + $0x38] sm:$0xff]
      %v2665 = vpack.c.bf16 %v2658, %v2657
      %v2666 = vpack.c.bf16 %v2660, %v2659
      %v2667 = vpack.c.bf16 %v2662, %v2661
      %v2668 = vpack.c.bf16 %v2664, %v2663
      %v2669 = vpack.c.bf16 %v2594, %v2593
      %v2670 = vpack.c.bf16 %v2596, %v2595
      %v2671 = vpack.c.bf16 %v2598, %v2597
      %v2672 = vpack.c.bf16 %v2600, %v2599
      %v2673 = vpack.c.bf16 %v2602, %v2601
      %v2674 = vpack.c.bf16 %v2604, %v2603
      %v2675 = vpack.c.bf16 %v2606, %v2605
      %v2676 = vpack.c.bf16 %v2608, %v2607
      %v2677 = vpack.c.bf16 %v2610, %v2609
      %v2678 = vpack.c.bf16 %v2612, %v2611
      %v2679 = vpack.c.bf16 %v2614, %v2613
      %v2680 = vpack.c.bf16 %v2616, %v2615
      %v2681 = vpack.c.bf16 %v2618, %v2617
      %v2682 = vpack.c.bf16 %v2620, %v2619
      %v2683 = vpack.c.bf16 %v2622, %v2621
      %v2684 = vpack.c.bf16 %v2624, %v2623
      %v2685 = vpack.c.bf16 %v2626, %v2625
      %v2686 = vpack.c.bf16 %v2628, %v2627
      %v2687 = vpack.c.bf16 %v2630, %v2629
      %v2688 = vpack.c.bf16 %v2632, %v2631
      %v2689 = vpack.c.bf16 %v2634, %v2633
      %v2690 = vpack.c.bf16 %v2636, %v2635
      %v2691 = vpack.c.bf16 %v2638, %v2637
      %v2692 = vpack.c.bf16 %v2640, %v2639
      %v2693 = vpack.c.bf16 %v2642, %v2641
      %v2694 = vpack.c.bf16 %v2644, %v2643
      %v2695 = vpack.c.bf16 %v2646, %v2645
      %v2696 = vpack.c.bf16 %v2648, %v2647
      %v2697 = vpack.c.bf16 %v2650, %v2649
      %v2698 = vpack.c.bf16 %v2652, %v2651
      %v2699 = vpack.c.bf16 %v2654, %v2653
      %v2700 = vpack.c.bf16 %v2656, %v2655
      %v2701 = vld [vmem:[%s637] sm:$0xff]
      %v2702 = vld [vmem:[%s637 + $0x8] sm:$0xff]
      %v2703 = vld [vmem:[%s637 + $0x10] sm:$0xff]
      %v2704 = vld [vmem:[%s637 + $0x18] sm:$0xff]
      %v2705 = vld [vmem:[%s637 + $0x20] sm:$0xff]
      %v2706 = vld [vmem:[%s637 + $0x28] sm:$0xff]
      %v2707 = vld [vmem:[%s637 + $0x30] sm:$0xff]
      %v2708 = vld [vmem:[%s637 + $0x38] sm:$0xff]
      %2710 = vset.pattern.permute.xlu0 0
      %2711 = vperm.xlu0 %2710, %v2701
      %v2712 = vpop.permute.xlu0 %2711
      %2715 = vset.pattern.permute.xlu0 0
      %2716 = vperm.xlu0 %2715, %v2702
      %v2717 = vpop.permute.xlu0 %2716
      %2720 = vset.pattern.permute.xlu0 0
      %2721 = vperm.xlu0 %2720, %v2703
      %v2722 = vpop.permute.xlu0 %2721
      %2725 = vset.pattern.permute.xlu0 0
      %2726 = vperm.xlu0 %2725, %v2704
      %v2727 = vpop.permute.xlu0 %2726
      %2730 = vset.pattern.permute.xlu0 0
      %2731 = vperm.xlu0 %2730, %v2705
      %v2732 = vpop.permute.xlu0 %2731
      %2735 = vset.pattern.permute.xlu0 0
      %2736 = vperm.xlu0 %2735, %v2706
      %v2737 = vpop.permute.xlu0 %2736
      %2740 = vset.pattern.permute.xlu0 0
      %2741 = vperm.xlu0 %2740, %v2707
      %v2742 = vpop.permute.xlu0 %2741
      %2745 = vset.pattern.permute.xlu0 0
      %2746 = vperm.xlu0 %2745, %v2708
      %v2747 = vpop.permute.xlu0 %2746
      %v2750 = vsel %vm1804, %v2665, 0
      %v2753 = vsel %vm1804, %v2666, 0
      %v2756 = vsel %vm1804, %v2667, 0
      %v2759 = vsel %vm1804, %v2668, 0
      %2761 = vmatprep.subr.bf16.mxu0 0
      %2762 = vmatpush1.bf16.msra.mxu0 %v2669
      %2763 = vmatprep.subr.bf16.mxu0 0
      %2764 = vmatpush1.bf16.msra.mxu0 %v2670
      %2765 = vmatprep.subr.bf16.mxu0 0
      %2766 = vmatpush1.bf16.msra.mxu0 %v2671
      %2767 = vmatprep.subr.bf16.mxu0 0
      %2768 = vmatpush1.bf16.msra.mxu0 %v2672
      %2769 = vmatprep.subr.bf16.mxu0 0
      %2770 = vmatpush1.bf16.msra.mxu0 0
      %2771 = vmatprep.subr.bf16.mxu0 0
      %2772 = vmatpush1.bf16.msra.mxu0 0
      %2773 = vmatprep.subr.bf16.mxu0 0
      %2774 = vmatpush1.bf16.msra.mxu0 0
      %2775 = vmatprep.subr.bf16.mxu0 0
      %2776 = vmatpush1.bf16.msra.mxu0 0
      %2777 = vmatprep.subr.bf16.mxu0 0
      %2778 = vmatpush1.bf16.msra.mxu0 0
      %2779 = vmatprep.subr.bf16.mxu0 0
      %2780 = vmatpush1.bf16.msra.mxu0 0
      %2781 = vmatprep.subr.bf16.mxu0 0
      %2782 = vmatpush1.bf16.msra.mxu0 0
      %2783 = vmatprep.subr.bf16.mxu0 0
      %2784 = vmatpush1.bf16.msra.mxu0 0
      %2785 = vmatprep.subr.bf16.mxu0 0
      %2786 = vmatpush1.bf16.msra.mxu0 0
      %2787 = vmatprep.subr.bf16.mxu0 0
      %2788 = vmatpush1.bf16.msra.mxu0 0
      %2789 = vmatprep.subr.bf16.mxu0 0
      %2790 = vmatpush1.bf16.msra.mxu0 0
      %2791 = vmatprep.subr.bf16.mxu0 0
      %2792 = vmatpush1.bf16.msra.mxu0 0
      %2793 = vmatprep.mubr.bf16.mxu0 0
      %2794 = vmatmul.mubr.bf16.gmra.mrb[0].mxu0 %v2750
      %v2795 = vpop.f32.mrb[0].mxu0
      %v2796 = vadd.f32 %v2712, %v2795
      %v2797 = vpop.f32.mrb[0].mxu0
      %v2798 = vpop.f32.mrb[0].mxu0
      %v2799 = vadd.f32 %v2717, %v2798
      %v2800 = vpop.f32.mrb[0].mxu0
      %2801 = vmatprep.mubr.bf16.mxu0 0
      %2802 = vmatmul.mubr.bf16.gmra.mrb[0].mxu0 %v2753
      %v2803 = vpop.f32.mrb[0].mxu0
      %v2804 = vadd.f32 %v2722, %v2803
      %v2805 = vpop.f32.mrb[0].mxu0
      %v2806 = vpop.f32.mrb[0].mxu0
      %v2807 = vadd.f32 %v2727, %v2806
      %v2808 = vpop.f32.mrb[0].mxu0
      %2809 = vmatprep.mubr.bf16.mxu0 0
      %2810 = vmatmul.mubr.bf16.gmra.mrb[0].mxu0 %v2756
      %v2811 = vpop.f32.mrb[0].mxu0
      %v2812 = vadd.f32 %v2732, %v2811
      %v2813 = vpop.f32.mrb[0].mxu0
      %v2814 = vpop.f32.mrb[0].mxu0
      %v2815 = vadd.f32 %v2737, %v2814
      %v2816 = vpop.f32.mrb[0].mxu0
      %2817 = vmatprep.mubr.bf16.mxu0 0
      %2818 = vmatmul.mubr.bf16.gmra.mrb[0].mxu0 %v2759
      %v2819 = vpop.f32.mrb[0].mxu0
      %v2820 = vadd.f32 %v2742, %v2819
      %v2821 = vpop.f32.mrb[0].mxu0
      %v2822 = vpop.f32.mrb[0].mxu0
      %v2823 = vadd.f32 %v2747, %v2822
      %v2824 = vpop.f32.mrb[0].mxu0
      %2825 = vdwg.mxu0
      %2826 = vmatprep.subr.bf16.mxu0 0
      %2827 = vmatpush1.bf16.msra.mxu0 %v2673
      %2828 = vmatprep.subr.bf16.mxu0 0
      %2829 = vmatpush1.bf16.msra.mxu0 %v2674
      %2830 = vmatprep.subr.bf16.mxu0 0
      %2831 = vmatpush1.bf16.msra.mxu0 %v2675
      %2832 = vmatprep.subr.bf16.mxu0 0
      %2833 = vmatpush1.bf16.msra.mxu0 %v2676
      %2834 = vmatprep.subr.bf16.mxu0 0
      %2835 = vmatpush1.bf16.msra.mxu0 0
      %2836 = vmatprep.subr.bf16.mxu0 0
      %2837 = vmatpush1.bf16.msra.mxu0 0
      %2838 = vmatprep.subr.bf16.mxu0 0
      %2839 = vmatpush1.bf16.msra.mxu0 0
      %2840 = vmatprep.subr.bf16.mxu0 0
      %2841 = vmatpush1.bf16.msra.mxu0 0
      %2842 = vmatprep.subr.bf16.mxu0 0
      %2843 = vmatpush1.bf16.msra.mxu0 0
      %2844 = vmatprep.subr.bf16.mxu0 0
      %2845 = vmatpush1.bf16.msra.mxu0 0
      %2846 = vmatprep.subr.bf16.mxu0 0
      %2847 = vmatpush1.bf16.msra.mxu0 0
      %2848 = vmatprep.subr.bf16.mxu0 0
      %2849 = vmatpush1.bf16.msra.mxu0 0
      %2850 = vmatprep.subr.bf16.mxu0 0
      %2851 = vmatpush1.bf16.msra.mxu0 0
      %2852 = vmatprep.subr.bf16.mxu0 0
      %2853 = vmatpush1.bf16.msra.mxu0 0
      %2854 = vmatprep.subr.bf16.mxu0 0
      %2855 = vmatpush1.bf16.msra.mxu0 0
      %2856 = vmatprep.subr.bf16.mxu0 0
      %2857 = vmatpush1.bf16.msra.mxu0 0
      %2858 = vmatprep.mubr.bf16.mxu0 0
      %2859 = vmatmul.mubr.bf16.gmra.mrb[0].mxu0 %v2750
      %v2860 = vpop.f32.mrb[0].mxu0
      %v2861 = vadd.f32 %v2712, %v2860
      %v2862 = vpop.f32.mrb[0].mxu0
      %v2863 = vpop.f32.mrb[0].mxu0
      %v2864 = vadd.f32 %v2717, %v2863
      %v2865 = vpop.f32.mrb[0].mxu0
      %2866 = vmatprep.mubr.bf16.mxu0 0
      %2867 = vmatmul.mubr.bf16.gmra.mrb[0].mxu0 %v2753
      %v2868 = vpop.f32.mrb[0].mxu0
      %v2869 = vadd.f32 %v2722, %v2868
      %v2870 = vpop.f32.mrb[0].mxu0
      %v2871 = vpop.f32.mrb[0].mxu0
      %v2872 = vadd.f32 %v2727, %v2871
      %v2873 = vpop.f32.mrb[0].mxu0
      %2874 = vmatprep.mubr.bf16.mxu0 0
      %2875 = vmatmul.mubr.bf16.gmra.mrb[0].mxu0 %v2756
      %v2876 = vpop.f32.mrb[0].mxu0
      %v2877 = vadd.f32 %v2732, %v2876
      %v2878 = vpop.f32.mrb[0].mxu0
      %v2879 = vpop.f32.mrb[0].mxu0
      %v2880 = vadd.f32 %v2737, %v2879
      %v2881 = vpop.f32.mrb[0].mxu0
      %2882 = vmatprep.mubr.bf16.mxu0 0
      %2883 = vmatmul.mubr.bf16.gmra.mrb[0].mxu0 %v2759
      %v2884 = vpop.f32.mrb[0].mxu0
      %v2885 = vadd.f32 %v2742, %v2884
      %v2886 = vpop.f32.mrb[0].mxu0
      %v2887 = vpop.f32.mrb[0].mxu0
      %v2888 = vadd.f32 %v2747, %v2887
      %v2889 = vpop.f32.mrb[0].mxu0
      %2890 = vdwg.mxu0
      %2891 = vmatprep.subr.bf16.mxu0 0
      %2892 = vmatpush1.bf16.msra.mxu0 %v2677
      %2893 = vmatprep.subr.bf16.mxu0 0
      %2894 = vmatpush1.bf16.msra.mxu0 %v2678
      %2895 = vmatprep.subr.bf16.mxu0 0
      %2896 = vmatpush1.bf16.msra.mxu0 %v2679
      %2897 = vmatprep.subr.bf16.mxu0 0
      %2898 = vmatpush1.bf16.msra.mxu0 %v2680
      %2899 = vmatprep.subr.bf16.mxu0 0
      %2900 = vmatpush1.bf16.msra.mxu0 0
      %2901 = vmatprep.subr.bf16.mxu0 0
      %2902 = vmatpush1.bf16.msra.mxu0 0
      %2903 = vmatprep.subr.bf16.mxu0 0
      %2904 = vmatpush1.bf16.msra.mxu0 0
      %2905 = vmatprep.subr.bf16.mxu0 0
      %2906 = vmatpush1.bf16.msra.mxu0 0
      %2907 = vmatprep.subr.bf16.mxu0 0
      %2908 = vmatpush1.bf16.msra.mxu0 0
      %2909 = vmatprep.subr.bf16.mxu0 0
      %2910 = vmatpush1.bf16.msra.mxu0 0
      %2911 = vmatprep.subr.bf16.mxu0 0
      %2912 = vmatpush1.bf16.msra.mxu0 0
      %2913 = vmatprep.subr.bf16.mxu0 0
      %2914 = vmatpush1.bf16.msra.mxu0 0
      %2915 = vmatprep.subr.bf16.mxu0 0
      %2916 = vmatpush1.bf16.msra.mxu0 0
      %2917 = vmatprep.subr.bf16.mxu0 0
      %2918 = vmatpush1.bf16.msra.mxu0 0
      %2919 = vmatprep.subr.bf16.mxu0 0
      %2920 = vmatpush1.bf16.msra.mxu0 0
      %2921 = vmatprep.subr.bf16.mxu0 0
      %2922 = vmatpush1.bf16.msra.mxu0 0
      %2923 = vmatprep.mubr.bf16.mxu0 0
      %2924 = vmatmul.mubr.bf16.gmra.mrb[0].mxu0 %v2750
      %v2925 = vpop.f32.mrb[0].mxu0
      %v2926 = vadd.f32 %v2712, %v2925
      %v2927 = vpop.f32.mrb[0].mxu0
      %v2928 = vpop.f32.mrb[0].mxu0
      %v2929 = vadd.f32 %v2717, %v2928
      %v2930 = vpop.f32.mrb[0].mxu0
      %2931 = vmatprep.mubr.bf16.mxu0 0
      %2932 = vmatmul.mubr.bf16.gmra.mrb[0].mxu0 %v2753
      %v2933 = vpop.f32.mrb[0].mxu0
      %v2934 = vadd.f32 %v2722, %v2933
      %v2935 = vpop.f32.mrb[0].mxu0
      %v2936 = vpop.f32.mrb[0].mxu0
      %v2937 = vadd.f32 %v2727, %v2936
      %v2938 = vpop.f32.mrb[0].mxu0
      %2939 = vmatprep.mubr.bf16.mxu0 0
      %2940 = vmatmul.mubr.bf16.gmra.mrb[0].mxu0 %v2756
      %v2941 = vpop.f32.mrb[0].mxu0
      %v2942 = vadd.f32 %v2732, %v2941
      %v2943 = vpop.f32.mrb[0].mxu0
      %v2944 = vpop.f32.mrb[0].mxu0
      %v2945 = vadd.f32 %v2737, %v2944
      %v2946 = vpop.f32.mrb[0].mxu0
      %2947 = vmatprep.mubr.bf16.mxu0 0
      %2948 = vmatmul.mubr.bf16.gmra.mrb[0].mxu0 %v2759
      %v2949 = vpop.f32.mrb[0].mxu0
      %v2950 = vadd.f32 %v2742, %v2949
      %v2951 = vpop.f32.mrb[0].mxu0
      %v2952 = vpop.f32.mrb[0].mxu0
      %v2953 = vadd.f32 %v2747, %v2952
      %v2954 = vpop.f32.mrb[0].mxu0
      %2955 = vdwg.mxu0
      %2956 = vmatprep.subr.bf16.mxu0 0
      %2957 = vmatpush1.bf16.msra.mxu0 %v2681
      %2958 = vmatprep.subr.bf16.mxu0 0
      %2959 = vmatpush1.bf16.msra.mxu0 %v2682
      %2960 = vmatprep.subr.bf16.mxu0 0
      %2961 = vmatpush1.bf16.msra.mxu0 %v2683
      %2962 = vmatprep.subr.bf16.mxu0 0
      %2963 = vmatpush1.bf16.msra.mxu0 %v2684
      %2964 = vmatprep.subr.bf16.mxu0 0
      %2965 = vmatpush1.bf16.msra.mxu0 0
      %2966 = vmatprep.subr.bf16.mxu0 0
      %2967 = vmatpush1.bf16.msra.mxu0 0
      %2968 = vmatprep.subr.bf16.mxu0 0
      %2969 = vmatpush1.bf16.msra.mxu0 0
      %2970 = vmatprep.subr.bf16.mxu0 0
      %2971 = vmatpush1.bf16.msra.mxu0 0
      %2972 = vmatprep.subr.bf16.mxu0 0
      %2973 = vmatpush1.bf16.msra.mxu0 0
      %2974 = vmatprep.subr.bf16.mxu0 0
      %2975 = vmatpush1.bf16.msra.mxu0 0
      %2976 = vmatprep.subr.bf16.mxu0 0
      %2977 = vmatpush1.bf16.msra.mxu0 0
      %2978 = vmatprep.subr.bf16.mxu0 0
      %2979 = vmatpush1.bf16.msra.mxu0 0
      %2980 = vmatprep.subr.bf16.mxu0 0
      %2981 = vmatpush1.bf16.msra.mxu0 0
      %2982 = vmatprep.subr.bf16.mxu0 0
      %2983 = vmatpush1.bf16.msra.mxu0 0
      %2984 = vmatprep.subr.bf16.mxu0 0
      %2985 = vmatpush1.bf16.msra.mxu0 0
      %2986 = vmatprep.subr.bf16.mxu0 0
      %2987 = vmatpush1.bf16.msra.mxu0 0
      %2988 = vmatprep.mubr.bf16.mxu0 0
      %2989 = vmatmul.mubr.bf16.gmra.mrb[0].mxu0 %v2750
      %v2990 = vpop.f32.mrb[0].mxu0
      %v2991 = vadd.f32 %v2712, %v2990
      %v2992 = vpop.f32.mrb[0].mxu0
      %v2993 = vpop.f32.mrb[0].mxu0
      %v2994 = vadd.f32 %v2717, %v2993
      %v2995 = vpop.f32.mrb[0].mxu0
      %2996 = vmatprep.mubr.bf16.mxu0 0
      %2997 = vmatmul.mubr.bf16.gmra.mrb[0].mxu0 %v2753
      %v2998 = vpop.f32.mrb[0].mxu0
      %v2999 = vadd.f32 %v2722, %v2998
      %v3000 = vpop.f32.mrb[0].mxu0
      %v3001 = vpop.f32.mrb[0].mxu0
      %v3002 = vadd.f32 %v2727, %v3001
      %v3003 = vpop.f32.mrb[0].mxu0
      %3004 = vmatprep.mubr.bf16.mxu0 0
      %3005 = vmatmul.mubr.bf16.gmra.mrb[0].mxu0 %v2756
      %v3006 = vpop.f32.mrb[0].mxu0
      %v3007 = vadd.f32 %v2732, %v3006
      %v3008 = vpop.f32.mrb[0].mxu0
      %v3009 = vpop.f32.mrb[0].mxu0
      %v3010 = vadd.f32 %v2737, %v3009
      %v3011 = vpop.f32.mrb[0].mxu0
      %3012 = vmatprep.mubr.bf16.mxu0 0
      %3013 = vmatmul.mubr.bf16.gmra.mrb[0].mxu0 %v2759
      %v3014 = vpop.f32.mrb[0].mxu0
      %v3015 = vadd.f32 %v2742, %v3014
      %v3016 = vpop.f32.mrb[0].mxu0
      %v3017 = vpop.f32.mrb[0].mxu0
      %v3018 = vadd.f32 %v2747, %v3017
      %v3019 = vpop.f32.mrb[0].mxu0
      %3020 = vdwg.mxu0
      %3021 = vmatprep.subr.bf16.mxu0 0
      %3022 = vmatpush1.bf16.msra.mxu0 %v2685
      %3023 = vmatprep.subr.bf16.mxu0 0
      %3024 = vmatpush1.bf16.msra.mxu0 %v2686
      %3025 = vmatprep.subr.bf16.mxu0 0
      %3026 = vmatpush1.bf16.msra.mxu0 %v2687
      %3027 = vmatprep.subr.bf16.mxu0 0
      %3028 = vmatpush1.bf16.msra.mxu0 %v2688
      %3029 = vmatprep.subr.bf16.mxu0 0
      %3030 = vmatpush1.bf16.msra.mxu0 0
      %3031 = vmatprep.subr.bf16.mxu0 0
      %3032 = vmatpush1.bf16.msra.mxu0 0
      %3033 = vmatprep.subr.bf16.mxu0 0
      %3034 = vmatpush1.bf16.msra.mxu0 0
      %3035 = vmatprep.subr.bf16.mxu0 0
      %3036 = vmatpush1.bf16.msra.mxu0 0
      %3037 = vmatprep.subr.bf16.mxu0 0
      %3038 = vmatpush1.bf16.msra.mxu0 0
      %3039 = vmatprep.subr.bf16.mxu0 0
      %3040 = vmatpush1.bf16.msra.mxu0 0
      %3041 = vmatprep.subr.bf16.mxu0 0
      %3042 = vmatpush1.bf16.msra.mxu0 0
      %3043 = vmatprep.subr.bf16.mxu0 0
      %3044 = vmatpush1.bf16.msra.mxu0 0
      %3045 = vmatprep.subr.bf16.mxu0 0
      %3046 = vmatpush1.bf16.msra.mxu0 0
      %3047 = vmatprep.subr.bf16.mxu0 0
      %3048 = vmatpush1.bf16.msra.mxu0 0
      %3049 = vmatprep.subr.bf16.mxu0 0
      %3050 = vmatpush1.bf16.msra.mxu0 0
      %3051 = vmatprep.subr.bf16.mxu0 0
      %3052 = vmatpush1.bf16.msra.mxu0 0
      %3053 = vmatprep.mubr.bf16.mxu0 0
      %3054 = vmatmul.mubr.bf16.gmra.mrb[0].mxu0 %v2750
      %v3055 = vpop.f32.mrb[0].mxu0
      %v3056 = vadd.f32 %v2712, %v3055
      %v3057 = vpop.f32.mrb[0].mxu0
      %v3058 = vpop.f32.mrb[0].mxu0
      %v3059 = vadd.f32 %v2717, %v3058
      %v3060 = vpop.f32.mrb[0].mxu0
      %3061 = vmatprep.mubr.bf16.mxu0 0
      %3062 = vmatmul.mubr.bf16.gmra.mrb[0].mxu0 %v2753
      %v3063 = vpop.f32.mrb[0].mxu0
      %v3064 = vadd.f32 %v2722, %v3063
      %v3065 = vpop.f32.mrb[0].mxu0
      %v3066 = vpop.f32.mrb[0].mxu0
      %v3067 = vadd.f32 %v2727, %v3066
      %v3068 = vpop.f32.mrb[0].mxu0
      %3069 = vmatprep.mubr.bf16.mxu0 0
      %3070 = vmatmul.mubr.bf16.gmra.mrb[0].mxu0 %v2756
      %v3071 = vpop.f32.mrb[0].mxu0
      %v3072 = vadd.f32 %v2732, %v3071
      %v3073 = vpop.f32.mrb[0].mxu0
      %v3074 = vpop.f32.mrb[0].mxu0
      %v3075 = vadd.f32 %v2737, %v3074
      %v3076 = vpop.f32.mrb[0].mxu0
      %3077 = vmatprep.mubr.bf16.mxu0 0
      %3078 = vmatmul.mubr.bf16.gmra.mrb[0].mxu0 %v2759
      %v3079 = vpop.f32.mrb[0].mxu0
      %v3080 = vadd.f32 %v2742, %v3079
      %v3081 = vpop.f32.mrb[0].mxu0
      %v3082 = vpop.f32.mrb[0].mxu0
      %v3083 = vadd.f32 %v2747, %v3082
      %v3084 = vpop.f32.mrb[0].mxu0
      %3085 = vdwg.mxu0
      %3086 = vmatprep.subr.bf16.mxu0 0
      %3087 = vmatpush1.bf16.msra.mxu0 %v2689
      %3088 = vmatprep.subr.bf16.mxu0 0
      %3089 = vmatpush1.bf16.msra.mxu0 %v2690
      %3090 = vmatprep.subr.bf16.mxu0 0
      %3091 = vmatpush1.bf16.msra.mxu0 %v2691
      %3092 = vmatprep.subr.bf16.mxu0 0
      %3093 = vmatpush1.bf16.msra.mxu0 %v2692
      %3094 = vmatprep.subr.bf16.mxu0 0
      %3095 = vmatpush1.bf16.msra.mxu0 0
      %3096 = vmatprep.subr.bf16.mxu0 0
      %3097 = vmatpush1.bf16.msra.mxu0 0
      %3098 = vmatprep.subr.bf16.mxu0 0
      %3099 = vmatpush1.bf16.msra.mxu0 0
      %3100 = vmatprep.subr.bf16.mxu0 0
      %3101 = vmatpush1.bf16.msra.mxu0 0
      %3102 = vmatprep.subr.bf16.mxu0 0
      %3103 = vmatpush1.bf16.msra.mxu0 0
      %3104 = vmatprep.subr.bf16.mxu0 0
      %3105 = vmatpush1.bf16.msra.mxu0 0
      %3106 = vmatprep.subr.bf16.mxu0 0
      %3107 = vmatpush1.bf16.msra.mxu0 0
      %3108 = vmatprep.subr.bf16.mxu0 0
      %3109 = vmatpush1.bf16.msra.mxu0 0
      %3110 = vmatprep.subr.bf16.mxu0 0
      %3111 = vmatpush1.bf16.msra.mxu0 0
      %3112 = vmatprep.subr.bf16.mxu0 0
      %3113 = vmatpush1.bf16.msra.mxu0 0
      %3114 = vmatprep.subr.bf16.mxu0 0
      %3115 = vmatpush1.bf16.msra.mxu0 0
      %3116 = vmatprep.subr.bf16.mxu0 0
      %3117 = vmatpush1.bf16.msra.mxu0 0
      %3118 = vmatprep.mubr.bf16.mxu0 0
      %3119 = vmatmul.mubr.bf16.gmra.mrb[0].mxu0 %v2750
      %v3120 = vpop.f32.mrb[0].mxu0
      %v3121 = vadd.f32 %v2712, %v3120
      %v3122 = vpop.f32.mrb[0].mxu0
      %v3123 = vpop.f32.mrb[0].mxu0
      %v3124 = vadd.f32 %v2717, %v3123
      %v3125 = vpop.f32.mrb[0].mxu0
      %3126 = vmatprep.mubr.bf16.mxu0 0
      %3127 = vmatmul.mubr.bf16.gmra.mrb[0].mxu0 %v2753
      %v3128 = vpop.f32.mrb[0].mxu0
      %v3129 = vadd.f32 %v2722, %v3128
      %v3130 = vpop.f32.mrb[0].mxu0
      %v3131 = vpop.f32.mrb[0].mxu0
      %v3132 = vadd.f32 %v2727, %v3131
      %v3133 = vpop.f32.mrb[0].mxu0
      %3134 = vmatprep.mubr.bf16.mxu0 0
      %3135 = vmatmul.mubr.bf16.gmra.mrb[0].mxu0 %v2756
      %v3136 = vpop.f32.mrb[0].mxu0
      %v3137 = vadd.f32 %v2732, %v3136
      %v3138 = vpop.f32.mrb[0].mxu0
      %v3139 = vpop.f32.mrb[0].mxu0
      %v3140 = vadd.f32 %v2737, %v3139
      %v3141 = vpop.f32.mrb[0].mxu0
      %3142 = vmatprep.mubr.bf16.mxu0 0
      %3143 = vmatmul.mubr.bf16.gmra.mrb[0].mxu0 %v2759
      %v3144 = vpop.f32.mrb[0].mxu0
      %v3145 = vadd.f32 %v2742, %v3144
      %v3146 = vpop.f32.mrb[0].mxu0
      %v3147 = vpop.f32.mrb[0].mxu0
      %v3148 = vadd.f32 %v2747, %v3147
      %v3149 = vpop.f32.mrb[0].mxu0
      %3150 = vdwg.mxu0
      %3151 = vmatprep.subr.bf16.mxu0 0
      %3152 = vmatpush1.bf16.msra.mxu0 %v2693
      %3153 = vmatprep.subr.bf16.mxu0 0
      %3154 = vmatpush1.bf16.msra.mxu0 %v2694
      %3155 = vmatprep.subr.bf16.mxu0 0
      %3156 = vmatpush1.bf16.msra.mxu0 %v2695
      %3157 = vmatprep.subr.bf16.mxu0 0
      %3158 = vmatpush1.bf16.msra.mxu0 %v2696
      %3159 = vmatprep.subr.bf16.mxu0 0
      %3160 = vmatpush1.bf16.msra.mxu0 0
      %3161 = vmatprep.subr.bf16.mxu0 0
      %3162 = vmatpush1.bf16.msra.mxu0 0
      %3163 = vmatprep.subr.bf16.mxu0 0
      %3164 = vmatpush1.bf16.msra.mxu0 0
      %3165 = vmatprep.subr.bf16.mxu0 0
      %3166 = vmatpush1.bf16.msra.mxu0 0
      %3167 = vmatprep.subr.bf16.mxu0 0
      %3168 = vmatpush1.bf16.msra.mxu0 0
      %3169 = vmatprep.subr.bf16.mxu0 0
      %3170 = vmatpush1.bf16.msra.mxu0 0
      %3171 = vmatprep.subr.bf16.mxu0 0
      %3172 = vmatpush1.bf16.msra.mxu0 0
      %3173 = vmatprep.subr.bf16.mxu0 0
      %3174 = vmatpush1.bf16.msra.mxu0 0
      %3175 = vmatprep.subr.bf16.mxu0 0
      %3176 = vmatpush1.bf16.msra.mxu0 0
      %3177 = vmatprep.subr.bf16.mxu0 0
      %3178 = vmatpush1.bf16.msra.mxu0 0
      %3179 = vmatprep.subr.bf16.mxu0 0
      %3180 = vmatpush1.bf16.msra.mxu0 0
      %3181 = vmatprep.subr.bf16.mxu0 0
      %3182 = vmatpush1.bf16.msra.mxu0 0
      %3183 = vmatprep.mubr.bf16.mxu0 0
      %3184 = vmatmul.mubr.bf16.gmra.mrb[0].mxu0 %v2750
      %v3185 = vpop.f32.mrb[0].mxu0
      %v3186 = vadd.f32 %v2712, %v3185
      %v3187 = vpop.f32.mrb[0].mxu0
      %v3188 = vpop.f32.mrb[0].mxu0
      %v3189 = vadd.f32 %v2717, %v3188
      %v3190 = vpop.f32.mrb[0].mxu0
      %3191 = vmatprep.mubr.bf16.mxu0 0
      %3192 = vmatmul.mubr.bf16.gmra.mrb[0].mxu0 %v2753
      %v3193 = vpop.f32.mrb[0].mxu0
      %v3194 = vadd.f32 %v2722, %v3193
      %v3195 = vpop.f32.mrb[0].mxu0
      %v3196 = vpop.f32.mrb[0].mxu0
      %v3197 = vadd.f32 %v2727, %v3196
      %v3198 = vpop.f32.mrb[0].mxu0
      %3199 = vmatprep.mubr.bf16.mxu0 0
      %3200 = vmatmul.mubr.bf16.gmra.mrb[0].mxu0 %v2756
      %v3201 = vpop.f32.mrb[0].mxu0
      %v3202 = vadd.f32 %v2732, %v3201
      %v3203 = vpop.f32.mrb[0].mxu0
      %v3204 = vpop.f32.mrb[0].mxu0
      %v3205 = vadd.f32 %v2737, %v3204
      %v3206 = vpop.f32.mrb[0].mxu0
      %3207 = vmatprep.mubr.bf16.mxu0 0
      %3208 = vmatmul.mubr.bf16.gmra.mrb[0].mxu0 %v2759
      %v3209 = vpop.f32.mrb[0].mxu0
      %v3210 = vadd.f32 %v2742, %v3209
      %v3211 = vpop.f32.mrb[0].mxu0
      %v3212 = vpop.f32.mrb[0].mxu0
      %v3213 = vadd.f32 %v2747, %v3212
      %v3214 = vpop.f32.mrb[0].mxu0
      %3215 = vdwg.mxu0
      %3216 = vmatprep.subr.bf16.mxu0 0
      %3217 = vmatpush1.bf16.msra.mxu0 %v2697
      %3218 = vmatprep.subr.bf16.mxu0 0
      %3219 = vmatpush1.bf16.msra.mxu0 %v2698
      %3220 = vmatprep.subr.bf16.mxu0 0
      %3221 = vmatpush1.bf16.msra.mxu0 %v2699
      %3222 = vmatprep.subr.bf16.mxu0 0
      %3223 = vmatpush1.bf16.msra.mxu0 %v2700
      %3224 = vmatprep.subr.bf16.mxu0 0
      %3225 = vmatpush1.bf16.msra.mxu0 0
      %3226 = vmatprep.subr.bf16.mxu0 0
      %3227 = vmatpush1.bf16.msra.mxu0 0
      %3228 = vmatprep.subr.bf16.mxu0 0
      %3229 = vmatpush1.bf16.msra.mxu0 0
      %3230 = vmatprep.subr.bf16.mxu0 0
      %3231 = vmatpush1.bf16.msra.mxu0 0
      %3232 = vmatprep.subr.bf16.mxu0 0
      %3233 = vmatpush1.bf16.msra.mxu0 0
      %3234 = vmatprep.subr.bf16.mxu0 0
      %3235 = vmatpush1.bf16.msra.mxu0 0
      %3236 = vmatprep.subr.bf16.mxu0 0
      %3237 = vmatpush1.bf16.msra.mxu0 0
      %3238 = vmatprep.subr.bf16.mxu0 0
      %3239 = vmatpush1.bf16.msra.mxu0 0
      %3240 = vmatprep.subr.bf16.mxu0 0
      %3241 = vmatpush1.bf16.msra.mxu0 0
      %3242 = vmatprep.subr.bf16.mxu0 0
      %3243 = vmatpush1.bf16.msra.mxu0 0
      %3244 = vmatprep.subr.bf16.mxu0 0
      %3245 = vmatpush1.bf16.msra.mxu0 0
      %3246 = vmatprep.subr.bf16.mxu0 0
      %3247 = vmatpush1.bf16.msra.mxu0 0
      %3248 = vmatprep.mubr.bf16.mxu0 0
      %3249 = vmatmul.mubr.bf16.gmra.mrb[0].mxu0 %v2750
      %v3250 = vpop.f32.mrb[0].mxu0
      %v3251 = vadd.f32 %v2712, %v3250
      %v3252 = vpop.f32.mrb[0].mxu0
      %v3253 = vpop.f32.mrb[0].mxu0
      %v3254 = vadd.f32 %v2717, %v3253
      %v3255 = vpop.f32.mrb[0].mxu0
      %3256 = vmatprep.mubr.bf16.mxu0 0
      %3257 = vmatmul.mubr.bf16.gmra.mrb[0].mxu0 %v2753
      %v3258 = vpop.f32.mrb[0].mxu0
      %v3259 = vadd.f32 %v2722, %v3258
      %v3260 = vpop.f32.mrb[0].mxu0
      %v3261 = vpop.f32.mrb[0].mxu0
      %v3262 = vadd.f32 %v2727, %v3261
      %v3263 = vpop.f32.mrb[0].mxu0
      %3264 = vmatprep.mubr.bf16.mxu0 0
      %3265 = vmatmul.mubr.bf16.gmra.mrb[0].mxu0 %v2756
      %v3266 = vpop.f32.mrb[0].mxu0
      %v3267 = vadd.f32 %v2732, %v3266
      %v3268 = vpop.f32.mrb[0].mxu0
      %v3269 = vpop.f32.mrb[0].mxu0
      %v3270 = vadd.f32 %v2737, %v3269
      %v3271 = vpop.f32.mrb[0].mxu0
      %3272 = vmatprep.mubr.bf16.mxu0 0
      %3273 = vmatmul.mubr.bf16.gmra.mrb[0].mxu0 %v2759
      %v3274 = vpop.f32.mrb[0].mxu0
      %v3275 = vadd.f32 %v2742, %v3274
      %v3276 = vpop.f32.mrb[0].mxu0
      %v3277 = vpop.f32.mrb[0].mxu0
      %v3278 = vadd.f32 %v2747, %v3277
      %v3279 = vpop.f32.mrb[0].mxu0
      %3280 = vdwg.mxu0
      %v3281 = vadd.f32 %v801, %v2796
      %v3282 = vadd.f32 %v802, %v2799
      %v3283 = vadd.f32 %v803, %v2804
      %v3284 = vadd.f32 %v804, %v2807
      %v3285 = vadd.f32 %v805, %v2812
      %v3286 = vadd.f32 %v806, %v2815
      %v3287 = vadd.f32 %v807, %v2820
      %v3288 = vadd.f32 %v808, %v2823
      %v3289 = vadd.f32 %v809, %v2861
      %v3290 = vadd.f32 %v810, %v2864
      %v3291 = vadd.f32 %v811, %v2869
      %v3292 = vadd.f32 %v812, %v2872
      %v3293 = vadd.f32 %v813, %v2877
      %v3294 = vadd.f32 %v814, %v2880
      %v3295 = vadd.f32 %v815, %v2885
      %v3296 = vadd.f32 %v816, %v2888
      %v3297 = vadd.f32 %v817, %v2926
      %v3298 = vadd.f32 %v818, %v2929
      %v3299 = vadd.f32 %v819, %v2934
      %v3300 = vadd.f32 %v820, %v2937
      %v3301 = vadd.f32 %v821, %v2942
      %v3302 = vadd.f32 %v822, %v2945
      %v3303 = vadd.f32 %v823, %v2950
      %v3304 = vadd.f32 %v824, %v2953
      %v3305 = vadd.f32 %v825, %v2991
      %v3306 = vadd.f32 %v826, %v2994
      %v3307 = vadd.f32 %v827, %v2999
      %v3308 = vadd.f32 %v828, %v3002
      %v3309 = vadd.f32 %v829, %v3007
      %v3310 = vadd.f32 %v830, %v3010
      %v3311 = vadd.f32 %v831, %v3015
      %v3312 = vadd.f32 %v832, %v3018
      %v3313 = vadd.f32 %v833, %v3056
      %v3314 = vadd.f32 %v834, %v3059
      %v3315 = vadd.f32 %v835, %v3064
      %v3316 = vadd.f32 %v836, %v3067
      %v3317 = vadd.f32 %v837, %v3072
      %v3318 = vadd.f32 %v838, %v3075
      %v3319 = vadd.f32 %v839, %v3080
      %v3320 = vadd.f32 %v840, %v3083
      %v3321 = vadd.f32 %v841, %v3121
      %v3322 = vadd.f32 %v842, %v3124
      %v3323 = vadd.f32 %v843, %v3129
      %v3324 = vadd.f32 %v844, %v3132
      %v3325 = vadd.f32 %v845, %v3137
      %v3326 = vadd.f32 %v846, %v3140
      %v3327 = vadd.f32 %v847, %v3145
      %v3328 = vadd.f32 %v848, %v3148
      %v3329 = vadd.f32 %v849, %v3186
      %v3330 = vadd.f32 %v850, %v3189
      %v3331 = vadd.f32 %v851, %v3194
      %v3332 = vadd.f32 %v852, %v3197
      %v3333 = vadd.f32 %v853, %v3202
      %v3334 = vadd.f32 %v854, %v3205
      %v3335 = vadd.f32 %v855, %v3210
      %v3336 = vadd.f32 %v856, %v3213
      %v3337 = vadd.f32 %v857, %v3251
      %v3338 = vadd.f32 %v858, %v3254
      %v3339 = vadd.f32 %v859, %v3259
      %v3340 = vadd.f32 %v860, %v3262
      %v3341 = vadd.f32 %v861, %v3267
      %v3342 = vadd.f32 %v862, %v3270
      %v3343 = vadd.f32 %v863, %v3275
      %v3344 = vadd.f32 %v864, %v3278
      %v3345 = vld [vmem:[%s640] sm:$0x1]
      %v3346 = vld [vmem:[%s643] sm:$0x1]
      %3347 = vadd.xlane.f32.xlu0 %v3281
      %v3348 = vpop.xlane.xlu0 %3347
      %3349 = vadd.xlane.f32.xlu0 %v3282
      %v3350 = vpop.xlane.xlu0 %3349
      %3351 = vadd.xlane.f32.xlu0 %v3283
      %v3352 = vpop.xlane.xlu0 %3351
      %3353 = vadd.xlane.f32.xlu0 %v3284
      %v3354 = vpop.xlane.xlu0 %3353
      %3355 = vadd.xlane.f32.xlu0 %v3285
      %v3356 = vpop.xlane.xlu0 %3355
      %3357 = vadd.xlane.f32.xlu0 %v3286
      %v3358 = vpop.xlane.xlu0 %3357
      %3359 = vadd.xlane.f32.xlu0 %v3287
      %v3360 = vpop.xlane.xlu0 %3359
      %3361 = vadd.xlane.f32.xlu0 %v3288
      %v3362 = vpop.xlane.xlu0 %3361
      %3363 = vadd.xlane.f32.xlu0 %v3289
      %v3364 = vpop.xlane.xlu0 %3363
      %3365 = vadd.xlane.f32.xlu0 %v3290
      %v3366 = vpop.xlane.xlu0 %3365
      %3367 = vadd.xlane.f32.xlu0 %v3291
      %v3368 = vpop.xlane.xlu0 %3367
      %3369 = vadd.xlane.f32.xlu0 %v3292
      %v3370 = vpop.xlane.xlu0 %3369
      %3371 = vadd.xlane.f32.xlu0 %v3293
      %v3372 = vpop.xlane.xlu0 %3371
      %3373 = vadd.xlane.f32.xlu0 %v3294
      %v3374 = vpop.xlane.xlu0 %3373
      %3375 = vadd.xlane.f32.xlu0 %v3295
      %v3376 = vpop.xlane.xlu0 %3375
      %3377 = vadd.xlane.f32.xlu0 %v3296
      %v3378 = vpop.xlane.xlu0 %3377
      %3379 = vadd.xlane.f32.xlu0 %v3297
      %v3380 = vpop.xlane.xlu0 %3379
      %3381 = vadd.xlane.f32.xlu0 %v3298
      %v3382 = vpop.xlane.xlu0 %3381
      %3383 = vadd.xlane.f32.xlu0 %v3299
      %v3384 = vpop.xlane.xlu0 %3383
      %3385 = vadd.xlane.f32.xlu0 %v3300
      %v3386 = vpop.xlane.xlu0 %3385
      %3387 = vadd.xlane.f32.xlu0 %v3301
      %v3388 = vpop.xlane.xlu0 %3387
      %3389 = vadd.xlane.f32.xlu0 %v3302
      %v3390 = vpop.xlane.xlu0 %3389
      %3391 = vadd.xlane.f32.xlu0 %v3303
      %v3392 = vpop.xlane.xlu0 %3391
      %3393 = vadd.xlane.f32.xlu0 %v3304
      %v3394 = vpop.xlane.xlu0 %3393
      %3395 = vadd.xlane.f32.xlu0 %v3305
      %v3396 = vpop.xlane.xlu0 %3395
      %3397 = vadd.xlane.f32.xlu0 %v3306
      %v3398 = vpop.xlane.xlu0 %3397
      %3399 = vadd.xlane.f32.xlu0 %v3307
      %v3400 = vpop.xlane.xlu0 %3399
      %3401 = vadd.xlane.f32.xlu0 %v3308
      %v3402 = vpop.xlane.xlu0 %3401
      %3403 = vadd.xlane.f32.xlu0 %v3309
      %v3404 = vpop.xlane.xlu0 %3403
      %3405 = vadd.xlane.f32.xlu0 %v3310
      %v3406 = vpop.xlane.xlu0 %3405
      %3407 = vadd.xlane.f32.xlu0 %v3311
      %v3408 = vpop.xlane.xlu0 %3407
      %3409 = vadd.xlane.f32.xlu0 %v3312
      %v3410 = vpop.xlane.xlu0 %3409
      %3411 = vadd.xlane.f32.xlu0 %v3313
      %v3412 = vpop.xlane.xlu0 %3411
      %3413 = vadd.xlane.f32.xlu0 %v3314
      %v3414 = vpop.xlane.xlu0 %3413
      %3415 = vadd.xlane.f32.xlu0 %v3315
      %v3416 = vpop.xlane.xlu0 %3415
      %3417 = vadd.xlane.f32.xlu0 %v3316
      %v3418 = vpop.xlane.xlu0 %3417
      %3419 = vadd.xlane.f32.xlu0 %v3317
      %v3420 = vpop.xlane.xlu0 %3419
      %3421 = vadd.xlane.f32.xlu0 %v3318
      %v3422 = vpop.xlane.xlu0 %3421
      %3423 = vadd.xlane.f32.xlu0 %v3319
      %v3424 = vpop.xlane.xlu0 %3423
      %3425 = vadd.xlane.f32.xlu0 %v3320
      %v3426 = vpop.xlane.xlu0 %3425
      %3427 = vadd.xlane.f32.xlu0 %v3321
      %v3428 = vpop.xlane.xlu0 %3427
      %3429 = vadd.xlane.f32.xlu0 %v3322
      %v3430 = vpop.xlane.xlu0 %3429
      %3431 = vadd.xlane.f32.xlu0 %v3323
      %v3432 = vpop.xlane.xlu0 %3431
      %3433 = vadd.xlane.f32.xlu0 %v3324
      %v3434 = vpop.xlane.xlu0 %3433
      %3435 = vadd.xlane.f32.xlu0 %v3325
      %v3436 = vpop.xlane.xlu0 %3435
      %3437 = vadd.xlane.f32.xlu0 %v3326
      %v3438 = vpop.xlane.xlu0 %3437
      %3439 = vadd.xlane.f32.xlu0 %v3327
      %v3440 = vpop.xlane.xlu0 %3439
      %3441 = vadd.xlane.f32.xlu0 %v3328
      %v3442 = vpop.xlane.xlu0 %3441
      %3443 = vadd.xlane.f32.xlu0 %v3329
      %v3444 = vpop.xlane.xlu0 %3443
      %3445 = vadd.xlane.f32.xlu0 %v3330
      %v3446 = vpop.xlane.xlu0 %3445
      %3447 = vadd.xlane.f32.xlu0 %v3331
      %v3448 = vpop.xlane.xlu0 %3447
      %3449 = vadd.xlane.f32.xlu0 %v3332
      %v3450 = vpop.xlane.xlu0 %3449
      %3451 = vadd.xlane.f32.xlu0 %v3333
      %v3452 = vpop.xlane.xlu0 %3451
      %3453 = vadd.xlane.f32.xlu0 %v3334
      %v3454 = vpop.xlane.xlu0 %3453
      %3455 = vadd.xlane.f32.xlu0 %v3335
      %v3456 = vpop.xlane.xlu0 %3455
      %3457 = vadd.xlane.f32.xlu0 %v3336
      %v3458 = vpop.xlane.xlu0 %3457
      %3459 = vadd.xlane.f32.xlu0 %v3337
      %v3460 = vpop.xlane.xlu0 %3459
      %3461 = vadd.xlane.f32.xlu0 %v3338
      %v3462 = vpop.xlane.xlu0 %3461
      %3463 = vadd.xlane.f32.xlu0 %v3339
      %v3464 = vpop.xlane.xlu0 %3463
      %3465 = vadd.xlane.f32.xlu0 %v3340
      %v3466 = vpop.xlane.xlu0 %3465
      %3467 = vadd.xlane.f32.xlu0 %v3341
      %v3468 = vpop.xlane.xlu0 %3467
      %3469 = vadd.xlane.f32.xlu0 %v3342
      %v3470 = vpop.xlane.xlu0 %3469
      %3471 = vadd.xlane.f32.xlu0 %v3343
      %v3472 = vpop.xlane.xlu0 %3471
      %3473 = vadd.xlane.f32.xlu0 %v3344
      %v3474 = vpop.xlane.xlu0 %3473
      %v3475 = vmul.f32 %v3348, %v995
      %v3476 = vmul.f32 %v3350, %v995
      %v3477 = vmul.f32 %v3352, %v995
      %v3478 = vmul.f32 %v3354, %v995
      %v3479 = vmul.f32 %v3356, %v995
      %v3480 = vmul.f32 %v3358, %v995
      %v3481 = vmul.f32 %v3360, %v995
      %v3482 = vmul.f32 %v3362, %v995
      %v3483 = vmul.f32 %v3364, %v995
      %v3484 = vmul.f32 %v3366, %v995
      %v3485 = vmul.f32 %v3368, %v995
      %v3486 = vmul.f32 %v3370, %v995
      %v3487 = vmul.f32 %v3372, %v995
      %v3488 = vmul.f32 %v3374, %v995
      %v3489 = vmul.f32 %v3376, %v995
      %v3490 = vmul.f32 %v3378, %v995
      %v3491 = vmul.f32 %v3380, %v995
      %v3492 = vmul.f32 %v3382, %v995
      %v3493 = vmul.f32 %v3384, %v995
      %v3494 = vmul.f32 %v3386, %v995
      %v3495 = vmul.f32 %v3388, %v995
      %v3496 = vmul.f32 %v3390, %v995
      %v3497 = vmul.f32 %v3392, %v995
      %v3498 = vmul.f32 %v3394, %v995
      %v3499 = vmul.f32 %v3396, %v995
      %v3500 = vmul.f32 %v3398, %v995
      %v3501 = vmul.f32 %v3400, %v995
      %v3502 = vmul.f32 %v3402, %v995
      %v3503 = vmul.f32 %v3404, %v995
      %v3504 = vmul.f32 %v3406, %v995
      %v3505 = vmul.f32 %v3408, %v995
      %v3506 = vmul.f32 %v3410, %v995
      %v3507 = vmul.f32 %v3412, %v995
      %v3508 = vmul.f32 %v3414, %v995
      %v3509 = vmul.f32 %v3416, %v995
      %v3510 = vmul.f32 %v3418, %v995
      %v3511 = vmul.f32 %v3420, %v995
      %v3512 = vmul.f32 %v3422, %v995
      %v3513 = vmul.f32 %v3424, %v995
      %v3514 = vmul.f32 %v3426, %v995
      %v3515 = vmul.f32 %v3428, %v995
      %v3516 = vmul.f32 %v3430, %v995
      %v3517 = vmul.f32 %v3432, %v995
      %v3518 = vmul.f32 %v3434, %v995
      %v3519 = vmul.f32 %v3436, %v995
      %v3520 = vmul.f32 %v3438, %v995
      %v3521 = vmul.f32 %v3440, %v995
      %v3522 = vmul.f32 %v3442, %v995
      %v3523 = vmul.f32 %v3444, %v995
      %v3524 = vmul.f32 %v3446, %v995
      %v3525 = vmul.f32 %v3448, %v995
      %v3526 = vmul.f32 %v3450, %v995
      %v3527 = vmul.f32 %v3452, %v995
      %v3528 = vmul.f32 %v3454, %v995
      %v3529 = vmul.f32 %v3456, %v995
      %v3530 = vmul.f32 %v3458, %v995
      %v3531 = vmul.f32 %v3460, %v995
      %v3532 = vmul.f32 %v3462, %v995
      %v3533 = vmul.f32 %v3464, %v995
      %v3534 = vmul.f32 %v3466, %v995
      %v3535 = vmul.f32 %v3468, %v995
      %v3536 = vmul.f32 %v3470, %v995
      %v3537 = vmul.f32 %v3472, %v995
      %v3538 = vmul.f32 %v3474, %v995
      %v3539 = vsub.f32 %v3281, %v3475
      %v3540 = vsub.f32 %v3282, %v3476
      %v3541 = vsub.f32 %v3283, %v3477
      %v3542 = vsub.f32 %v3284, %v3478
      %v3543 = vsub.f32 %v3285, %v3479
      %v3544 = vsub.f32 %v3286, %v3480
      %v3545 = vsub.f32 %v3287, %v3481
      %v3546 = vsub.f32 %v3288, %v3482
      %v3547 = vsub.f32 %v3289, %v3483
      %v3548 = vsub.f32 %v3290, %v3484
      %v3549 = vsub.f32 %v3291, %v3485
      %v3550 = vsub.f32 %v3292, %v3486
      %v3551 = vsub.f32 %v3293, %v3487
      %v3552 = vsub.f32 %v3294, %v3488
      %v3553 = vsub.f32 %v3295, %v3489
      %v3554 = vsub.f32 %v3296, %v3490
      %v3555 = vsub.f32 %v3297, %v3491
      %v3556 = vsub.f32 %v3298, %v3492
      %v3557 = vsub.f32 %v3299, %v3493
      %v3558 = vsub.f32 %v3300, %v3494
      %v3559 = vsub.f32 %v3301, %v3495
      %v3560 = vsub.f32 %v3302, %v3496
      %v3561 = vsub.f32 %v3303, %v3497
      %v3562 = vsub.f32 %v3304, %v3498
      %v3563 = vsub.f32 %v3305, %v3499
      %v3564 = vsub.f32 %v3306, %v3500
      %v3565 = vsub.f32 %v3307, %v3501
      %v3566 = vsub.f32 %v3308, %v3502
      %v3567 = vsub.f32 %v3309, %v3503
      %v3568 = vsub.f32 %v3310, %v3504
      %v3569 = vsub.f32 %v3311, %v3505
      %v3570 = vsub.f32 %v3312, %v3506
      %v3571 = vsub.f32 %v3313, %v3507
      %v3572 = vsub.f32 %v3314, %v3508
      %v3573 = vsub.f32 %v3315, %v3509
      %v3574 = vsub.f32 %v3316, %v3510
      %v3575 = vsub.f32 %v3317, %v3511
      %v3576 = vsub.f32 %v3318, %v3512
      %v3577 = vsub.f32 %v3319, %v3513
      %v3578 = vsub.f32 %v3320, %v3514
      %v3579 = vsub.f32 %v3321, %v3515
      %v3580 = vsub.f32 %v3322, %v3516
      %v3581 = vsub.f32 %v3323, %v3517
      %v3582 = vsub.f32 %v3324, %v3518
      %v3583 = vsub.f32 %v3325, %v3519
      %v3584 = vsub.f32 %v3326, %v3520
      %v3585 = vsub.f32 %v3327, %v3521
      %v3586 = vsub.f32 %v3328, %v3522
      %v3587 = vsub.f32 %v3329, %v3523
      %v3588 = vsub.f32 %v3330, %v3524
      %v3589 = vsub.f32 %v3331, %v3525
      %v3590 = vsub.f32 %v3332, %v3526
      %v3591 = vsub.f32 %v3333, %v3527
      %v3592 = vsub.f32 %v3334, %v3528
      %v3593 = vsub.f32 %v3335, %v3529
      %v3594 = vsub.f32 %v3336, %v3530
      %v3595 = vsub.f32 %v3337, %v3531
      %v3596 = vsub.f32 %v3338, %v3532
      %v3597 = vsub.f32 %v3339, %v3533
      %v3598 = vsub.f32 %v3340, %v3534
      %v3599 = vsub.f32 %v3341, %v3535
      %v3600 = vsub.f32 %v3342, %v3536
      %v3601 = vsub.f32 %v3343, %v3537
      %v3602 = vsub.f32 %v3344, %v3538
      %v3603 = vmul.f32 %v3539, %v3539
      %v3604 = vmul.f32 %v3540, %v3540
      %v3605 = vmul.f32 %v3541, %v3541
      %v3606 = vmul.f32 %v3542, %v3542
      %v3607 = vmul.f32 %v3543, %v3543
      %v3608 = vmul.f32 %v3544, %v3544
      %v3609 = vmul.f32 %v3545, %v3545
      %v3610 = vmul.f32 %v3546, %v3546
      %v3611 = vmul.f32 %v3547, %v3547
      %v3612 = vmul.f32 %v3548, %v3548
      %v3613 = vmul.f32 %v3549, %v3549
      %v3614 = vmul.f32 %v3550, %v3550
      %v3615 = vmul.f32 %v3551, %v3551
      %v3616 = vmul.f32 %v3552, %v3552
      %v3617 = vmul.f32 %v3553, %v3553
      %v3618 = vmul.f32 %v3554, %v3554
      %v3619 = vmul.f32 %v3555, %v3555
      %v3620 = vmul.f32 %v3556, %v3556
      %v3621 = vmul.f32 %v3557, %v3557
      %v3622 = vmul.f32 %v3558, %v3558
      %v3623 = vmul.f32 %v3559, %v3559
      %v3624 = vmul.f32 %v3560, %v3560
      %v3625 = vmul.f32 %v3561, %v3561
      %v3626 = vmul.f32 %v3562, %v3562
      %v3627 = vmul.f32 %v3563, %v3563
      %v3628 = vmul.f32 %v3564, %v3564
      %v3629 = vmul.f32 %v3565, %v3565
      %v3630 = vmul.f32 %v3566, %v3566
      %v3631 = vmul.f32 %v3567, %v3567
      %v3632 = vmul.f32 %v3568, %v3568
      %v3633 = vmul.f32 %v3569, %v3569
      %v3634 = vmul.f32 %v3570, %v3570
      %v3635 = vmul.f32 %v3571, %v3571
      %v3636 = vmul.f32 %v3572, %v3572
      %v3637 = vmul.f32 %v3573, %v3573
      %v3638 = vmul.f32 %v3574, %v3574
      %v3639 = vmul.f32 %v3575, %v3575
      %v3640 = vmul.f32 %v3576, %v3576
      %v3641 = vmul.f32 %v3577, %v3577
      %v3642 = vmul.f32 %v3578, %v3578
      %v3643 = vmul.f32 %v3579, %v3579
      %v3644 = vmul.f32 %v3580, %v3580
      %v3645 = vmul.f32 %v3581, %v3581
      %v3646 = vmul.f32 %v3582, %v3582
      %v3647 = vmul.f32 %v3583, %v3583
      %v3648 = vmul.f32 %v3584, %v3584
      %v3649 = vmul.f32 %v3585, %v3585
      %v3650 = vmul.f32 %v3586, %v3586
      %v3651 = vmul.f32 %v3587, %v3587
      %v3652 = vmul.f32 %v3588, %v3588
      %v3653 = vmul.f32 %v3589, %v3589
      %v3654 = vmul.f32 %v3590, %v3590
      %v3655 = vmul.f32 %v3591, %v3591
      %v3656 = vmul.f32 %v3592, %v3592
      %v3657 = vmul.f32 %v3593, %v3593
      %v3658 = vmul.f32 %v3594, %v3594
      %v3659 = vmul.f32 %v3595, %v3595
      %v3660 = vmul.f32 %v3596, %v3596
      %v3661 = vmul.f32 %v3597, %v3597
      %v3662 = vmul.f32 %v3598, %v3598
      %v3663 = vmul.f32 %v3599, %v3599
      %v3664 = vmul.f32 %v3600, %v3600
      %v3665 = vmul.f32 %v3601, %v3601
      %v3666 = vmul.f32 %v3602, %v3602
      %3667 = vadd.xlane.f32.xlu0 %v3603
      %v3668 = vpop.xlane.xlu0 %3667
      %3669 = vadd.xlane.f32.xlu0 %v3604
      %v3670 = vpop.xlane.xlu0 %3669
      %3671 = vadd.xlane.f32.xlu0 %v3605
      %v3672 = vpop.xlane.xlu0 %3671
      %3673 = vadd.xlane.f32.xlu0 %v3606
      %v3674 = vpop.xlane.xlu0 %3673
      %3675 = vadd.xlane.f32.xlu0 %v3607
      %v3676 = vpop.xlane.xlu0 %3675
      %3677 = vadd.xlane.f32.xlu0 %v3608
      %v3678 = vpop.xlane.xlu0 %3677
      %3679 = vadd.xlane.f32.xlu0 %v3609
      %v3680 = vpop.xlane.xlu0 %3679
      %3681 = vadd.xlane.f32.xlu0 %v3610
      %v3682 = vpop.xlane.xlu0 %3681
      %3683 = vadd.xlane.f32.xlu0 %v3611
      %v3684 = vpop.xlane.xlu0 %3683
      %3685 = vadd.xlane.f32.xlu0 %v3612
      %v3686 = vpop.xlane.xlu0 %3685
      %3687 = vadd.xlane.f32.xlu0 %v3613
      %v3688 = vpop.xlane.xlu0 %3687
      %3689 = vadd.xlane.f32.xlu0 %v3614
      %v3690 = vpop.xlane.xlu0 %3689
      %3691 = vadd.xlane.f32.xlu0 %v3615
      %v3692 = vpop.xlane.xlu0 %3691
      %3693 = vadd.xlane.f32.xlu0 %v3616
      %v3694 = vpop.xlane.xlu0 %3693
      %3695 = vadd.xlane.f32.xlu0 %v3617
      %v3696 = vpop.xlane.xlu0 %3695
      %3697 = vadd.xlane.f32.xlu0 %v3618
      %v3698 = vpop.xlane.xlu0 %3697
      %3699 = vadd.xlane.f32.xlu0 %v3619
      %v3700 = vpop.xlane.xlu0 %3699
      %3701 = vadd.xlane.f32.xlu0 %v3620
      %v3702 = vpop.xlane.xlu0 %3701
      %3703 = vadd.xlane.f32.xlu0 %v3621
      %v3704 = vpop.xlane.xlu0 %3703
      %3705 = vadd.xlane.f32.xlu0 %v3622
      %v3706 = vpop.xlane.xlu0 %3705
      %3707 = vadd.xlane.f32.xlu0 %v3623
      %v3708 = vpop.xlane.xlu0 %3707
      %3709 = vadd.xlane.f32.xlu0 %v3624
      %v3710 = vpop.xlane.xlu0 %3709
      %3711 = vadd.xlane.f32.xlu0 %v3625
      %v3712 = vpop.xlane.xlu0 %3711
      %3713 = vadd.xlane.f32.xlu0 %v3626
      %v3714 = vpop.xlane.xlu0 %3713
      %3715 = vadd.xlane.f32.xlu0 %v3627
      %v3716 = vpop.xlane.xlu0 %3715
      %3717 = vadd.xlane.f32.xlu0 %v3628
      %v3718 = vpop.xlane.xlu0 %3717
      %3719 = vadd.xlane.f32.xlu0 %v3629
      %v3720 = vpop.xlane.xlu0 %3719
      %3721 = vadd.xlane.f32.xlu0 %v3630
      %v3722 = vpop.xlane.xlu0 %3721
      %3723 = vadd.xlane.f32.xlu0 %v3631
      %v3724 = vpop.xlane.xlu0 %3723
      %3725 = vadd.xlane.f32.xlu0 %v3632
      %v3726 = vpop.xlane.xlu0 %3725
      %3727 = vadd.xlane.f32.xlu0 %v3633
      %v3728 = vpop.xlane.xlu0 %3727
      %3729 = vadd.xlane.f32.xlu0 %v3634
      %v3730 = vpop.xlane.xlu0 %3729
      %3731 = vadd.xlane.f32.xlu0 %v3635
      %v3732 = vpop.xlane.xlu0 %3731
      %3733 = vadd.xlane.f32.xlu0 %v3636
      %v3734 = vpop.xlane.xlu0 %3733
      %3735 = vadd.xlane.f32.xlu0 %v3637
      %v3736 = vpop.xlane.xlu0 %3735
      %3737 = vadd.xlane.f32.xlu0 %v3638
      %v3738 = vpop.xlane.xlu0 %3737
      %3739 = vadd.xlane.f32.xlu0 %v3639
      %v3740 = vpop.xlane.xlu0 %3739
      %3741 = vadd.xlane.f32.xlu0 %v3640
      %v3742 = vpop.xlane.xlu0 %3741
      %3743 = vadd.xlane.f32.xlu0 %v3641
      %v3744 = vpop.xlane.xlu0 %3743
      %3745 = vadd.xlane.f32.xlu0 %v3642
      %v3746 = vpop.xlane.xlu0 %3745
      %3747 = vadd.xlane.f32.xlu0 %v3643
      %v3748 = vpop.xlane.xlu0 %3747
      %3749 = vadd.xlane.f32.xlu0 %v3644
      %v3750 = vpop.xlane.xlu0 %3749
      %3751 = vadd.xlane.f32.xlu0 %v3645
      %v3752 = vpop.xlane.xlu0 %3751
      %3753 = vadd.xlane.f32.xlu0 %v3646
      %v3754 = vpop.xlane.xlu0 %3753
      %3755 = vadd.xlane.f32.xlu0 %v3647
      %v3756 = vpop.xlane.xlu0 %3755
      %3757 = vadd.xlane.f32.xlu0 %v3648
      %v3758 = vpop.xlane.xlu0 %3757
      %3759 = vadd.xlane.f32.xlu0 %v3649
      %v3760 = vpop.xlane.xlu0 %3759
      %3761 = vadd.xlane.f32.xlu0 %v3650
      %v3762 = vpop.xlane.xlu0 %3761
      %3763 = vadd.xlane.f32.xlu0 %v3651
      %v3764 = vpop.xlane.xlu0 %3763
      %3765 = vadd.xlane.f32.xlu0 %v3652
      %v3766 = vpop.xlane.xlu0 %3765
      %3767 = vadd.xlane.f32.xlu0 %v3653
      %v3768 = vpop.xlane.xlu0 %3767
      %3769 = vadd.xlane.f32.xlu0 %v3654
      %v3770 = vpop.xlane.xlu0 %3769
      %3771 = vadd.xlane.f32.xlu0 %v3655
      %v3772 = vpop.xlane.xlu0 %3771
      %3773 = vadd.xlane.f32.xlu0 %v3656
      %v3774 = vpop.xlane.xlu0 %3773
      %3775 = vadd.xlane.f32.xlu0 %v3657
      %v3776 = vpop.xlane.xlu0 %3775
      %3777 = vadd.xlane.f32.xlu0 %v3658
      %v3778 = vpop.xlane.xlu0 %3777
      %3779 = vadd.xlane.f32.xlu0 %v3659
      %v3780 = vpop.xlane.xlu0 %3779
      %3781 = vadd.xlane.f32.xlu0 %v3660
      %v3782 = vpop.xlane.xlu0 %3781
      %3783 = vadd.xlane.f32.xlu0 %v3661
      %v3784 = vpop.xlane.xlu0 %3783
      %3785 = vadd.xlane.f32.xlu0 %v3662
      %v3786 = vpop.xlane.xlu0 %3785
      %3787 = vadd.xlane.f32.xlu0 %v3663
      %v3788 = vpop.xlane.xlu0 %3787
      %3789 = vadd.xlane.f32.xlu0 %v3664
      %v3790 = vpop.xlane.xlu0 %3789
      %3791 = vadd.xlane.f32.xlu0 %v3665
      %v3792 = vpop.xlane.xlu0 %3791
      %3793 = vadd.xlane.f32.xlu0 %v3666
      %v3794 = vpop.xlane.xlu0 %3793
      %v3795 = vmul.f32 %v3668, %v995
      %v3796 = vmul.f32 %v3670, %v995
      %v3797 = vmul.f32 %v3672, %v995
      %v3798 = vmul.f32 %v3674, %v995
      %v3799 = vmul.f32 %v3676, %v995
      %v3800 = vmul.f32 %v3678, %v995
      %v3801 = vmul.f32 %v3680, %v995
      %v3802 = vmul.f32 %v3682, %v995
      %v3803 = vmul.f32 %v3684, %v995
      %v3804 = vmul.f32 %v3686, %v995
      %v3805 = vmul.f32 %v3688, %v995
      %v3806 = vmul.f32 %v3690, %v995
      %v3807 = vmul.f32 %v3692, %v995
      %v3808 = vmul.f32 %v3694, %v995
      %v3809 = vmul.f32 %v3696, %v995
      %v3810 = vmul.f32 %v3698, %v995
      %v3811 = vmul.f32 %v3700, %v995
      %v3812 = vmul.f32 %v3702, %v995
      %v3813 = vmul.f32 %v3704, %v995
      %v3814 = vmul.f32 %v3706, %v995
      %v3815 = vmul.f32 %v3708, %v995
      %v3816 = vmul.f32 %v3710, %v995
      %v3817 = vmul.f32 %v3712, %v995
      %v3818 = vmul.f32 %v3714, %v995
      %v3819 = vmul.f32 %v3716, %v995
      %v3820 = vmul.f32 %v3718, %v995
      %v3821 = vmul.f32 %v3720, %v995
      %v3822 = vmul.f32 %v3722, %v995
      %v3823 = vmul.f32 %v3724, %v995
      %v3824 = vmul.f32 %v3726, %v995
      %v3825 = vmul.f32 %v3728, %v995
      %v3826 = vmul.f32 %v3730, %v995
      %v3827 = vmul.f32 %v3732, %v995
      %v3828 = vmul.f32 %v3734, %v995
      %v3829 = vmul.f32 %v3736, %v995
      %v3830 = vmul.f32 %v3738, %v995
      %v3831 = vmul.f32 %v3740, %v995
      %v3832 = vmul.f32 %v3742, %v995
      %v3833 = vmul.f32 %v3744, %v995
      %v3834 = vmul.f32 %v3746, %v995
      %v3835 = vmul.f32 %v3748, %v995
      %v3836 = vmul.f32 %v3750, %v995
      %v3837 = vmul.f32 %v3752, %v995
      %v3838 = vmul.f32 %v3754, %v995
      %v3839 = vmul.f32 %v3756, %v995
      %v3840 = vmul.f32 %v3758, %v995
      %v3841 = vmul.f32 %v3760, %v995
      %v3842 = vmul.f32 %v3762, %v995
      %v3843 = vmul.f32 %v3764, %v995
      %v3844 = vmul.f32 %v3766, %v995
      %v3845 = vmul.f32 %v3768, %v995
      %v3846 = vmul.f32 %v3770, %v995
      %v3847 = vmul.f32 %v3772, %v995
      %v3848 = vmul.f32 %v3774, %v995
      %v3849 = vmul.f32 %v3776, %v995
      %v3850 = vmul.f32 %v3778, %v995
      %v3851 = vmul.f32 %v3780, %v995
      %v3852 = vmul.f32 %v3782, %v995
      %v3853 = vmul.f32 %v3784, %v995
      %v3854 = vmul.f32 %v3786, %v995
      %v3855 = vmul.f32 %v3788, %v995
      %v3856 = vmul.f32 %v3790, %v995
      %v3857 = vmul.f32 %v3792, %v995
      %v3858 = vmul.f32 %v3794, %v995
      %v3859 = vadd.f32 %v3795, 1e-05
      %v3860 = vadd.f32 %v3796, 1e-05
      %v3861 = vadd.f32 %v3797, 1e-05
      %v3862 = vadd.f32 %v3798, 1e-05
      %v3863 = vadd.f32 %v3799, 1e-05
      %v3864 = vadd.f32 %v3800, 1e-05
      %v3865 = vadd.f32 %v3801, 1e-05
      %v3866 = vadd.f32 %v3802, 1e-05
      %v3867 = vadd.f32 %v3803, 1e-05
      %v3868 = vadd.f32 %v3804, 1e-05
      %v3869 = vadd.f32 %v3805, 1e-05
      %v3870 = vadd.f32 %v3806, 1e-05
      %v3871 = vadd.f32 %v3807, 1e-05
      %v3872 = vadd.f32 %v3808, 1e-05
      %v3873 = vadd.f32 %v3809, 1e-05
      %v3874 = vadd.f32 %v3810, 1e-05
      %v3875 = vadd.f32 %v3811, 1e-05
      %v3876 = vadd.f32 %v3812, 1e-05
      %v3877 = vadd.f32 %v3813, 1e-05
      %v3878 = vadd.f32 %v3814, 1e-05
      %v3879 = vadd.f32 %v3815, 1e-05
      %v3880 = vadd.f32 %v3816, 1e-05
      %v3881 = vadd.f32 %v3817, 1e-05
      %v3882 = vadd.f32 %v3818, 1e-05
      %v3883 = vadd.f32 %v3819, 1e-05
      %v3884 = vadd.f32 %v3820, 1e-05
      %v3885 = vadd.f32 %v3821, 1e-05
      %v3886 = vadd.f32 %v3822, 1e-05
      %v3887 = vadd.f32 %v3823, 1e-05
      %v3888 = vadd.f32 %v3824, 1e-05
      %v3889 = vadd.f32 %v3825, 1e-05
      %v3890 = vadd.f32 %v3826, 1e-05
      %v3891 = vadd.f32 %v3827, 1e-05
      %v3892 = vadd.f32 %v3828, 1e-05
      %v3893 = vadd.f32 %v3829, 1e-05
      %v3894 = vadd.f32 %v3830, 1e-05
      %v3895 = vadd.f32 %v3831, 1e-05
      %v3896 = vadd.f32 %v3832, 1e-05
      %v3897 = vadd.f32 %v3833, 1e-05
      %v3898 = vadd.f32 %v3834, 1e-05
      %v3899 = vadd.f32 %v3835, 1e-05
      %v3900 = vadd.f32 %v3836, 1e-05
      %v3901 = vadd.f32 %v3837, 1e-05
      %v3902 = vadd.f32 %v3838, 1e-05
      %v3903 = vadd.f32 %v3839, 1e-05
      %v3904 = vadd.f32 %v3840, 1e-05
      %v3905 = vadd.f32 %v3841, 1e-05
      %v3906 = vadd.f32 %v3842, 1e-05
      %v3907 = vadd.f32 %v3843, 1e-05
      %v3908 = vadd.f32 %v3844, 1e-05
      %v3909 = vadd.f32 %v3845, 1e-05
      %v3910 = vadd.f32 %v3846, 1e-05
      %v3911 = vadd.f32 %v3847, 1e-05
      %v3912 = vadd.f32 %v3848, 1e-05
      %v3913 = vadd.f32 %v3849, 1e-05
      %v3914 = vadd.f32 %v3850, 1e-05
      %v3915 = vadd.f32 %v3851, 1e-05
      %v3916 = vadd.f32 %v3852, 1e-05
      %v3917 = vadd.f32 %v3853, 1e-05
      %v3918 = vadd.f32 %v3854, 1e-05
      %v3919 = vadd.f32 %v3855, 1e-05
      %v3920 = vadd.f32 %v3856, 1e-05
      %v3921 = vadd.f32 %v3857, 1e-05
      %v3922 = vadd.f32 %v3858, 1e-05
      %v3923 = vrsqrt.pop %v3859
      %v3924 = vrsqrt.pop %v3860
      %v3925 = vrsqrt.pop %v3861
      %v3926 = vrsqrt.pop %v3862
      %v3927 = vrsqrt.pop %v3863
      %v3928 = vrsqrt.pop %v3864
      %v3929 = vrsqrt.pop %v3865
      %v3930 = vrsqrt.pop %v3866
      %v3931 = vrsqrt.pop %v3867
      %v3932 = vrsqrt.pop %v3868
      %v3933 = vrsqrt.pop %v3869
      %v3934 = vrsqrt.pop %v3870
      %v3935 = vrsqrt.pop %v3871
      %v3936 = vrsqrt.pop %v3872
      %v3937 = vrsqrt.pop %v3873
      %v3938 = vrsqrt.pop %v3874
      %v3939 = vrsqrt.pop %v3875
      %v3940 = vrsqrt.pop %v3876
      %v3941 = vrsqrt.pop %v3877
      %v3942 = vrsqrt.pop %v3878
      %v3943 = vrsqrt.pop %v3879
      %v3944 = vrsqrt.pop %v3880
      %v3945 = vrsqrt.pop %v3881
      %v3946 = vrsqrt.pop %v3882
      %v3947 = vrsqrt.pop %v3883
      %v3948 = vrsqrt.pop %v3884
      %v3949 = vrsqrt.pop %v3885
      %v3950 = vrsqrt.pop %v3886
      %v3951 = vrsqrt.pop %v3887
      %v3952 = vrsqrt.pop %v3888
      %v3953 = vrsqrt.pop %v3889
      %v3954 = vrsqrt.pop %v3890
      %v3955 = vrsqrt.pop %v3891
      %v3956 = vrsqrt.pop %v3892
      %v3957 = vrsqrt.pop %v3893
      %v3958 = vrsqrt.pop %v3894
      %v3959 = vrsqrt.pop %v3895
      %v3960 = vrsqrt.pop %v3896
      %v3961 = vrsqrt.pop %v3897
      %v3962 = vrsqrt.pop %v3898
      %v3963 = vrsqrt.pop %v3899
      %v3964 = vrsqrt.pop %v3900
      %v3965 = vrsqrt.pop %v3901
      %v3966 = vrsqrt.pop %v3902
      %v3967 = vrsqrt.pop %v3903
      %v3968 = vrsqrt.pop %v3904
      %v3969 = vrsqrt.pop %v3905
      %v3970 = vrsqrt.pop %v3906
      %v3971 = vrsqrt.pop %v3907
      %v3972 = vrsqrt.pop %v3908
      %v3973 = vrsqrt.pop %v3909
      %v3974 = vrsqrt.pop %v3910
      %v3975 = vrsqrt.pop %v3911
      %v3976 = vrsqrt.pop %v3912
      %v3977 = vrsqrt.pop %v3913
      %v3978 = vrsqrt.pop %v3914
      %v3979 = vrsqrt.pop %v3915
      %v3980 = vrsqrt.pop %v3916
      %v3981 = vrsqrt.pop %v3917
      %v3982 = vrsqrt.pop %v3918
      %v3983 = vrsqrt.pop %v3919
      %v3984 = vrsqrt.pop %v3920
      %v3985 = vrsqrt.pop %v3921
      %v3986 = vrsqrt.pop %v3922
      %v3987 = vmul.f32 %v3539, %v3923
      %v3988 = vmul.f32 %v3540, %v3924
      %v3989 = vmul.f32 %v3541, %v3925
      %v3990 = vmul.f32 %v3542, %v3926
      %v3991 = vmul.f32 %v3543, %v3927
      %v3992 = vmul.f32 %v3544, %v3928
      %v3993 = vmul.f32 %v3545, %v3929
      %v3994 = vmul.f32 %v3546, %v3930
      %v3995 = vmul.f32 %v3547, %v3931
      %v3996 = vmul.f32 %v3548, %v3932
      %v3997 = vmul.f32 %v3549, %v3933
      %v3998 = vmul.f32 %v3550, %v3934
      %v3999 = vmul.f32 %v3551, %v3935
      %v4000 = vmul.f32 %v3552, %v3936
      %v4001 = vmul.f32 %v3553, %v3937
      %v4002 = vmul.f32 %v3554, %v3938
      %v4003 = vmul.f32 %v3555, %v3939
      %v4004 = vmul.f32 %v3556, %v3940
      %v4005 = vmul.f32 %v3557, %v3941
      %v4006 = vmul.f32 %v3558, %v3942
      %v4007 = vmul.f32 %v3559, %v3943
      %v4008 = vmul.f32 %v3560, %v3944
      %v4009 = vmul.f32 %v3561, %v3945
      %v4010 = vmul.f32 %v3562, %v3946
      %v4011 = vmul.f32 %v3563, %v3947
      %v4012 = vmul.f32 %v3564, %v3948
      %v4013 = vmul.f32 %v3565, %v3949
      %v4014 = vmul.f32 %v3566, %v3950
      %v4015 = vmul.f32 %v3567, %v3951
      %v4016 = vmul.f32 %v3568, %v3952
      %v4017 = vmul.f32 %v3569, %v3953
      %v4018 = vmul.f32 %v3570, %v3954
      %v4019 = vmul.f32 %v3571, %v3955
      %v4020 = vmul.f32 %v3572, %v3956
      %v4021 = vmul.f32 %v3573, %v3957
      %v4022 = vmul.f32 %v3574, %v3958
      %v4023 = vmul.f32 %v3575, %v3959
      %v4024 = vmul.f32 %v3576, %v3960
      %v4025 = vmul.f32 %v3577, %v3961
      %v4026 = vmul.f32 %v3578, %v3962
      %v4027 = vmul.f32 %v3579, %v3963
      %v4028 = vmul.f32 %v3580, %v3964
      %v4029 = vmul.f32 %v3581, %v3965
      %v4030 = vmul.f32 %v3582, %v3966
      %v4031 = vmul.f32 %v3583, %v3967
      %v4032 = vmul.f32 %v3584, %v3968
      %v4033 = vmul.f32 %v3585, %v3969
      %v4034 = vmul.f32 %v3586, %v3970
      %v4035 = vmul.f32 %v3587, %v3971
      %v4036 = vmul.f32 %v3588, %v3972
      %v4037 = vmul.f32 %v3589, %v3973
      %v4038 = vmul.f32 %v3590, %v3974
      %v4039 = vmul.f32 %v3591, %v3975
      %v4040 = vmul.f32 %v3592, %v3976
      %v4041 = vmul.f32 %v3593, %v3977
      %v4042 = vmul.f32 %v3594, %v3978
      %v4043 = vmul.f32 %v3595, %v3979
      %v4044 = vmul.f32 %v3596, %v3980
      %v4045 = vmul.f32 %v3597, %v3981
      %v4046 = vmul.f32 %v3598, %v3982
      %v4047 = vmul.f32 %v3599, %v3983
      %v4048 = vmul.f32 %v3600, %v3984
      %v4049 = vmul.f32 %v3601, %v3985
      %v4050 = vmul.f32 %v3602, %v3986
      %v4052 = vlaneseq
      %v4053 = vshrl.u32 %v4052, 7
      %v4054 = vsub.s32 0, %v4053
      %v4055 = vrot.slane %v3345, %v4054
      %v4057 = vmul.f32 %v3987, %v4055
      %v4058 = vmul.f32 %v3988, %v4055
      %v4059 = vmul.f32 %v3989, %v4055
      %v4060 = vmul.f32 %v3990, %v4055
      %v4061 = vmul.f32 %v3991, %v4055
      %v4062 = vmul.f32 %v3992, %v4055
      %v4063 = vmul.f32 %v3993, %v4055
      %v4064 = vmul.f32 %v3994, %v4055
      %v4065 = vmul.f32 %v3995, %v4055
      %v4066 = vmul.f32 %v3996, %v4055
      %v4067 = vmul.f32 %v3997, %v4055
      %v4068 = vmul.f32 %v3998, %v4055
      %v4069 = vmul.f32 %v3999, %v4055
      %v4070 = vmul.f32 %v4000, %v4055
      %v4071 = vmul.f32 %v4001, %v4055
      %v4072 = vmul.f32 %v4002, %v4055
      %v4073 = vmul.f32 %v4003, %v4055
      %v4074 = vmul.f32 %v4004, %v4055
      %v4075 = vmul.f32 %v4005, %v4055
      %v4076 = vmul.f32 %v4006, %v4055
      %v4077 = vmul.f32 %v4007, %v4055
      %v4078 = vmul.f32 %v4008, %v4055
      %v4079 = vmul.f32 %v4009, %v4055
      %v4080 = vmul.f32 %v4010, %v4055
      %v4081 = vmul.f32 %v4011, %v4055
      %v4082 = vmul.f32 %v4012, %v4055
      %v4083 = vmul.f32 %v4013, %v4055
      %v4084 = vmul.f32 %v4014, %v4055
      %v4085 = vmul.f32 %v4015, %v4055
      %v4086 = vmul.f32 %v4016, %v4055
      %v4087 = vmul.f32 %v4017, %v4055
      %v4088 = vmul.f32 %v4018, %v4055
      %v4089 = vmul.f32 %v4019, %v4055
      %v4090 = vmul.f32 %v4020, %v4055
      %v4091 = vmul.f32 %v4021, %v4055
      %v4092 = vmul.f32 %v4022, %v4055
      %v4093 = vmul.f32 %v4023, %v4055
      %v4094 = vmul.f32 %v4024, %v4055
      %v4095 = vmul.f32 %v4025, %v4055
      %v4096 = vmul.f32 %v4026, %v4055
      %v4097 = vmul.f32 %v4027, %v4055
      %v4098 = vmul.f32 %v4028, %v4055
      %v4099 = vmul.f32 %v4029, %v4055
      %v4100 = vmul.f32 %v4030, %v4055
      %v4101 = vmul.f32 %v4031, %v4055
      %v4102 = vmul.f32 %v4032, %v4055
      %v4103 = vmul.f32 %v4033, %v4055
      %v4104 = vmul.f32 %v4034, %v4055
      %v4105 = vmul.f32 %v4035, %v4055
      %v4106 = vmul.f32 %v4036, %v4055
      %v4107 = vmul.f32 %v4037, %v4055
      %v4108 = vmul.f32 %v4038, %v4055
      %v4109 = vmul.f32 %v4039, %v4055
      %v4110 = vmul.f32 %v4040, %v4055
      %v4111 = vmul.f32 %v4041, %v4055
      %v4112 = vmul.f32 %v4042, %v4055
      %v4113 = vmul.f32 %v4043, %v4055
      %v4114 = vmul.f32 %v4044, %v4055
      %v4115 = vmul.f32 %v4045, %v4055
      %v4116 = vmul.f32 %v4046, %v4055
      %v4117 = vmul.f32 %v4047, %v4055
      %v4118 = vmul.f32 %v4048, %v4055
      %v4119 = vmul.f32 %v4049, %v4055
      %v4120 = vmul.f32 %v4050, %v4055
      %v4122 = vlaneseq
      %v4123 = vshrl.u32 %v4122, 7
      %v4124 = vsub.s32 0, %v4123
      %v4125 = vrot.slane %v3346, %v4124
      %v4127 = vadd.f32 %v4057, %v4125
      %v4128 = vadd.f32 %v4058, %v4125
      %v4129 = vadd.f32 %v4059, %v4125
      %v4130 = vadd.f32 %v4060, %v4125
      %v4131 = vadd.f32 %v4061, %v4125
      %v4132 = vadd.f32 %v4062, %v4125
      %v4133 = vadd.f32 %v4063, %v4125
      %v4134 = vadd.f32 %v4064, %v4125
      %v4135 = vadd.f32 %v4065, %v4125
      %v4136 = vadd.f32 %v4066, %v4125
      %v4137 = vadd.f32 %v4067, %v4125
      %v4138 = vadd.f32 %v4068, %v4125
      %v4139 = vadd.f32 %v4069, %v4125
      %v4140 = vadd.f32 %v4070, %v4125
      %v4141 = vadd.f32 %v4071, %v4125
      %v4142 = vadd.f32 %v4072, %v4125
      %v4143 = vadd.f32 %v4073, %v4125
      %v4144 = vadd.f32 %v4074, %v4125
      %v4145 = vadd.f32 %v4075, %v4125
      %v4146 = vadd.f32 %v4076, %v4125
      %v4147 = vadd.f32 %v4077, %v4125
      %v4148 = vadd.f32 %v4078, %v4125
      %v4149 = vadd.f32 %v4079, %v4125
      %v4150 = vadd.f32 %v4080, %v4125
      %v4151 = vadd.f32 %v4081, %v4125
      %v4152 = vadd.f32 %v4082, %v4125
      %v4153 = vadd.f32 %v4083, %v4125
      %v4154 = vadd.f32 %v4084, %v4125
      %v4155 = vadd.f32 %v4085, %v4125
      %v4156 = vadd.f32 %v4086, %v4125
      %v4157 = vadd.f32 %v4087, %v4125
      %v4158 = vadd.f32 %v4088, %v4125
      %v4159 = vadd.f32 %v4089, %v4125
      %v4160 = vadd.f32 %v4090, %v4125
      %v4161 = vadd.f32 %v4091, %v4125
      %v4162 = vadd.f32 %v4092, %v4125
      %v4163 = vadd.f32 %v4093, %v4125
      %v4164 = vadd.f32 %v4094, %v4125
      %v4165 = vadd.f32 %v4095, %v4125
      %v4166 = vadd.f32 %v4096, %v4125
      %v4167 = vadd.f32 %v4097, %v4125
      %v4168 = vadd.f32 %v4098, %v4125
      %v4169 = vadd.f32 %v4099, %v4125
      %v4170 = vadd.f32 %v4100, %v4125
      %v4171 = vadd.f32 %v4101, %v4125
      %v4172 = vadd.f32 %v4102, %v4125
      %v4173 = vadd.f32 %v4103, %v4125
      %v4174 = vadd.f32 %v4104, %v4125
      %v4175 = vadd.f32 %v4105, %v4125
      %v4176 = vadd.f32 %v4106, %v4125
      %v4177 = vadd.f32 %v4107, %v4125
      %v4178 = vadd.f32 %v4108, %v4125
      %v4179 = vadd.f32 %v4109, %v4125
      %v4180 = vadd.f32 %v4110, %v4125
      %v4181 = vadd.f32 %v4111, %v4125
      %v4182 = vadd.f32 %v4112, %v4125
      %v4183 = vadd.f32 %v4113, %v4125
      %v4184 = vadd.f32 %v4114, %v4125
      %v4185 = vadd.f32 %v4115, %v4125
      %v4186 = vadd.f32 %v4116, %v4125
      %v4187 = vadd.f32 %v4117, %v4125
      %v4188 = vadd.f32 %v4118, %v4125
      %v4189 = vadd.f32 %v4119, %v4125
      %v4190 = vadd.f32 %v4120, %v4125
      %v4191 = vpack.c.bf16 %v4128, %v4127
      %v4192 = vpack.c.bf16 %v4130, %v4129
      %v4193 = vpack.c.bf16 %v4132, %v4131
      %v4194 = vpack.c.bf16 %v4134, %v4133
      %v4195 = vpack.c.bf16 %v4136, %v4135
      %v4196 = vpack.c.bf16 %v4138, %v4137
      %v4197 = vpack.c.bf16 %v4140, %v4139
      %v4198 = vpack.c.bf16 %v4142, %v4141
      %v4199 = vpack.c.bf16 %v4144, %v4143
      %v4200 = vpack.c.bf16 %v4146, %v4145
      %v4201 = vpack.c.bf16 %v4148, %v4147
      %v4202 = vpack.c.bf16 %v4150, %v4149
      %v4203 = vpack.c.bf16 %v4152, %v4151
      %v4204 = vpack.c.bf16 %v4154, %v4153
      %v4205 = vpack.c.bf16 %v4156, %v4155
      %v4206 = vpack.c.bf16 %v4158, %v4157
      %v4207 = vpack.c.bf16 %v4160, %v4159
      %v4208 = vpack.c.bf16 %v4162, %v4161
      %v4209 = vpack.c.bf16 %v4164, %v4163
      %v4210 = vpack.c.bf16 %v4166, %v4165
      %v4211 = vpack.c.bf16 %v4168, %v4167
      %v4212 = vpack.c.bf16 %v4170, %v4169
      %v4213 = vpack.c.bf16 %v4172, %v4171
      %v4214 = vpack.c.bf16 %v4174, %v4173
      %v4215 = vpack.c.bf16 %v4176, %v4175
      %v4216 = vpack.c.bf16 %v4178, %v4177
      %v4217 = vpack.c.bf16 %v4180, %v4179
      %v4218 = vpack.c.bf16 %v4182, %v4181
      %v4219 = vpack.c.bf16 %v4184, %v4183
      %v4220 = vpack.c.bf16 %v4186, %v4185
      %v4221 = vpack.c.bf16 %v4188, %v4187
      %v4222 = vpack.c.bf16 %v4190, %v4189
      %v4223 = vld [vmem:[%s648] sm:$0xff]
      %v4224 = vld [vmem:[%s648 + $0x8] sm:$0xff]
      %v4225 = vld [vmem:[%s648 + $0x10] sm:$0xff]
      %v4226 = vld [vmem:[%s648 + $0x18] sm:$0xff]
      %v4227 = vld [vmem:[%s648 + $0x20] sm:$0xff]
      %v4228 = vld [vmem:[%s648 + $0x28] sm:$0xff]
      %v4229 = vld [vmem:[%s648 + $0x30] sm:$0xff]
      %v4230 = vld [vmem:[%s648 + $0x38] sm:$0xff]
      %v4231 = vld [vmem:[%s648 + $0x40] sm:$0xff]
      %v4232 = vld [vmem:[%s648 + $0x48] sm:$0xff]
      %v4233 = vld [vmem:[%s648 + $0x50] sm:$0xff]
      %v4234 = vld [vmem:[%s648 + $0x58] sm:$0xff]
      %v4235 = vld [vmem:[%s648 + $0x60] sm:$0xff]
      %v4236 = vld [vmem:[%s648 + $0x68] sm:$0xff]
      %v4237 = vld [vmem:[%s648 + $0x70] sm:$0xff]
      %v4238 = vld [vmem:[%s648 + $0x78] sm:$0xff]
      %v4239 = vld [vmem:[%s648 + $0x80] sm:$0xff]
      %v4240 = vld [vmem:[%s648 + $0x88] sm:$0xff]
      %v4241 = vld [vmem:[%s648 + $0x90] sm:$0xff]
      %v4242 = vld [vmem:[%s648 + $0x98] sm:$0xff]
      %v4243 = vld [vmem:[%s648 + $0xa0] sm:$0xff]
      %v4244 = vld [vmem:[%s648 + $0xa8] sm:$0xff]
      %v4245 = vld [vmem:[%s648 + $0xb0] sm:$0xff]
      %v4246 = vld [vmem:[%s648 + $0xb8] sm:$0xff]
      %v4247 = vld [vmem:[%s648 + $0xc0] sm:$0xff]
      %v4248 = vld [vmem:[%s648 + $0xc8] sm:$0xff]
      %v4249 = vld [vmem:[%s648 + $0xd0] sm:$0xff]
      %v4250 = vld [vmem:[%s648 + $0xd8] sm:$0xff]
      %v4251 = vld [vmem:[%s648 + $0xe0] sm:$0xff]
      %v4252 = vld [vmem:[%s648 + $0xe8] sm:$0xff]
      %v4253 = vld [vmem:[%s648 + $0xf0] sm:$0xff]
      %v4254 = vld [vmem:[%s648 + $0xf8] sm:$0xff]
      %v4255 = vpack.c.bf16 %v4225, %v4223
      %v4256 = vpack.c.bf16 %v4226, %v4224
      %v4257 = vpack.c.bf16 %v4229, %v4227
      %v4258 = vpack.c.bf16 %v4230, %v4228
      %v4259 = vpack.c.bf16 %v4233, %v4231
      %v4260 = vpack.c.bf16 %v4234, %v4232
      %v4261 = vpack.c.bf16 %v4237, %v4235
      %v4262 = vpack.c.bf16 %v4238, %v4236
      %v4263 = vpack.c.bf16 %v4241, %v4239
      %v4264 = vpack.c.bf16 %v4242, %v4240
      %v4265 = vpack.c.bf16 %v4245, %v4243
      %v4266 = vpack.c.bf16 %v4246, %v4244
      %v4267 = vpack.c.bf16 %v4249, %v4247
      %v4268 = vpack.c.bf16 %v4250, %v4248
      %v4269 = vpack.c.bf16 %v4253, %v4251
      %v4270 = vpack.c.bf16 %v4254, %v4252
      %v4271 = vld [vmem:[%s652] sm:$0x3]
      %v4273 = vlaneseq
      %v4274 = vshrl.u32 %v4273, 7
      %v4275 = vsub.s32 0, %v4274
      %v4276 = vrot.slane %v4271, %v4275
      %v4277 = vlaneseq
      %v4278 = vshrl.u32 %v4277, 7
      %v4279 = vsub.s32 1, %v4278
      %v4280 = vrot.slane %v4271, %v4279
      %4283 = vmatprep.subr.bf16.mxu0 %v4256
      %4284 = vmatpush1.bf16.msra.mxu0 %v4255
      %4285 = vmatprep.subr.bf16.mxu0 %v4258
      %4286 = vmatpush1.bf16.msra.mxu0 %v4257
      %4287 = vmatprep.subr.bf16.mxu0 %v4260
      %4288 = vmatpush1.bf16.msra.mxu0 %v4259
      %4289 = vmatprep.subr.bf16.mxu0 %v4262
      %4290 = vmatpush1.bf16.msra.mxu0 %v4261
      %4291 = vmatprep.subr.bf16.mxu0 %v4264
      %4292 = vmatpush1.bf16.msra.mxu0 %v4263
      %4293 = vmatprep.subr.bf16.mxu0 %v4266
      %4294 = vmatpush1.bf16.msra.mxu0 %v4265
      %4295 = vmatprep.subr.bf16.mxu0 %v4268
      %4296 = vmatpush1.bf16.msra.mxu0 %v4267
      %4297 = vmatprep.subr.bf16.mxu0 %v4270
      %4298 = vmatpush1.bf16.msra.mxu0 %v4269
      %4299 = vmatprep.subr.bf16.mxu0 0
      %4300 = vmatpush1.bf16.msra.mxu0 0
      %4301 = vmatprep.subr.bf16.mxu0 0
      %4302 = vmatpush1.bf16.msra.mxu0 0
      %4303 = vmatprep.subr.bf16.mxu0 0
      %4304 = vmatpush1.bf16.msra.mxu0 0
      %4305 = vmatprep.subr.bf16.mxu0 0
      %4306 = vmatpush1.bf16.msra.mxu0 0
      %4307 = vmatprep.subr.bf16.mxu0 0
      %4308 = vmatpush1.bf16.msra.mxu0 0
      %4309 = vmatprep.subr.bf16.mxu0 0
      %4310 = vmatpush1.bf16.msra.mxu0 0
      %4311 = vmatprep.subr.bf16.mxu0 0
      %4312 = vmatpush1.bf16.msra.mxu0 0
      %4313 = vmatprep.subr.bf16.mxu0 0
      %4314 = vmatpush1.bf16.msra.mxu0 0
      %4315 = vmatprep.mubr.bf16.mxu0 0
      %4316 = vmatmul.mubr.bf16.gmra.mrb[0].mxu0 %v4191
      %v4317 = vpop.f32.mrb[0].mxu0
      %v4318 = vadd.f32 %v4276, %v4317
      %v4319 = vpop.f32.mrb[0].mxu0
      %v4320 = vadd.f32 %v4280, %v4319
      %v4321 = vpop.f32.mrb[0].mxu0
      %v4322 = vadd.f32 %v4276, %v4321
      %v4323 = vpop.f32.mrb[0].mxu0
      %v4324 = vadd.f32 %v4280, %v4323
      %4325 = vmatprep.mubr.bf16.mxu0 0
      %4326 = vmatmul.mubr.bf16.gmra.mrb[0].mxu0 %v4192
      %v4327 = vpop.f32.mrb[0].mxu0
      %v4328 = vadd.f32 %v4276, %v4327
      %v4329 = vpop.f32.mrb[0].mxu0
      %v4330 = vadd.f32 %v4280, %v4329
      %v4331 = vpop.f32.mrb[0].mxu0
      %v4332 = vadd.f32 %v4276, %v4331
      %v4333 = vpop.f32.mrb[0].mxu0
      %v4334 = vadd.f32 %v4280, %v4333
      %4335 = vmatprep.mubr.bf16.mxu0 0
      %4336 = vmatmul.mubr.bf16.gmra.mrb[0].mxu0 %v4193
      %v4337 = vpop.f32.mrb[0].mxu0
      %v4338 = vadd.f32 %v4276, %v4337
      %v4339 = vpop.f32.mrb[0].mxu0
      %v4340 = vadd.f32 %v4280, %v4339
      %v4341 = vpop.f32.mrb[0].mxu0
      %v4342 = vadd.f32 %v4276, %v4341
      %v4343 = vpop.f32.mrb[0].mxu0
      %v4344 = vadd.f32 %v4280, %v4343
      %4345 = vmatprep.mubr.bf16.mxu0 0
      %4346 = vmatmul.mubr.bf16.gmra.mrb[0].mxu0 %v4194
      %v4347 = vpop.f32.mrb[0].mxu0
      %v4348 = vadd.f32 %v4276, %v4347
      %v4349 = vpop.f32.mrb[0].mxu0
      %v4350 = vadd.f32 %v4280, %v4349
      %v4351 = vpop.f32.mrb[0].mxu0
      %v4352 = vadd.f32 %v4276, %v4351
      %v4353 = vpop.f32.mrb[0].mxu0
      %v4354 = vadd.f32 %v4280, %v4353
      %4355 = vmatprep.mubr.bf16.mxu0 0
      %4356 = vmatmul.mubr.bf16.gmra.mrb[0].mxu0 %v4195
      %v4357 = vpop.f32.mrb[0].mxu0
      %v4358 = vadd.f32 %v4276, %v4357
      %v4359 = vpop.f32.mrb[0].mxu0
      %v4360 = vadd.f32 %v4280, %v4359
      %v4361 = vpop.f32.mrb[0].mxu0
      %v4362 = vadd.f32 %v4276, %v4361
      %v4363 = vpop.f32.mrb[0].mxu0
      %v4364 = vadd.f32 %v4280, %v4363
      %4365 = vmatprep.mubr.bf16.mxu0 0
      %4366 = vmatmul.mubr.bf16.gmra.mrb[0].mxu0 %v4196
      %v4367 = vpop.f32.mrb[0].mxu0
      %v4368 = vadd.f32 %v4276, %v4367
      %v4369 = vpop.f32.mrb[0].mxu0
      %v4370 = vadd.f32 %v4280, %v4369
      %v4371 = vpop.f32.mrb[0].mxu0
      %v4372 = vadd.f32 %v4276, %v4371
      %v4373 = vpop.f32.mrb[0].mxu0
      %v4374 = vadd.f32 %v4280, %v4373
      %4375 = vmatprep.mubr.bf16.mxu0 0
      %4376 = vmatmul.mubr.bf16.gmra.mrb[0].mxu0 %v4197
      %v4377 = vpop.f32.mrb[0].mxu0
      %v4378 = vadd.f32 %v4276, %v4377
      %v4379 = vpop.f32.mrb[0].mxu0
      %v4380 = vadd.f32 %v4280, %v4379
      %v4381 = vpop.f32.mrb[0].mxu0
      %v4382 = vadd.f32 %v4276, %v4381
      %v4383 = vpop.f32.mrb[0].mxu0
      %v4384 = vadd.f32 %v4280, %v4383
      %4385 = vmatprep.mubr.bf16.mxu0 0
      %4386 = vmatmul.mubr.bf16.gmra.mrb[0].mxu0 %v4198
      %v4387 = vpop.f32.mrb[0].mxu0
      %v4388 = vadd.f32 %v4276, %v4387
      %v4389 = vpop.f32.mrb[0].mxu0
      %v4390 = vadd.f32 %v4280, %v4389
      %v4391 = vpop.f32.mrb[0].mxu0
      %v4392 = vadd.f32 %v4276, %v4391
      %v4393 = vpop.f32.mrb[0].mxu0
      %v4394 = vadd.f32 %v4280, %v4393
      %4395 = vmatprep.mubr.bf16.mxu0 0
      %4396 = vmatmul.mubr.bf16.gmra.mrb[0].mxu0 %v4199
      %v4397 = vpop.f32.mrb[0].mxu0
      %v4398 = vadd.f32 %v4276, %v4397
      %v4399 = vpop.f32.mrb[0].mxu0
      %v4400 = vadd.f32 %v4280, %v4399
      %v4401 = vpop.f32.mrb[0].mxu0
      %v4402 = vadd.f32 %v4276, %v4401
      %v4403 = vpop.f32.mrb[0].mxu0
      %v4404 = vadd.f32 %v4280, %v4403
      %4405 = vmatprep.mubr.bf16.mxu0 0
      %4406 = vmatmul.mubr.bf16.gmra.mrb[0].mxu0 %v4200
      %v4407 = vpop.f32.mrb[0].mxu0
      %v4408 = vadd.f32 %v4276, %v4407
      %v4409 = vpop.f32.mrb[0].mxu0
      %v4410 = vadd.f32 %v4280, %v4409
      %v4411 = vpop.f32.mrb[0].mxu0
      %v4412 = vadd.f32 %v4276, %v4411
      %v4413 = vpop.f32.mrb[0].mxu0
      %v4414 = vadd.f32 %v4280, %v4413
      %4415 = vmatprep.mubr.bf16.mxu0 0
      %4416 = vmatmul.mubr.bf16.gmra.mrb[0].mxu0 %v4201
      %v4417 = vpop.f32.mrb[0].mxu0
      %v4418 = vadd.f32 %v4276, %v4417
      %v4419 = vpop.f32.mrb[0].mxu0
      %v4420 = vadd.f32 %v4280, %v4419
      %v4421 = vpop.f32.mrb[0].mxu0
      %v4422 = vadd.f32 %v4276, %v4421
      %v4423 = vpop.f32.mrb[0].mxu0
      %v4424 = vadd.f32 %v4280, %v4423
      %4425 = vmatprep.mubr.bf16.mxu0 0
      %4426 = vmatmul.mubr.bf16.gmra.mrb[0].mxu0 %v4202
      %v4427 = vpop.f32.mrb[0].mxu0
      %v4428 = vadd.f32 %v4276, %v4427
      %v4429 = vpop.f32.mrb[0].mxu0
      %v4430 = vadd.f32 %v4280, %v4429
      %v4431 = vpop.f32.mrb[0].mxu0
      %v4432 = vadd.f32 %v4276, %v4431
      %v4433 = vpop.f32.mrb[0].mxu0
      %v4434 = vadd.f32 %v4280, %v4433
      %4435 = vmatprep.mubr.bf16.mxu0 0
      %4436 = vmatmul.mubr.bf16.gmra.mrb[0].mxu0 %v4203
      %v4437 = vpop.f32.mrb[0].mxu0
      %v4438 = vadd.f32 %v4276, %v4437
      %v4439 = vpop.f32.mrb[0].mxu0
      %v4440 = vadd.f32 %v4280, %v4439
      %v4441 = vpop.f32.mrb[0].mxu0
      %v4442 = vadd.f32 %v4276, %v4441
      %v4443 = vpop.f32.mrb[0].mxu0
      %v4444 = vadd.f32 %v4280, %v4443
      %4445 = vmatprep.mubr.bf16.mxu0 0
      %4446 = vmatmul.mubr.bf16.gmra.mrb[0].mxu0 %v4204
      %v4447 = vpop.f32.mrb[0].mxu0
      %v4448 = vadd.f32 %v4276, %v4447
      %v4449 = vpop.f32.mrb[0].mxu0
      %v4450 = vadd.f32 %v4280, %v4449
      %v4451 = vpop.f32.mrb[0].mxu0
      %v4452 = vadd.f32 %v4276, %v4451
      %v4453 = vpop.f32.mrb[0].mxu0
      %v4454 = vadd.f32 %v4280, %v4453
      %4455 = vmatprep.mubr.bf16.mxu0 0
      %4456 = vmatmul.mubr.bf16.gmra.mrb[0].mxu0 %v4205
      %v4457 = vpop.f32.mrb[0].mxu0
      %v4458 = vadd.f32 %v4276, %v4457
      %v4459 = vpop.f32.mrb[0].mxu0
      %v4460 = vadd.f32 %v4280, %v4459
      %v4461 = vpop.f32.mrb[0].mxu0
      %v4462 = vadd.f32 %v4276, %v4461
      %v4463 = vpop.f32.mrb[0].mxu0
      %v4464 = vadd.f32 %v4280, %v4463
      %4465 = vmatprep.mubr.bf16.mxu0 0
      %4466 = vmatmul.mubr.bf16.gmra.mrb[0].mxu0 %v4206
      %v4467 = vpop.f32.mrb[0].mxu0
      %v4468 = vadd.f32 %v4276, %v4467
      %v4469 = vpop.f32.mrb[0].mxu0
      %v4470 = vadd.f32 %v4280, %v4469
      %v4471 = vpop.f32.mrb[0].mxu0
      %v4472 = vadd.f32 %v4276, %v4471
      %v4473 = vpop.f32.mrb[0].mxu0
      %v4474 = vadd.f32 %v4280, %v4473
      %4475 = vmatprep.mubr.bf16.mxu0 0
      %4476 = vmatmul.mubr.bf16.gmra.mrb[0].mxu0 %v4207
      %v4477 = vpop.f32.mrb[0].mxu0
      %v4478 = vadd.f32 %v4276, %v4477
      %v4479 = vpop.f32.mrb[0].mxu0
      %v4480 = vadd.f32 %v4280, %v4479
      %v4481 = vpop.f32.mrb[0].mxu0
      %v4482 = vadd.f32 %v4276, %v4481
      %v4483 = vpop.f32.mrb[0].mxu0
      %v4484 = vadd.f32 %v4280, %v4483
      %4485 = vmatprep.mubr.bf16.mxu0 0
      %4486 = vmatmul.mubr.bf16.gmra.mrb[0].mxu0 %v4208
      %v4487 = vpop.f32.mrb[0].mxu0
      %v4488 = vadd.f32 %v4276, %v4487
      %v4489 = vpop.f32.mrb[0].mxu0
      %v4490 = vadd.f32 %v4280, %v4489
      %v4491 = vpop.f32.mrb[0].mxu0
      %v4492 = vadd.f32 %v4276, %v4491
      %v4493 = vpop.f32.mrb[0].mxu0
      %v4494 = vadd.f32 %v4280, %v4493
      %4495 = vmatprep.mubr.bf16.mxu0 0
      %4496 = vmatmul.mubr.bf16.gmra.mrb[0].mxu0 %v4209
      %v4497 = vpop.f32.mrb[0].mxu0
      %v4498 = vadd.f32 %v4276, %v4497
      %v4499 = vpop.f32.mrb[0].mxu0
      %v4500 = vadd.f32 %v4280, %v4499
      %v4501 = vpop.f32.mrb[0].mxu0
      %v4502 = vadd.f32 %v4276, %v4501
      %v4503 = vpop.f32.mrb[0].mxu0
      %v4504 = vadd.f32 %v4280, %v4503
      %4505 = vmatprep.mubr.bf16.mxu0 0
      %4506 = vmatmul.mubr.bf16.gmra.mrb[0].mxu0 %v4210
      %v4507 = vpop.f32.mrb[0].mxu0
      %v4508 = vadd.f32 %v4276, %v4507
      %v4509 = vpop.f32.mrb[0].mxu0
      %v4510 = vadd.f32 %v4280, %v4509
      %v4511 = vpop.f32.mrb[0].mxu0
      %v4512 = vadd.f32 %v4276, %v4511
      %v4513 = vpop.f32.mrb[0].mxu0
      %v4514 = vadd.f32 %v4280, %v4513
      %4515 = vmatprep.mubr.bf16.mxu0 0
      %4516 = vmatmul.mubr.bf16.gmra.mrb[0].mxu0 %v4211
      %v4517 = vpop.f32.mrb[0].mxu0
      %v4518 = vadd.f32 %v4276, %v4517
      %v4519 = vpop.f32.mrb[0].mxu0
      %v4520 = vadd.f32 %v4280, %v4519
      %v4521 = vpop.f32.mrb[0].mxu0
      %v4522 = vadd.f32 %v4276, %v4521
      %v4523 = vpop.f32.mrb[0].mxu0
      %v4524 = vadd.f32 %v4280, %v4523
      %4525 = vmatprep.mubr.bf16.mxu0 0
      %4526 = vmatmul.mubr.bf16.gmra.mrb[0].mxu0 %v4212
      %v4527 = vpop.f32.mrb[0].mxu0
      %v4528 = vadd.f32 %v4276, %v4527
      %v4529 = vpop.f32.mrb[0].mxu0
      %v4530 = vadd.f32 %v4280, %v4529
      %v4531 = vpop.f32.mrb[0].mxu0
      %v4532 = vadd.f32 %v4276, %v4531
      %v4533 = vpop.f32.mrb[0].mxu0
      %v4534 = vadd.f32 %v4280, %v4533
      %4535 = vmatprep.mubr.bf16.mxu0 0
      %4536 = vmatmul.mubr.bf16.gmra.mrb[0].mxu0 %v4213
      %v4537 = vpop.f32.mrb[0].mxu0
      %v4538 = vadd.f32 %v4276, %v4537
      %v4539 = vpop.f32.mrb[0].mxu0
      %v4540 = vadd.f32 %v4280, %v4539
      %v4541 = vpop.f32.mrb[0].mxu0
      %v4542 = vadd.f32 %v4276, %v4541
      %v4543 = vpop.f32.mrb[0].mxu0
      %v4544 = vadd.f32 %v4280, %v4543
      %4545 = vmatprep.mubr.bf16.mxu0 0
      %4546 = vmatmul.mubr.bf16.gmra.mrb[0].mxu0 %v4214
      %v4547 = vpop.f32.mrb[0].mxu0
      %v4548 = vadd.f32 %v4276, %v4547
      %v4549 = vpop.f32.mrb[0].mxu0
      %v4550 = vadd.f32 %v4280, %v4549
      %v4551 = vpop.f32.mrb[0].mxu0
      %v4552 = vadd.f32 %v4276, %v4551
      %v4553 = vpop.f32.mrb[0].mxu0
      %v4554 = vadd.f32 %v4280, %v4553
      %4555 = vmatprep.mubr.bf16.mxu0 0
      %4556 = vmatmul.mubr.bf16.gmra.mrb[0].mxu0 %v4215
      %v4557 = vpop.f32.mrb[0].mxu0
      %v4558 = vadd.f32 %v4276, %v4557
      %v4559 = vpop.f32.mrb[0].mxu0
      %v4560 = vadd.f32 %v4280, %v4559
      %v4561 = vpop.f32.mrb[0].mxu0
      %v4562 = vadd.f32 %v4276, %v4561
      %v4563 = vpop.f32.mrb[0].mxu0
      %v4564 = vadd.f32 %v4280, %v4563
      %4565 = vmatprep.mubr.bf16.mxu0 0
      %4566 = vmatmul.mubr.bf16.gmra.mrb[0].mxu0 %v4216
      %v4567 = vpop.f32.mrb[0].mxu0
      %v4568 = vadd.f32 %v4276, %v4567
      %v4569 = vpop.f32.mrb[0].mxu0
      %v4570 = vadd.f32 %v4280, %v4569
      %v4571 = vpop.f32.mrb[0].mxu0
      %v4572 = vadd.f32 %v4276, %v4571
      %v4573 = vpop.f32.mrb[0].mxu0
      %v4574 = vadd.f32 %v4280, %v4573
      %4575 = vmatprep.mubr.bf16.mxu0 0
      %4576 = vmatmul.mubr.bf16.gmra.mrb[0].mxu0 %v4217
      %v4577 = vpop.f32.mrb[0].mxu0
      %v4578 = vadd.f32 %v4276, %v4577
      %v4579 = vpop.f32.mrb[0].mxu0
      %v4580 = vadd.f32 %v4280, %v4579
      %v4581 = vpop.f32.mrb[0].mxu0
      %v4582 = vadd.f32 %v4276, %v4581
      %v4583 = vpop.f32.mrb[0].mxu0
      %v4584 = vadd.f32 %v4280, %v4583
      %4585 = vmatprep.mubr.bf16.mxu0 0
      %4586 = vmatmul.mubr.bf16.gmra.mrb[0].mxu0 %v4218
      %v4587 = vpop.f32.mrb[0].mxu0
      %v4588 = vadd.f32 %v4276, %v4587
      %v4589 = vpop.f32.mrb[0].mxu0
      %v4590 = vadd.f32 %v4280, %v4589
      %v4591 = vpop.f32.mrb[0].mxu0
      %v4592 = vadd.f32 %v4276, %v4591
      %v4593 = vpop.f32.mrb[0].mxu0
      %v4594 = vadd.f32 %v4280, %v4593
      %4595 = vmatprep.mubr.bf16.mxu0 0
      %4596 = vmatmul.mubr.bf16.gmra.mrb[0].mxu0 %v4219
      %v4597 = vpop.f32.mrb[0].mxu0
      %v4598 = vadd.f32 %v4276, %v4597
      %v4599 = vpop.f32.mrb[0].mxu0
      %v4600 = vadd.f32 %v4280, %v4599
      %v4601 = vpop.f32.mrb[0].mxu0
      %v4602 = vadd.f32 %v4276, %v4601
      %v4603 = vpop.f32.mrb[0].mxu0
      %v4604 = vadd.f32 %v4280, %v4603
      %4605 = vmatprep.mubr.bf16.mxu0 0
      %4606 = vmatmul.mubr.bf16.gmra.mrb[0].mxu0 %v4220
      %v4607 = vpop.f32.mrb[0].mxu0
      %v4608 = vadd.f32 %v4276, %v4607
      %v4609 = vpop.f32.mrb[0].mxu0
      %v4610 = vadd.f32 %v4280, %v4609
      %v4611 = vpop.f32.mrb[0].mxu0
      %v4612 = vadd.f32 %v4276, %v4611
      %v4613 = vpop.f32.mrb[0].mxu0
      %v4614 = vadd.f32 %v4280, %v4613
      %4615 = vmatprep.mubr.bf16.mxu0 0
      %4616 = vmatmul.mubr.bf16.gmra.mrb[0].mxu0 %v4221
      %v4617 = vpop.f32.mrb[0].mxu0
      %v4618 = vadd.f32 %v4276, %v4617
      %v4619 = vpop.f32.mrb[0].mxu0
      %v4620 = vadd.f32 %v4280, %v4619
      %v4621 = vpop.f32.mrb[0].mxu0
      %v4622 = vadd.f32 %v4276, %v4621
      %v4623 = vpop.f32.mrb[0].mxu0
      %v4624 = vadd.f32 %v4280, %v4623
      %4625 = vmatprep.mubr.bf16.mxu0 0
      %4626 = vmatmul.mubr.bf16.gmra.mrb[0].mxu0 %v4222
      %v4627 = vpop.f32.mrb[0].mxu0
      %v4628 = vadd.f32 %v4276, %v4627
      %v4629 = vpop.f32.mrb[0].mxu0
      %v4630 = vadd.f32 %v4280, %v4629
      %v4631 = vpop.f32.mrb[0].mxu0
      %v4632 = vadd.f32 %v4276, %v4631
      %v4633 = vpop.f32.mrb[0].mxu0
      %v4634 = vadd.f32 %v4280, %v4633
      %4635 = vdwg.mxu0
      %v4636 = vmul.f32 %v4318, 0.5
      %v4637 = vmul.f32 %v4320, 0.5
      %v4638 = vmul.f32 %v4322, 0.5
      %v4639 = vmul.f32 %v4324, 0.5
      %v4640 = vmul.f32 %v4328, 0.5
      %v4641 = vmul.f32 %v4330, 0.5
      %v4642 = vmul.f32 %v4332, 0.5
      %v4643 = vmul.f32 %v4334, 0.5
      %v4644 = vmul.f32 %v4338, 0.5
      %v4645 = vmul.f32 %v4340, 0.5
      %v4646 = vmul.f32 %v4342, 0.5
      %v4647 = vmul.f32 %v4344, 0.5
      %v4648 = vmul.f32 %v4348, 0.5
      %v4649 = vmul.f32 %v4350, 0.5
      %v4650 = vmul.f32 %v4352, 0.5
      %v4651 = vmul.f32 %v4354, 0.5
      %v4652 = vmul.f32 %v4358, 0.5
      %v4653 = vmul.f32 %v4360, 0.5
      %v4654 = vmul.f32 %v4362, 0.5
      %v4655 = vmul.f32 %v4364, 0.5
      %v4656 = vmul.f32 %v4368, 0.5
      %v4657 = vmul.f32 %v4370, 0.5
      %v4658 = vmul.f32 %v4372, 0.5
      %v4659 = vmul.f32 %v4374, 0.5
      %v4660 = vmul.f32 %v4378, 0.5
      %v4661 = vmul.f32 %v4380, 0.5
      %v4662 = vmul.f32 %v4382, 0.5
      %v4663 = vmul.f32 %v4384, 0.5
      %v4664 = vmul.f32 %v4388, 0.5
      %v4665 = vmul.f32 %v4390, 0.5
      %v4666 = vmul.f32 %v4392, 0.5
      %v4667 = vmul.f32 %v4394, 0.5
      %v4668 = vmul.f32 %v4398, 0.5
      %v4669 = vmul.f32 %v4400, 0.5
      %v4670 = vmul.f32 %v4402, 0.5
      %v4671 = vmul.f32 %v4404, 0.5
      %v4672 = vmul.f32 %v4408, 0.5
      %v4673 = vmul.f32 %v4410, 0.5
      %v4674 = vmul.f32 %v4412, 0.5
      %v4675 = vmul.f32 %v4414, 0.5
      %v4676 = vmul.f32 %v4418, 0.5
      %v4677 = vmul.f32 %v4420, 0.5
      %v4678 = vmul.f32 %v4422, 0.5
      %v4679 = vmul.f32 %v4424, 0.5
      %v4680 = vmul.f32 %v4428, 0.5
      %v4681 = vmul.f32 %v4430, 0.5
      %v4682 = vmul.f32 %v4432, 0.5
      %v4683 = vmul.f32 %v4434, 0.5
      %v4684 = vmul.f32 %v4438, 0.5
      %v4685 = vmul.f32 %v4440, 0.5
      %v4686 = vmul.f32 %v4442, 0.5
      %v4687 = vmul.f32 %v4444, 0.5
      %v4688 = vmul.f32 %v4448, 0.5
      %v4689 = vmul.f32 %v4450, 0.5
      %v4690 = vmul.f32 %v4452, 0.5
      %v4691 = vmul.f32 %v4454, 0.5
      %v4692 = vmul.f32 %v4458, 0.5
      %v4693 = vmul.f32 %v4460, 0.5
      %v4694 = vmul.f32 %v4462, 0.5
      %v4695 = vmul.f32 %v4464, 0.5
      %v4696 = vmul.f32 %v4468, 0.5
      %v4697 = vmul.f32 %v4470, 0.5
      %v4698 = vmul.f32 %v4472, 0.5
      %v4699 = vmul.f32 %v4474, 0.5
      %v4700 = vmul.f32 %v4478, 0.5
      %v4701 = vmul.f32 %v4480, 0.5
      %v4702 = vmul.f32 %v4482, 0.5
      %v4703 = vmul.f32 %v4484, 0.5
      %v4704 = vmul.f32 %v4488, 0.5
      %v4705 = vmul.f32 %v4490, 0.5
      %v4706 = vmul.f32 %v4492, 0.5
      %v4707 = vmul.f32 %v4494, 0.5
      %v4708 = vmul.f32 %v4498, 0.5
      %v4709 = vmul.f32 %v4500, 0.5
      %v4710 = vmul.f32 %v4502, 0.5
      %v4711 = vmul.f32 %v4504, 0.5
      %v4712 = vmul.f32 %v4508, 0.5
      %v4713 = vmul.f32 %v4510, 0.5
      %v4714 = vmul.f32 %v4512, 0.5
      %v4715 = vmul.f32 %v4514, 0.5
      %v4716 = vmul.f32 %v4518, 0.5
      %v4717 = vmul.f32 %v4520, 0.5
      %v4718 = vmul.f32 %v4522, 0.5
      %v4719 = vmul.f32 %v4524, 0.5
      %v4720 = vmul.f32 %v4528, 0.5
      %v4721 = vmul.f32 %v4530, 0.5
      %v4722 = vmul.f32 %v4532, 0.5
      %v4723 = vmul.f32 %v4534, 0.5
      %v4724 = vmul.f32 %v4538, 0.5
      %v4725 = vmul.f32 %v4540, 0.5
      %v4726 = vmul.f32 %v4542, 0.5
      %v4727 = vmul.f32 %v4544, 0.5
      %v4728 = vmul.f32 %v4548, 0.5
      %v4729 = vmul.f32 %v4550, 0.5
      %v4730 = vmul.f32 %v4552, 0.5
      %v4731 = vmul.f32 %v4554, 0.5
      %v4732 = vmul.f32 %v4558, 0.5
      %v4733 = vmul.f32 %v4560, 0.5
      %v4734 = vmul.f32 %v4562, 0.5
      %v4735 = vmul.f32 %v4564, 0.5
      %v4736 = vmul.f32 %v4568, 0.5
      %v4737 = vmul.f32 %v4570, 0.5
      %v4738 = vmul.f32 %v4572, 0.5
      %v4739 = vmul.f32 %v4574, 0.5
      %v4740 = vmul.f32 %v4578, 0.5
      %v4741 = vmul.f32 %v4580, 0.5
      %v4742 = vmul.f32 %v4582, 0.5
      %v4743 = vmul.f32 %v4584, 0.5
      %v4744 = vmul.f32 %v4588, 0.5
      %v4745 = vmul.f32 %v4590, 0.5
      %v4746 = vmul.f32 %v4592, 0.5
      %v4747 = vmul.f32 %v4594, 0.5
      %v4748 = vmul.f32 %v4598, 0.5
      %v4749 = vmul.f32 %v4600, 0.5
      %v4750 = vmul.f32 %v4602, 0.5
      %v4751 = vmul.f32 %v4604, 0.5
      %v4752 = vmul.f32 %v4608, 0.5
      %v4753 = vmul.f32 %v4610, 0.5
      %v4754 = vmul.f32 %v4612, 0.5
      %v4755 = vmul.f32 %v4614, 0.5
      %v4756 = vmul.f32 %v4618, 0.5
      %v4757 = vmul.f32 %v4620, 0.5
      %v4758 = vmul.f32 %v4622, 0.5
      %v4759 = vmul.f32 %v4624, 0.5
      %v4760 = vmul.f32 %v4628, 0.5
      %v4761 = vmul.f32 %v4630, 0.5
      %v4762 = vmul.f32 %v4632, 0.5
      %v4763 = vmul.f32 %v4634, 0.5
      %v4764 = vmul.f32 %v4318, 0.70710677
      %v4765 = vmul.f32 %v4320, 0.70710677
      %v4766 = vmul.f32 %v4322, 0.70710677
      %v4767 = vmul.f32 %v4324, 0.70710677
      %v4768 = vmul.f32 %v4328, 0.70710677
      %v4769 = vmul.f32 %v4330, 0.70710677
      %v4770 = vmul.f32 %v4332, 0.70710677
      %v4771 = vmul.f32 %v4334, 0.70710677
      %v4772 = vmul.f32 %v4338, 0.70710677
      %v4773 = vmul.f32 %v4340, 0.70710677
      %v4774 = vmul.f32 %v4342, 0.70710677
      %v4775 = vmul.f32 %v4344, 0.70710677
      %v4776 = vmul.f32 %v4348, 0.70710677
      %v4777 = vmul.f32 %v4350, 0.70710677
      %v4778 = vmul.f32 %v4352, 0.70710677
      %v4779 = vmul.f32 %v4354, 0.70710677
      %v4780 = vmul.f32 %v4358, 0.70710677
      %v4781 = vmul.f32 %v4360, 0.70710677
      %v4782 = vmul.f32 %v4362, 0.70710677
      %v4783 = vmul.f32 %v4364, 0.70710677
      %v4784 = vmul.f32 %v4368, 0.70710677
      %v4785 = vmul.f32 %v4370, 0.70710677
      %v4786 = vmul.f32 %v4372, 0.70710677
      %v4787 = vmul.f32 %v4374, 0.70710677
      %v4788 = vmul.f32 %v4378, 0.70710677
      %v4789 = vmul.f32 %v4380, 0.70710677
      %v4790 = vmul.f32 %v4382, 0.70710677
      %v4791 = vmul.f32 %v4384, 0.70710677
      %v4792 = vmul.f32 %v4388, 0.70710677
      %v4793 = vmul.f32 %v4390, 0.70710677
      %v4794 = vmul.f32 %v4392, 0.70710677
      %v4795 = vmul.f32 %v4394, 0.70710677
      %v4796 = vmul.f32 %v4398, 0.70710677
      %v4797 = vmul.f32 %v4400, 0.70710677
      %v4798 = vmul.f32 %v4402, 0.70710677
      %v4799 = vmul.f32 %v4404, 0.70710677
      %v4800 = vmul.f32 %v4408, 0.70710677
      %v4801 = vmul.f32 %v4410, 0.70710677
      %v4802 = vmul.f32 %v4412, 0.70710677
      %v4803 = vmul.f32 %v4414, 0.70710677
      %v4804 = vmul.f32 %v4418, 0.70710677
      %v4805 = vmul.f32 %v4420, 0.70710677
      %v4806 = vmul.f32 %v4422, 0.70710677
      %v4807 = vmul.f32 %v4424, 0.70710677
      %v4808 = vmul.f32 %v4428, 0.70710677
      %v4809 = vmul.f32 %v4430, 0.70710677
      %v4810 = vmul.f32 %v4432, 0.70710677
      %v4811 = vmul.f32 %v4434, 0.70710677
      %v4812 = vmul.f32 %v4438, 0.70710677
      %v4813 = vmul.f32 %v4440, 0.70710677
      %v4814 = vmul.f32 %v4442, 0.70710677
      %v4815 = vmul.f32 %v4444, 0.70710677
      %v4816 = vmul.f32 %v4448, 0.70710677
      %v4817 = vmul.f32 %v4450, 0.70710677
      %v4818 = vmul.f32 %v4452, 0.70710677
      %v4819 = vmul.f32 %v4454, 0.70710677
      %v4820 = vmul.f32 %v4458, 0.70710677
      %v4821 = vmul.f32 %v4460, 0.70710677
      %v4822 = vmul.f32 %v4462, 0.70710677
      %v4823 = vmul.f32 %v4464, 0.70710677
      %v4824 = vmul.f32 %v4468, 0.70710677
      %v4825 = vmul.f32 %v4470, 0.70710677
      %v4826 = vmul.f32 %v4472, 0.70710677
      %v4827 = vmul.f32 %v4474, 0.70710677
      %v4828 = vmul.f32 %v4478, 0.70710677
      %v4829 = vmul.f32 %v4480, 0.70710677
      %v4830 = vmul.f32 %v4482, 0.70710677
      %v4831 = vmul.f32 %v4484, 0.70710677
      %v4832 = vmul.f32 %v4488, 0.70710677
      %v4833 = vmul.f32 %v4490, 0.70710677
      %v4834 = vmul.f32 %v4492, 0.70710677
      %v4835 = vmul.f32 %v4494, 0.70710677
      %v4836 = vmul.f32 %v4498, 0.70710677
      %v4837 = vmul.f32 %v4500, 0.70710677
      %v4838 = vmul.f32 %v4502, 0.70710677
      %v4839 = vmul.f32 %v4504, 0.70710677
      %v4840 = vmul.f32 %v4508, 0.70710677
      %v4841 = vmul.f32 %v4510, 0.70710677
      %v4842 = vmul.f32 %v4512, 0.70710677
      %v4843 = vmul.f32 %v4514, 0.70710677
      %v4844 = vmul.f32 %v4518, 0.70710677
      %v4845 = vmul.f32 %v4520, 0.70710677
      %v4846 = vmul.f32 %v4522, 0.70710677
      %v4847 = vmul.f32 %v4524, 0.70710677
      %v4848 = vmul.f32 %v4528, 0.70710677
      %v4849 = vmul.f32 %v4530, 0.70710677
      %v4850 = vmul.f32 %v4532, 0.70710677
      %v4851 = vmul.f32 %v4534, 0.70710677
      %v4852 = vmul.f32 %v4538, 0.70710677
      %v4853 = vmul.f32 %v4540, 0.70710677
      %v4854 = vmul.f32 %v4542, 0.70710677
      %v4855 = vmul.f32 %v4544, 0.70710677
      %v4856 = vmul.f32 %v4548, 0.70710677
      %v4857 = vmul.f32 %v4550, 0.70710677
      %v4858 = vmul.f32 %v4552, 0.70710677
      %v4859 = vmul.f32 %v4554, 0.70710677
      %v4860 = vmul.f32 %v4558, 0.70710677
      %v4861 = vmul.f32 %v4560, 0.70710677
      %v4862 = vmul.f32 %v4562, 0.70710677
      %v4863 = vmul.f32 %v4564, 0.70710677
      %v4864 = vmul.f32 %v4568, 0.70710677
      %v4865 = vmul.f32 %v4570, 0.70710677
      %v4866 = vmul.f32 %v4572, 0.70710677
      %v4867 = vmul.f32 %v4574, 0.70710677
      %v4868 = vmul.f32 %v4578, 0.70710677
      %v4869 = vmul.f32 %v4580, 0.70710677
      %v4870 = vmul.f32 %v4582, 0.70710677
      %v4871 = vmul.f32 %v4584, 0.70710677
      %v4872 = vmul.f32 %v4588, 0.70710677
      %v4873 = vmul.f32 %v4590, 0.70710677
      %v4874 = vmul.f32 %v4592, 0.70710677
      %v4875 = vmul.f32 %v4594, 0.70710677
      %v4876 = vmul.f32 %v4598, 0.70710677
      %v4877 = vmul.f32 %v4600, 0.70710677
      %v4878 = vmul.f32 %v4602, 0.70710677
      %v4879 = vmul.f32 %v4604, 0.70710677
      %v4880 = vmul.f32 %v4608, 0.70710677
      %v4881 = vmul.f32 %v4610, 0.70710677
      %v4882 = vmul.f32 %v4612, 0.70710677
      %v4883 = vmul.f32 %v4614, 0.70710677
      %v4884 = vmul.f32 %v4618, 0.70710677
      %v4885 = vmul.f32 %v4620, 0.70710677
      %v4886 = vmul.f32 %v4622, 0.70710677
      %v4887 = vmul.f32 %v4624, 0.70710677
      %v4888 = vmul.f32 %v4628, 0.70710677
      %v4889 = vmul.f32 %v4630, 0.70710677
      %v4890 = vmul.f32 %v4632, 0.70710677
      %v4891 = vmul.f32 %v4634, 0.70710677
      %v4892 = verf.f32.pop %v4764
      %v4893 = verf.f32.pop %v4765
      %v4894 = verf.f32.pop %v4766
      %v4895 = verf.f32.pop %v4767
      %v4896 = verf.f32.pop %v4768
      %v4897 = verf.f32.pop %v4769
      %v4898 = verf.f32.pop %v4770
      %v4899 = verf.f32.pop %v4771
      %v4900 = verf.f32.pop %v4772
      %v4901 = verf.f32.pop %v4773
      %v4902 = verf.f32.pop %v4774
      %v4903 = verf.f32.pop %v4775
      %v4904 = verf.f32.pop %v4776
      %v4905 = verf.f32.pop %v4777
      %v4906 = verf.f32.pop %v4778
      %v4907 = verf.f32.pop %v4779
      %v4908 = verf.f32.pop %v4780
      %v4909 = verf.f32.pop %v4781
      %v4910 = verf.f32.pop %v4782
      %v4911 = verf.f32.pop %v4783
      %v4912 = verf.f32.pop %v4784
      %v4913 = verf.f32.pop %v4785
      %v4914 = verf.f32.pop %v4786
      %v4915 = verf.f32.pop %v4787
      %v4916 = verf.f32.pop %v4788
      %v4917 = verf.f32.pop %v4789
      %v4918 = verf.f32.pop %v4790
      %v4919 = verf.f32.pop %v4791
      %v4920 = verf.f32.pop %v4792
      %v4921 = verf.f32.pop %v4793
      %v4922 = verf.f32.pop %v4794
      %v4923 = verf.f32.pop %v4795
      %v4924 = verf.f32.pop %v4796
      %v4925 = verf.f32.pop %v4797
      %v4926 = verf.f32.pop %v4798
      %v4927 = verf.f32.pop %v4799
      %v4928 = verf.f32.pop %v4800
      %v4929 = verf.f32.pop %v4801
      %v4930 = verf.f32.pop %v4802
      %v4931 = verf.f32.pop %v4803
      %v4932 = verf.f32.pop %v4804
      %v4933 = verf.f32.pop %v4805
      %v4934 = verf.f32.pop %v4806
      %v4935 = verf.f32.pop %v4807
      %v4936 = verf.f32.pop %v4808
      %v4937 = verf.f32.pop %v4809
      %v4938 = verf.f32.pop %v4810
      %v4939 = verf.f32.pop %v4811
      %v4940 = verf.f32.pop %v4812
      %v4941 = verf.f32.pop %v4813
      %v4942 = verf.f32.pop %v4814
      %v4943 = verf.f32.pop %v4815
      %v4944 = verf.f32.pop %v4816
      %v4945 = verf.f32.pop %v4817
      %v4946 = verf.f32.pop %v4818
      %v4947 = verf.f32.pop %v4819
      %v4948 = verf.f32.pop %v4820
      %v4949 = verf.f32.pop %v4821
      %v4950 = verf.f32.pop %v4822
      %v4951 = verf.f32.pop %v4823
      %v4952 = verf.f32.pop %v4824
      %v4953 = verf.f32.pop %v4825
      %v4954 = verf.f32.pop %v4826
      %v4955 = verf.f32.pop %v4827
      %v4956 = verf.f32.pop %v4828
      %v4957 = verf.f32.pop %v4829
      %v4958 = verf.f32.pop %v4830
      %v4959 = verf.f32.pop %v4831
      %v4960 = verf.f32.pop %v4832
      %v4961 = verf.f32.pop %v4833
      %v4962 = verf.f32.pop %v4834
      %v4963 = verf.f32.pop %v4835
      %v4964 = verf.f32.pop %v4836
      %v4965 = verf.f32.pop %v4837
      %v4966 = verf.f32.pop %v4838
      %v4967 = verf.f32.pop %v4839
      %v4968 = verf.f32.pop %v4840
      %v4969 = verf.f32.pop %v4841
      %v4970 = verf.f32.pop %v4842
      %v4971 = verf.f32.pop %v4843
      %v4972 = verf.f32.pop %v4844
      %v4973 = verf.f32.pop %v4845
      %v4974 = verf.f32.pop %v4846
      %v4975 = verf.f32.pop %v4847
      %v4976 = verf.f32.pop %v4848
      %v4977 = verf.f32.pop %v4849
      %v4978 = verf.f32.pop %v4850
      %v4979 = verf.f32.pop %v4851
      %v4980 = verf.f32.pop %v4852
      %v4981 = verf.f32.pop %v4853
      %v4982 = verf.f32.pop %v4854
      %v4983 = verf.f32.pop %v4855
      %v4984 = verf.f32.pop %v4856
      %v4985 = verf.f32.pop %v4857
      %v4986 = verf.f32.pop %v4858
      %v4987 = verf.f32.pop %v4859
      %v4988 = verf.f32.pop %v4860
      %v4989 = verf.f32.pop %v4861
      %v4990 = verf.f32.pop %v4862
      %v4991 = verf.f32.pop %v4863
      %v4992 = verf.f32.pop %v4864
      %v4993 = verf.f32.pop %v4865
      %v4994 = verf.f32.pop %v4866
      %v4995 = verf.f32.pop %v4867
      %v4996 = verf.f32.pop %v4868
      %v4997 = verf.f32.pop %v4869
      %v4998 = verf.f32.pop %v4870
      %v4999 = verf.f32.pop %v4871
      %v5000 = verf.f32.pop %v4872
      %v5001 = verf.f32.pop %v4873
      %v5002 = verf.f32.pop %v4874
      %v5003 = verf.f32.pop %v4875
      %v5004 = verf.f32.pop %v4876
      %v5005 = verf.f32.pop %v4877
      %v5006 = verf.f32.pop %v4878
      %v5007 = verf.f32.pop %v4879
      %v5008 = verf.f32.pop %v4880
      %v5009 = verf.f32.pop %v4881
      %v5010 = verf.f32.pop %v4882
      %v5011 = verf.f32.pop %v4883
      %v5012 = verf.f32.pop %v4884
      %v5013 = verf.f32.pop %v4885
      %v5014 = verf.f32.pop %v4886
      %v5015 = verf.f32.pop %v4887
      %v5016 = verf.f32.pop %v4888
      %v5017 = verf.f32.pop %v4889
      %v5018 = verf.f32.pop %v4890
      %v5019 = verf.f32.pop %v4891
      %v5020 = vadd.f32 %v4892, 1.0
      %v5021 = vadd.f32 %v4893, 1.0
      %v5022 = vadd.f32 %v4894, 1.0
      %v5023 = vadd.f32 %v4895, 1.0
      %v5024 = vadd.f32 %v4896, 1.0
      %v5025 = vadd.f32 %v4897, 1.0
      %v5026 = vadd.f32 %v4898, 1.0
      %v5027 = vadd.f32 %v4899, 1.0
      %v5028 = vadd.f32 %v4900, 1.0
      %v5029 = vadd.f32 %v4901, 1.0
      %v5030 = vadd.f32 %v4902, 1.0
      %v5031 = vadd.f32 %v4903, 1.0
      %v5032 = vadd.f32 %v4904, 1.0
      %v5033 = vadd.f32 %v4905, 1.0
      %v5034 = vadd.f32 %v4906, 1.0
      %v5035 = vadd.f32 %v4907, 1.0
      %v5036 = vadd.f32 %v4908, 1.0
      %v5037 = vadd.f32 %v4909, 1.0
      %v5038 = vadd.f32 %v4910, 1.0
      %v5039 = vadd.f32 %v4911, 1.0
      %v5040 = vadd.f32 %v4912, 1.0
      %v5041 = vadd.f32 %v4913, 1.0
      %v5042 = vadd.f32 %v4914, 1.0
      %v5043 = vadd.f32 %v4915, 1.0
      %v5044 = vadd.f32 %v4916, 1.0
      %v5045 = vadd.f32 %v4917, 1.0
      %v5046 = vadd.f32 %v4918, 1.0
      %v5047 = vadd.f32 %v4919, 1.0
      %v5048 = vadd.f32 %v4920, 1.0
      %v5049 = vadd.f32 %v4921, 1.0
      %v5050 = vadd.f32 %v4922, 1.0
      %v5051 = vadd.f32 %v4923, 1.0
      %v5052 = vadd.f32 %v4924, 1.0
      %v5053 = vadd.f32 %v4925, 1.0
      %v5054 = vadd.f32 %v4926, 1.0
      %v5055 = vadd.f32 %v4927, 1.0
      %v5056 = vadd.f32 %v4928, 1.0
      %v5057 = vadd.f32 %v4929, 1.0
      %v5058 = vadd.f32 %v4930, 1.0
      %v5059 = vadd.f32 %v4931, 1.0
      %v5060 = vadd.f32 %v4932, 1.0
      %v5061 = vadd.f32 %v4933, 1.0
      %v5062 = vadd.f32 %v4934, 1.0
      %v5063 = vadd.f32 %v4935, 1.0
      %v5064 = vadd.f32 %v4936, 1.0
      %v5065 = vadd.f32 %v4937, 1.0
      %v5066 = vadd.f32 %v4938, 1.0
      %v5067 = vadd.f32 %v4939, 1.0
      %v5068 = vadd.f32 %v4940, 1.0
      %v5069 = vadd.f32 %v4941, 1.0
      %v5070 = vadd.f32 %v4942, 1.0
      %v5071 = vadd.f32 %v4943, 1.0
      %v5072 = vadd.f32 %v4944, 1.0
      %v5073 = vadd.f32 %v4945, 1.0
      %v5074 = vadd.f32 %v4946, 1.0
      %v5075 = vadd.f32 %v4947, 1.0
      %v5076 = vadd.f32 %v4948, 1.0
      %v5077 = vadd.f32 %v4949, 1.0
      %v5078 = vadd.f32 %v4950, 1.0
      %v5079 = vadd.f32 %v4951, 1.0
      %v5080 = vadd.f32 %v4952, 1.0
      %v5081 = vadd.f32 %v4953, 1.0
      %v5082 = vadd.f32 %v4954, 1.0
      %v5083 = vadd.f32 %v4955, 1.0
      %v5084 = vadd.f32 %v4956, 1.0
      %v5085 = vadd.f32 %v4957, 1.0
      %v5086 = vadd.f32 %v4958, 1.0
      %v5087 = vadd.f32 %v4959, 1.0
      %v5088 = vadd.f32 %v4960, 1.0
      %v5089 = vadd.f32 %v4961, 1.0
      %v5090 = vadd.f32 %v4962, 1.0
      %v5091 = vadd.f32 %v4963, 1.0
      %v5092 = vadd.f32 %v4964, 1.0
      %v5093 = vadd.f32 %v4965, 1.0
      %v5094 = vadd.f32 %v4966, 1.0
      %v5095 = vadd.f32 %v4967, 1.0
      %v5096 = vadd.f32 %v4968, 1.0
      %v5097 = vadd.f32 %v4969, 1.0
      %v5098 = vadd.f32 %v4970, 1.0
      %v5099 = vadd.f32 %v4971, 1.0
      %v5100 = vadd.f32 %v4972, 1.0
      %v5101 = vadd.f32 %v4973, 1.0
      %v5102 = vadd.f32 %v4974, 1.0
      %v5103 = vadd.f32 %v4975, 1.0
      %v5104 = vadd.f32 %v4976, 1.0
      %v5105 = vadd.f32 %v4977, 1.0
      %v5106 = vadd.f32 %v4978, 1.0
      %v5107 = vadd.f32 %v4979, 1.0
      %v5108 = vadd.f32 %v4980, 1.0
      %v5109 = vadd.f32 %v4981, 1.0
      %v5110 = vadd.f32 %v4982, 1.0
      %v5111 = vadd.f32 %v4983, 1.0
      %v5112 = vadd.f32 %v4984, 1.0
      %v5113 = vadd.f32 %v4985, 1.0
      %v5114 = vadd.f32 %v4986, 1.0
      %v5115 = vadd.f32 %v4987, 1.0
      %v5116 = vadd.f32 %v4988, 1.0
      %v5117 = vadd.f32 %v4989, 1.0
      %v5118 = vadd.f32 %v4990, 1.0
      %v5119 = vadd.f32 %v4991, 1.0
      %v5120 = vadd.f32 %v4992, 1.0
      %v5121 = vadd.f32 %v4993, 1.0
      %v5122 = vadd.f32 %v4994, 1.0
      %v5123 = vadd.f32 %v4995, 1.0
      %v5124 = vadd.f32 %v4996, 1.0
      %v5125 = vadd.f32 %v4997, 1.0
      %v5126 = vadd.f32 %v4998, 1.0
      %v5127 = vadd.f32 %v4999, 1.0
      %v5128 = vadd.f32 %v5000, 1.0
      %v5129 = vadd.f32 %v5001, 1.0
      %v5130 = vadd.f32 %v5002, 1.0
      %v5131 = vadd.f32 %v5003, 1.0
      %v5132 = vadd.f32 %v5004, 1.0
      %v5133 = vadd.f32 %v5005, 1.0
      %v5134 = vadd.f32 %v5006, 1.0
      %v5135 = vadd.f32 %v5007, 1.0
      %v5136 = vadd.f32 %v5008, 1.0
      %v5137 = vadd.f32 %v5009, 1.0
      %v5138 = vadd.f32 %v5010, 1.0
      %v5139 = vadd.f32 %v5011, 1.0
      %v5140 = vadd.f32 %v5012, 1.0
      %v5141 = vadd.f32 %v5013, 1.0
      %v5142 = vadd.f32 %v5014, 1.0
      %v5143 = vadd.f32 %v5015, 1.0
      %v5144 = vadd.f32 %v5016, 1.0
      %v5145 = vadd.f32 %v5017, 1.0
      %v5146 = vadd.f32 %v5018, 1.0
      %v5147 = vadd.f32 %v5019, 1.0
      %v5148 = vmul.f32 %v4636, %v5020
      %v5149 = vmul.f32 %v4637, %v5021
      %v5150 = vmul.f32 %v4638, %v5022
      %v5151 = vmul.f32 %v4639, %v5023
      %v5152 = vmul.f32 %v4640, %v5024
      %v5153 = vmul.f32 %v4641, %v5025
      %v5154 = vmul.f32 %v4642, %v5026
      %v5155 = vmul.f32 %v4643, %v5027
      %v5156 = vmul.f32 %v4644, %v5028
      %v5157 = vmul.f32 %v4645, %v5029
      %v5158 = vmul.f32 %v4646, %v5030
      %v5159 = vmul.f32 %v4647, %v5031
      %v5160 = vmul.f32 %v4648, %v5032
      %v5161 = vmul.f32 %v4649, %v5033
      %v5162 = vmul.f32 %v4650, %v5034
      %v5163 = vmul.f32 %v4651, %v5035
      %v5164 = vmul.f32 %v4652, %v5036
      %v5165 = vmul.f32 %v4653, %v5037
      %v5166 = vmul.f32 %v4654, %v5038
      %v5167 = vmul.f32 %v4655, %v5039
      %v5168 = vmul.f32 %v4656, %v5040
      %v5169 = vmul.f32 %v4657, %v5041
      %v5170 = vmul.f32 %v4658, %v5042
      %v5171 = vmul.f32 %v4659, %v5043
      %v5172 = vmul.f32 %v4660, %v5044
      %v5173 = vmul.f32 %v4661, %v5045
      %v5174 = vmul.f32 %v4662, %v5046
      %v5175 = vmul.f32 %v4663, %v5047
      %v5176 = vmul.f32 %v4664, %v5048
      %v5177 = vmul.f32 %v4665, %v5049
      %v5178 = vmul.f32 %v4666, %v5050
      %v5179 = vmul.f32 %v4667, %v5051
      %v5180 = vmul.f32 %v4668, %v5052
      %v5181 = vmul.f32 %v4669, %v5053
      %v5182 = vmul.f32 %v4670, %v5054
      %v5183 = vmul.f32 %v4671, %v5055
      %v5184 = vmul.f32 %v4672, %v5056
      %v5185 = vmul.f32 %v4673, %v5057
      %v5186 = vmul.f32 %v4674, %v5058
      %v5187 = vmul.f32 %v4675, %v5059
      %v5188 = vmul.f32 %v4676, %v5060
      %v5189 = vmul.f32 %v4677, %v5061
      %v5190 = vmul.f32 %v4678, %v5062
      %v5191 = vmul.f32 %v4679, %v5063
      %v5192 = vmul.f32 %v4680, %v5064
      %v5193 = vmul.f32 %v4681, %v5065
      %v5194 = vmul.f32 %v4682, %v5066
      %v5195 = vmul.f32 %v4683, %v5067
      %v5196 = vmul.f32 %v4684, %v5068
      %v5197 = vmul.f32 %v4685, %v5069
      %v5198 = vmul.f32 %v4686, %v5070
      %v5199 = vmul.f32 %v4687, %v5071
      %v5200 = vmul.f32 %v4688, %v5072
      %v5201 = vmul.f32 %v4689, %v5073
      %v5202 = vmul.f32 %v4690, %v5074
      %v5203 = vmul.f32 %v4691, %v5075
      %v5204 = vmul.f32 %v4692, %v5076
      %v5205 = vmul.f32 %v4693, %v5077
      %v5206 = vmul.f32 %v4694, %v5078
      %v5207 = vmul.f32 %v4695, %v5079
      %v5208 = vmul.f32 %v4696, %v5080
      %v5209 = vmul.f32 %v4697, %v5081
      %v5210 = vmul.f32 %v4698, %v5082
      %v5211 = vmul.f32 %v4699, %v5083
      %v5212 = vmul.f32 %v4700, %v5084
      %v5213 = vmul.f32 %v4701, %v5085
      %v5214 = vmul.f32 %v4702, %v5086
      %v5215 = vmul.f32 %v4703, %v5087
      %v5216 = vmul.f32 %v4704, %v5088
      %v5217 = vmul.f32 %v4705, %v5089
      %v5218 = vmul.f32 %v4706, %v5090
      %v5219 = vmul.f32 %v4707, %v5091
      %v5220 = vmul.f32 %v4708, %v5092
      %v5221 = vmul.f32 %v4709, %v5093
      %v5222 = vmul.f32 %v4710, %v5094
      %v5223 = vmul.f32 %v4711, %v5095
      %v5224 = vmul.f32 %v4712, %v5096
      %v5225 = vmul.f32 %v4713, %v5097
      %v5226 = vmul.f32 %v4714, %v5098
      %v5227 = vmul.f32 %v4715, %v5099
      %v5228 = vmul.f32 %v4716, %v5100
      %v5229 = vmul.f32 %v4717, %v5101
      %v5230 = vmul.f32 %v4718, %v5102
      %v5231 = vmul.f32 %v4719, %v5103
      %v5232 = vmul.f32 %v4720, %v5104
      %v5233 = vmul.f32 %v4721, %v5105
      %v5234 = vmul.f32 %v4722, %v5106
      %v5235 = vmul.f32 %v4723, %v5107
      %v5236 = vmul.f32 %v4724, %v5108
      %v5237 = vmul.f32 %v4725, %v5109
      %v5238 = vmul.f32 %v4726, %v5110
      %v5239 = vmul.f32 %v4727, %v5111
      %v5240 = vmul.f32 %v4728, %v5112
      %v5241 = vmul.f32 %v4729, %v5113
      %v5242 = vmul.f32 %v4730, %v5114
      %v5243 = vmul.f32 %v4731, %v5115
      %v5244 = vmul.f32 %v4732, %v5116
      %v5245 = vmul.f32 %v4733, %v5117
      %v5246 = vmul.f32 %v4734, %v5118
      %v5247 = vmul.f32 %v4735, %v5119
      %v5248 = vmul.f32 %v4736, %v5120
      %v5249 = vmul.f32 %v4737, %v5121
      %v5250 = vmul.f32 %v4738, %v5122
      %v5251 = vmul.f32 %v4739, %v5123
      %v5252 = vmul.f32 %v4740, %v5124
      %v5253 = vmul.f32 %v4741, %v5125
      %v5254 = vmul.f32 %v4742, %v5126
      %v5255 = vmul.f32 %v4743, %v5127
      %v5256 = vmul.f32 %v4744, %v5128
      %v5257 = vmul.f32 %v4745, %v5129
      %v5258 = vmul.f32 %v4746, %v5130
      %v5259 = vmul.f32 %v4747, %v5131
      %v5260 = vmul.f32 %v4748, %v5132
      %v5261 = vmul.f32 %v4749, %v5133
      %v5262 = vmul.f32 %v4750, %v5134
      %v5263 = vmul.f32 %v4751, %v5135
      %v5264 = vmul.f32 %v4752, %v5136
      %v5265 = vmul.f32 %v4753, %v5137
      %v5266 = vmul.f32 %v4754, %v5138
      %v5267 = vmul.f32 %v4755, %v5139
      %v5268 = vmul.f32 %v4756, %v5140
      %v5269 = vmul.f32 %v4757, %v5141
      %v5270 = vmul.f32 %v4758, %v5142
      %v5271 = vmul.f32 %v4759, %v5143
      %v5272 = vmul.f32 %v4760, %v5144
      %v5273 = vmul.f32 %v4761, %v5145
      %v5274 = vmul.f32 %v4762, %v5146
      %v5275 = vmul.f32 %v4763, %v5147
      %v5276 = vpack.c.bf16 %v5150, %v5148
      %v5277 = vpack.c.bf16 %v5151, %v5149
      %v5278 = vpack.c.bf16 %v5154, %v5152
      %v5279 = vpack.c.bf16 %v5155, %v5153
      %v5280 = vpack.c.bf16 %v5158, %v5156
      %v5281 = vpack.c.bf16 %v5159, %v5157
      %v5282 = vpack.c.bf16 %v5162, %v5160
      %v5283 = vpack.c.bf16 %v5163, %v5161
      %v5284 = vpack.c.bf16 %v5166, %v5164
      %v5285 = vpack.c.bf16 %v5167, %v5165
      %v5286 = vpack.c.bf16 %v5170, %v5168
      %v5287 = vpack.c.bf16 %v5171, %v5169
      %v5288 = vpack.c.bf16 %v5174, %v5172
      %v5289 = vpack.c.bf16 %v5175, %v5173
      %v5290 = vpack.c.bf16 %v5178, %v5176
      %v5291 = vpack.c.bf16 %v5179, %v5177
      %v5292 = vpack.c.bf16 %v5182, %v5180
      %v5293 = vpack.c.bf16 %v5183, %v5181
      %v5294 = vpack.c.bf16 %v5186, %v5184
      %v5295 = vpack.c.bf16 %v5187, %v5185
      %v5296 = vpack.c.bf16 %v5190, %v5188
      %v5297 = vpack.c.bf16 %v5191, %v5189
      %v5298 = vpack.c.bf16 %v5194, %v5192
      %v5299 = vpack.c.bf16 %v5195, %v5193
      %v5300 = vpack.c.bf16 %v5198, %v5196
      %v5301 = vpack.c.bf16 %v5199, %v5197
      %v5302 = vpack.c.bf16 %v5202, %v5200
      %v5303 = vpack.c.bf16 %v5203, %v5201
      %v5304 = vpack.c.bf16 %v5206, %v5204
      %v5305 = vpack.c.bf16 %v5207, %v5205
      %v5306 = vpack.c.bf16 %v5210, %v5208
      %v5307 = vpack.c.bf16 %v5211, %v5209
      %v5308 = vpack.c.bf16 %v5214, %v5212
      %v5309 = vpack.c.bf16 %v5215, %v5213
      %v5310 = vpack.c.bf16 %v5218, %v5216
      %v5311 = vpack.c.bf16 %v5219, %v5217
      %v5312 = vpack.c.bf16 %v5222, %v5220
      %v5313 = vpack.c.bf16 %v5223, %v5221
      %v5314 = vpack.c.bf16 %v5226, %v5224
      %v5315 = vpack.c.bf16 %v5227, %v5225
      %v5316 = vpack.c.bf16 %v5230, %v5228
      %v5317 = vpack.c.bf16 %v5231, %v5229
      %v5318 = vpack.c.bf16 %v5234, %v5232
      %v5319 = vpack.c.bf16 %v5235, %v5233
      %v5320 = vpack.c.bf16 %v5238, %v5236
      %v5321 = vpack.c.bf16 %v5239, %v5237
      %v5322 = vpack.c.bf16 %v5242, %v5240
      %v5323 = vpack.c.bf16 %v5243, %v5241
      %v5324 = vpack.c.bf16 %v5246, %v5244
      %v5325 = vpack.c.bf16 %v5247, %v5245
      %v5326 = vpack.c.bf16 %v5250, %v5248
      %v5327 = vpack.c.bf16 %v5251, %v5249
      %v5328 = vpack.c.bf16 %v5254, %v5252
      %v5329 = vpack.c.bf16 %v5255, %v5253
      %v5330 = vpack.c.bf16 %v5258, %v5256
      %v5331 = vpack.c.bf16 %v5259, %v5257
      %v5332 = vpack.c.bf16 %v5262, %v5260
      %v5333 = vpack.c.bf16 %v5263, %v5261
      %v5334 = vpack.c.bf16 %v5266, %v5264
      %v5335 = vpack.c.bf16 %v5267, %v5265
      %v5336 = vpack.c.bf16 %v5270, %v5268
      %v5337 = vpack.c.bf16 %v5271, %v5269
      %v5338 = vpack.c.bf16 %v5274, %v5272
      %v5339 = vpack.c.bf16 %v5275, %v5273
      %v5340 = vld [vmem:[%s657] sm:$0xff]
      %v5341 = vld [vmem:[%s657 + $0x8] sm:$0xff]
      %v5342 = vld [vmem:[%s657 + $0x10] sm:$0xff]
      %v5343 = vld [vmem:[%s657 + $0x18] sm:$0xff]
      %v5344 = vld [vmem:[%s657 + $0x20] sm:$0xff]
      %v5345 = vld [vmem:[%s657 + $0x28] sm:$0xff]
      %v5346 = vld [vmem:[%s657 + $0x30] sm:$0xff]
      %v5347 = vld [vmem:[%s657 + $0x38] sm:$0xff]
      %v5348 = vld [vmem:[%s657 + $0x40] sm:$0xff]
      %v5349 = vld [vmem:[%s657 + $0x48] sm:$0xff]
      %v5350 = vld [vmem:[%s657 + $0x50] sm:$0xff]
      %v5351 = vld [vmem:[%s657 + $0x58] sm:$0xff]
      %v5352 = vld [vmem:[%s657 + $0x60] sm:$0xff]
      %v5353 = vld [vmem:[%s657 + $0x68] sm:$0xff]
      %v5354 = vld [vmem:[%s657 + $0x70] sm:$0xff]
      %v5355 = vld [vmem:[%s657 + $0x78] sm:$0xff]
      %v5356 = vld [vmem:[%s657 + $0x80] sm:$0xff]
      %v5357 = vld [vmem:[%s657 + $0x88] sm:$0xff]
      %v5358 = vld [vmem:[%s657 + $0x90] sm:$0xff]
      %v5359 = vld [vmem:[%s657 + $0x98] sm:$0xff]
      %v5360 = vld [vmem:[%s657 + $0xa0] sm:$0xff]
      %v5361 = vld [vmem:[%s657 + $0xa8] sm:$0xff]
      %v5362 = vld [vmem:[%s657 + $0xb0] sm:$0xff]
      %v5363 = vld [vmem:[%s657 + $0xb8] sm:$0xff]
      %v5364 = vld [vmem:[%s657 + $0xc0] sm:$0xff]
      %v5365 = vld [vmem:[%s657 + $0xc8] sm:$0xff]
      %v5366 = vld [vmem:[%s657 + $0xd0] sm:$0xff]
      %v5367 = vld [vmem:[%s657 + $0xd8] sm:$0xff]
      %v5368 = vld [vmem:[%s657 + $0xe0] sm:$0xff]
      %v5369 = vld [vmem:[%s657 + $0xe8] sm:$0xff]
      %v5370 = vld [vmem:[%s657 + $0xf0] sm:$0xff]
      %v5371 = vld [vmem:[%s657 + $0xf8] sm:$0xff]
      %v5372 = vpack.c.bf16 %v5341, %v5340
      %v5373 = vpack.c.bf16 %v5343, %v5342
      %v5374 = vpack.c.bf16 %v5345, %v5344
      %v5375 = vpack.c.bf16 %v5347, %v5346
      %v5376 = vpack.c.bf16 %v5349, %v5348
      %v5377 = vpack.c.bf16 %v5351, %v5350
      %v5378 = vpack.c.bf16 %v5353, %v5352
      %v5379 = vpack.c.bf16 %v5355, %v5354
      %v5380 = vpack.c.bf16 %v5357, %v5356
      %v5381 = vpack.c.bf16 %v5359, %v5358
      %v5382 = vpack.c.bf16 %v5361, %v5360
      %v5383 = vpack.c.bf16 %v5363, %v5362
      %v5384 = vpack.c.bf16 %v5365, %v5364
      %v5385 = vpack.c.bf16 %v5367, %v5366
      %v5386 = vpack.c.bf16 %v5369, %v5368
      %v5387 = vpack.c.bf16 %v5371, %v5370
      %v5388 = vld [vmem:[%s660] sm:$0x1]
      %v5390 = vlaneseq
      %v5391 = vshrl.u32 %v5390, 7
      %v5392 = vsub.s32 0, %v5391
      %v5393 = vrot.slane %v5388, %v5392
      %5395 = vmatprep.subr.bf16.mxu0 0
      %5396 = vmatpush1.bf16.msra.mxu0 %v5372
      %5397 = vmatprep.subr.bf16.mxu0 0
      %5398 = vmatpush1.bf16.msra.mxu0 %v5373
      %5399 = vmatprep.subr.bf16.mxu0 0
      %5400 = vmatpush1.bf16.msra.mxu0 %v5374
      %5401 = vmatprep.subr.bf16.mxu0 0
      %5402 = vmatpush1.bf16.msra.mxu0 %v5375
      %5403 = vmatprep.subr.bf16.mxu0 0
      %5404 = vmatpush1.bf16.msra.mxu0 %v5376
      %5405 = vmatprep.subr.bf16.mxu0 0
      %5406 = vmatpush1.bf16.msra.mxu0 %v5377
      %5407 = vmatprep.subr.bf16.mxu0 0
      %5408 = vmatpush1.bf16.msra.mxu0 %v5378
      %5409 = vmatprep.subr.bf16.mxu0 0
      %5410 = vmatpush1.bf16.msra.mxu0 %v5379
      %5411 = vmatprep.subr.bf16.mxu0 0
      %5412 = vmatpush1.bf16.msra.mxu0 %v5380
      %5413 = vmatprep.subr.bf16.mxu0 0
      %5414 = vmatpush1.bf16.msra.mxu0 %v5381
      %5415 = vmatprep.subr.bf16.mxu0 0
      %5416 = vmatpush1.bf16.msra.mxu0 %v5382
      %5417 = vmatprep.subr.bf16.mxu0 0
      %5418 = vmatpush1.bf16.msra.mxu0 %v5383
      %5419 = vmatprep.subr.bf16.mxu0 0
      %5420 = vmatpush1.bf16.msra.mxu0 %v5384
      %5421 = vmatprep.subr.bf16.mxu0 0
      %5422 = vmatpush1.bf16.msra.mxu0 %v5385
      %5423 = vmatprep.subr.bf16.mxu0 0
      %5424 = vmatpush1.bf16.msra.mxu0 %v5386
      %5425 = vmatprep.subr.bf16.mxu0 0
      %5426 = vmatpush1.bf16.msra.mxu0 %v5387
      %5427 = vmatprep.mubr.bf16.mxu0 %v5277
      %5428 = vmatmul.mubr.bf16.gmra.mrb[0].mxu0 %v5276
      %v5429 = vpop.f32.mrb[0].mxu0
      %v5430 = vadd.f32 %v5393, %v5429
      %v5431 = vpop.f32.mrb[0].mxu0
      %v5432 = vpop.f32.mrb[0].mxu0
      %v5433 = vadd.f32 %v5393, %v5432
      %v5434 = vpop.f32.mrb[0].mxu0
      %5435 = vmatprep.mubr.bf16.mxu0 %v5279
      %5436 = vmatmul.mubr.bf16.gmra.mrb[0].mxu0 %v5278
      %v5437 = vpop.f32.mrb[0].mxu0
      %v5438 = vadd.f32 %v5393, %v5437
      %v5439 = vpop.f32.mrb[0].mxu0
      %v5440 = vpop.f32.mrb[0].mxu0
      %v5441 = vadd.f32 %v5393, %v5440
      %v5442 = vpop.f32.mrb[0].mxu0
      %5443 = vmatprep.mubr.bf16.mxu0 %v5281
      %5444 = vmatmul.mubr.bf16.gmra.mrb[0].mxu0 %v5280
      %v5445 = vpop.f32.mrb[0].mxu0
      %v5446 = vadd.f32 %v5393, %v5445
      %v5447 = vpop.f32.mrb[0].mxu0
      %v5448 = vpop.f32.mrb[0].mxu0
      %v5449 = vadd.f32 %v5393, %v5448
      %v5450 = vpop.f32.mrb[0].mxu0
      %5451 = vmatprep.mubr.bf16.mxu0 %v5283
      %5452 = vmatmul.mubr.bf16.gmra.mrb[0].mxu0 %v5282
      %v5453 = vpop.f32.mrb[0].mxu0
      %v5454 = vadd.f32 %v5393, %v5453
      %v5455 = vpop.f32.mrb[0].mxu0
      %v5456 = vpop.f32.mrb[0].mxu0
      %v5457 = vadd.f32 %v5393, %v5456
      %v5458 = vpop.f32.mrb[0].mxu0
      %5459 = vmatprep.mubr.bf16.mxu0 %v5285
      %5460 = vmatmul.mubr.bf16.gmra.mrb[0].mxu0 %v5284
      %v5461 = vpop.f32.mrb[0].mxu0
      %v5462 = vadd.f32 %v5393, %v5461
      %v5463 = vpop.f32.mrb[0].mxu0
      %v5464 = vpop.f32.mrb[0].mxu0
      %v5465 = vadd.f32 %v5393, %v5464
      %v5466 = vpop.f32.mrb[0].mxu0
      %5467 = vmatprep.mubr.bf16.mxu0 %v5287
      %5468 = vmatmul.mubr.bf16.gmra.mrb[0].mxu0 %v5286
      %v5469 = vpop.f32.mrb[0].mxu0
      %v5470 = vadd.f32 %v5393, %v5469
      %v5471 = vpop.f32.mrb[0].mxu0
      %v5472 = vpop.f32.mrb[0].mxu0
      %v5473 = vadd.f32 %v5393, %v5472
      %v5474 = vpop.f32.mrb[0].mxu0
      %5475 = vmatprep.mubr.bf16.mxu0 %v5289
      %5476 = vmatmul.mubr.bf16.gmra.mrb[0].mxu0 %v5288
      %v5477 = vpop.f32.mrb[0].mxu0
      %v5478 = vadd.f32 %v5393, %v5477
      %v5479 = vpop.f32.mrb[0].mxu0
      %v5480 = vpop.f32.mrb[0].mxu0
      %v5481 = vadd.f32 %v5393, %v5480
      %v5482 = vpop.f32.mrb[0].mxu0
      %5483 = vmatprep.mubr.bf16.mxu0 %v5291
      %5484 = vmatmul.mubr.bf16.gmra.mrb[0].mxu0 %v5290
      %v5485 = vpop.f32.mrb[0].mxu0
      %v5486 = vadd.f32 %v5393, %v5485
      %v5487 = vpop.f32.mrb[0].mxu0
      %v5488 = vpop.f32.mrb[0].mxu0
      %v5489 = vadd.f32 %v5393, %v5488
      %v5490 = vpop.f32.mrb[0].mxu0
      %5491 = vmatprep.mubr.bf16.mxu0 %v5293
      %5492 = vmatmul.mubr.bf16.gmra.mrb[0].mxu0 %v5292
      %v5493 = vpop.f32.mrb[0].mxu0
      %v5494 = vadd.f32 %v5393, %v5493
      %v5495 = vpop.f32.mrb[0].mxu0
      %v5496 = vpop.f32.mrb[0].mxu0
      %v5497 = vadd.f32 %v5393, %v5496
      %v5498 = vpop.f32.mrb[0].mxu0
      %5499 = vmatprep.mubr.bf16.mxu0 %v5295
      %5500 = vmatmul.mubr.bf16.gmra.mrb[0].mxu0 %v5294
      %v5501 = vpop.f32.mrb[0].mxu0
      %v5502 = vadd.f32 %v5393, %v5501
      %v5503 = vpop.f32.mrb[0].mxu0
      %v5504 = vpop.f32.mrb[0].mxu0
      %v5505 = vadd.f32 %v5393, %v5504
      %v5506 = vpop.f32.mrb[0].mxu0
      %5507 = vmatprep.mubr.bf16.mxu0 %v5297
      %5508 = vmatmul.mubr.bf16.gmra.mrb[0].mxu0 %v5296
      %v5509 = vpop.f32.mrb[0].mxu0
      %v5510 = vadd.f32 %v5393, %v5509
      %v5511 = vpop.f32.mrb[0].mxu0
      %v5512 = vpop.f32.mrb[0].mxu0
      %v5513 = vadd.f32 %v5393, %v5512
      %v5514 = vpop.f32.mrb[0].mxu0
      %5515 = vmatprep.mubr.bf16.mxu0 %v5299
      %5516 = vmatmul.mubr.bf16.gmra.mrb[0].mxu0 %v5298
      %v5517 = vpop.f32.mrb[0].mxu0
      %v5518 = vadd.f32 %v5393, %v5517
      %v5519 = vpop.f32.mrb[0].mxu0
      %v5520 = vpop.f32.mrb[0].mxu0
      %v5521 = vadd.f32 %v5393, %v5520
      %v5522 = vpop.f32.mrb[0].mxu0
      %5523 = vmatprep.mubr.bf16.mxu0 %v5301
      %5524 = vmatmul.mubr.bf16.gmra.mrb[0].mxu0 %v5300
      %v5525 = vpop.f32.mrb[0].mxu0
      %v5526 = vadd.f32 %v5393, %v5525
      %v5527 = vpop.f32.mrb[0].mxu0
      %v5528 = vpop.f32.mrb[0].mxu0
      %v5529 = vadd.f32 %v5393, %v5528
      %v5530 = vpop.f32.mrb[0].mxu0
      %5531 = vmatprep.mubr.bf16.mxu0 %v5303
      %5532 = vmatmul.mubr.bf16.gmra.mrb[0].mxu0 %v5302
      %v5533 = vpop.f32.mrb[0].mxu0
      %v5534 = vadd.f32 %v5393, %v5533
      %v5535 = vpop.f32.mrb[0].mxu0
      %v5536 = vpop.f32.mrb[0].mxu0
      %v5537 = vadd.f32 %v5393, %v5536
      %v5538 = vpop.f32.mrb[0].mxu0
      %5539 = vmatprep.mubr.bf16.mxu0 %v5305
      %5540 = vmatmul.mubr.bf16.gmra.mrb[0].mxu0 %v5304
      %v5541 = vpop.f32.mrb[0].mxu0
      %v5542 = vadd.f32 %v5393, %v5541
      %v5543 = vpop.f32.mrb[0].mxu0
      %v5544 = vpop.f32.mrb[0].mxu0
      %v5545 = vadd.f32 %v5393, %v5544
      %v5546 = vpop.f32.mrb[0].mxu0
      %5547 = vmatprep.mubr.bf16.mxu0 %v5307
      %5548 = vmatmul.mubr.bf16.gmra.mrb[0].mxu0 %v5306
      %v5549 = vpop.f32.mrb[0].mxu0
      %v5550 = vadd.f32 %v5393, %v5549
      %v5551 = vpop.f32.mrb[0].mxu0
      %v5552 = vpop.f32.mrb[0].mxu0
      %v5553 = vadd.f32 %v5393, %v5552
      %v5554 = vpop.f32.mrb[0].mxu0
      %5555 = vmatprep.mubr.bf16.mxu0 %v5309
      %5556 = vmatmul.mubr.bf16.gmra.mrb[0].mxu0 %v5308
      %v5557 = vpop.f32.mrb[0].mxu0
      %v5558 = vadd.f32 %v5393, %v5557
      %v5559 = vpop.f32.mrb[0].mxu0
      %v5560 = vpop.f32.mrb[0].mxu0
      %v5561 = vadd.f32 %v5393, %v5560
      %v5562 = vpop.f32.mrb[0].mxu0
      %5563 = vmatprep.mubr.bf16.mxu0 %v5311
      %5564 = vmatmul.mubr.bf16.gmra.mrb[0].mxu0 %v5310
      %v5565 = vpop.f32.mrb[0].mxu0
      %v5566 = vadd.f32 %v5393, %v5565
      %v5567 = vpop.f32.mrb[0].mxu0
      %v5568 = vpop.f32.mrb[0].mxu0
      %v5569 = vadd.f32 %v5393, %v5568
      %v5570 = vpop.f32.mrb[0].mxu0
      %5571 = vmatprep.mubr.bf16.mxu0 %v5313
      %5572 = vmatmul.mubr.bf16.gmra.mrb[0].mxu0 %v5312
      %v5573 = vpop.f32.mrb[0].mxu0
      %v5574 = vadd.f32 %v5393, %v5573
      %v5575 = vpop.f32.mrb[0].mxu0
      %v5576 = vpop.f32.mrb[0].mxu0
      %v5577 = vadd.f32 %v5393, %v5576
      %v5578 = vpop.f32.mrb[0].mxu0
      %5579 = vmatprep.mubr.bf16.mxu0 %v5315
      %5580 = vmatmul.mubr.bf16.gmra.mrb[0].mxu0 %v5314
      %v5581 = vpop.f32.mrb[0].mxu0
      %v5582 = vadd.f32 %v5393, %v5581
      %v5583 = vpop.f32.mrb[0].mxu0
      %v5584 = vpop.f32.mrb[0].mxu0
      %v5585 = vadd.f32 %v5393, %v5584
      %v5586 = vpop.f32.mrb[0].mxu0
      %5587 = vmatprep.mubr.bf16.mxu0 %v5317
      %5588 = vmatmul.mubr.bf16.gmra.mrb[0].mxu0 %v5316
      %v5589 = vpop.f32.mrb[0].mxu0
      %v5590 = vadd.f32 %v5393, %v5589
      %v5591 = vpop.f32.mrb[0].mxu0
      %v5592 = vpop.f32.mrb[0].mxu0
      %v5593 = vadd.f32 %v5393, %v5592
      %v5594 = vpop.f32.mrb[0].mxu0
      %5595 = vmatprep.mubr.bf16.mxu0 %v5319
      %5596 = vmatmul.mubr.bf16.gmra.mrb[0].mxu0 %v5318
      %v5597 = vpop.f32.mrb[0].mxu0
      %v5598 = vadd.f32 %v5393, %v5597
      %v5599 = vpop.f32.mrb[0].mxu0
      %v5600 = vpop.f32.mrb[0].mxu0
      %v5601 = vadd.f32 %v5393, %v5600
      %v5602 = vpop.f32.mrb[0].mxu0
      %5603 = vmatprep.mubr.bf16.mxu0 %v5321
      %5604 = vmatmul.mubr.bf16.gmra.mrb[0].mxu0 %v5320
      %v5605 = vpop.f32.mrb[0].mxu0
      %v5606 = vadd.f32 %v5393, %v5605
      %v5607 = vpop.f32.mrb[0].mxu0
      %v5608 = vpop.f32.mrb[0].mxu0
      %v5609 = vadd.f32 %v5393, %v5608
      %v5610 = vpop.f32.mrb[0].mxu0
      %5611 = vmatprep.mubr.bf16.mxu0 %v5323
      %5612 = vmatmul.mubr.bf16.gmra.mrb[0].mxu0 %v5322
      %v5613 = vpop.f32.mrb[0].mxu0
      %v5614 = vadd.f32 %v5393, %v5613
      %v5615 = vpop.f32.mrb[0].mxu0
      %v5616 = vpop.f32.mrb[0].mxu0
      %v5617 = vadd.f32 %v5393, %v5616
      %v5618 = vpop.f32.mrb[0].mxu0
      %5619 = vmatprep.mubr.bf16.mxu0 %v5325
      %5620 = vmatmul.mubr.bf16.gmra.mrb[0].mxu0 %v5324
      %v5621 = vpop.f32.mrb[0].mxu0
      %v5622 = vadd.f32 %v5393, %v5621
      %v5623 = vpop.f32.mrb[0].mxu0
      %v5624 = vpop.f32.mrb[0].mxu0
      %v5625 = vadd.f32 %v5393, %v5624
      %v5626 = vpop.f32.mrb[0].mxu0
      %5627 = vmatprep.mubr.bf16.mxu0 %v5327
      %5628 = vmatmul.mubr.bf16.gmra.mrb[0].mxu0 %v5326
      %v5629 = vpop.f32.mrb[0].mxu0
      %v5630 = vadd.f32 %v5393, %v5629
      %v5631 = vpop.f32.mrb[0].mxu0
      %v5632 = vpop.f32.mrb[0].mxu0
      %v5633 = vadd.f32 %v5393, %v5632
      %v5634 = vpop.f32.mrb[0].mxu0
      %5635 = vmatprep.mubr.bf16.mxu0 %v5329
      %5636 = vmatmul.mubr.bf16.gmra.mrb[0].mxu0 %v5328
      %v5637 = vpop.f32.mrb[0].mxu0
      %v5638 = vadd.f32 %v5393, %v5637
      %v5639 = vpop.f32.mrb[0].mxu0
      %v5640 = vpop.f32.mrb[0].mxu0
      %v5641 = vadd.f32 %v5393, %v5640
      %v5642 = vpop.f32.mrb[0].mxu0
      %5643 = vmatprep.mubr.bf16.mxu0 %v5331
      %5644 = vmatmul.mubr.bf16.gmra.mrb[0].mxu0 %v5330
      %v5645 = vpop.f32.mrb[0].mxu0
      %v5646 = vadd.f32 %v5393, %v5645
      %v5647 = vpop.f32.mrb[0].mxu0
      %v5648 = vpop.f32.mrb[0].mxu0
      %v5649 = vadd.f32 %v5393, %v5648
      %v5650 = vpop.f32.mrb[0].mxu0
      %5651 = vmatprep.mubr.bf16.mxu0 %v5333
      %5652 = vmatmul.mubr.bf16.gmra.mrb[0].mxu0 %v5332
      %v5653 = vpop.f32.mrb[0].mxu0
      %v5654 = vadd.f32 %v5393, %v5653
      %v5655 = vpop.f32.mrb[0].mxu0
      %v5656 = vpop.f32.mrb[0].mxu0
      %v5657 = vadd.f32 %v5393, %v5656
      %v5658 = vpop.f32.mrb[0].mxu0
      %5659 = vmatprep.mubr.bf16.mxu0 %v5335
      %5660 = vmatmul.mubr.bf16.gmra.mrb[0].mxu0 %v5334
      %v5661 = vpop.f32.mrb[0].mxu0
      %v5662 = vadd.f32 %v5393, %v5661
      %v5663 = vpop.f32.mrb[0].mxu0
      %v5664 = vpop.f32.mrb[0].mxu0
      %v5665 = vadd.f32 %v5393, %v5664
      %v5666 = vpop.f32.mrb[0].mxu0
      %5667 = vmatprep.mubr.bf16.mxu0 %v5337
      %5668 = vmatmul.mubr.bf16.gmra.mrb[0].mxu0 %v5336
      %v5669 = vpop.f32.mrb[0].mxu0
      %v5670 = vadd.f32 %v5393, %v5669
      %v5671 = vpop.f32.mrb[0].mxu0
      %v5672 = vpop.f32.mrb[0].mxu0
      %v5673 = vadd.f32 %v5393, %v5672
      %v5674 = vpop.f32.mrb[0].mxu0
      %5675 = vmatprep.mubr.bf16.mxu0 %v5339
      %5676 = vmatmul.mubr.bf16.gmra.mrb[0].mxu0 %v5338
      %v5677 = vpop.f32.mrb[0].mxu0
      %v5678 = vadd.f32 %v5393, %v5677
      %v5679 = vpop.f32.mrb[0].mxu0
      %v5680 = vpop.f32.mrb[0].mxu0
      %v5681 = vadd.f32 %v5393, %v5680
      %v5682 = vpop.f32.mrb[0].mxu0
      %5683 = vdwg.mxu0
      %v5684 = vadd.f32 %v3281, %v5430
      %v5685 = vadd.f32 %v3282, %v5433
      %v5686 = vadd.f32 %v3283, %v5438
      %v5687 = vadd.f32 %v3284, %v5441
      %v5688 = vadd.f32 %v3285, %v5446
      %v5689 = vadd.f32 %v3286, %v5449
      %v5690 = vadd.f32 %v3287, %v5454
      %v5691 = vadd.f32 %v3288, %v5457
      %v5692 = vadd.f32 %v3289, %v5462
      %v5693 = vadd.f32 %v3290, %v5465
      %v5694 = vadd.f32 %v3291, %v5470
      %v5695 = vadd.f32 %v3292, %v5473
      %v5696 = vadd.f32 %v3293, %v5478
      %v5697 = vadd.f32 %v3294, %v5481
      %v5698 = vadd.f32 %v3295, %v5486
      %v5699 = vadd.f32 %v3296, %v5489
      %v5700 = vadd.f32 %v3297, %v5494
      %v5701 = vadd.f32 %v3298, %v5497
      %v5702 = vadd.f32 %v3299, %v5502
      %v5703 = vadd.f32 %v3300, %v5505
      %v5704 = vadd.f32 %v3301, %v5510
      %v5705 = vadd.f32 %v3302, %v5513
      %v5706 = vadd.f32 %v3303, %v5518
      %v5707 = vadd.f32 %v3304, %v5521
      %v5708 = vadd.f32 %v3305, %v5526
      %v5709 = vadd.f32 %v3306, %v5529
      %v5710 = vadd.f32 %v3307, %v5534
      %v5711 = vadd.f32 %v3308, %v5537
      %v5712 = vadd.f32 %v3309, %v5542
      %v5713 = vadd.f32 %v3310, %v5545
      %v5714 = vadd.f32 %v3311, %v5550
      %v5715 = vadd.f32 %v3312, %v5553
      %v5716 = vadd.f32 %v3313, %v5558
      %v5717 = vadd.f32 %v3314, %v5561
      %v5718 = vadd.f32 %v3315, %v5566
      %v5719 = vadd.f32 %v3316, %v5569
      %v5720 = vadd.f32 %v3317, %v5574
      %v5721 = vadd.f32 %v3318, %v5577
      %v5722 = vadd.f32 %v3319, %v5582
      %v5723 = vadd.f32 %v3320, %v5585
      %v5724 = vadd.f32 %v3321, %v5590
      %v5725 = vadd.f32 %v3322, %v5593
      %v5726 = vadd.f32 %v3323, %v5598
      %v5727 = vadd.f32 %v3324, %v5601
      %v5728 = vadd.f32 %v3325, %v5606
      %v5729 = vadd.f32 %v3326, %v5609
      %v5730 = vadd.f32 %v3327, %v5614
      %v5731 = vadd.f32 %v3328, %v5617
      %v5732 = vadd.f32 %v3329, %v5622
      %v5733 = vadd.f32 %v3330, %v5625
      %v5734 = vadd.f32 %v3331, %v5630
      %v5735 = vadd.f32 %v3332, %v5633
      %v5736 = vadd.f32 %v3333, %v5638
      %v5737 = vadd.f32 %v3334, %v5641
      %v5738 = vadd.f32 %v3335, %v5646
      %v5739 = vadd.f32 %v3336, %v5649
      %v5740 = vadd.f32 %v3337, %v5654
      %v5741 = vadd.f32 %v3338, %v5657
      %v5742 = vadd.f32 %v3339, %v5662
      %v5743 = vadd.f32 %v3340, %v5665
      %v5744 = vadd.f32 %v3341, %v5670
      %v5745 = vadd.f32 %v3342, %v5673
      %v5746 = vadd.f32 %v3343, %v5678
      %v5747 = vadd.f32 %v3344, %v5681
      %5748 = vst [vmem:[%s666] sm:$0xff] %v5684
      %5749 = vst [vmem:[%s666 + $0x8] sm:$0xff] %v5685
      %5750 = vst [vmem:[%s666 + $0x10] sm:$0xff] %v5686
      %5751 = vst [vmem:[%s666 + $0x18] sm:$0xff] %v5687
      %5752 = vst [vmem:[%s666 + $0x20] sm:$0xff] %v5688
      %5753 = vst [vmem:[%s666 + $0x28] sm:$0xff] %v5689
      %5754 = vst [vmem:[%s666 + $0x30] sm:$0xff] %v5690
      %5755 = vst [vmem:[%s666 + $0x38] sm:$0xff] %v5691
      %5756 = vst [vmem:[%s666 + $0x40] sm:$0xff] %v5692
      %5757 = vst [vmem:[%s666 + $0x48] sm:$0xff] %v5693
      %5758 = vst [vmem:[%s666 + $0x50] sm:$0xff] %v5694
      %5759 = vst [vmem:[%s666 + $0x58] sm:$0xff] %v5695
      %5760 = vst [vmem:[%s666 + $0x60] sm:$0xff] %v5696
      %5761 = vst [vmem:[%s666 + $0x68] sm:$0xff] %v5697
      %5762 = vst [vmem:[%s666 + $0x70] sm:$0xff] %v5698
      %5763 = vst [vmem:[%s666 + $0x78] sm:$0xff] %v5699
      %5764 = vst [vmem:[%s666 + $0x80] sm:$0xff] %v5700
      %5765 = vst [vmem:[%s666 + $0x88] sm:$0xff] %v5701
      %5766 = vst [vmem:[%s666 + $0x90] sm:$0xff] %v5702
      %5767 = vst [vmem:[%s666 + $0x98] sm:$0xff] %v5703
      %5768 = vst [vmem:[%s666 + $0xa0] sm:$0xff] %v5704
      %5769 = vst [vmem:[%s666 + $0xa8] sm:$0xff] %v5705
      %5770 = vst [vmem:[%s666 + $0xb0] sm:$0xff] %v5706
      %5771 = vst [vmem:[%s666 + $0xb8] sm:$0xff] %v5707
      %5772 = vst [vmem:[%s666 + $0xc0] sm:$0xff] %v5708
      %5773 = vst [vmem:[%s666 + $0xc8] sm:$0xff] %v5709
      %5774 = vst [vmem:[%s666 + $0xd0] sm:$0xff] %v5710
      %5775 = vst [vmem:[%s666 + $0xd8] sm:$0xff] %v5711
      %5776 = vst [vmem:[%s666 + $0xe0] sm:$0xff] %v5712
      %5777 = vst [vmem:[%s666 + $0xe8] sm:$0xff] %v5713
      %5778 = vst [vmem:[%s666 + $0xf0] sm:$0xff] %v5714
      %5779 = vst [vmem:[%s666 + $0xf8] sm:$0xff] %v5715
      %5780 = vst [vmem:[%s666 + $0x100] sm:$0xff] %v5716
      %5781 = vst [vmem:[%s666 + $0x108] sm:$0xff] %v5717
      %5782 = vst [vmem:[%s666 + $0x110] sm:$0xff] %v5718
      %5783 = vst [vmem:[%s666 + $0x118] sm:$0xff] %v5719
      %5784 = vst [vmem:[%s666 + $0x120] sm:$0xff] %v5720
      %5785 = vst [vmem:[%s666 + $0x128] sm:$0xff] %v5721
      %5786 = vst [vmem:[%s666 + $0x130] sm:$0xff] %v5722
      %5787 = vst [vmem:[%s666 + $0x138] sm:$0xff] %v5723
      %5788 = vst [vmem:[%s666 + $0x140] sm:$0xff] %v5724
      %5789 = vst [vmem:[%s666 + $0x148] sm:$0xff] %v5725
      %5790 = vst [vmem:[%s666 + $0x150] sm:$0xff] %v5726
      %5791 = vst [vmem:[%s666 + $0x158] sm:$0xff] %v5727
      %5792 = vst [vmem:[%s666 + $0x160] sm:$0xff] %v5728
      %5793 = vst [vmem:[%s666 + $0x168] sm:$0xff] %v5729
      %5794 = vst [vmem:[%s666 + $0x170] sm:$0xff] %v5730
      %5795 = vst [vmem:[%s666 + $0x178] sm:$0xff] %v5731
      %5796 = vst [vmem:[%s666 + $0x180] sm:$0xff] %v5732
      %5797 = vst [vmem:[%s666 + $0x188] sm:$0xff] %v5733
      %5798 = vst [vmem:[%s666 + $0x190] sm:$0xff] %v5734
      %5799 = vst [vmem:[%s666 + $0x198] sm:$0xff] %v5735
      %5800 = vst [vmem:[%s666 + $0x1a0] sm:$0xff] %v5736
      %5801 = vst [vmem:[%s666 + $0x1a8] sm:$0xff] %v5737
      %5802 = vst [vmem:[%s666 + $0x1b0] sm:$0xff] %v5738
      %5803 = vst [vmem:[%s666 + $0x1b8] sm:$0xff] %v5739
      %5804 = vst [vmem:[%s666 + $0x1c0] sm:$0xff] %v5740
      %5805 = vst [vmem:[%s666 + $0x1c8] sm:$0xff] %v5741
      %5806 = vst [vmem:[%s666 + $0x1d0] sm:$0xff] %v5742
      %5807 = vst [vmem:[%s666 + $0x1d8] sm:$0xff] %v5743
      %5808 = vst [vmem:[%s666 + $0x1e0] sm:$0xff] %v5744
      %5809 = vst [vmem:[%s666 + $0x1e8] sm:$0xff] %v5745
      %5810 = vst [vmem:[%s666 + $0x1f0] sm:$0xff] %v5746
      %5811 = vst [vmem:[%s666 + $0x1f8] sm:$0xff] %v5747
      %s5812 = smul.u32 8, %s28
      %p5813 = scmp.lt.s32.totalorder %s5812, 15
      %s5814 = scalar_select %p5813, %s5812, 15
      %s5815 = smul.addr %s5814, 8
      %s5816 = smul.addr %s5815, 8
      %s5817 = scalar_lea.vmem %s13, %s5816
      // Predicated region
      $region77: #{_lambda_.4} parent=71 // pred_check
        %p5818 = pneg %p392
      $region78: #{_lambda_.4} parent=71 // pred_check_branch
        %5820 = sbr.rel (%p5818) target = $region80
      $region79: #{_lambda_.4} parent=71 // pred_region
        %s5821 = smul.u32 8, %s28
      $region80: #{_lambda_.4} parent=71 // pred_fallthru
        _
    $region72: #{_lambda_.4} parent=5 // pred_fallthru
      _
    %p5822 = scmp.le.s32.totalorder 2, %s19
    // Predicated region
    $region81: #{_lambda_.4} parent=5 // pred_check
      %p5823 = pneg %p5822
    $region82: #{_lambda_.4} parent=5 // pred_check_branch
      %5825 = sbr.rel (%p5823) target = $region84
    $region83: #{_lambda_.4} parent=5 // pred_region
      %s5826 = ssub.s32 %s19, 2
      // Predicated region
      $region85: #{_lambda_.4} parent=83 // pred_check
        %p5827 = pneg %p398
      $region86: #{_lambda_.4} parent=83 // pred_check_branch
        %5829 = sbr.rel (%p5827) target = $region88
      $region87: #{_lambda_.4} parent=83 // pred_region
        %s5830 = smul.u32 8, %s30
        %p5831 = scmp.lt.s32.totalorder %s5830, 15
        %s5832 = scalar_select %p5831, %s5830, 15
        %s5833 = smul.addr %s5832, 8
        %s5834 = smul.addr %s5833, 8
        %s5835 = scalar_lea.vmem %s13, %s5834
      $region88: #{_lambda_.4} parent=83 // pred_fallthru
        _
    $region84: #{_lambda_.4} parent=5 // pred_fallthru
      _
  $region6: #{_lambda_.4} parent=0 // loop_footer
    %s23 = sadd.s32 1, %s19
  $region7: #{_lambda_.4} parent=0 // loop_footer_branch
    %18 = sbr.rel target = $region3
  $region8: #{_lambda_.4} parent=0 // loop_exit
    _

</llo_original>
